<compile_context>
chip_gen: v7x
topology: tpu7x:2x2x1
jax: 0.10.0
libtpu: 0.0.40
codegen_flags: <defaults>
</compile_context>

<pallas_src>
import functools

import numpy as np
import jax
import jax.numpy as jnp
from jax.experimental import pallas as pl
from jax.experimental.pallas import tpu as pltpu

LEAKY_SLOPE = 0.33  # TODO(synk): BrainNetCNN-style slope assumed; nn.LeakyReLU default is 0.01.


# ----------------------------------------------------------------------------
# Fused whole-network Pallas kernel
# ----------------------------------------------------------------------------
def _network_kernel(
    x_ref, kmat_ref,
    w1t_ref, b1_ref,
    a2_ref, w2_ref, b2_ref,
    a3_ref, w3_ref, b3_ref,
    a4_ref, w4_ref, b4_ref,
    a5a_ref, w5a_ref, a5b_ref, w5b_ref, b5_ref,
    a6_ref, w6_ref, b6_ref,
    w7a_ref, w7b_ref, b7_ref,
    fc1w_ref, fc1b_ref, fc2w_ref, fc2b_ref,
    out_ref, layer4_ref,
    *, B, d):
    f32 = jnp.float32

    def leaky(u):
        return jnp.where(u >= 0.0, u, LEAKY_SLOPE * u)

    def s_term(V, Wcjo):
        # V: (B*d, Cin) row-layout activations; Wcjo: (Cin, d, Cout).
        # s[b, o] = sum_{c, j} V[b*d + j, c] * Wcjo[c, j, o]   (one value per batch row)
        Cin, _, Cout = Wcjo.shape
        Vr = V.reshape(B, d, Cin)                 # split leading dim: safe reshape
        s = jnp.zeros((B, Cout), f32)
        for c in range(Cin):                      # unrolled; Cin <= 8 per call (VPU work)
            s = s + jnp.sum(Vr[:, :, c:c + 1] * Wcjo[c][None, :, :], axis=1)
        return s

    def e2e_block(contribs, bias):
        # Conv2d(Cin, Cout, (1, d)) applied to E2E(V) for each (V, A, Wcjo) contribution
        # (channel concat == sum of contributions), + bias, + LeakyReLU.
        # Bias is folded into the per-batch s term before the row broadcast.
        t = None
        s = bias                                  # (1, Cout) broadcasts against (B, Cout)
        for V, A, Wcjo in contribs:
            dv = jnp.dot(V, A, preferred_element_type=f32)   # (B*d, Cout) row term (MXU)
            t = dv if t is None else t + dv
            s = s + s_term(V, Wcjo)
        Cout = s.shape[1]
        s_rows = jnp.broadcast_to(s[:, None, :], (B, d, Cout)).reshape(B * d, Cout)
        return leaky(t + s_rows)

    # ---- E1: plain (1, d) conv on the raw (B, 1, d, d) input ------------------
    x = x_ref[...]                                               # (B*d, d)
    v1 = leaky(jnp.dot(x, w1t_ref[...], preferred_element_type=f32) + b1_ref[...])
    # ---- E2 / E3 / E1_3 on E2E(.)  (dropout == identity) ----------------------
    v2 = e2e_block([(v1, a2_ref[...], w2_ref[...])], b2_ref[...])
    v3 = e2e_block([(v2, a3_ref[...], w3_ref[...])], b3_ref[...])
    v4 = e2e_block([(v1, a4_ref[...], w4_ref[...])], b4_ref[...])
    # ---- N1 on cat([E2E(v3), E2E(v4)], C): sum of per-source contributions ----
    v5 = e2e_block([(v3, a5a_ref[...], w5a_ref[...]),
                    (v4, a5b_ref[...], w5b_ref[...])], b5_ref[...])
    # ---- N2_4 on E2E(v2) -------------------------------------------------------
    v6 = e2e_block([(v2, a6_ref[...], w6_ref[...])], b6_ref[...])
    # ---- G1 on cat([E2N(v5), E2N(v6)], C); the E2N x2 is folded into w7a/w7b --
    layer7 = leaky(s_term(v5, w7a_ref[...]) + s_term(v6, w7b_ref[...]) + b7_ref[...])
    # ---- FC head (fc2: Linear -> ReLU -> Linear) + softmax --------------------
    h = jnp.maximum(
        jnp.dot(layer7, fc1w_ref[...], preferred_element_type=f32) + fc1b_ref[...], 0.0)
    logits = jnp.dot(h, fc2w_ref[...], preferred_element_type=f32) + fc2b_ref[...]
    m = jnp.max(logits, axis=1, keepdims=True)
    e = jnp.exp(logits - m)
    out_ref[...] = (e / jnp.sum(e, axis=1, keepdims=True)).astype(out_ref.dtype)

    # ---- layer4 = E2E(v4), written lane-dense as (B*C4, d*d) ------------------
    C4 = v4.shape[1]
    v4m = jnp.transpose(v4.reshape(B, d, C4), (0, 2, 1)).reshape(B * C4, d)
    layer4_ref[...] = jnp.dot(v4m, kmat_ref[...],
                              preferred_element_type=f32).astype(layer4_ref.dtype)


def _full_spec(shape):
    n = len(shape)
    return pl.BlockSpec(shape, lambda i, _n=n: (0,) * _n)


@jax.jit
def network_sw_forward(kp, x):
    """Fused forward. x: (B, 1, d, d) f32 -> (softmax (B, 2), layer4 (B, C4, d, d))."""
    B = x.shape[0]
    d = x.shape[2]
    C4 = kp["A4"].shape[1]

    x2d = x.reshape(B * d, d)                    # free (contiguous) reshape under jit
    inputs = (
        x2d, kp["KMAT"],
        kp["W1T"], kp["B1"],
        kp["A2"], kp["W2"], kp["B2"],
        kp["A3"], kp["W3"], kp["B3"],
        kp["A4"], kp["W4"], kp["B4"],
        kp["A5A"], kp["W5A"], kp["A5B"], kp["W5B"], kp["B5"],
        kp["A6"], kp["W6"], kp["B6"],
        kp["W7A"], kp["W7B"], kp["B7"],
        kp["FC1_W"], kp["FC1_B"], kp["FC2_W"], kp["FC2_B"],
    )

    out_shape = (jax.ShapeDtypeStruct((B, 2), jnp.float32),
                 jax.ShapeDtypeStruct((B * C4, d * d), jnp.float32))
    in_specs = [_full_spec(a.shape) for a in inputs]
    out_specs = (_full_spec((B, 2)), _full_spec((B * C4, d * d)))

    in_elems = sum(a.size for a in inputs)
    out_elems = B * 2 + B * C4 * d * d
    cost = pl.CostEstimate(
        flops=int(2 * B * d * in_elems + 2 * B * C4 * d * d * d),
        transcendentals=int(2 * B),
        bytes_accessed=int(4 * (in_elems + out_elems)),
    )

    probs, layer4_flat = pl.pallas_call(
        functools.partial(_network_kernel, B=B, d=d),
        grid=(1,),
        in_specs=in_specs,
        out_specs=out_specs,
        out_shape=out_shape,
        compiler_params=pltpu.CompilerParams(dimension_semantics=("arbitrary",)),
        cost_estimate=cost,
    )(*inputs)
    return probs, layer4_flat.reshape(B, C4, d, d)


# ----------------------------------------------------------------------------
# Parameters (PyTorch layout) and one-time kernel re-layout
# ----------------------------------------------------------------------------
def init_params(key, list_arch, d):
    """PyTorch-layout parameters: conv weights (C_out, C_in, d), biases (C,)."""
    c1, c2, c3, c4, c5, c6, c7 = (list_arch[i][4] for i in range(7))
    hidden = list_arch[7][1]

    def conv_p(k, cout, cin):
        kw, kb = jax.random.split(k)
        return (0.1 * jax.random.normal(kw, (cout, cin, d), jnp.float32),
                0.1 * jax.random.normal(kb, (cout,), jnp.float32))

    def fc_p(k, cin, cout):
        kw, kb = jax.random.split(k)
        return (0.1 * jax.random.normal(kw, (cin, cout), jnp.float32),
                0.1 * jax.random.normal(kb, (cout,), jnp.float32))

    ks = jax.random.split(key, 9)
    p = {}
    p["E1_w"], p["E1_b"] = conv_p(ks[0], c1, 1)
    p["E2_w"], p["E2_b"] = conv_p(ks[1], c2, c1)
    p["E3_w"], p["E3_b"] = conv_p(ks[2], c3, c2)
    p["E13_w"], p["E13_b"] = conv_p(ks[3], c4, c1)
    p["N1_w"], p["N1_b"] = conv_p(ks[4], c5, c3 + c4)
    p["N24_w"], p["N24_b"] = conv_p(ks[5], c6, c2)
    p["G1_w"], p["G1_b"] = conv_p(ks[6], c7, c5 + c6)
    p["FC1_w"], p["FC1_b"] = fc_p(ks[7], c7, hidden)   # fc2 head: Linear-ReLU-Linear
    p["FC2_w"], p["FC2_b"] = fc_p(ks[8], hidden, 2)
    return p


def prepare_params(params):
    """One-time re-layout of module parameters into the fused-kernel layout."""
    d = params["E1_w"].shape[2]

    def conv_split(w):   # (Cout, Cin, d) -> A (Cin, Cout), Wcjo (Cin, d, Cout)
        return (jnp.transpose(jnp.sum(w, axis=2), (1, 0)),
                jnp.transpose(w, (1, 2, 0)))

    kp = {}
    kp["W1T"] = jnp.transpose(params["E1_w"][:, 0, :], (1, 0))          # (d, C1)
    kp["B1"] = params["E1_b"].reshape(1, -1)
    for idx, src in (("2", "E2"), ("3", "E3"), ("4", "E13"), ("6", "N24")):
        a, w = conv_split(params[src + "_w"])
        kp["A" + idx], kp["W" + idx] = a, w
        kp["B" + idx] = params[src + "_b"].reshape(1, -1)
    c3 = params["E3_w"].shape[0]
    kp["A5A"], kp["W5A"] = conv_split(params["N1_w"][:, :c3, :])
    kp["A5B"], kp["W5B"] = conv_split(params["N1_w"][:, c3:, :])
    kp["B5"] = params["N1_b"].reshape(1, -1)
    c5 = params["N1_w"].shape[0]
    kp["W7A"] = 2.0 * jnp.transpose(params["G1_w"][:, :c5, :], (1, 2, 0))  # E2N x2 folded
    kp["W7B"] = 2.0 * jnp.transpose(params["G1_w"][:, c5:, :], (1, 2, 0))
    kp["B7"] = params["G1_b"].reshape(1, -1)
    kp["FC1_W"], kp["FC1_B"] = params["FC1_w"], params["FC1_b"].reshape(1, -1)
    kp["FC2_W"], kp["FC2_B"] = params["FC2_w"], params["FC2_b"].reshape(1, -1)
    # Constant lane-dense E2E expansion matrix: K[p, i*d + j] = [p == i] + [p == j].
    p_idx = np.arange(d)[:, None]
    k_idx = np.arange(d * d)[None, :]
    kp["KMAT"] = jnp.asarray(((k_idx // d) == p_idx).astype(np.float32)
                             + ((k_idx % d) == p_idx).astype(np.float32))
    return kp


# ----------------------------------------------------------------------------
# Pure-JAX reference (literal port of the PyTorch forward) for a self-check
# ----------------------------------------------------------------------------
def _reference_forward(params, x):
    def base(v, w, b):            # Conv2d(Cin, Cout, (1, d)) + bias + LeakyReLU
        y = jnp.einsum("bchj,ocj->boh", v, w) + b[None, :, None]
        return jnp.where(y >= 0.0, y, LEAKY_SLOPE * y)[..., None]

    e2e = lambda t: t + jnp.transpose(t, (0, 1, 3, 2))
    e2n = lambda t: 2.0 * jnp.transpose(t, (0, 1, 3, 2))

    l1 = e2e(base(x, params["E1_w"], params["E1_b"]))
    l2 = e2e(base(l1, params["E2_w"], params["E2_b"]))
    l3 = e2e(base(l2, params["E3_w"], params["E3_b"]))
    l4 = e2e(base(l1, params["E13_w"], params["E13_b"]))
    in5 = jnp.concatenate([l3, l4], axis=1)
    l5 = e2n(base(in5, params["N1_w"], params["N1_b"]))
    l6 = e2n(base(l2, params["N24_w"], params["N24_b"]))
    in7 = jnp.concatenate([l5, l6], axis=1)
    l7 = base(in7, params["G1_w"], params["G1_b"])                 # (B, C7, 1, 1)
    flat = l7.reshape(x.shape[0], -1)
    h = jnp.maximum(flat @ params["FC1_w"] + params["FC1_b"], 0.0)
    logits = h @ params["FC2_w"] + params["FC2_b"]
    return jax.nn.softmax(logits, axis=1), l4


if __name__ == "__main__":
    jax.config.update("jax_default_matmul_precision", "highest")

    # [n_repeat, k1, k2, k3, C_out] per conv stage; last entry = [fc_depth, fc_hidden]
    list_arch = [
        [2, 1, 1, 1, 4],
        [2, 1, 1, 1, 4],
        [2, 1, 1, 1, 8],
        [2, 1, 1, 1, 8],
        [2, 1, 1, 1, 8],
        [2, 1, 1, 1, 8],
        [2, 1, 1, 1, 16],
        [2, 32],
    ]
    B, d = 2, 16

    key = jax.random.PRNGKey(0)
    pkey, xkey = jax.random.split(key)
    params = init_params(pkey, list_arch, d)
    kparams = prepare_params(params)                       # one-time weight re-layout
    x = jax.random.normal(xkey, (B, 1, d, d), jnp.float32)  # NCHW input

    out, layer4 = network_sw_forward(kparams, x)
    jax.block_until_ready((out, layer4))

    assert out.shape == (B, 2)
    assert layer4.shape == (B, list_arch[3][4], d, d)

    # Correctness self-check against a literal pure-JAX port of the PyTorch module.
    ref_out, ref_l4 = _reference_forward(params, x)
    np.testing.assert_allclose(np.asarray(out), np.asarray(ref_out), rtol=5e-2, atol=5e-3)
    np.testing.assert_allclose(np.asarray(layer4), np.asarray(ref_l4), rtol=5e-2, atol=5e-3)

    print("KERNEL_OK")
</pallas_src>

<mosaic_0001>
module attributes {stable_mosaic.version = 11 : i64} {
  func.func @_network_kernel(%arg0: i32, %arg1: memref<32x16xf32, #tpu.memory_space<vmem>>, %arg2: memref<16x256xf32, #tpu.memory_space<vmem>>, %arg3: memref<16x4xf32, #tpu.memory_space<vmem>>, %arg4: memref<1x4xf32, #tpu.memory_space<vmem>>, %arg5: memref<4x4xf32, #tpu.memory_space<vmem>>, %arg6: memref<4x16x4xf32, #tpu.memory_space<vmem>>, %arg7: memref<1x4xf32, #tpu.memory_space<vmem>>, %arg8: memref<4x8xf32, #tpu.memory_space<vmem>>, %arg9: memref<4x16x8xf32, #tpu.memory_space<vmem>>, %arg10: memref<1x8xf32, #tpu.memory_space<vmem>>, %arg11: memref<4x8xf32, #tpu.memory_space<vmem>>, %arg12: memref<4x16x8xf32, #tpu.memory_space<vmem>>, %arg13: memref<1x8xf32, #tpu.memory_space<vmem>>, %arg14: memref<8x8xf32, #tpu.memory_space<vmem>>, %arg15: memref<8x16x8xf32, #tpu.memory_space<vmem>>, %arg16: memref<8x8xf32, #tpu.memory_space<vmem>>, %arg17: memref<8x16x8xf32, #tpu.memory_space<vmem>>, %arg18: memref<1x8xf32, #tpu.memory_space<vmem>>, %arg19: memref<4x8xf32, #tpu.memory_space<vmem>>, %arg20: memref<4x16x8xf32, #tpu.memory_space<vmem>>, %arg21: memref<1x8xf32, #tpu.memory_space<vmem>>, %arg22: memref<8x16x16xf32, #tpu.memory_space<vmem>>, %arg23: memref<8x16x16xf32, #tpu.memory_space<vmem>>, %arg24: memref<1x16xf32, #tpu.memory_space<vmem>>, %arg25: memref<16x32xf32, #tpu.memory_space<vmem>>, %arg26: memref<1x32xf32, #tpu.memory_space<vmem>>, %arg27: memref<32x2xf32, #tpu.memory_space<vmem>>, %arg28: memref<1x2xf32, #tpu.memory_space<vmem>>, %arg29: memref<2x2xf32, #tpu.memory_space<vmem>>, %arg30: memref<16x256xf32, #tpu.memory_space<vmem>>) attributes {dimension_semantics = [#tpu.dimension_semantics<arbitrary>], iteration_bounds = array<i64: 1>, scalar_prefetch = 0 : i64, scratch_operands = 0 : i64, tpu.core_type = #tpu.core_type<tc>, window_params = [{pipeline_mode = #tpu.pipeline_mode<synchronous>, transform_indices = @transform_0, window_bounds = array<i64: 32, 16>}, {pipeline_mode = #tpu.pipeline_mode<synchronous>, transform_indices = @transform_1, window_bounds = array<i64: 16, 256>}, {pipeline_mode = #tpu.pipeline_mode<synchronous>, transform_indices = @transform_2, window_bounds = array<i64: 16, 4>}, {pipeline_mode = #tpu.pipeline_mode<synchronous>, transform_indices = @transform_3, window_bounds = array<i64: 1, 4>}, {pipeline_mode = #tpu.pipeline_mode<synchronous>, transform_indices = @transform_4, window_bounds = array<i64: 4, 4>}, {pipeline_mode = #tpu.pipeline_mode<synchronous>, transform_indices = @transform_5, window_bounds = array<i64: 4, 16, 4>}, {pipeline_mode = #tpu.pipeline_mode<synchronous>, transform_indices = @transform_6, window_bounds = array<i64: 1, 4>}, {pipeline_mode = #tpu.pipeline_mode<synchronous>, transform_indices = @transform_7, window_bounds = array<i64: 4, 8>}, {pipeline_mode = #tpu.pipeline_mode<synchronous>, transform_indices = @transform_8, window_bounds = array<i64: 4, 16, 8>}, {pipeline_mode = #tpu.pipeline_mode<synchronous>, transform_indices = @transform_9, window_bounds = array<i64: 1, 8>}, {pipeline_mode = #tpu.pipeline_mode<synchronous>, transform_indices = @transform_10, window_bounds = array<i64: 4, 8>}, {pipeline_mode = #tpu.pipeline_mode<synchronous>, transform_indices = @transform_11, window_bounds = array<i64: 4, 16, 8>}, {pipeline_mode = #tpu.pipeline_mode<synchronous>, transform_indices = @transform_12, window_bounds = array<i64: 1, 8>}, {pipeline_mode = #tpu.pipeline_mode<synchronous>, transform_indices = @transform_13, window_bounds = array<i64: 8, 8>}, {pipeline_mode = #tpu.pipeline_mode<synchronous>, transform_indices = @transform_14, window_bounds = array<i64: 8, 16, 8>}, {pipeline_mode = #tpu.pipeline_mode<synchronous>, transform_indices = @transform_15, window_bounds = array<i64: 8, 8>}, {pipeline_mode = #tpu.pipeline_mode<synchronous>, transform_indices = @transform_16, window_bounds = array<i64: 8, 16, 8>}, {pipeline_mode = #tpu.pipeline_mode<synchronous>, transform_indices = @transform_17, window_bounds = array<i64: 1, 8>}, {pipeline_mode = #tpu.pipeline_mode<synchronous>, transform_indices = @transform_18, window_bounds = array<i64: 4, 8>}, {pipeline_mode = #tpu.pipeline_mode<synchronous>, transform_indices = @transform_19, window_bounds = array<i64: 4, 16, 8>}, {pipeline_mode = #tpu.pipeline_mode<synchronous>, transform_indices = @transform_20, window_bounds = array<i64: 1, 8>}, {pipeline_mode = #tpu.pipeline_mode<synchronous>, transform_indices = @transform_21, window_bounds = array<i64: 8, 16, 16>}, {pipeline_mode = #tpu.pipeline_mode<synchronous>, transform_indices = @transform_22, window_bounds = array<i64: 8, 16, 16>}, {pipeline_mode = #tpu.pipeline_mode<synchronous>, transform_indices = @transform_23, window_bounds = array<i64: 1, 16>}, {pipeline_mode = #tpu.pipeline_mode<synchronous>, transform_indices = @transform_24, window_bounds = array<i64: 16, 32>}, {pipeline_mode = #tpu.pipeline_mode<synchronous>, transform_indices = @transform_25, window_bounds = array<i64: 1, 32>}, {pipeline_mode = #tpu.pipeline_mode<synchronous>, transform_indices = @transform_26, window_bounds = array<i64: 32, 2>}, {pipeline_mode = #tpu.pipeline_mode<synchronous>, transform_indices = @transform_27, window_bounds = array<i64: 1, 2>}, {pipeline_mode = #tpu.pipeline_mode<synchronous>, transform_indices = @transform_28, window_bounds = array<i64: 2, 2>}, {pipeline_mode = #tpu.pipeline_mode<synchronous>, transform_indices = @transform_29, window_bounds = array<i64: 16, 256>}]} {
    %c0 = arith.constant 0 : index
    %c0_0 = arith.constant 0 : index
    %0 = vector.load %arg1[%c0, %c0_0] : memref<32x16xf32, #tpu.memory_space<vmem>>, vector<32x16xf32>
    %c0_1 = arith.constant 0 : index
    %c0_2 = arith.constant 0 : index
    %1 = vector.load %arg3[%c0_1, %c0_2] : memref<16x4xf32, #tpu.memory_space<vmem>>, vector<16x4xf32>
    %cst = arith.constant dense<0.000000e+00> : vector<32x4xf32>
    %2 = tpu.matmul %0, %1, %cst {dimension_numbers = #tpu.dot_dimension_numbers<[1], [0], [0], [1], [0, 0, 1, 1], [], []>, precision = #tpu.contract_precision<fp32>} : vector<32x16xf32>, vector<16x4xf32>, vector<32x4xf32> -> vector<32x4xf32>
    %c0_3 = arith.constant 0 : index
    %c0_4 = arith.constant 0 : index
    %3 = vector.load %arg4[%c0_3, %c0_4] : memref<1x4xf32, #tpu.memory_space<vmem>>, vector<1x4xf32>
    %4 = vector.broadcast %3 : vector<1x4xf32> to vector<32x4xf32>
    %5 = arith.addf %2, %4 : vector<32x4xf32>
    %cst_5 = arith.constant 0.000000e+00 : f32
    %6 = vector.broadcast %cst_5 : f32 to vector<32x4xf32>
    %7 = arith.cmpf oge, %5, %6 : vector<32x4xf32>
    %cst_6 = arith.constant 3.300000e-01 : f32
    %8 = vector.broadcast %cst_6 : f32 to vector<32x4xf32>
    %9 = arith.mulf %8, %5 : vector<32x4xf32>
    %10 = arith.select %7, %5, %9 : vector<32x4xi1>, vector<32x4xf32>
    %c0_7 = arith.constant 0 : index
    %c0_8 = arith.constant 0 : index
    %11 = vector.load %arg5[%c0_7, %c0_8] : memref<4x4xf32, #tpu.memory_space<vmem>>, vector<4x4xf32>
    %c0_9 = arith.constant 0 : index
    %c0_10 = arith.constant 0 : index
    %c0_11 = arith.constant 0 : index
    %12 = vector.load %arg6[%c0_9, %c0_10, %c0_11] : memref<4x16x4xf32, #tpu.memory_space<vmem>>, vector<4x16x4xf32>
    %c0_12 = arith.constant 0 : index
    %c0_13 = arith.constant 0 : index
    %13 = vector.load %arg7[%c0_12, %c0_13] : memref<1x4xf32, #tpu.memory_space<vmem>>, vector<1x4xf32>
    %cst_14 = arith.constant dense<0.000000e+00> : vector<32x4xf32>
    %14 = tpu.matmul %10, %11, %cst_14 {dimension_numbers = #tpu.dot_dimension_numbers<[1], [0], [0], [1], [0, 0, 1, 1], [], []>, precision = #tpu.contract_precision<fp32>} : vector<32x4xf32>, vector<4x4xf32>, vector<32x4xf32> -> vector<32x4xf32>
    %15 = vector.shape_cast %10 : vector<32x4xf32> to vector<2x16x4xf32>
    %cst_15 = arith.constant 0.000000e+00 : f32
    %16 = vector.broadcast %cst_15 : f32 to vector<2x4xf32>
    %17 = vector.extract_strided_slice %15 {offsets = [0, 0, 0], sizes = [2, 16, 1], strides = [1, 1, 1]} : vector<2x16x4xf32> to vector<2x16x1xf32>
    %18 = vector.extract_strided_slice %12 {offsets = [0, 0, 0], sizes = [1, 16, 4], strides = [1, 1, 1]} : vector<4x16x4xf32> to vector<1x16x4xf32>
    %19 = vector.shape_cast %18 : vector<1x16x4xf32> to vector<16x4xf32>
    %20 = vector.shape_cast %19 : vector<16x4xf32> to vector<1x16x4xf32>
    %21 = vector.broadcast %17 : vector<2x16x1xf32> to vector<2x16x4xf32>
    %22 = vector.broadcast %20 : vector<1x16x4xf32> to vector<2x16x4xf32>
    %23 = arith.mulf %21, %22 : vector<2x16x4xf32>
    %cst_16 = arith.constant dense<0.000000e+00> : vector<2x4xf32>
    %24 = vector.multi_reduction <add>, %23, %cst_16 [1] : vector<2x16x4xf32> to vector<2x4xf32>
    %25 = arith.addf %16, %24 : vector<2x4xf32>
    %26 = vector.extract_strided_slice %15 {offsets = [0, 0, 1], sizes = [2, 16, 1], strides = [1, 1, 1]} : vector<2x16x4xf32> to vector<2x16x1xf32>
    %27 = vector.extract_strided_slice %12 {offsets = [1, 0, 0], sizes = [1, 16, 4], strides = [1, 1, 1]} : vector<4x16x4xf32> to vector<1x16x4xf32>
    %28 = vector.shape_cast %27 : vector<1x16x4xf32> to vector<16x4xf32>
    %29 = vector.shape_cast %28 : vector<16x4xf32> to vector<1x16x4xf32>
    %30 = vector.broadcast %26 : vector<2x16x1xf32> to vector<2x16x4xf32>
    %31 = vector.broadcast %29 : vector<1x16x4xf32> to vector<2x16x4xf32>
    %32 = arith.mulf %30, %31 : vector<2x16x4xf32>
    %cst_17 = arith.constant dense<0.000000e+00> : vector<2x4xf32>
    %33 = vector.multi_reduction <add>, %32, %cst_17 [1] : vector<2x16x4xf32> to vector<2x4xf32>
    %34 = arith.addf %25, %33 : vector<2x4xf32>
    %35 = vector.extract_strided_slice %15 {offsets = [0, 0, 2], sizes = [2, 16, 1], strides = [1, 1, 1]} : vector<2x16x4xf32> to vector<2x16x1xf32>
    %36 = vector.extract_strided_slice %12 {offsets = [2, 0, 0], sizes = [1, 16, 4], strides = [1, 1, 1]} : vector<4x16x4xf32> to vector<1x16x4xf32>
    %37 = vector.shape_cast %36 : vector<1x16x4xf32> to vector<16x4xf32>
    %38 = vector.shape_cast %37 : vector<16x4xf32> to vector<1x16x4xf32>
    %39 = vector.broadcast %35 : vector<2x16x1xf32> to vector<2x16x4xf32>
    %40 = vector.broadcast %38 : vector<1x16x4xf32> to vector<2x16x4xf32>
    %41 = arith.mulf %39, %40 : vector<2x16x4xf32>
    %cst_18 = arith.constant dense<0.000000e+00> : vector<2x4xf32>
    %42 = vector.multi_reduction <add>, %41, %cst_18 [1] : vector<2x16x4xf32> to vector<2x4xf32>
    %43 = arith.addf %34, %42 : vector<2x4xf32>
    %44 = vector.extract_strided_slice %15 {offsets = [0, 0, 3], sizes = [2, 16, 1], strides = [1, 1, 1]} : vector<2x16x4xf32> to vector<2x16x1xf32>
    %45 = vector.extract_strided_slice %12 {offsets = [3, 0, 0], sizes = [1, 16, 4], strides = [1, 1, 1]} : vector<4x16x4xf32> to vector<1x16x4xf32>
    %46 = vector.shape_cast %45 : vector<1x16x4xf32> to vector<16x4xf32>
    %47 = vector.shape_cast %46 : vector<16x4xf32> to vector<1x16x4xf32>
    %48 = vector.broadcast %44 : vector<2x16x1xf32> to vector<2x16x4xf32>
    %49 = vector.broadcast %47 : vector<1x16x4xf32> to vector<2x16x4xf32>
    %50 = arith.mulf %48, %49 : vector<2x16x4xf32>
    %cst_19 = arith.constant dense<0.000000e+00> : vector<2x4xf32>
    %51 = vector.multi_reduction <add>, %50, %cst_19 [1] : vector<2x16x4xf32> to vector<2x4xf32>
    %52 = arith.addf %43, %51 : vector<2x4xf32>
    %53 = vector.broadcast %13 : vector<1x4xf32> to vector<2x4xf32>
    %54 = arith.addf %53, %52 : vector<2x4xf32>
    %55 = vector.shape_cast %54 : vector<2x4xf32> to vector<2x1x4xf32>
    %56 = vector.shape_cast %55 : vector<2x1x4xf32> to vector<2x1x4xf32>
    %57 = vector.broadcast %56 : vector<2x1x4xf32> to vector<2x16x4xf32>
    %58 = vector.shape_cast %57 : vector<2x16x4xf32> to vector<32x4xf32>
    %59 = arith.addf %14, %58 : vector<32x4xf32>
    %cst_20 = arith.constant 0.000000e+00 : f32
    %60 = vector.broadcast %cst_20 : f32 to vector<32x4xf32>
    %61 = arith.cmpf oge, %59, %60 : vector<32x4xf32>
    %cst_21 = arith.constant 3.300000e-01 : f32
    %62 = vector.broadcast %cst_21 : f32 to vector<32x4xf32>
    %63 = arith.mulf %62, %59 : vector<32x4xf32>
    %64 = arith.select %61, %59, %63 : vector<32x4xi1>, vector<32x4xf32>
    %c0_22 = arith.constant 0 : index
    %c0_23 = arith.constant 0 : index
    %65 = vector.load %arg8[%c0_22, %c0_23] : memref<4x8xf32, #tpu.memory_space<vmem>>, vector<4x8xf32>
    %c0_24 = arith.constant 0 : index
    %c0_25 = arith.constant 0 : index
    %c0_26 = arith.constant 0 : index
    %66 = vector.load %arg9[%c0_24, %c0_25, %c0_26] : memref<4x16x8xf32, #tpu.memory_space<vmem>>, vector<4x16x8xf32>
    %c0_27 = arith.constant 0 : index
    %c0_28 = arith.constant 0 : index
    %67 = vector.load %arg10[%c0_27, %c0_28] : memref<1x8xf32, #tpu.memory_space<vmem>>, vector<1x8xf32>
    %cst_29 = arith.constant dense<0.000000e+00> : vector<32x8xf32>
    %68 = tpu.matmul %64, %65, %cst_29 {dimension_numbers = #tpu.dot_dimension_numbers<[1], [0], [0], [1], [0, 0, 1, 1], [], []>, precision = #tpu.contract_precision<fp32>} : vector<32x4xf32>, vector<4x8xf32>, vector<32x8xf32> -> vector<32x8xf32>
    %69 = vector.shape_cast %64 : vector<32x4xf32> to vector<2x16x4xf32>
    %cst_30 = arith.constant 0.000000e+00 : f32
    %70 = vector.broadcast %cst_30 : f32 to vector<2x8xf32>
    %71 = vector.extract_strided_slice %69 {offsets = [0, 0, 0], sizes = [2, 16, 1], strides = [1, 1, 1]} : vector<2x16x4xf32> to vector<2x16x1xf32>
    %72 = vector.extract_strided_slice %66 {offsets = [0, 0, 0], sizes = [1, 16, 8], strides = [1, 1, 1]} : vector<4x16x8xf32> to vector<1x16x8xf32>
    %73 = vector.shape_cast %72 : vector<1x16x8xf32> to vector<16x8xf32>
    %74 = vector.shape_cast %73 : vector<16x8xf32> to vector<1x16x8xf32>
    %75 = vector.broadcast %71 : vector<2x16x1xf32> to vector<2x16x8xf32>
    %76 = vector.broadcast %74 : vector<1x16x8xf32> to vector<2x16x8xf32>
    %77 = arith.mulf %75, %76 : vector<2x16x8xf32>
    %cst_31 = arith.constant dense<0.000000e+00> : vector<2x8xf32>
    %78 = vector.multi_reduction <add>, %77, %cst_31 [1] : vector<2x16x8xf32> to vector<2x8xf32>
    %79 = arith.addf %70, %78 : vector<2x8xf32>
    %80 = vector.extract_strided_slice %69 {offsets = [0, 0, 1], sizes = [2, 16, 1], strides = [1, 1, 1]} : vector<2x16x4xf32> to vector<2x16x1xf32>
    %81 = vector.extract_strided_slice %66 {offsets = [1, 0, 0], sizes = [1, 16, 8], strides = [1, 1, 1]} : vector<4x16x8xf32> to vector<1x16x8xf32>
    %82 = vector.shape_cast %81 : vector<1x16x8xf32> to vector<16x8xf32>
    %83 = vector.shape_cast %82 : vector<16x8xf32> to vector<1x16x8xf32>
    %84 = vector.broadcast %80 : vector<2x16x1xf32> to vector<2x16x8xf32>
    %85 = vector.broadcast %83 : vector<1x16x8xf32> to vector<2x16x8xf32>
    %86 = arith.mulf %84, %85 : vector<2x16x8xf32>
    %cst_32 = arith.constant dense<0.000000e+00> : vector<2x8xf32>
    %87 = vector.multi_reduction <add>, %86, %cst_32 [1] : vector<2x16x8xf32> to vector<2x8xf32>
    %88 = arith.addf %79, %87 : vector<2x8xf32>
    %89 = vector.extract_strided_slice %69 {offsets = [0, 0, 2], sizes = [2, 16, 1], strides = [1, 1, 1]} : vector<2x16x4xf32> to vector<2x16x1xf32>
    %90 = vector.extract_strided_slice %66 {offsets = [2, 0, 0], sizes = [1, 16, 8], strides = [1, 1, 1]} : vector<4x16x8xf32> to vector<1x16x8xf32>
    %91 = vector.shape_cast %90 : vector<1x16x8xf32> to vector<16x8xf32>
    %92 = vector.shape_cast %91 : vector<16x8xf32> to vector<1x16x8xf32>
    %93 = vector.broadcast %89 : vector<2x16x1xf32> to vector<2x16x8xf32>
    %94 = vector.broadcast %92 : vector<1x16x8xf32> to vector<2x16x8xf32>
    %95 = arith.mulf %93, %94 : vector<2x16x8xf32>
    %cst_33 = arith.constant dense<0.000000e+00> : vector<2x8xf32>
    %96 = vector.multi_reduction <add>, %95, %cst_33 [1] : vector<2x16x8xf32> to vector<2x8xf32>
    %97 = arith.addf %88, %96 : vector<2x8xf32>
    %98 = vector.extract_strided_slice %69 {offsets = [0, 0, 3], sizes = [2, 16, 1], strides = [1, 1, 1]} : vector<2x16x4xf32> to vector<2x16x1xf32>
    %99 = vector.extract_strided_slice %66 {offsets = [3, 0, 0], sizes = [1, 16, 8], strides = [1, 1, 1]} : vector<4x16x8xf32> to vector<1x16x8xf32>
    %100 = vector.shape_cast %99 : vector<1x16x8xf32> to vector<16x8xf32>
    %101 = vector.shape_cast %100 : vector<16x8xf32> to vector<1x16x8xf32>
    %102 = vector.broadcast %98 : vector<2x16x1xf32> to vector<2x16x8xf32>
    %103 = vector.broadcast %101 : vector<1x16x8xf32> to vector<2x16x8xf32>
    %104 = arith.mulf %102, %103 : vector<2x16x8xf32>
    %cst_34 = arith.constant dense<0.000000e+00> : vector<2x8xf32>
    %105 = vector.multi_reduction <add>, %104, %cst_34 [1] : vector<2x16x8xf32> to vector<2x8xf32>
    %106 = arith.addf %97, %105 : vector<2x8xf32>
    %107 = vector.broadcast %67 : vector<1x8xf32> to vector<2x8xf32>
    %108 = arith.addf %107, %106 : vector<2x8xf32>
    %109 = vector.shape_cast %108 : vector<2x8xf32> to vector<2x1x8xf32>
    %110 = vector.shape_cast %109 : vector<2x1x8xf32> to vector<2x1x8xf32>
    %111 = vector.broadcast %110 : vector<2x1x8xf32> to vector<2x16x8xf32>
    %112 = vector.shape_cast %111 : vector<2x16x8xf32> to vector<32x8xf32>
    %113 = arith.addf %68, %112 : vector<32x8xf32>
    %cst_35 = arith.constant 0.000000e+00 : f32
    %114 = vector.broadcast %cst_35 : f32 to vector<32x8xf32>
    %115 = arith.cmpf oge, %113, %114 : vector<32x8xf32>
    %cst_36 = arith.constant 3.300000e-01 : f32
    %116 = vector.broadcast %cst_36 : f32 to vector<32x8xf32>
    %117 = arith.mulf %116, %113 : vector<32x8xf32>
    %118 = arith.select %115, %113, %117 : vector<32x8xi1>, vector<32x8xf32>
    %c0_37 = arith.constant 0 : index
    %c0_38 = arith.constant 0 : index
    %119 = vector.load %arg11[%c0_37, %c0_38] : memref<4x8xf32, #tpu.memory_space<vmem>>, vector<4x8xf32>
    %c0_39 = arith.constant 0 : index
    %c0_40 = arith.constant 0 : index
    %c0_41 = arith.constant 0 : index
    %120 = vector.load %arg12[%c0_39, %c0_40, %c0_41] : memref<4x16x8xf32, #tpu.memory_space<vmem>>, vector<4x16x8xf32>
    %c0_42 = arith.constant 0 : index
    %c0_43 = arith.constant 0 : index
    %121 = vector.load %arg13[%c0_42, %c0_43] : memref<1x8xf32, #tpu.memory_space<vmem>>, vector<1x8xf32>
    %cst_44 = arith.constant dense<0.000000e+00> : vector<32x8xf32>
    %122 = tpu.matmul %10, %119, %cst_44 {dimension_numbers = #tpu.dot_dimension_numbers<[1], [0], [0], [1], [0, 0, 1, 1], [], []>, precision = #tpu.contract_precision<fp32>} : vector<32x4xf32>, vector<4x8xf32>, vector<32x8xf32> -> vector<32x8xf32>
    %123 = vector.shape_cast %10 : vector<32x4xf32> to vector<2x16x4xf32>
    %cst_45 = arith.constant 0.000000e+00 : f32
    %124 = vector.broadcast %cst_45 : f32 to vector<2x8xf32>
    %125 = vector.extract_strided_slice %123 {offsets = [0, 0, 0], sizes = [2, 16, 1], strides = [1, 1, 1]} : vector<2x16x4xf32> to vector<2x16x1xf32>
    %126 = vector.extract_strided_slice %120 {offsets = [0, 0, 0], sizes = [1, 16, 8], strides = [1, 1, 1]} : vector<4x16x8xf32> to vector<1x16x8xf32>
    %127 = vector.shape_cast %126 : vector<1x16x8xf32> to vector<16x8xf32>
    %128 = vector.shape_cast %127 : vector<16x8xf32> to vector<1x16x8xf32>
    %129 = vector.broadcast %125 : vector<2x16x1xf32> to vector<2x16x8xf32>
    %130 = vector.broadcast %128 : vector<1x16x8xf32> to vector<2x16x8xf32>
    %131 = arith.mulf %129, %130 : vector<2x16x8xf32>
    %cst_46 = arith.constant dense<0.000000e+00> : vector<2x8xf32>
    %132 = vector.multi_reduction <add>, %131, %cst_46 [1] : vector<2x16x8xf32> to vector<2x8xf32>
    %133 = arith.addf %124, %132 : vector<2x8xf32>
    %134 = vector.extract_strided_slice %123 {offsets = [0, 0, 1], sizes = [2, 16, 1], strides = [1, 1, 1]} : vector<2x16x4xf32> to vector<2x16x1xf32>
    %135 = vector.extract_strided_slice %120 {offsets = [1, 0, 0], sizes = [1, 16, 8], strides = [1, 1, 1]} : vector<4x16x8xf32> to vector<1x16x8xf32>
    %136 = vector.shape_cast %135 : vector<1x16x8xf32> to vector<16x8xf32>
    %137 = vector.shape_cast %136 : vector<16x8xf32> to vector<1x16x8xf32>
    %138 = vector.broadcast %134 : vector<2x16x1xf32> to vector<2x16x8xf32>
    %139 = vector.broadcast %137 : vector<1x16x8xf32> to vector<2x16x8xf32>
    %140 = arith.mulf %138, %139 : vector<2x16x8xf32>
    %cst_47 = arith.constant dense<0.000000e+00> : vector<2x8xf32>
    %141 = vector.multi_reduction <add>, %140, %cst_47 [1] : vector<2x16x8xf32> to vector<2x8xf32>
    %142 = arith.addf %133, %141 : vector<2x8xf32>
    %143 = vector.extract_strided_slice %123 {offsets = [0, 0, 2], sizes = [2, 16, 1], strides = [1, 1, 1]} : vector<2x16x4xf32> to vector<2x16x1xf32>
    %144 = vector.extract_strided_slice %120 {offsets = [2, 0, 0], sizes = [1, 16, 8], strides = [1, 1, 1]} : vector<4x16x8xf32> to vector<1x16x8xf32>
    %145 = vector.shape_cast %144 : vector<1x16x8xf32> to vector<16x8xf32>
    %146 = vector.shape_cast %145 : vector<16x8xf32> to vector<1x16x8xf32>
    %147 = vector.broadcast %143 : vector<2x16x1xf32> to vector<2x16x8xf32>
    %148 = vector.broadcast %146 : vector<1x16x8xf32> to vector<2x16x8xf32>
    %149 = arith.mulf %147, %148 : vector<2x16x8xf32>
    %cst_48 = arith.constant dense<0.000000e+00> : vector<2x8xf32>
    %150 = vector.multi_reduction <add>, %149, %cst_48 [1] : vector<2x16x8xf32> to vector<2x8xf32>
    %151 = arith.addf %142, %150 : vector<2x8xf32>
    %152 = vector.extract_strided_slice %123 {offsets = [0, 0, 3], sizes = [2, 16, 1], strides = [1, 1, 1]} : vector<2x16x4xf32> to vector<2x16x1xf32>
    %153 = vector.extract_strided_slice %120 {offsets = [3, 0, 0], sizes = [1, 16, 8], strides = [1, 1, 1]} : vector<4x16x8xf32> to vector<1x16x8xf32>
    %154 = vector.shape_cast %153 : vector<1x16x8xf32> to vector<16x8xf32>
    %155 = vector.shape_cast %154 : vector<16x8xf32> to vector<1x16x8xf32>
    %156 = vector.broadcast %152 : vector<2x16x1xf32> to vector<2x16x8xf32>
    %157 = vector.broadcast %155 : vector<1x16x8xf32> to vector<2x16x8xf32>
    %158 = arith.mulf %156, %157 : vector<2x16x8xf32>
    %cst_49 = arith.constant dense<0.000000e+00> : vector<2x8xf32>
    %159 = vector.multi_reduction <add>, %158, %cst_49 [1] : vector<2x16x8xf32> to vector<2x8xf32>
    %160 = arith.addf %151, %159 : vector<2x8xf32>
    %161 = vector.broadcast %121 : vector<1x8xf32> to vector<2x8xf32>
    %162 = arith.addf %161, %160 : vector<2x8xf32>
    %163 = vector.shape_cast %162 : vector<2x8xf32> to vector<2x1x8xf32>
    %164 = vector.shape_cast %163 : vector<2x1x8xf32> to vector<2x1x8xf32>
    %165 = vector.broadcast %164 : vector<2x1x8xf32> to vector<2x16x8xf32>
    %166 = vector.shape_cast %165 : vector<2x16x8xf32> to vector<32x8xf32>
    %167 = arith.addf %122, %166 : vector<32x8xf32>
    %cst_50 = arith.constant 0.000000e+00 : f32
    %168 = vector.broadcast %cst_50 : f32 to vector<32x8xf32>
    %169 = arith.cmpf oge, %167, %168 : vector<32x8xf32>
    %cst_51 = arith.constant 3.300000e-01 : f32
    %170 = vector.broadcast %cst_51 : f32 to vector<32x8xf32>
    %171 = arith.mulf %170, %167 : vector<32x8xf32>
    %172 = arith.select %169, %167, %171 : vector<32x8xi1>, vector<32x8xf32>
    %c0_52 = arith.constant 0 : index
    %c0_53 = arith.constant 0 : index
    %173 = vector.load %arg14[%c0_52, %c0_53] : memref<8x8xf32, #tpu.memory_space<vmem>>, vector<8x8xf32>
    %c0_54 = arith.constant 0 : index
    %c0_55 = arith.constant 0 : index
    %c0_56 = arith.constant 0 : index
    %174 = vector.load %arg15[%c0_54, %c0_55, %c0_56] : memref<8x16x8xf32, #tpu.memory_space<vmem>>, vector<8x16x8xf32>
    %c0_57 = arith.constant 0 : index
    %c0_58 = arith.constant 0 : index
    %175 = vector.load %arg16[%c0_57, %c0_58] : memref<8x8xf32, #tpu.memory_space<vmem>>, vector<8x8xf32>
    %c0_59 = arith.constant 0 : index
    %c0_60 = arith.constant 0 : index
    %c0_61 = arith.constant 0 : index
    %176 = vector.load %arg17[%c0_59, %c0_60, %c0_61] : memref<8x16x8xf32, #tpu.memory_space<vmem>>, vector<8x16x8xf32>
    %c0_62 = arith.constant 0 : index
    %c0_63 = arith.constant 0 : index
    %177 = vector.load %arg18[%c0_62, %c0_63] : memref<1x8xf32, #tpu.memory_space<vmem>>, vector<1x8xf32>
    %cst_64 = arith.constant dense<0.000000e+00> : vector<32x8xf32>
    %178 = tpu.matmul %118, %173, %cst_64 {dimension_numbers = #tpu.dot_dimension_numbers<[1], [0], [0], [1], [0, 0, 1, 1], [], []>, precision = #tpu.contract_precision<fp32>} : vector<32x8xf32>, vector<8x8xf32>, vector<32x8xf32> -> vector<32x8xf32>
    %179 = vector.shape_cast %118 : vector<32x8xf32> to vector<2x16x8xf32>
    %cst_65 = arith.constant 0.000000e+00 : f32
    %180 = vector.broadcast %cst_65 : f32 to vector<2x8xf32>
    %181 = vector.extract_strided_slice %179 {offsets = [0, 0, 0], sizes = [2, 16, 1], strides = [1, 1, 1]} : vector<2x16x8xf32> to vector<2x16x1xf32>
    %182 = vector.extract_strided_slice %174 {offsets = [0, 0, 0], sizes = [1, 16, 8], strides = [1, 1, 1]} : vector<8x16x8xf32> to vector<1x16x8xf32>
    %183 = vector.shape_cast %182 : vector<1x16x8xf32> to vector<16x8xf32>
    %184 = vector.shape_cast %183 : vector<16x8xf32> to vector<1x16x8xf32>
    %185 = vector.broadcast %181 : vector<2x16x1xf32> to vector<2x16x8xf32>
    %186 = vector.broadcast %184 : vector<1x16x8xf32> to vector<2x16x8xf32>
    %187 = arith.mulf %185, %186 : vector<2x16x8xf32>
    %cst_66 = arith.constant dense<0.000000e+00> : vector<2x8xf32>
    %188 = vector.multi_reduction <add>, %187, %cst_66 [1] : vector<2x16x8xf32> to vector<2x8xf32>
    %189 = arith.addf %180, %188 : vector<2x8xf32>
    %190 = vector.extract_strided_slice %179 {offsets = [0, 0, 1], sizes = [2, 16, 1], strides = [1, 1, 1]} : vector<2x16x8xf32> to vector<2x16x1xf32>
    %191 = vector.extract_strided_slice %174 {offsets = [1, 0, 0], sizes = [1, 16, 8], strides = [1, 1, 1]} : vector<8x16x8xf32> to vector<1x16x8xf32>
    %192 = vector.shape_cast %191 : vector<1x16x8xf32> to vector<16x8xf32>
    %193 = vector.shape_cast %192 : vector<16x8xf32> to vector<1x16x8xf32>
    %194 = vector.broadcast %190 : vector<2x16x1xf32> to vector<2x16x8xf32>
    %195 = vector.broadcast %193 : vector<1x16x8xf32> to vector<2x16x8xf32>
    %196 = arith.mulf %194, %195 : vector<2x16x8xf32>
    %cst_67 = arith.constant dense<0.000000e+00> : vector<2x8xf32>
    %197 = vector.multi_reduction <add>, %196, %cst_67 [1] : vector<2x16x8xf32> to vector<2x8xf32>
    %198 = arith.addf %189, %197 : vector<2x8xf32>
    %199 = vector.extract_strided_slice %179 {offsets = [0, 0, 2], sizes = [2, 16, 1], strides = [1, 1, 1]} : vector<2x16x8xf32> to vector<2x16x1xf32>
    %200 = vector.extract_strided_slice %174 {offsets = [2, 0, 0], sizes = [1, 16, 8], strides = [1, 1, 1]} : vector<8x16x8xf32> to vector<1x16x8xf32>
    %201 = vector.shape_cast %200 : vector<1x16x8xf32> to vector<16x8xf32>
    %202 = vector.shape_cast %201 : vector<16x8xf32> to vector<1x16x8xf32>
    %203 = vector.broadcast %199 : vector<2x16x1xf32> to vector<2x16x8xf32>
    %204 = vector.broadcast %202 : vector<1x16x8xf32> to vector<2x16x8xf32>
    %205 = arith.mulf %203, %204 : vector<2x16x8xf32>
    %cst_68 = arith.constant dense<0.000000e+00> : vector<2x8xf32>
    %206 = vector.multi_reduction <add>, %205, %cst_68 [1] : vector<2x16x8xf32> to vector<2x8xf32>
    %207 = arith.addf %198, %206 : vector<2x8xf32>
    %208 = vector.extract_strided_slice %179 {offsets = [0, 0, 3], sizes = [2, 16, 1], strides = [1, 1, 1]} : vector<2x16x8xf32> to vector<2x16x1xf32>
    %209 = vector.extract_strided_slice %174 {offsets = [3, 0, 0], sizes = [1, 16, 8], strides = [1, 1, 1]} : vector<8x16x8xf32> to vector<1x16x8xf32>
    %210 = vector.shape_cast %209 : vector<1x16x8xf32> to vector<16x8xf32>
    %211 = vector.shape_cast %210 : vector<16x8xf32> to vector<1x16x8xf32>
    %212 = vector.broadcast %208 : vector<2x16x1xf32> to vector<2x16x8xf32>
    %213 = vector.broadcast %211 : vector<1x16x8xf32> to vector<2x16x8xf32>
    %214 = arith.mulf %212, %213 : vector<2x16x8xf32>
    %cst_69 = arith.constant dense<0.000000e+00> : vector<2x8xf32>
    %215 = vector.multi_reduction <add>, %214, %cst_69 [1] : vector<2x16x8xf32> to vector<2x8xf32>
    %216 = arith.addf %207, %215 : vector<2x8xf32>
    %217 = vector.extract_strided_slice %179 {offsets = [0, 0, 4], sizes = [2, 16, 1], strides = [1, 1, 1]} : vector<2x16x8xf32> to vector<2x16x1xf32>
    %218 = vector.extract_strided_slice %174 {offsets = [4, 0, 0], sizes = [1, 16, 8], strides = [1, 1, 1]} : vector<8x16x8xf32> to vector<1x16x8xf32>
    %219 = vector.shape_cast %218 : vector<1x16x8xf32> to vector<16x8xf32>
    %220 = vector.shape_cast %219 : vector<16x8xf32> to vector<1x16x8xf32>
    %221 = vector.broadcast %217 : vector<2x16x1xf32> to vector<2x16x8xf32>
    %222 = vector.broadcast %220 : vector<1x16x8xf32> to vector<2x16x8xf32>
    %223 = arith.mulf %221, %222 : vector<2x16x8xf32>
    %cst_70 = arith.constant dense<0.000000e+00> : vector<2x8xf32>
    %224 = vector.multi_reduction <add>, %223, %cst_70 [1] : vector<2x16x8xf32> to vector<2x8xf32>
    %225 = arith.addf %216, %224 : vector<2x8xf32>
    %226 = vector.extract_strided_slice %179 {offsets = [0, 0, 5], sizes = [2, 16, 1], strides = [1, 1, 1]} : vector<2x16x8xf32> to vector<2x16x1xf32>
    %227 = vector.extract_strided_slice %174 {offsets = [5, 0, 0], sizes = [1, 16, 8], strides = [1, 1, 1]} : vector<8x16x8xf32> to vector<1x16x8xf32>
    %228 = vector.shape_cast %227 : vector<1x16x8xf32> to vector<16x8xf32>
    %229 = vector.shape_cast %228 : vector<16x8xf32> to vector<1x16x8xf32>
    %230 = vector.broadcast %226 : vector<2x16x1xf32> to vector<2x16x8xf32>
    %231 = vector.broadcast %229 : vector<1x16x8xf32> to vector<2x16x8xf32>
    %232 = arith.mulf %230, %231 : vector<2x16x8xf32>
    %cst_71 = arith.constant dense<0.000000e+00> : vector<2x8xf32>
    %233 = vector.multi_reduction <add>, %232, %cst_71 [1] : vector<2x16x8xf32> to vector<2x8xf32>
    %234 = arith.addf %225, %233 : vector<2x8xf32>
    %235 = vector.extract_strided_slice %179 {offsets = [0, 0, 6], sizes = [2, 16, 1], strides = [1, 1, 1]} : vector<2x16x8xf32> to vector<2x16x1xf32>
    %236 = vector.extract_strided_slice %174 {offsets = [6, 0, 0], sizes = [1, 16, 8], strides = [1, 1, 1]} : vector<8x16x8xf32> to vector<1x16x8xf32>
    %237 = vector.shape_cast %236 : vector<1x16x8xf32> to vector<16x8xf32>
    %238 = vector.shape_cast %237 : vector<16x8xf32> to vector<1x16x8xf32>
    %239 = vector.broadcast %235 : vector<2x16x1xf32> to vector<2x16x8xf32>
    %240 = vector.broadcast %238 : vector<1x16x8xf32> to vector<2x16x8xf32>
    %241 = arith.mulf %239, %240 : vector<2x16x8xf32>
    %cst_72 = arith.constant dense<0.000000e+00> : vector<2x8xf32>
    %242 = vector.multi_reduction <add>, %241, %cst_72 [1] : vector<2x16x8xf32> to vector<2x8xf32>
    %243 = arith.addf %234, %242 : vector<2x8xf32>
    %244 = vector.extract_strided_slice %179 {offsets = [0, 0, 7], sizes = [2, 16, 1], strides = [1, 1, 1]} : vector<2x16x8xf32> to vector<2x16x1xf32>
    %245 = vector.extract_strided_slice %174 {offsets = [7, 0, 0], sizes = [1, 16, 8], strides = [1, 1, 1]} : vector<8x16x8xf32> to vector<1x16x8xf32>
    %246 = vector.shape_cast %245 : vector<1x16x8xf32> to vector<16x8xf32>
    %247 = vector.shape_cast %246 : vector<16x8xf32> to vector<1x16x8xf32>
    %248 = vector.broadcast %244 : vector<2x16x1xf32> to vector<2x16x8xf32>
    %249 = vector.broadcast %247 : vector<1x16x8xf32> to vector<2x16x8xf32>
    %250 = arith.mulf %248, %249 : vector<2x16x8xf32>
    %cst_73 = arith.constant dense<0.000000e+00> : vector<2x8xf32>
    %251 = vector.multi_reduction <add>, %250, %cst_73 [1] : vector<2x16x8xf32> to vector<2x8xf32>
    %252 = arith.addf %243, %251 : vector<2x8xf32>
    %253 = vector.broadcast %177 : vector<1x8xf32> to vector<2x8xf32>
    %254 = arith.addf %253, %252 : vector<2x8xf32>
    %cst_74 = arith.constant dense<0.000000e+00> : vector<32x8xf32>
    %255 = tpu.matmul %172, %175, %cst_74 {dimension_numbers = #tpu.dot_dimension_numbers<[1], [0], [0], [1], [0, 0, 1, 1], [], []>, precision = #tpu.contract_precision<fp32>} : vector<32x8xf32>, vector<8x8xf32>, vector<32x8xf32> -> vector<32x8xf32>
    %256 = arith.addf %178, %255 : vector<32x8xf32>
    %257 = vector.shape_cast %172 : vector<32x8xf32> to vector<2x16x8xf32>
    %cst_75 = arith.constant 0.000000e+00 : f32
    %258 = vector.broadcast %cst_75 : f32 to vector<2x8xf32>
    %259 = vector.extract_strided_slice %257 {offsets = [0, 0, 0], sizes = [2, 16, 1], strides = [1, 1, 1]} : vector<2x16x8xf32> to vector<2x16x1xf32>
    %260 = vector.extract_strided_slice %176 {offsets = [0, 0, 0], sizes = [1, 16, 8], strides = [1, 1, 1]} : vector<8x16x8xf32> to vector<1x16x8xf32>
    %261 = vector.shape_cast %260 : vector<1x16x8xf32> to vector<16x8xf32>
    %262 = vector.shape_cast %261 : vector<16x8xf32> to vector<1x16x8xf32>
    %263 = vector.broadcast %259 : vector<2x16x1xf32> to vector<2x16x8xf32>
    %264 = vector.broadcast %262 : vector<1x16x8xf32> to vector<2x16x8xf32>
    %265 = arith.mulf %263, %264 : vector<2x16x8xf32>
    %cst_76 = arith.constant dense<0.000000e+00> : vector<2x8xf32>
    %266 = vector.multi_reduction <add>, %265, %cst_76 [1] : vector<2x16x8xf32> to vector<2x8xf32>
    %267 = arith.addf %258, %266 : vector<2x8xf32>
    %268 = vector.extract_strided_slice %257 {offsets = [0, 0, 1], sizes = [2, 16, 1], strides = [1, 1, 1]} : vector<2x16x8xf32> to vector<2x16x1xf32>
    %269 = vector.extract_strided_slice %176 {offsets = [1, 0, 0], sizes = [1, 16, 8], strides = [1, 1, 1]} : vector<8x16x8xf32> to vector<1x16x8xf32>
    %270 = vector.shape_cast %269 : vector<1x16x8xf32> to vector<16x8xf32>
    %271 = vector.shape_cast %270 : vector<16x8xf32> to vector<1x16x8xf32>
    %272 = vector.broadcast %268 : vector<2x16x1xf32> to vector<2x16x8xf32>
    %273 = vector.broadcast %271 : vector<1x16x8xf32> to vector<2x16x8xf32>
    %274 = arith.mulf %272, %273 : vector<2x16x8xf32>
    %cst_77 = arith.constant dense<0.000000e+00> : vector<2x8xf32>
    %275 = vector.multi_reduction <add>, %274, %cst_77 [1] : vector<2x16x8xf32> to vector<2x8xf32>
    %276 = arith.addf %267, %275 : vector<2x8xf32>
    %277 = vector.extract_strided_slice %257 {offsets = [0, 0, 2], sizes = [2, 16, 1], strides = [1, 1, 1]} : vector<2x16x8xf32> to vector<2x16x1xf32>
    %278 = vector.extract_strided_slice %176 {offsets = [2, 0, 0], sizes = [1, 16, 8], strides = [1, 1, 1]} : vector<8x16x8xf32> to vector<1x16x8xf32>
    %279 = vector.shape_cast %278 : vector<1x16x8xf32> to vector<16x8xf32>
    %280 = vector.shape_cast %279 : vector<16x8xf32> to vector<1x16x8xf32>
    %281 = vector.broadcast %277 : vector<2x16x1xf32> to vector<2x16x8xf32>
    %282 = vector.broadcast %280 : vector<1x16x8xf32> to vector<2x16x8xf32>
    %283 = arith.mulf %281, %282 : vector<2x16x8xf32>
    %cst_78 = arith.constant dense<0.000000e+00> : vector<2x8xf32>
    %284 = vector.multi_reduction <add>, %283, %cst_78 [1] : vector<2x16x8xf32> to vector<2x8xf32>
    %285 = arith.addf %276, %284 : vector<2x8xf32>
    %286 = vector.extract_strided_slice %257 {offsets = [0, 0, 3], sizes = [2, 16, 1], strides = [1, 1, 1]} : vector<2x16x8xf32> to vector<2x16x1xf32>
    %287 = vector.extract_strided_slice %176 {offsets = [3, 0, 0], sizes = [1, 16, 8], strides = [1, 1, 1]} : vector<8x16x8xf32> to vector<1x16x8xf32>
    %288 = vector.shape_cast %287 : vector<1x16x8xf32> to vector<16x8xf32>
    %289 = vector.shape_cast %288 : vector<16x8xf32> to vector<1x16x8xf32>
    %290 = vector.broadcast %286 : vector<2x16x1xf32> to vector<2x16x8xf32>
    %291 = vector.broadcast %289 : vector<1x16x8xf32> to vector<2x16x8xf32>
    %292 = arith.mulf %290, %291 : vector<2x16x8xf32>
    %cst_79 = arith.constant dense<0.000000e+00> : vector<2x8xf32>
    %293 = vector.multi_reduction <add>, %292, %cst_79 [1] : vector<2x16x8xf32> to vector<2x8xf32>
    %294 = arith.addf %285, %293 : vector<2x8xf32>
    %295 = vector.extract_strided_slice %257 {offsets = [0, 0, 4], sizes = [2, 16, 1], strides = [1, 1, 1]} : vector<2x16x8xf32> to vector<2x16x1xf32>
    %296 = vector.extract_strided_slice %176 {offsets = [4, 0, 0], sizes = [1, 16, 8], strides = [1, 1, 1]} : vector<8x16x8xf32> to vector<1x16x8xf32>
    %297 = vector.shape_cast %296 : vector<1x16x8xf32> to vector<16x8xf32>
    %298 = vector.shape_cast %297 : vector<16x8xf32> to vector<1x16x8xf32>
    %299 = vector.broadcast %295 : vector<2x16x1xf32> to vector<2x16x8xf32>
    %300 = vector.broadcast %298 : vector<1x16x8xf32> to vector<2x16x8xf32>
    %301 = arith.mulf %299, %300 : vector<2x16x8xf32>
    %cst_80 = arith.constant dense<0.000000e+00> : vector<2x8xf32>
    %302 = vector.multi_reduction <add>, %301, %cst_80 [1] : vector<2x16x8xf32> to vector<2x8xf32>
    %303 = arith.addf %294, %302 : vector<2x8xf32>
    %304 = vector.extract_strided_slice %257 {offsets = [0, 0, 5], sizes = [2, 16, 1], strides = [1, 1, 1]} : vector<2x16x8xf32> to vector<2x16x1xf32>
    %305 = vector.extract_strided_slice %176 {offsets = [5, 0, 0], sizes = [1, 16, 8], strides = [1, 1, 1]} : vector<8x16x8xf32> to vector<1x16x8xf32>
    %306 = vector.shape_cast %305 : vector<1x16x8xf32> to vector<16x8xf32>
    %307 = vector.shape_cast %306 : vector<16x8xf32> to vector<1x16x8xf32>
    %308 = vector.broadcast %304 : vector<2x16x1xf32> to vector<2x16x8xf32>
    %309 = vector.broadcast %307 : vector<1x16x8xf32> to vector<2x16x8xf32>
    %310 = arith.mulf %308, %309 : vector<2x16x8xf32>
    %cst_81 = arith.constant dense<0.000000e+00> : vector<2x8xf32>
    %311 = vector.multi_reduction <add>, %310, %cst_81 [1] : vector<2x16x8xf32> to vector<2x8xf32>
    %312 = arith.addf %303, %311 : vector<2x8xf32>
    %313 = vector.extract_strided_slice %257 {offsets = [0, 0, 6], sizes = [2, 16, 1], strides = [1, 1, 1]} : vector<2x16x8xf32> to vector<2x16x1xf32>
    %314 = vector.extract_strided_slice %176 {offsets = [6, 0, 0], sizes = [1, 16, 8], strides = [1, 1, 1]} : vector<8x16x8xf32> to vector<1x16x8xf32>
    %315 = vector.shape_cast %314 : vector<1x16x8xf32> to vector<16x8xf32>
    %316 = vector.shape_cast %315 : vector<16x8xf32> to vector<1x16x8xf32>
    %317 = vector.broadcast %313 : vector<2x16x1xf32> to vector<2x16x8xf32>
    %318 = vector.broadcast %316 : vector<1x16x8xf32> to vector<2x16x8xf32>
    %319 = arith.mulf %317, %318 : vector<2x16x8xf32>
    %cst_82 = arith.constant dense<0.000000e+00> : vector<2x8xf32>
    %320 = vector.multi_reduction <add>, %319, %cst_82 [1] : vector<2x16x8xf32> to vector<2x8xf32>
    %321 = arith.addf %312, %320 : vector<2x8xf32>
    %322 = vector.extract_strided_slice %257 {offsets = [0, 0, 7], sizes = [2, 16, 1], strides = [1, 1, 1]} : vector<2x16x8xf32> to vector<2x16x1xf32>
    %323 = vector.extract_strided_slice %176 {offsets = [7, 0, 0], sizes = [1, 16, 8], strides = [1, 1, 1]} : vector<8x16x8xf32> to vector<1x16x8xf32>
    %324 = vector.shape_cast %323 : vector<1x16x8xf32> to vector<16x8xf32>
    %325 = vector.shape_cast %324 : vector<16x8xf32> to vector<1x16x8xf32>
    %326 = vector.broadcast %322 : vector<2x16x1xf32> to vector<2x16x8xf32>
    %327 = vector.broadcast %325 : vector<1x16x8xf32> to vector<2x16x8xf32>
    %328 = arith.mulf %326, %327 : vector<2x16x8xf32>
    %cst_83 = arith.constant dense<0.000000e+00> : vector<2x8xf32>
    %329 = vector.multi_reduction <add>, %328, %cst_83 [1] : vector<2x16x8xf32> to vector<2x8xf32>
    %330 = arith.addf %321, %329 : vector<2x8xf32>
    %331 = arith.addf %254, %330 : vector<2x8xf32>
    %332 = vector.shape_cast %331 : vector<2x8xf32> to vector<2x1x8xf32>
    %333 = vector.shape_cast %332 : vector<2x1x8xf32> to vector<2x1x8xf32>
    %334 = vector.broadcast %333 : vector<2x1x8xf32> to vector<2x16x8xf32>
    %335 = vector.shape_cast %334 : vector<2x16x8xf32> to vector<32x8xf32>
    %336 = arith.addf %256, %335 : vector<32x8xf32>
    %cst_84 = arith.constant 0.000000e+00 : f32
    %337 = vector.broadcast %cst_84 : f32 to vector<32x8xf32>
    %338 = arith.cmpf oge, %336, %337 : vector<32x8xf32>
    %cst_85 = arith.constant 3.300000e-01 : f32
    %339 = vector.broadcast %cst_85 : f32 to vector<32x8xf32>
    %340 = arith.mulf %339, %336 : vector<32x8xf32>
    %341 = arith.select %338, %336, %340 : vector<32x8xi1>, vector<32x8xf32>
    %c0_86 = arith.constant 0 : index
    %c0_87 = arith.constant 0 : index
    %342 = vector.load %arg19[%c0_86, %c0_87] : memref<4x8xf32, #tpu.memory_space<vmem>>, vector<4x8xf32>
    %c0_88 = arith.constant 0 : index
    %c0_89 = arith.constant 0 : index
    %c0_90 = arith.constant 0 : index
    %343 = vector.load %arg20[%c0_88, %c0_89, %c0_90] : memref<4x16x8xf32, #tpu.memory_space<vmem>>, vector<4x16x8xf32>
    %c0_91 = arith.constant 0 : index
    %c0_92 = arith.constant 0 : index
    %344 = vector.load %arg21[%c0_91, %c0_92] : memref<1x8xf32, #tpu.memory_space<vmem>>, vector<1x8xf32>
    %cst_93 = arith.constant dense<0.000000e+00> : vector<32x8xf32>
    %345 = tpu.matmul %64, %342, %cst_93 {dimension_numbers = #tpu.dot_dimension_numbers<[1], [0], [0], [1], [0, 0, 1, 1], [], []>, precision = #tpu.contract_precision<fp32>} : vector<32x4xf32>, vector<4x8xf32>, vector<32x8xf32> -> vector<32x8xf32>
    %346 = vector.shape_cast %64 : vector<32x4xf32> to vector<2x16x4xf32>
    %cst_94 = arith.constant 0.000000e+00 : f32
    %347 = vector.broadcast %cst_94 : f32 to vector<2x8xf32>
    %348 = vector.extract_strided_slice %346 {offsets = [0, 0, 0], sizes = [2, 16, 1], strides = [1, 1, 1]} : vector<2x16x4xf32> to vector<2x16x1xf32>
    %349 = vector.extract_strided_slice %343 {offsets = [0, 0, 0], sizes = [1, 16, 8], strides = [1, 1, 1]} : vector<4x16x8xf32> to vector<1x16x8xf32>
    %350 = vector.shape_cast %349 : vector<1x16x8xf32> to vector<16x8xf32>
    %351 = vector.shape_cast %350 : vector<16x8xf32> to vector<1x16x8xf32>
    %352 = vector.broadcast %348 : vector<2x16x1xf32> to vector<2x16x8xf32>
    %353 = vector.broadcast %351 : vector<1x16x8xf32> to vector<2x16x8xf32>
    %354 = arith.mulf %352, %353 : vector<2x16x8xf32>
    %cst_95 = arith.constant dense<0.000000e+00> : vector<2x8xf32>
    %355 = vector.multi_reduction <add>, %354, %cst_95 [1] : vector<2x16x8xf32> to vector<2x8xf32>
    %356 = arith.addf %347, %355 : vector<2x8xf32>
    %357 = vector.extract_strided_slice %346 {offsets = [0, 0, 1], sizes = [2, 16, 1], strides = [1, 1, 1]} : vector<2x16x4xf32> to vector<2x16x1xf32>
    %358 = vector.extract_strided_slice %343 {offsets = [1, 0, 0], sizes = [1, 16, 8], strides = [1, 1, 1]} : vector<4x16x8xf32> to vector<1x16x8xf32>
    %359 = vector.shape_cast %358 : vector<1x16x8xf32> to vector<16x8xf32>
    %360 = vector.shape_cast %359 : vector<16x8xf32> to vector<1x16x8xf32>
    %361 = vector.broadcast %357 : vector<2x16x1xf32> to vector<2x16x8xf32>
    %362 = vector.broadcast %360 : vector<1x16x8xf32> to vector<2x16x8xf32>
    %363 = arith.mulf %361, %362 : vector<2x16x8xf32>
    %cst_96 = arith.constant dense<0.000000e+00> : vector<2x8xf32>
    %364 = vector.multi_reduction <add>, %363, %cst_96 [1] : vector<2x16x8xf32> to vector<2x8xf32>
    %365 = arith.addf %356, %364 : vector<2x8xf32>
    %366 = vector.extract_strided_slice %346 {offsets = [0, 0, 2], sizes = [2, 16, 1], strides = [1, 1, 1]} : vector<2x16x4xf32> to vector<2x16x1xf32>
    %367 = vector.extract_strided_slice %343 {offsets = [2, 0, 0], sizes = [1, 16, 8], strides = [1, 1, 1]} : vector<4x16x8xf32> to vector<1x16x8xf32>
    %368 = vector.shape_cast %367 : vector<1x16x8xf32> to vector<16x8xf32>
    %369 = vector.shape_cast %368 : vector<16x8xf32> to vector<1x16x8xf32>
    %370 = vector.broadcast %366 : vector<2x16x1xf32> to vector<2x16x8xf32>
    %371 = vector.broadcast %369 : vector<1x16x8xf32> to vector<2x16x8xf32>
    %372 = arith.mulf %370, %371 : vector<2x16x8xf32>
    %cst_97 = arith.constant dense<0.000000e+00> : vector<2x8xf32>
    %373 = vector.multi_reduction <add>, %372, %cst_97 [1] : vector<2x16x8xf32> to vector<2x8xf32>
    %374 = arith.addf %365, %373 : vector<2x8xf32>
    %375 = vector.extract_strided_slice %346 {offsets = [0, 0, 3], sizes = [2, 16, 1], strides = [1, 1, 1]} : vector<2x16x4xf32> to vector<2x16x1xf32>
    %376 = vector.extract_strided_slice %343 {offsets = [3, 0, 0], sizes = [1, 16, 8], strides = [1, 1, 1]} : vector<4x16x8xf32> to vector<1x16x8xf32>
    %377 = vector.shape_cast %376 : vector<1x16x8xf32> to vector<16x8xf32>
    %378 = vector.shape_cast %377 : vector<16x8xf32> to vector<1x16x8xf32>
    %379 = vector.broadcast %375 : vector<2x16x1xf32> to vector<2x16x8xf32>
    %380 = vector.broadcast %378 : vector<1x16x8xf32> to vector<2x16x8xf32>
    %381 = arith.mulf %379, %380 : vector<2x16x8xf32>
    %cst_98 = arith.constant dense<0.000000e+00> : vector<2x8xf32>
    %382 = vector.multi_reduction <add>, %381, %cst_98 [1] : vector<2x16x8xf32> to vector<2x8xf32>
    %383 = arith.addf %374, %382 : vector<2x8xf32>
    %384 = vector.broadcast %344 : vector<1x8xf32> to vector<2x8xf32>
    %385 = arith.addf %384, %383 : vector<2x8xf32>
    %386 = vector.shape_cast %385 : vector<2x8xf32> to vector<2x1x8xf32>
    %387 = vector.shape_cast %386 : vector<2x1x8xf32> to vector<2x1x8xf32>
    %388 = vector.broadcast %387 : vector<2x1x8xf32> to vector<2x16x8xf32>
    %389 = vector.shape_cast %388 : vector<2x16x8xf32> to vector<32x8xf32>
    %390 = arith.addf %345, %389 : vector<32x8xf32>
    %cst_99 = arith.constant 0.000000e+00 : f32
    %391 = vector.broadcast %cst_99 : f32 to vector<32x8xf32>
    %392 = arith.cmpf oge, %390, %391 : vector<32x8xf32>
    %cst_100 = arith.constant 3.300000e-01 : f32
    %393 = vector.broadcast %cst_100 : f32 to vector<32x8xf32>
    %394 = arith.mulf %393, %390 : vector<32x8xf32>
    %395 = arith.select %392, %390, %394 : vector<32x8xi1>, vector<32x8xf32>
    %c0_101 = arith.constant 0 : index
    %c0_102 = arith.constant 0 : index
    %c0_103 = arith.constant 0 : index
    %396 = vector.load %arg22[%c0_101, %c0_102, %c0_103] : memref<8x16x16xf32, #tpu.memory_space<vmem>>, vector<8x16x16xf32>
    %397 = vector.shape_cast %341 : vector<32x8xf32> to vector<2x16x8xf32>
    %cst_104 = arith.constant 0.000000e+00 : f32
    %398 = vector.broadcast %cst_104 : f32 to vector<2x16xf32>
    %399 = vector.extract_strided_slice %397 {offsets = [0, 0, 0], sizes = [2, 16, 1], strides = [1, 1, 1]} : vector<2x16x8xf32> to vector<2x16x1xf32>
    %400 = vector.extract_strided_slice %396 {offsets = [0, 0, 0], sizes = [1, 16, 16], strides = [1, 1, 1]} : vector<8x16x16xf32> to vector<1x16x16xf32>
    %401 = vector.shape_cast %400 : vector<1x16x16xf32> to vector<16x16xf32>
    %402 = vector.shape_cast %401 : vector<16x16xf32> to vector<1x16x16xf32>
    %403 = vector.broadcast %399 : vector<2x16x1xf32> to vector<2x16x16xf32>
    %404 = vector.broadcast %402 : vector<1x16x16xf32> to vector<2x16x16xf32>
    %405 = arith.mulf %403, %404 : vector<2x16x16xf32>
    %cst_105 = arith.constant dense<0.000000e+00> : vector<2x16xf32>
    %406 = vector.multi_reduction <add>, %405, %cst_105 [1] : vector<2x16x16xf32> to vector<2x16xf32>
    %407 = arith.addf %398, %406 : vector<2x16xf32>
    %408 = vector.extract_strided_slice %397 {offsets = [0, 0, 1], sizes = [2, 16, 1], strides = [1, 1, 1]} : vector<2x16x8xf32> to vector<2x16x1xf32>
    %409 = vector.extract_strided_slice %396 {offsets = [1, 0, 0], sizes = [1, 16, 16], strides = [1, 1, 1]} : vector<8x16x16xf32> to vector<1x16x16xf32>
    %410 = vector.shape_cast %409 : vector<1x16x16xf32> to vector<16x16xf32>
    %411 = vector.shape_cast %410 : vector<16x16xf32> to vector<1x16x16xf32>
    %412 = vector.broadcast %408 : vector<2x16x1xf32> to vector<2x16x16xf32>
    %413 = vector.broadcast %411 : vector<1x16x16xf32> to vector<2x16x16xf32>
    %414 = arith.mulf %412, %413 : vector<2x16x16xf32>
    %cst_106 = arith.constant dense<0.000000e+00> : vector<2x16xf32>
    %415 = vector.multi_reduction <add>, %414, %cst_106 [1] : vector<2x16x16xf32> to vector<2x16xf32>
    %416 = arith.addf %407, %415 : vector<2x16xf32>
    %417 = vector.extract_strided_slice %397 {offsets = [0, 0, 2], sizes = [2, 16, 1], strides = [1, 1, 1]} : vector<2x16x8xf32> to vector<2x16x1xf32>
    %418 = vector.extract_strided_slice %396 {offsets = [2, 0, 0], sizes = [1, 16, 16], strides = [1, 1, 1]} : vector<8x16x16xf32> to vector<1x16x16xf32>
    %419 = vector.shape_cast %418 : vector<1x16x16xf32> to vector<16x16xf32>
    %420 = vector.shape_cast %419 : vector<16x16xf32> to vector<1x16x16xf32>
    %421 = vector.broadcast %417 : vector<2x16x1xf32> to vector<2x16x16xf32>
    %422 = vector.broadcast %420 : vector<1x16x16xf32> to vector<2x16x16xf32>
    %423 = arith.mulf %421, %422 : vector<2x16x16xf32>
    %cst_107 = arith.constant dense<0.000000e+00> : vector<2x16xf32>
    %424 = vector.multi_reduction <add>, %423, %cst_107 [1] : vector<2x16x16xf32> to vector<2x16xf32>
    %425 = arith.addf %416, %424 : vector<2x16xf32>
    %426 = vector.extract_strided_slice %397 {offsets = [0, 0, 3], sizes = [2, 16, 1], strides = [1, 1, 1]} : vector<2x16x8xf32> to vector<2x16x1xf32>
    %427 = vector.extract_strided_slice %396 {offsets = [3, 0, 0], sizes = [1, 16, 16], strides = [1, 1, 1]} : vector<8x16x16xf32> to vector<1x16x16xf32>
    %428 = vector.shape_cast %427 : vector<1x16x16xf32> to vector<16x16xf32>
    %429 = vector.shape_cast %428 : vector<16x16xf32> to vector<1x16x16xf32>
    %430 = vector.broadcast %426 : vector<2x16x1xf32> to vector<2x16x16xf32>
    %431 = vector.broadcast %429 : vector<1x16x16xf32> to vector<2x16x16xf32>
    %432 = arith.mulf %430, %431 : vector<2x16x16xf32>
    %cst_108 = arith.constant dense<0.000000e+00> : vector<2x16xf32>
    %433 = vector.multi_reduction <add>, %432, %cst_108 [1] : vector<2x16x16xf32> to vector<2x16xf32>
    %434 = arith.addf %425, %433 : vector<2x16xf32>
    %435 = vector.extract_strided_slice %397 {offsets = [0, 0, 4], sizes = [2, 16, 1], strides = [1, 1, 1]} : vector<2x16x8xf32> to vector<2x16x1xf32>
    %436 = vector.extract_strided_slice %396 {offsets = [4, 0, 0], sizes = [1, 16, 16], strides = [1, 1, 1]} : vector<8x16x16xf32> to vector<1x16x16xf32>
    %437 = vector.shape_cast %436 : vector<1x16x16xf32> to vector<16x16xf32>
    %438 = vector.shape_cast %437 : vector<16x16xf32> to vector<1x16x16xf32>
    %439 = vector.broadcast %435 : vector<2x16x1xf32> to vector<2x16x16xf32>
    %440 = vector.broadcast %438 : vector<1x16x16xf32> to vector<2x16x16xf32>
    %441 = arith.mulf %439, %440 : vector<2x16x16xf32>
    %cst_109 = arith.constant dense<0.000000e+00> : vector<2x16xf32>
    %442 = vector.multi_reduction <add>, %441, %cst_109 [1] : vector<2x16x16xf32> to vector<2x16xf32>
    %443 = arith.addf %434, %442 : vector<2x16xf32>
    %444 = vector.extract_strided_slice %397 {offsets = [0, 0, 5], sizes = [2, 16, 1], strides = [1, 1, 1]} : vector<2x16x8xf32> to vector<2x16x1xf32>
    %445 = vector.extract_strided_slice %396 {offsets = [5, 0, 0], sizes = [1, 16, 16], strides = [1, 1, 1]} : vector<8x16x16xf32> to vector<1x16x16xf32>
    %446 = vector.shape_cast %445 : vector<1x16x16xf32> to vector<16x16xf32>
    %447 = vector.shape_cast %446 : vector<16x16xf32> to vector<1x16x16xf32>
    %448 = vector.broadcast %444 : vector<2x16x1xf32> to vector<2x16x16xf32>
    %449 = vector.broadcast %447 : vector<1x16x16xf32> to vector<2x16x16xf32>
    %450 = arith.mulf %448, %449 : vector<2x16x16xf32>
    %cst_110 = arith.constant dense<0.000000e+00> : vector<2x16xf32>
    %451 = vector.multi_reduction <add>, %450, %cst_110 [1] : vector<2x16x16xf32> to vector<2x16xf32>
    %452 = arith.addf %443, %451 : vector<2x16xf32>
    %453 = vector.extract_strided_slice %397 {offsets = [0, 0, 6], sizes = [2, 16, 1], strides = [1, 1, 1]} : vector<2x16x8xf32> to vector<2x16x1xf32>
    %454 = vector.extract_strided_slice %396 {offsets = [6, 0, 0], sizes = [1, 16, 16], strides = [1, 1, 1]} : vector<8x16x16xf32> to vector<1x16x16xf32>
    %455 = vector.shape_cast %454 : vector<1x16x16xf32> to vector<16x16xf32>
    %456 = vector.shape_cast %455 : vector<16x16xf32> to vector<1x16x16xf32>
    %457 = vector.broadcast %453 : vector<2x16x1xf32> to vector<2x16x16xf32>
    %458 = vector.broadcast %456 : vector<1x16x16xf32> to vector<2x16x16xf32>
    %459 = arith.mulf %457, %458 : vector<2x16x16xf32>
    %cst_111 = arith.constant dense<0.000000e+00> : vector<2x16xf32>
    %460 = vector.multi_reduction <add>, %459, %cst_111 [1] : vector<2x16x16xf32> to vector<2x16xf32>
    %461 = arith.addf %452, %460 : vector<2x16xf32>
    %462 = vector.extract_strided_slice %397 {offsets = [0, 0, 7], sizes = [2, 16, 1], strides = [1, 1, 1]} : vector<2x16x8xf32> to vector<2x16x1xf32>
    %463 = vector.extract_strided_slice %396 {offsets = [7, 0, 0], sizes = [1, 16, 16], strides = [1, 1, 1]} : vector<8x16x16xf32> to vector<1x16x16xf32>
    %464 = vector.shape_cast %463 : vector<1x16x16xf32> to vector<16x16xf32>
    %465 = vector.shape_cast %464 : vector<16x16xf32> to vector<1x16x16xf32>
    %466 = vector.broadcast %462 : vector<2x16x1xf32> to vector<2x16x16xf32>
    %467 = vector.broadcast %465 : vector<1x16x16xf32> to vector<2x16x16xf32>
    %468 = arith.mulf %466, %467 : vector<2x16x16xf32>
    %cst_112 = arith.constant dense<0.000000e+00> : vector<2x16xf32>
    %469 = vector.multi_reduction <add>, %468, %cst_112 [1] : vector<2x16x16xf32> to vector<2x16xf32>
    %470 = arith.addf %461, %469 : vector<2x16xf32>
    %c0_113 = arith.constant 0 : index
    %c0_114 = arith.constant 0 : index
    %c0_115 = arith.constant 0 : index
    %471 = vector.load %arg23[%c0_113, %c0_114, %c0_115] : memref<8x16x16xf32, #tpu.memory_space<vmem>>, vector<8x16x16xf32>
    %472 = vector.shape_cast %395 : vector<32x8xf32> to vector<2x16x8xf32>
    %cst_116 = arith.constant 0.000000e+00 : f32
    %473 = vector.broadcast %cst_116 : f32 to vector<2x16xf32>
    %474 = vector.extract_strided_slice %472 {offsets = [0, 0, 0], sizes = [2, 16, 1], strides = [1, 1, 1]} : vector<2x16x8xf32> to vector<2x16x1xf32>
    %475 = vector.extract_strided_slice %471 {offsets = [0, 0, 0], sizes = [1, 16, 16], strides = [1, 1, 1]} : vector<8x16x16xf32> to vector<1x16x16xf32>
    %476 = vector.shape_cast %475 : vector<1x16x16xf32> to vector<16x16xf32>
    %477 = vector.shape_cast %476 : vector<16x16xf32> to vector<1x16x16xf32>
    %478 = vector.broadcast %474 : vector<2x16x1xf32> to vector<2x16x16xf32>
    %479 = vector.broadcast %477 : vector<1x16x16xf32> to vector<2x16x16xf32>
    %480 = arith.mulf %478, %479 : vector<2x16x16xf32>
    %cst_117 = arith.constant dense<0.000000e+00> : vector<2x16xf32>
    %481 = vector.multi_reduction <add>, %480, %cst_117 [1] : vector<2x16x16xf32> to vector<2x16xf32>
    %482 = arith.addf %473, %481 : vector<2x16xf32>
    %483 = vector.extract_strided_slice %472 {offsets = [0, 0, 1], sizes = [2, 16, 1], strides = [1, 1, 1]} : vector<2x16x8xf32> to vector<2x16x1xf32>
    %484 = vector.extract_strided_slice %471 {offsets = [1, 0, 0], sizes = [1, 16, 16], strides = [1, 1, 1]} : vector<8x16x16xf32> to vector<1x16x16xf32>
    %485 = vector.shape_cast %484 : vector<1x16x16xf32> to vector<16x16xf32>
    %486 = vector.shape_cast %485 : vector<16x16xf32> to vector<1x16x16xf32>
    %487 = vector.broadcast %483 : vector<2x16x1xf32> to vector<2x16x16xf32>
    %488 = vector.broadcast %486 : vector<1x16x16xf32> to vector<2x16x16xf32>
    %489 = arith.mulf %487, %488 : vector<2x16x16xf32>
    %cst_118 = arith.constant dense<0.000000e+00> : vector<2x16xf32>
    %490 = vector.multi_reduction <add>, %489, %cst_118 [1] : vector<2x16x16xf32> to vector<2x16xf32>
    %491 = arith.addf %482, %490 : vector<2x16xf32>
    %492 = vector.extract_strided_slice %472 {offsets = [0, 0, 2], sizes = [2, 16, 1], strides = [1, 1, 1]} : vector<2x16x8xf32> to vector<2x16x1xf32>
    %493 = vector.extract_strided_slice %471 {offsets = [2, 0, 0], sizes = [1, 16, 16], strides = [1, 1, 1]} : vector<8x16x16xf32> to vector<1x16x16xf32>
    %494 = vector.shape_cast %493 : vector<1x16x16xf32> to vector<16x16xf32>
    %495 = vector.shape_cast %494 : vector<16x16xf32> to vector<1x16x16xf32>
    %496 = vector.broadcast %492 : vector<2x16x1xf32> to vector<2x16x16xf32>
    %497 = vector.broadcast %495 : vector<1x16x16xf32> to vector<2x16x16xf32>
    %498 = arith.mulf %496, %497 : vector<2x16x16xf32>
    %cst_119 = arith.constant dense<0.000000e+00> : vector<2x16xf32>
    %499 = vector.multi_reduction <add>, %498, %cst_119 [1] : vector<2x16x16xf32> to vector<2x16xf32>
    %500 = arith.addf %491, %499 : vector<2x16xf32>
    %501 = vector.extract_strided_slice %472 {offsets = [0, 0, 3], sizes = [2, 16, 1], strides = [1, 1, 1]} : vector<2x16x8xf32> to vector<2x16x1xf32>
    %502 = vector.extract_strided_slice %471 {offsets = [3, 0, 0], sizes = [1, 16, 16], strides = [1, 1, 1]} : vector<8x16x16xf32> to vector<1x16x16xf32>
    %503 = vector.shape_cast %502 : vector<1x16x16xf32> to vector<16x16xf32>
    %504 = vector.shape_cast %503 : vector<16x16xf32> to vector<1x16x16xf32>
    %505 = vector.broadcast %501 : vector<2x16x1xf32> to vector<2x16x16xf32>
    %506 = vector.broadcast %504 : vector<1x16x16xf32> to vector<2x16x16xf32>
    %507 = arith.mulf %505, %506 : vector<2x16x16xf32>
    %cst_120 = arith.constant dense<0.000000e+00> : vector<2x16xf32>
    %508 = vector.multi_reduction <add>, %507, %cst_120 [1] : vector<2x16x16xf32> to vector<2x16xf32>
    %509 = arith.addf %500, %508 : vector<2x16xf32>
    %510 = vector.extract_strided_slice %472 {offsets = [0, 0, 4], sizes = [2, 16, 1], strides = [1, 1, 1]} : vector<2x16x8xf32> to vector<2x16x1xf32>
    %511 = vector.extract_strided_slice %471 {offsets = [4, 0, 0], sizes = [1, 16, 16], strides = [1, 1, 1]} : vector<8x16x16xf32> to vector<1x16x16xf32>
    %512 = vector.shape_cast %511 : vector<1x16x16xf32> to vector<16x16xf32>
    %513 = vector.shape_cast %512 : vector<16x16xf32> to vector<1x16x16xf32>
    %514 = vector.broadcast %510 : vector<2x16x1xf32> to vector<2x16x16xf32>
    %515 = vector.broadcast %513 : vector<1x16x16xf32> to vector<2x16x16xf32>
    %516 = arith.mulf %514, %515 : vector<2x16x16xf32>
    %cst_121 = arith.constant dense<0.000000e+00> : vector<2x16xf32>
    %517 = vector.multi_reduction <add>, %516, %cst_121 [1] : vector<2x16x16xf32> to vector<2x16xf32>
    %518 = arith.addf %509, %517 : vector<2x16xf32>
    %519 = vector.extract_strided_slice %472 {offsets = [0, 0, 5], sizes = [2, 16, 1], strides = [1, 1, 1]} : vector<2x16x8xf32> to vector<2x16x1xf32>
    %520 = vector.extract_strided_slice %471 {offsets = [5, 0, 0], sizes = [1, 16, 16], strides = [1, 1, 1]} : vector<8x16x16xf32> to vector<1x16x16xf32>
    %521 = vector.shape_cast %520 : vector<1x16x16xf32> to vector<16x16xf32>
    %522 = vector.shape_cast %521 : vector<16x16xf32> to vector<1x16x16xf32>
    %523 = vector.broadcast %519 : vector<2x16x1xf32> to vector<2x16x16xf32>
    %524 = vector.broadcast %522 : vector<1x16x16xf32> to vector<2x16x16xf32>
    %525 = arith.mulf %523, %524 : vector<2x16x16xf32>
    %cst_122 = arith.constant dense<0.000000e+00> : vector<2x16xf32>
    %526 = vector.multi_reduction <add>, %525, %cst_122 [1] : vector<2x16x16xf32> to vector<2x16xf32>
    %527 = arith.addf %518, %526 : vector<2x16xf32>
    %528 = vector.extract_strided_slice %472 {offsets = [0, 0, 6], sizes = [2, 16, 1], strides = [1, 1, 1]} : vector<2x16x8xf32> to vector<2x16x1xf32>
    %529 = vector.extract_strided_slice %471 {offsets = [6, 0, 0], sizes = [1, 16, 16], strides = [1, 1, 1]} : vector<8x16x16xf32> to vector<1x16x16xf32>
    %530 = vector.shape_cast %529 : vector<1x16x16xf32> to vector<16x16xf32>
    %531 = vector.shape_cast %530 : vector<16x16xf32> to vector<1x16x16xf32>
    %532 = vector.broadcast %528 : vector<2x16x1xf32> to vector<2x16x16xf32>
    %533 = vector.broadcast %531 : vector<1x16x16xf32> to vector<2x16x16xf32>
    %534 = arith.mulf %532, %533 : vector<2x16x16xf32>
    %cst_123 = arith.constant dense<0.000000e+00> : vector<2x16xf32>
    %535 = vector.multi_reduction <add>, %534, %cst_123 [1] : vector<2x16x16xf32> to vector<2x16xf32>
    %536 = arith.addf %527, %535 : vector<2x16xf32>
    %537 = vector.extract_strided_slice %472 {offsets = [0, 0, 7], sizes = [2, 16, 1], strides = [1, 1, 1]} : vector<2x16x8xf32> to vector<2x16x1xf32>
    %538 = vector.extract_strided_slice %471 {offsets = [7, 0, 0], sizes = [1, 16, 16], strides = [1, 1, 1]} : vector<8x16x16xf32> to vector<1x16x16xf32>
    %539 = vector.shape_cast %538 : vector<1x16x16xf32> to vector<16x16xf32>
    %540 = vector.shape_cast %539 : vector<16x16xf32> to vector<1x16x16xf32>
    %541 = vector.broadcast %537 : vector<2x16x1xf32> to vector<2x16x16xf32>
    %542 = vector.broadcast %540 : vector<1x16x16xf32> to vector<2x16x16xf32>
    %543 = arith.mulf %541, %542 : vector<2x16x16xf32>
    %cst_124 = arith.constant dense<0.000000e+00> : vector<2x16xf32>
    %544 = vector.multi_reduction <add>, %543, %cst_124 [1] : vector<2x16x16xf32> to vector<2x16xf32>
    %545 = arith.addf %536, %544 : vector<2x16xf32>
    %546 = arith.addf %470, %545 : vector<2x16xf32>
    %c0_125 = arith.constant 0 : index
    %c0_126 = arith.constant 0 : index
    %547 = vector.load %arg24[%c0_125, %c0_126] : memref<1x16xf32, #tpu.memory_space<vmem>>, vector<1x16xf32>
    %548 = vector.broadcast %547 : vector<1x16xf32> to vector<2x16xf32>
    %549 = arith.addf %546, %548 : vector<2x16xf32>
    %cst_127 = arith.constant 0.000000e+00 : f32
    %550 = vector.broadcast %cst_127 : f32 to vector<2x16xf32>
    %551 = arith.cmpf oge, %549, %550 : vector<2x16xf32>
    %cst_128 = arith.constant 3.300000e-01 : f32
    %552 = vector.broadcast %cst_128 : f32 to vector<2x16xf32>
    %553 = arith.mulf %552, %549 : vector<2x16xf32>
    %554 = arith.select %551, %549, %553 : vector<2x16xi1>, vector<2x16xf32>
    %c0_129 = arith.constant 0 : index
    %c0_130 = arith.constant 0 : index
    %555 = vector.load %arg25[%c0_129, %c0_130] : memref<16x32xf32, #tpu.memory_space<vmem>>, vector<16x32xf32>
    %cst_131 = arith.constant dense<0.000000e+00> : vector<2x32xf32>
    %556 = tpu.matmul %554, %555, %cst_131 {dimension_numbers = #tpu.dot_dimension_numbers<[1], [0], [0], [1], [0, 0, 1, 1], [], []>, precision = #tpu.contract_precision<fp32>} : vector<2x16xf32>, vector<16x32xf32>, vector<2x32xf32> -> vector<2x32xf32>
    %c0_132 = arith.constant 0 : index
    %c0_133 = arith.constant 0 : index
    %557 = vector.load %arg26[%c0_132, %c0_133] : memref<1x32xf32, #tpu.memory_space<vmem>>, vector<1x32xf32>
    %558 = vector.broadcast %557 : vector<1x32xf32> to vector<2x32xf32>
    %559 = arith.addf %556, %558 : vector<2x32xf32>
    %cst_134 = arith.constant 0.000000e+00 : f32
    %560 = vector.broadcast %cst_134 : f32 to vector<2x32xf32>
    %561 = arith.maximumf %559, %560 : vector<2x32xf32>
    %c0_135 = arith.constant 0 : index
    %c0_136 = arith.constant 0 : index
    %562 = vector.load %arg27[%c0_135, %c0_136] : memref<32x2xf32, #tpu.memory_space<vmem>>, vector<32x2xf32>
    %cst_137 = arith.constant dense<0.000000e+00> : vector<2x2xf32>
    %563 = tpu.matmul %561, %562, %cst_137 {dimension_numbers = #tpu.dot_dimension_numbers<[1], [0], [0], [1], [0, 0, 1, 1], [], []>, precision = #tpu.contract_precision<fp32>} : vector<2x32xf32>, vector<32x2xf32>, vector<2x2xf32> -> vector<2x2xf32>
    %c0_138 = arith.constant 0 : index
    %c0_139 = arith.constant 0 : index
    %564 = vector.load %arg28[%c0_138, %c0_139] : memref<1x2xf32, #tpu.memory_space<vmem>>, vector<1x2xf32>
    %565 = vector.broadcast %564 : vector<1x2xf32> to vector<2x2xf32>
    %566 = arith.addf %563, %565 : vector<2x2xf32>
    %cst_140 = arith.constant dense<0xFF800000> : vector<2xf32>
    %567 = vector.multi_reduction <maximumf>, %566, %cst_140 [1] : vector<2x2xf32> to vector<2xf32>
    %568 = vector.shape_cast %567 : vector<2xf32> to vector<2x1xf32>
    %569 = vector.broadcast %568 : vector<2x1xf32> to vector<2x2xf32>
    %570 = arith.subf %566, %569 : vector<2x2xf32>
    %571 = math.exp %570 : vector<2x2xf32>
    %cst_141 = arith.constant dense<0.000000e+00> : vector<2xf32>
    %572 = vector.multi_reduction <add>, %571, %cst_141 [1] : vector<2x2xf32> to vector<2xf32>
    %573 = vector.shape_cast %572 : vector<2xf32> to vector<2x1xf32>
    %574 = vector.broadcast %573 : vector<2x1xf32> to vector<2x2xf32>
    %575 = arith.divf %571, %574 : vector<2x2xf32>
    %c0_142 = arith.constant 0 : index
    %c0_143 = arith.constant 0 : index
    %576 = vector.load %arg29[%c0_142, %c0_143] : memref<2x2xf32, #tpu.memory_space<vmem>>, vector<2x2xf32>
    tpu.vector_store %arg29[%c0_142, %c0_143], %575 {strides = array<i32>} : memref<2x2xf32, #tpu.memory_space<vmem>>, vector<2x2xf32>,
    %577 = vector.shape_cast %172 : vector<32x8xf32> to vector<2x16x8xf32>
    %578 = tpu.transpose %577, [0, 2, 1] : vector<2x16x8xf32> -> vector<2x8x16xf32>
    %579 = vector.shape_cast %578 : vector<2x8x16xf32> to vector<16x16xf32>
    %c0_144 = arith.constant 0 : index
    %c0_145 = arith.constant 0 : index
    %580 = vector.load %arg2[%c0_144, %c0_145] : memref<16x256xf32, #tpu.memory_space<vmem>>, vector<16x256xf32>
    %cst_146 = arith.constant dense<0.000000e+00> : vector<16x256xf32>
    %581 = tpu.matmul %579, %580, %cst_146 {dimension_numbers = #tpu.dot_dimension_numbers<[1], [0], [0], [1], [0, 0, 1, 1], [], []>, precision = #tpu.contract_precision<fp32>} : vector<16x16xf32>, vector<16x256xf32>, vector<16x256xf32> -> vector<16x256xf32>
    %c0_147 = arith.constant 0 : index
    %c0_148 = arith.constant 0 : index
    %582 = vector.load %arg30[%c0_147, %c0_148] : memref<16x256xf32, #tpu.memory_space<vmem>>, vector<16x256xf32>
    tpu.vector_store %arg30[%c0_147, %c0_148], %581 {strides = array<i32>} : memref<16x256xf32, #tpu.memory_space<vmem>>, vector<16x256xf32>,
    return
  }
  func.func @transform_0(%arg0: i32) -> (i32, i32) {
    %c0_i32 = arith.constant 0 : i32
    %c0_i32_0 = arith.constant 0 : i32
    %c0_i32_1 = arith.constant 0 : i32
    return %c0_i32, %c0_i32_0 : i32, i32
  }
  func.func @transform_1(%arg0: i32) -> (i32, i32) {
    %c0_i32 = arith.constant 0 : i32
    %c0_i32_0 = arith.constant 0 : i32
    %c0_i32_1 = arith.constant 0 : i32
    return %c0_i32, %c0_i32_0 : i32, i32
  }
  func.func @transform_2(%arg0: i32) -> (i32, i32) {
    %c0_i32 = arith.constant 0 : i32
    %c0_i32_0 = arith.constant 0 : i32
    %c0_i32_1 = arith.constant 0 : i32
    return %c0_i32, %c0_i32_0 : i32, i32
  }
  func.func @transform_3(%arg0: i32) -> (i32, i32) {
    %c0_i32 = arith.constant 0 : i32
    %c0_i32_0 = arith.constant 0 : i32
    %c0_i32_1 = arith.constant 0 : i32
    return %c0_i32, %c0_i32_0 : i32, i32
  }
  func.func @transform_4(%arg0: i32) -> (i32, i32) {
    %c0_i32 = arith.constant 0 : i32
    %c0_i32_0 = arith.constant 0 : i32
    %c0_i32_1 = arith.constant 0 : i32
    return %c0_i32, %c0_i32_0 : i32, i32
  }
  func.func @transform_5(%arg0: i32) -> (i32, i32, i32) {
    %c0_i32 = arith.constant 0 : i32
    %c0_i32_0 = arith.constant 0 : i32
    %c0_i32_1 = arith.constant 0 : i32
    %c0_i32_2 = arith.constant 0 : i32
    return %c0_i32, %c0_i32_0, %c0_i32_1 : i32, i32, i32
  }
  func.func @transform_6(%arg0: i32) -> (i32, i32) {
    %c0_i32 = arith.constant 0 : i32
    %c0_i32_0 = arith.constant 0 : i32
    %c0_i32_1 = arith.constant 0 : i32
    return %c0_i32, %c0_i32_0 : i32, i32
  }
  func.func @transform_7(%arg0: i32) -> (i32, i32) {
    %c0_i32 = arith.constant 0 : i32
    %c0_i32_0 = arith.constant 0 : i32
    %c0_i32_1 = arith.constant 0 : i32
    return %c0_i32, %c0_i32_0 : i32, i32
  }
  func.func @transform_8(%arg0: i32) -> (i32, i32, i32) {
    %c0_i32 = arith.constant 0 : i32
    %c0_i32_0 = arith.constant 0 : i32
    %c0_i32_1 = arith.constant 0 : i32
    %c0_i32_2 = arith.constant 0 : i32
    return %c0_i32, %c0_i32_0, %c0_i32_1 : i32, i32, i32
  }
  func.func @transform_9(%arg0: i32) -> (i32, i32) {
    %c0_i32 = arith.constant 0 : i32
    %c0_i32_0 = arith.constant 0 : i32
    %c0_i32_1 = arith.constant 0 : i32
    return %c0_i32, %c0_i32_0 : i32, i32
  }
  func.func @transform_10(%arg0: i32) -> (i32, i32) {
    %c0_i32 = arith.constant 0 : i32
    %c0_i32_0 = arith.constant 0 : i32
    %c0_i32_1 = arith.constant 0 : i32
    return %c0_i32, %c0_i32_0 : i32, i32
  }
  func.func @transform_11(%arg0: i32) -> (i32, i32, i32) {
    %c0_i32 = arith.constant 0 : i32
    %c0_i32_0 = arith.constant 0 : i32
    %c0_i32_1 = arith.constant 0 : i32
    %c0_i32_2 = arith.constant 0 : i32
    return %c0_i32, %c0_i32_0, %c0_i32_1 : i32, i32, i32
  }
  func.func @transform_12(%arg0: i32) -> (i32, i32) {
    %c0_i32 = arith.constant 0 : i32
    %c0_i32_0 = arith.constant 0 : i32
    %c0_i32_1 = arith.constant 0 : i32
    return %c0_i32, %c0_i32_0 : i32, i32
  }
  func.func @transform_13(%arg0: i32) -> (i32, i32) {
    %c0_i32 = arith.constant 0 : i32
    %c0_i32_0 = arith.constant 0 : i32
    %c0_i32_1 = arith.constant 0 : i32
    return %c0_i32, %c0_i32_0 : i32, i32
  }
  func.func @transform_14(%arg0: i32) -> (i32, i32, i32) {
    %c0_i32 = arith.constant 0 : i32
    %c0_i32_0 = arith.constant 0 : i32
    %c0_i32_1 = arith.constant 0 : i32
    %c0_i32_2 = arith.constant 0 : i32
    return %c0_i32, %c0_i32_0, %c0_i32_1 : i32, i32, i32
  }
  func.func @transform_15(%arg0: i32) -> (i32, i32) {
    %c0_i32 = arith.constant 0 : i32
    %c0_i32_0 = arith.constant 0 : i32
    %c0_i32_1 = arith.constant 0 : i32
    return %c0_i32, %c0_i32_0 : i32, i32
  }
  func.func @transform_16(%arg0: i32) -> (i32, i32, i32) {
    %c0_i32 = arith.constant 0 : i32
    %c0_i32_0 = arith.constant 0 : i32
    %c0_i32_1 = arith.constant 0 : i32
    %c0_i32_2 = arith.constant 0 : i32
    return %c0_i32, %c0_i32_0, %c0_i32_1 : i32, i32, i32
  }
  func.func @transform_17(%arg0: i32) -> (i32, i32) {
    %c0_i32 = arith.constant 0 : i32
    %c0_i32_0 = arith.constant 0 : i32
    %c0_i32_1 = arith.constant 0 : i32
    return %c0_i32, %c0_i32_0 : i32, i32
  }
  func.func @transform_18(%arg0: i32) -> (i32, i32) {
    %c0_i32 = arith.constant 0 : i32
    %c0_i32_0 = arith.constant 0 : i32
    %c0_i32_1 = arith.constant 0 : i32
    return %c0_i32, %c0_i32_0 : i32, i32
  }
  func.func @transform_19(%arg0: i32) -> (i32, i32, i32) {
    %c0_i32 = arith.constant 0 : i32
    %c0_i32_0 = arith.constant 0 : i32
    %c0_i32_1 = arith.constant 0 : i32
    %c0_i32_2 = arith.constant 0 : i32
    return %c0_i32, %c0_i32_0, %c0_i32_1 : i32, i32, i32
  }
  func.func @transform_20(%arg0: i32) -> (i32, i32) {
    %c0_i32 = arith.constant 0 : i32
    %c0_i32_0 = arith.constant 0 : i32
    %c0_i32_1 = arith.constant 0 : i32
    return %c0_i32, %c0_i32_0 : i32, i32
  }
  func.func @transform_21(%arg0: i32) -> (i32, i32, i32) {
    %c0_i32 = arith.constant 0 : i32
    %c0_i32_0 = arith.constant 0 : i32
    %c0_i32_1 = arith.constant 0 : i32
    %c0_i32_2 = arith.constant 0 : i32
    return %c0_i32, %c0_i32_0, %c0_i32_1 : i32, i32, i32
  }
  func.func @transform_22(%arg0: i32) -> (i32, i32, i32) {
    %c0_i32 = arith.constant 0 : i32
    %c0_i32_0 = arith.constant 0 : i32
    %c0_i32_1 = arith.constant 0 : i32
    %c0_i32_2 = arith.constant 0 : i32
    return %c0_i32, %c0_i32_0, %c0_i32_1 : i32, i32, i32
  }
  func.func @transform_23(%arg0: i32) -> (i32, i32) {
    %c0_i32 = arith.constant 0 : i32
    %c0_i32_0 = arith.constant 0 : i32
    %c0_i32_1 = arith.constant 0 : i32
    return %c0_i32, %c0_i32_0 : i32, i32
  }
  func.func @transform_24(%arg0: i32) -> (i32, i32) {
    %c0_i32 = arith.constant 0 : i32
    %c0_i32_0 = arith.constant 0 : i32
    %c0_i32_1 = arith.constant 0 : i32
    return %c0_i32, %c0_i32_0 : i32, i32
  }
  func.func @transform_25(%arg0: i32) -> (i32, i32) {
    %c0_i32 = arith.constant 0 : i32
    %c0_i32_0 = arith.constant 0 : i32
    %c0_i32_1 = arith.constant 0 : i32
    return %c0_i32, %c0_i32_0 : i32, i32
  }
  func.func @transform_26(%arg0: i32) -> (i32, i32) {
    %c0_i32 = arith.constant 0 : i32
    %c0_i32_0 = arith.constant 0 : i32
    %c0_i32_1 = arith.constant 0 : i32
    return %c0_i32, %c0_i32_0 : i32, i32
  }
  func.func @transform_27(%arg0: i32) -> (i32, i32) {
    %c0_i32 = arith.constant 0 : i32
    %c0_i32_0 = arith.constant 0 : i32
    %c0_i32_1 = arith.constant 0 : i32
    return %c0_i32, %c0_i32_0 : i32, i32
  }
  func.func @transform_28(%arg0: i32) -> (i32, i32) {
    %c0_i32 = arith.constant 0 : i32
    %c0_i32_0 = arith.constant 0 : i32
    %c0_i32_1 = arith.constant 0 : i32
    return %c0_i32, %c0_i32_0 : i32, i32
  }
  func.func @transform_29(%arg0: i32) -> (i32, i32) {
    %c0_i32 = arith.constant 0 : i32
    %c0_i32_0 = arith.constant 0 : i32
    %c0_i32_1 = arith.constant 0 : i32
    return %c0_i32, %c0_i32_0 : i32, i32
  }
}

</mosaic_0001>

<llo_original>
// kernel: network_sw_forward.1
$region0: #{network_sw_forward.1}
  #allocation0 [shape = 'u32[]', space=smem, size = 0x4, offset = 0x4, fixed_abs, tag = 'smem constant byte address 0x4 - core index']
  #allocation1 [shape = 'u32[144,128]{1,0:T(1,128)}', space=vmem, size = 0x12000, scoped, tag = 'internal scratch']
  %s0 = inlined_call_operand.smem [shape: u32[30], index: -1, kind: input, shape index: {}]
  %s1 = sld [smem:[%s0]]
  %s2 = scalar_lea.smem %s0, 1
  %s3 = sld [smem:[%s2]]
  %s4 = scalar_lea.smem %s0, 2
  %s5 = sld [smem:[%s4]]
  %s6 = scalar_lea.smem %s0, 3
  %s7 = sld [smem:[%s6]]
  %s8 = scalar_lea.smem %s0, 4
  %s9 = sld [smem:[%s8]]
  %s10 = scalar_lea.smem %s0, 5
  %s11 = sld [smem:[%s10]]
  %s12 = scalar_lea.smem %s0, 6
  %s13 = sld [smem:[%s12]]
  %s14 = scalar_lea.smem %s0, 7
  %s15 = sld [smem:[%s14]]
  %s16 = scalar_lea.smem %s0, 8
  %s17 = sld [smem:[%s16]]
  %s18 = scalar_lea.smem %s0, 9
  %s19 = sld [smem:[%s18]]
  %s20 = scalar_lea.smem %s0, 10
  %s21 = sld [smem:[%s20]]
  %s22 = scalar_lea.smem %s0, 11
  %s23 = sld [smem:[%s22]]
  %s24 = scalar_lea.smem %s0, 12
  %s25 = sld [smem:[%s24]]
  %s26 = scalar_lea.smem %s0, 13
  %s27 = sld [smem:[%s26]]
  %s28 = scalar_lea.smem %s0, 14
  %s29 = sld [smem:[%s28]]
  %s30 = scalar_lea.smem %s0, 15
  %s31 = sld [smem:[%s30]]
  %s32 = scalar_lea.smem %s0, 16
  %s33 = sld [smem:[%s32]]
  %s34 = scalar_lea.smem %s0, 17
  %s35 = sld [smem:[%s34]]
  %s36 = scalar_lea.smem %s0, 18
  %s37 = sld [smem:[%s36]]
  %s38 = scalar_lea.smem %s0, 19
  %s39 = sld [smem:[%s38]]
  %s40 = scalar_lea.smem %s0, 20
  %s41 = sld [smem:[%s40]]
  %s42 = scalar_lea.smem %s0, 21
  %s43 = sld [smem:[%s42]]
  %s44 = scalar_lea.smem %s0, 22
  %s45 = sld [smem:[%s44]]
  %s46 = scalar_lea.smem %s0, 23
  %s47 = sld [smem:[%s46]]
  %s48 = scalar_lea.smem %s0, 24
  %s49 = sld [smem:[%s48]]
  %s50 = scalar_lea.smem %s0, 25
  %s51 = sld [smem:[%s50]]
  %s52 = scalar_lea.smem %s0, 26
  %s53 = sld [smem:[%s52]]
  %s54 = scalar_lea.smem %s0, 27
  %s55 = sld [smem:[%s54]]
  %s56 = scalar_lea.smem %s0, 28
  %s57 = sld [smem:[%s56]]
  %s58 = scalar_lea.smem %s0, 29
  %s59 = sld [smem:[%s58]]
  %60 = xla_tuple %s57, %s59
  %s61 = sld [smem:[#allocation0]]
  $region130: #{network_sw_forward.1} parent=0
    _
  %s63 = ssub.s32 1, %s61
  %s64 = scalar_select 0, %s63, %s61
  $region1: #{network_sw_forward.1} parent=0
    #allocation2 [shape = 'u8[1024]{0}', space=vmem, size = 0x400, scoped, tag = 'output window, operand 0, single buffered']
    #allocation3 [shape = 's32[1]{0}', space=sflag, size = 0x4, scoped, tag = 'scoped memory for network_sw_forward.1']
    %65 = vsyncpa [#allocation3], 0
    // Predicated region
    $region2: #{network_sw_forward.1} parent=1 // pred_check
      _
    $region3: #{network_sw_forward.1} parent=1 // pred_check_branch
      %67 = sbr.rel (0) target = $region5
    $region4: #{network_sw_forward.1} parent=1 // pred_region
      _
    $region5: #{network_sw_forward.1} parent=1 // pred_fallthru
      _
    // Predicated region
    $region6: #{network_sw_forward.1} parent=1 // pred_check
      _
    $region7: #{network_sw_forward.1} parent=1 // pred_check_branch
      %69 = sbr.rel (0) target = $region9
    $region8: #{network_sw_forward.1} parent=1 // pred_region
      _
    $region9: #{network_sw_forward.1} parent=1 // pred_fallthru
      _
    // Predicated region
    $region10: #{network_sw_forward.1} parent=1 // pred_check
      _
    $region11: #{network_sw_forward.1} parent=1 // pred_check_branch
      %71 = sbr.rel (0) target = $region13
    $region12: #{network_sw_forward.1} parent=1 // pred_region
      _
    $region13: #{network_sw_forward.1} parent=1 // pred_fallthru
      _
    // Predicated region
    $region14: #{network_sw_forward.1} parent=1 // pred_check
      _
    $region15: #{network_sw_forward.1} parent=1 // pred_check_branch
      %73 = sbr.rel (0) target = $region17
    $region16: #{network_sw_forward.1} parent=1 // pred_region
      _
    $region17: #{network_sw_forward.1} parent=1 // pred_fallthru
      _
    // Predicated region
    $region18: #{network_sw_forward.1} parent=1 // pred_check
      _
    $region19: #{network_sw_forward.1} parent=1 // pred_check_branch
      %75 = sbr.rel (0) target = $region21
    $region20: #{network_sw_forward.1} parent=1 // pred_region
      _
    $region21: #{network_sw_forward.1} parent=1 // pred_fallthru
      _
    // Predicated region
    $region22: #{network_sw_forward.1} parent=1 // pred_check
      _
    $region23: #{network_sw_forward.1} parent=1 // pred_check_branch
      %77 = sbr.rel (0) target = $region25
    $region24: #{network_sw_forward.1} parent=1 // pred_region
      _
    $region25: #{network_sw_forward.1} parent=1 // pred_fallthru
      _
    // Predicated region
    $region26: #{network_sw_forward.1} parent=1 // pred_check
      _
    $region27: #{network_sw_forward.1} parent=1 // pred_check_branch
      %79 = sbr.rel (0) target = $region29
    $region28: #{network_sw_forward.1} parent=1 // pred_region
      _
    $region29: #{network_sw_forward.1} parent=1 // pred_fallthru
      _
    // Predicated region
    $region30: #{network_sw_forward.1} parent=1 // pred_check
      _
    $region31: #{network_sw_forward.1} parent=1 // pred_check_branch
      %81 = sbr.rel (0) target = $region33
    $region32: #{network_sw_forward.1} parent=1 // pred_region
      _
    $region33: #{network_sw_forward.1} parent=1 // pred_fallthru
      _
    // Predicated region
    $region34: #{network_sw_forward.1} parent=1 // pred_check
      _
    $region35: #{network_sw_forward.1} parent=1 // pred_check_branch
      %83 = sbr.rel (0) target = $region37
    $region36: #{network_sw_forward.1} parent=1 // pred_region
      _
    $region37: #{network_sw_forward.1} parent=1 // pred_fallthru
      _
    // Predicated region
    $region38: #{network_sw_forward.1} parent=1 // pred_check
      _
    $region39: #{network_sw_forward.1} parent=1 // pred_check_branch
      %85 = sbr.rel (0) target = $region41
    $region40: #{network_sw_forward.1} parent=1 // pred_region
      _
    $region41: #{network_sw_forward.1} parent=1 // pred_fallthru
      _
    // Predicated region
    $region42: #{network_sw_forward.1} parent=1 // pred_check
      _
    $region43: #{network_sw_forward.1} parent=1 // pred_check_branch
      %87 = sbr.rel (0) target = $region45
    $region44: #{network_sw_forward.1} parent=1 // pred_region
      _
    $region45: #{network_sw_forward.1} parent=1 // pred_fallthru
      _
    // Predicated region
    $region46: #{network_sw_forward.1} parent=1 // pred_check
      _
    $region47: #{network_sw_forward.1} parent=1 // pred_check_branch
      %89 = sbr.rel (0) target = $region49
    $region48: #{network_sw_forward.1} parent=1 // pred_region
      _
    $region49: #{network_sw_forward.1} parent=1 // pred_fallthru
      _
    // Predicated region
    $region50: #{network_sw_forward.1} parent=1 // pred_check
      _
    $region51: #{network_sw_forward.1} parent=1 // pred_check_branch
      %91 = sbr.rel (0) target = $region53
    $region52: #{network_sw_forward.1} parent=1 // pred_region
      _
    $region53: #{network_sw_forward.1} parent=1 // pred_fallthru
      _
    // Predicated region
    $region54: #{network_sw_forward.1} parent=1 // pred_check
      _
    $region55: #{network_sw_forward.1} parent=1 // pred_check_branch
      %93 = sbr.rel (0) target = $region57
    $region56: #{network_sw_forward.1} parent=1 // pred_region
      _
    $region57: #{network_sw_forward.1} parent=1 // pred_fallthru
      _
    // Predicated region
    $region58: #{network_sw_forward.1} parent=1 // pred_check
      _
    $region59: #{network_sw_forward.1} parent=1 // pred_check_branch
      %95 = sbr.rel (0) target = $region61
    $region60: #{network_sw_forward.1} parent=1 // pred_region
      _
    $region61: #{network_sw_forward.1} parent=1 // pred_fallthru
      _
    // Predicated region
    $region62: #{network_sw_forward.1} parent=1 // pred_check
      _
    $region63: #{network_sw_forward.1} parent=1 // pred_check_branch
      %97 = sbr.rel (0) target = $region65
    $region64: #{network_sw_forward.1} parent=1 // pred_region
      _
    $region65: #{network_sw_forward.1} parent=1 // pred_fallthru
      _
    // Predicated region
    $region66: #{network_sw_forward.1} parent=1 // pred_check
      _
    $region67: #{network_sw_forward.1} parent=1 // pred_check_branch
      %99 = sbr.rel (0) target = $region69
    $region68: #{network_sw_forward.1} parent=1 // pred_region
      _
    $region69: #{network_sw_forward.1} parent=1 // pred_fallthru
      _
    // Predicated region
    $region70: #{network_sw_forward.1} parent=1 // pred_check
      _
    $region71: #{network_sw_forward.1} parent=1 // pred_check_branch
      %101 = sbr.rel (0) target = $region73
    $region72: #{network_sw_forward.1} parent=1 // pred_region
      _
    $region73: #{network_sw_forward.1} parent=1 // pred_fallthru
      _
    // Predicated region
    $region74: #{network_sw_forward.1} parent=1 // pred_check
      _
    $region75: #{network_sw_forward.1} parent=1 // pred_check_branch
      %103 = sbr.rel (0) target = $region77
    $region76: #{network_sw_forward.1} parent=1 // pred_region
      _
    $region77: #{network_sw_forward.1} parent=1 // pred_fallthru
      _
    // Predicated region
    $region78: #{network_sw_forward.1} parent=1 // pred_check
      _
    $region79: #{network_sw_forward.1} parent=1 // pred_check_branch
      %105 = sbr.rel (0) target = $region81
    $region80: #{network_sw_forward.1} parent=1 // pred_region
      _
    $region81: #{network_sw_forward.1} parent=1 // pred_fallthru
      _
    // Predicated region
    $region82: #{network_sw_forward.1} parent=1 // pred_check
      _
    $region83: #{network_sw_forward.1} parent=1 // pred_check_branch
      %107 = sbr.rel (0) target = $region85
    $region84: #{network_sw_forward.1} parent=1 // pred_region
      _
    $region85: #{network_sw_forward.1} parent=1 // pred_fallthru
      _
    // Predicated region
    $region86: #{network_sw_forward.1} parent=1 // pred_check
      _
    $region87: #{network_sw_forward.1} parent=1 // pred_check_branch
      %109 = sbr.rel (0) target = $region89
    $region88: #{network_sw_forward.1} parent=1 // pred_region
      _
    $region89: #{network_sw_forward.1} parent=1 // pred_fallthru
      _
    // Predicated region
    $region90: #{network_sw_forward.1} parent=1 // pred_check
      _
    $region91: #{network_sw_forward.1} parent=1 // pred_check_branch
      %111 = sbr.rel (0) target = $region93
    $region92: #{network_sw_forward.1} parent=1 // pred_region
      _
    $region93: #{network_sw_forward.1} parent=1 // pred_fallthru
      _
    // Predicated region
    $region94: #{network_sw_forward.1} parent=1 // pred_check
      _
    $region95: #{network_sw_forward.1} parent=1 // pred_check_branch
      %113 = sbr.rel (0) target = $region97
    $region96: #{network_sw_forward.1} parent=1 // pred_region
      _
    $region97: #{network_sw_forward.1} parent=1 // pred_fallthru
      _
    // Predicated region
    $region98: #{network_sw_forward.1} parent=1 // pred_check
      _
    $region99: #{network_sw_forward.1} parent=1 // pred_check_branch
      %115 = sbr.rel (0) target = $region101
    $region100: #{network_sw_forward.1} parent=1 // pred_region
      _
    $region101: #{network_sw_forward.1} parent=1 // pred_fallthru
      _
    // Predicated region
    $region102: #{network_sw_forward.1} parent=1 // pred_check
      _
    $region103: #{network_sw_forward.1} parent=1 // pred_check_branch
      %117 = sbr.rel (0) target = $region105
    $region104: #{network_sw_forward.1} parent=1 // pred_region
      _
    $region105: #{network_sw_forward.1} parent=1 // pred_fallthru
      _
    // Predicated region
    $region106: #{network_sw_forward.1} parent=1 // pred_check
      _
    $region107: #{network_sw_forward.1} parent=1 // pred_check_branch
      %119 = sbr.rel (0) target = $region109
    $region108: #{network_sw_forward.1} parent=1 // pred_region
      _
    $region109: #{network_sw_forward.1} parent=1 // pred_fallthru
      _
    // Predicated region
    $region110: #{network_sw_forward.1} parent=1 // pred_check
      _
    $region111: #{network_sw_forward.1} parent=1 // pred_check_branch
      %121 = sbr.rel (0) target = $region113
    $region112: #{network_sw_forward.1} parent=1 // pred_region
      _
    $region113: #{network_sw_forward.1} parent=1 // pred_fallthru
      _
    %v122 = vld [vmem:[%s1] sm:$0xff]
    %v123 = vld [vmem:[%s1 + $0x8] sm:$0xff]
    %v124 = vld [vmem:[%s1 + $0x10] sm:$0xff]
    %v125 = vld [vmem:[%s1 + $0x18] sm:$0xff]
    %v126 = vld [vmem:[%s5] sm:$0xff]
    %v127 = vld [vmem:[%s5 + $0x8] sm:$0xff]
    %v128 = vld [vmem:[%s7] sm:$0x1]
    %v130 = vlaneseq
    %v131 = vshrl.u32 %v130, 7
    %v132 = vsub.s32 0, %v131
    %v133 = vrot.slane %v128, %v132
    %vm135 = vcmask 130048
    %v137 = vsel %vm135, %v122, 0
    %v140 = vsel %vm135, %v123, 0
    %v143 = vsel %vm135, %v124, 0
    %v146 = vsel %vm135, %v125, 0
    %148 = vmatprep.subr.mxu0 0.0
    %v149 = vand.u32 %v126, 4294901760
    %150 = vmatpush1.msra.mxu0 %v149
    %151 = vmatprep.subr.mxu0 0.0
    %v152 = vand.u32 %v127, 4294901760
    %153 = vmatpush1.msra.mxu0 %v152
    %154 = vmatprep.subr.mxu0 0.0
    %155 = vmatpush1.msra.mxu0 0.0
    %156 = vmatprep.subr.mxu0 0.0
    %157 = vmatpush1.msra.mxu0 0.0
    %158 = vmatprep.subr.mxu0 0.0
    %159 = vmatpush1.msra.mxu0 0.0
    %160 = vmatprep.subr.mxu0 0.0
    %161 = vmatpush1.msra.mxu0 0.0
    %162 = vmatprep.subr.mxu0 0.0
    %163 = vmatpush1.msra.mxu0 0.0
    %164 = vmatprep.subr.mxu0 0.0
    %165 = vmatpush1.msra.mxu0 0.0
    %166 = vmatprep.subr.mxu0 0.0
    %167 = vmatpush1.msra.mxu0 0.0
    %168 = vmatprep.subr.mxu0 0.0
    %169 = vmatpush1.msra.mxu0 0.0
    %170 = vmatprep.subr.mxu0 0.0
    %171 = vmatpush1.msra.mxu0 0.0
    %172 = vmatprep.subr.mxu0 0.0
    %173 = vmatpush1.msra.mxu0 0.0
    %174 = vmatprep.subr.mxu0 0.0
    %175 = vmatpush1.msra.mxu0 0.0
    %176 = vmatprep.subr.mxu0 0.0
    %177 = vmatpush1.msra.mxu0 0.0
    %178 = vmatprep.subr.mxu0 0.0
    %179 = vmatpush1.msra.mxu0 0.0
    %180 = vmatprep.subr.mxu0 0.0
    %181 = vmatpush1.msra.mxu0 0.0
    %182 = vmatprep.subr.mxu0 0.0
    %183 = vmatpush1.msra.mxu0 0.0
    %184 = vmatprep.subr.mxu0 0.0
    %185 = vmatpush1.msra.mxu0 0.0
    %186 = vmatprep.subr.mxu0 0.0
    %187 = vmatpush1.msra.mxu0 0.0
    %188 = vmatprep.subr.mxu0 0.0
    %189 = vmatpush1.msra.mxu0 0.0
    %190 = vmatprep.subr.mxu0 0.0
    %191 = vmatpush1.msra.mxu0 0.0
    %192 = vmatprep.subr.mxu0 0.0
    %193 = vmatpush1.msra.mxu0 0.0
    %194 = vmatprep.subr.mxu0 0.0
    %195 = vmatpush1.msra.mxu0 0.0
    %196 = vmatprep.subr.mxu0 0.0
    %197 = vmatpush1.msra.mxu0 0.0
    %198 = vmatprep.subr.mxu0 0.0
    %199 = vmatpush1.msra.mxu0 0.0
    %200 = vmatprep.subr.mxu0 0.0
    %201 = vmatpush1.msra.mxu0 0.0
    %202 = vmatprep.subr.mxu0 0.0
    %203 = vmatpush1.msra.mxu0 0.0
    %204 = vmatprep.subr.mxu0 0.0
    %205 = vmatpush1.msra.mxu0 0.0
    %206 = vmatprep.subr.mxu0 0.0
    %207 = vmatpush1.msra.mxu0 0.0
    %208 = vmatprep.subr.mxu0 0.0
    %209 = vmatpush1.msra.mxu0 0.0
    %210 = vmatprep.subr.mxu0 0.0
    %211 = vmatpush1.msra.mxu0 0.0
    %212 = vmatprep.subr.mxu0 0.0
    %213 = vmatpush1.msra.mxu0 0.0
    %214 = vmatprep.mubr.f32.mxu0 0.0
    %v215 = vand.u32 %v137, 4294901760
    %v216 = vsub.f32 %v137, %v215
    %v217 = vand.u32 %v216, 4294901760
    %v218 = vsub.f32 %v216, %v217
    %v219 = vand.u32 %v218, 4294901760
    %220 = vmatmul.mubr.f32.gmra.mrb[0].mxu0 %v219
    %v221 = vpop.f32.mrb[0].mxu0
    %v222 = vadd.f32 %v133, %v221
    %v223 = vpop.f32.mrb[0].mxu0
    %224 = vmatprep.mubr.f32.mxu0 0.0
    %v225 = vand.u32 %v140, 4294901760
    %v226 = vsub.f32 %v140, %v225
    %v227 = vand.u32 %v226, 4294901760
    %v228 = vsub.f32 %v226, %v227
    %v229 = vand.u32 %v228, 4294901760
    %230 = vmatmul.mubr.f32.gmra.mrb[0].mxu0 %v229
    %v231 = vpop.f32.mrb[0].mxu0
    %v232 = vadd.f32 %v133, %v231
    %v233 = vpop.f32.mrb[0].mxu0
    %234 = vmatprep.mubr.f32.mxu0 0.0
    %v235 = vand.u32 %v143, 4294901760
    %v236 = vsub.f32 %v143, %v235
    %v237 = vand.u32 %v236, 4294901760
    %v238 = vsub.f32 %v236, %v237
    %v239 = vand.u32 %v238, 4294901760
    %240 = vmatmul.mubr.f32.gmra.mrb[0].mxu0 %v239
    %v241 = vpop.f32.mrb[0].mxu0
    %v242 = vadd.f32 %v133, %v241
    %v243 = vpop.f32.mrb[0].mxu0
    %244 = vmatprep.mubr.f32.mxu0 0.0
    %v245 = vand.u32 %v146, 4294901760
    %v246 = vsub.f32 %v146, %v245
    %v247 = vand.u32 %v246, 4294901760
    %v248 = vsub.f32 %v246, %v247
    %v249 = vand.u32 %v248, 4294901760
    %250 = vmatmul.mubr.f32.gmra.mrb[0].mxu0 %v249
    %v251 = vpop.f32.mrb[0].mxu0
    %v252 = vadd.f32 %v133, %v251
    %v253 = vpop.f32.mrb[0].mxu0
    %254 = vdwg.mxu0
    %255 = vmatprep.subr.mxu0 0.0
    %v256 = vand.u32 %v126, 4294901760
    %v257 = vsub.f32 %v126, %v256
    %v258 = vand.u32 %v257, 4294901760
    %v259 = vsub.f32 %v257, %v258
    %v260 = vand.u32 %v259, 4294901760
    %261 = vmatpush1.msra.mxu0 %v260
    %262 = vmatprep.subr.mxu0 0.0
    %v263 = vand.u32 %v127, 4294901760
    %v264 = vsub.f32 %v127, %v263
    %v265 = vand.u32 %v264, 4294901760
    %v266 = vsub.f32 %v264, %v265
    %v267 = vand.u32 %v266, 4294901760
    %268 = vmatpush1.msra.mxu0 %v267
    %269 = vmatprep.subr.mxu0 0.0
    %270 = vmatpush1.msra.mxu0 0.0
    %271 = vmatprep.subr.mxu0 0.0
    %272 = vmatpush1.msra.mxu0 0.0
    %273 = vmatprep.subr.mxu0 0.0
    %274 = vmatpush1.msra.mxu0 0.0
    %275 = vmatprep.subr.mxu0 0.0
    %276 = vmatpush1.msra.mxu0 0.0
    %277 = vmatprep.subr.mxu0 0.0
    %278 = vmatpush1.msra.mxu0 0.0
    %279 = vmatprep.subr.mxu0 0.0
    %280 = vmatpush1.msra.mxu0 0.0
    %281 = vmatprep.subr.mxu0 0.0
    %282 = vmatpush1.msra.mxu0 0.0
    %283 = vmatprep.subr.mxu0 0.0
    %284 = vmatpush1.msra.mxu0 0.0
    %285 = vmatprep.subr.mxu0 0.0
    %286 = vmatpush1.msra.mxu0 0.0
    %287 = vmatprep.subr.mxu0 0.0
    %288 = vmatpush1.msra.mxu0 0.0
    %289 = vmatprep.subr.mxu0 0.0
    %290 = vmatpush1.msra.mxu0 0.0
    %291 = vmatprep.subr.mxu0 0.0
    %292 = vmatpush1.msra.mxu0 0.0
    %293 = vmatprep.subr.mxu0 0.0
    %294 = vmatpush1.msra.mxu0 0.0
    %295 = vmatprep.subr.mxu0 0.0
    %296 = vmatpush1.msra.mxu0 0.0
    %297 = vmatprep.subr.mxu0 0.0
    %298 = vmatpush1.msra.mxu0 0.0
    %299 = vmatprep.subr.mxu0 0.0
    %300 = vmatpush1.msra.mxu0 0.0
    %301 = vmatprep.subr.mxu0 0.0
    %302 = vmatpush1.msra.mxu0 0.0
    %303 = vmatprep.subr.mxu0 0.0
    %304 = vmatpush1.msra.mxu0 0.0
    %305 = vmatprep.subr.mxu0 0.0
    %306 = vmatpush1.msra.mxu0 0.0
    %307 = vmatprep.subr.mxu0 0.0
    %308 = vmatpush1.msra.mxu0 0.0
    %309 = vmatprep.subr.mxu0 0.0
    %310 = vmatpush1.msra.mxu0 0.0
    %311 = vmatprep.subr.mxu0 0.0
    %312 = vmatpush1.msra.mxu0 0.0
    %313 = vmatprep.subr.mxu0 0.0
    %314 = vmatpush1.msra.mxu0 0.0
    %315 = vmatprep.subr.mxu0 0.0
    %316 = vmatpush1.msra.mxu0 0.0
    %317 = vmatprep.subr.mxu0 0.0
    %318 = vmatpush1.msra.mxu0 0.0
    %319 = vmatprep.subr.mxu0 0.0
    %320 = vmatpush1.msra.mxu0 0.0
    %321 = vmatprep.subr.mxu0 0.0
    %322 = vmatpush1.msra.mxu0 0.0
    %323 = vmatprep.subr.mxu0 0.0
    %324 = vmatpush1.msra.mxu0 0.0
    %325 = vmatprep.subr.mxu0 0.0
    %326 = vmatpush1.msra.mxu0 0.0
    %327 = vmatprep.subr.mxu0 0.0
    %328 = vmatpush1.msra.mxu0 0.0
    %329 = vmatprep.mubr.f32.mxu0 0.0
    %v330 = vand.u32 %v137, 4294901760
    %331 = vmatmul.mubr.f32.gmra.mrb[0].mxu0 %v330
    %v332 = vpop.f32.mrb[0].mxu0
    %v333 = vadd.f32 %v222, %v332
    %v334 = vpop.f32.mrb[0].mxu0
    %335 = vmatprep.mubr.f32.mxu0 0.0
    %v336 = vand.u32 %v140, 4294901760
    %337 = vmatmul.mubr.f32.gmra.mrb[0].mxu0 %v336
    %v338 = vpop.f32.mrb[0].mxu0
    %v339 = vadd.f32 %v232, %v338
    %v340 = vpop.f32.mrb[0].mxu0
    %341 = vmatprep.mubr.f32.mxu0 0.0
    %v342 = vand.u32 %v143, 4294901760
    %343 = vmatmul.mubr.f32.gmra.mrb[0].mxu0 %v342
    %v344 = vpop.f32.mrb[0].mxu0
    %v345 = vadd.f32 %v242, %v344
    %v346 = vpop.f32.mrb[0].mxu0
    %347 = vmatprep.mubr.f32.mxu0 0.0
    %v348 = vand.u32 %v146, 4294901760
    %349 = vmatmul.mubr.f32.gmra.mrb[0].mxu0 %v348
    %v350 = vpop.f32.mrb[0].mxu0
    %v351 = vadd.f32 %v252, %v350
    %v352 = vpop.f32.mrb[0].mxu0
    %353 = vdwg.mxu0
    %354 = vmatprep.subr.mxu0 0.0
    %v355 = vand.u32 %v126, 4294901760
    %v356 = vsub.f32 %v126, %v355
    %357 = vmatpush1.msra.mxu0 %v356
    %358 = vmatprep.subr.mxu0 0.0
    %v359 = vand.u32 %v127, 4294901760
    %v360 = vsub.f32 %v127, %v359
    %361 = vmatpush1.msra.mxu0 %v360
    %362 = vmatprep.subr.mxu0 0.0
    %363 = vmatpush1.msra.mxu0 0.0
    %364 = vmatprep.subr.mxu0 0.0
    %365 = vmatpush1.msra.mxu0 0.0
    %366 = vmatprep.subr.mxu0 0.0
    %367 = vmatpush1.msra.mxu0 0.0
    %368 = vmatprep.subr.mxu0 0.0
    %369 = vmatpush1.msra.mxu0 0.0
    %370 = vmatprep.subr.mxu0 0.0
    %371 = vmatpush1.msra.mxu0 0.0
    %372 = vmatprep.subr.mxu0 0.0
    %373 = vmatpush1.msra.mxu0 0.0
    %374 = vmatprep.subr.mxu0 0.0
    %375 = vmatpush1.msra.mxu0 0.0
    %376 = vmatprep.subr.mxu0 0.0
    %377 = vmatpush1.msra.mxu0 0.0
    %378 = vmatprep.subr.mxu0 0.0
    %379 = vmatpush1.msra.mxu0 0.0
    %380 = vmatprep.subr.mxu0 0.0
    %381 = vmatpush1.msra.mxu0 0.0
    %382 = vmatprep.subr.mxu0 0.0
    %383 = vmatpush1.msra.mxu0 0.0
    %384 = vmatprep.subr.mxu0 0.0
    %385 = vmatpush1.msra.mxu0 0.0
    %386 = vmatprep.subr.mxu0 0.0
    %387 = vmatpush1.msra.mxu0 0.0
    %388 = vmatprep.subr.mxu0 0.0
    %389 = vmatpush1.msra.mxu0 0.0
    %390 = vmatprep.subr.mxu0 0.0
    %391 = vmatpush1.msra.mxu0 0.0
    %392 = vmatprep.subr.mxu0 0.0
    %393 = vmatpush1.msra.mxu0 0.0
    %394 = vmatprep.subr.mxu0 0.0
    %395 = vmatpush1.msra.mxu0 0.0
    %396 = vmatprep.subr.mxu0 0.0
    %397 = vmatpush1.msra.mxu0 0.0
    %398 = vmatprep.subr.mxu0 0.0
    %399 = vmatpush1.msra.mxu0 0.0
    %400 = vmatprep.subr.mxu0 0.0
    %401 = vmatpush1.msra.mxu0 0.0
    %402 = vmatprep.subr.mxu0 0.0
    %403 = vmatpush1.msra.mxu0 0.0
    %404 = vmatprep.subr.mxu0 0.0
    %405 = vmatpush1.msra.mxu0 0.0
    %406 = vmatprep.subr.mxu0 0.0
    %407 = vmatpush1.msra.mxu0 0.0
    %408 = vmatprep.subr.mxu0 0.0
    %409 = vmatpush1.msra.mxu0 0.0
    %410 = vmatprep.subr.mxu0 0.0
    %411 = vmatpush1.msra.mxu0 0.0
    %412 = vmatprep.subr.mxu0 0.0
    %413 = vmatpush1.msra.mxu0 0.0
    %414 = vmatprep.subr.mxu0 0.0
    %415 = vmatpush1.msra.mxu0 0.0
    %416 = vmatprep.subr.mxu0 0.0
    %417 = vmatpush1.msra.mxu0 0.0
    %418 = vmatprep.subr.mxu0 0.0
    %419 = vmatpush1.msra.mxu0 0.0
    %420 = vmatprep.subr.mxu0 0.0
    %421 = vmatpush1.msra.mxu0 0.0
    %422 = vmatprep.mubr.f32.mxu0 0.0
    %v423 = vand.u32 %v137, 4294901760
    %v424 = vsub.f32 %v137, %v423
    %425 = vmatmul.mubr.f32.gmra.mrb[0].mxu0 %v424
    %v426 = vpop.f32.mrb[0].mxu0
    %v427 = vadd.f32 %v333, %v426
    %v428 = vpop.f32.mrb[0].mxu0
    %429 = vmatprep.mubr.f32.mxu0 0.0
    %v430 = vand.u32 %v140, 4294901760
    %v431 = vsub.f32 %v140, %v430
    %432 = vmatmul.mubr.f32.gmra.mrb[0].mxu0 %v431
    %v433 = vpop.f32.mrb[0].mxu0
    %v434 = vadd.f32 %v339, %v433
    %v435 = vpop.f32.mrb[0].mxu0
    %436 = vmatprep.mubr.f32.mxu0 0.0
    %v437 = vand.u32 %v143, 4294901760
    %v438 = vsub.f32 %v143, %v437
    %439 = vmatmul.mubr.f32.gmra.mrb[0].mxu0 %v438
    %v440 = vpop.f32.mrb[0].mxu0
    %v441 = vadd.f32 %v345, %v440
    %v442 = vpop.f32.mrb[0].mxu0
    %443 = vmatprep.mubr.f32.mxu0 0.0
    %v444 = vand.u32 %v146, 4294901760
    %v445 = vsub.f32 %v146, %v444
    %446 = vmatmul.mubr.f32.gmra.mrb[0].mxu0 %v445
    %v447 = vpop.f32.mrb[0].mxu0
    %v448 = vadd.f32 %v351, %v447
    %v449 = vpop.f32.mrb[0].mxu0
    %450 = vdwg.mxu0
    %451 = vmatprep.subr.mxu0 0.0
    %v452 = vand.u32 %v126, 4294901760
    %453 = vmatpush1.msra.mxu0 %v452
    %454 = vmatprep.subr.mxu0 0.0
    %v455 = vand.u32 %v127, 4294901760
    %456 = vmatpush1.msra.mxu0 %v455
    %457 = vmatprep.subr.mxu0 0.0
    %458 = vmatpush1.msra.mxu0 0.0
    %459 = vmatprep.subr.mxu0 0.0
    %460 = vmatpush1.msra.mxu0 0.0
    %461 = vmatprep.subr.mxu0 0.0
    %462 = vmatpush1.msra.mxu0 0.0
    %463 = vmatprep.subr.mxu0 0.0
    %464 = vmatpush1.msra.mxu0 0.0
    %465 = vmatprep.subr.mxu0 0.0
    %466 = vmatpush1.msra.mxu0 0.0
    %467 = vmatprep.subr.mxu0 0.0
    %468 = vmatpush1.msra.mxu0 0.0
    %469 = vmatprep.subr.mxu0 0.0
    %470 = vmatpush1.msra.mxu0 0.0
    %471 = vmatprep.subr.mxu0 0.0
    %472 = vmatpush1.msra.mxu0 0.0
    %473 = vmatprep.subr.mxu0 0.0
    %474 = vmatpush1.msra.mxu0 0.0
    %475 = vmatprep.subr.mxu0 0.0
    %476 = vmatpush1.msra.mxu0 0.0
    %477 = vmatprep.subr.mxu0 0.0
    %478 = vmatpush1.msra.mxu0 0.0
    %479 = vmatprep.subr.mxu0 0.0
    %480 = vmatpush1.msra.mxu0 0.0
    %481 = vmatprep.subr.mxu0 0.0
    %482 = vmatpush1.msra.mxu0 0.0
    %483 = vmatprep.subr.mxu0 0.0
    %484 = vmatpush1.msra.mxu0 0.0
    %485 = vmatprep.subr.mxu0 0.0
    %486 = vmatpush1.msra.mxu0 0.0
    %487 = vmatprep.subr.mxu0 0.0
    %488 = vmatpush1.msra.mxu0 0.0
    %489 = vmatprep.subr.mxu0 0.0
    %490 = vmatpush1.msra.mxu0 0.0
    %491 = vmatprep.subr.mxu0 0.0
    %492 = vmatpush1.msra.mxu0 0.0
    %493 = vmatprep.subr.mxu0 0.0
    %494 = vmatpush1.msra.mxu0 0.0
    %495 = vmatprep.subr.mxu0 0.0
    %496 = vmatpush1.msra.mxu0 0.0
    %497 = vmatprep.subr.mxu0 0.0
    %498 = vmatpush1.msra.mxu0 0.0
    %499 = vmatprep.subr.mxu0 0.0
    %500 = vmatpush1.msra.mxu0 0.0
    %501 = vmatprep.subr.mxu0 0.0
    %502 = vmatpush1.msra.mxu0 0.0
    %503 = vmatprep.subr.mxu0 0.0
    %504 = vmatpush1.msra.mxu0 0.0
    %505 = vmatprep.subr.mxu0 0.0
    %506 = vmatpush1.msra.mxu0 0.0
    %507 = vmatprep.subr.mxu0 0.0
    %508 = vmatpush1.msra.mxu0 0.0
    %509 = vmatprep.subr.mxu0 0.0
    %510 = vmatpush1.msra.mxu0 0.0
    %511 = vmatprep.subr.mxu0 0.0
    %512 = vmatpush1.msra.mxu0 0.0
    %513 = vmatprep.subr.mxu0 0.0
    %514 = vmatpush1.msra.mxu0 0.0
    %515 = vmatprep.subr.mxu0 0.0
    %516 = vmatpush1.msra.mxu0 0.0
    %517 = vmatprep.mubr.f32.mxu0 0.0
    %v518 = vand.u32 %v137, 4294901760
    %v519 = vsub.f32 %v137, %v518
    %v520 = vand.u32 %v519, 4294901760
    %521 = vmatmul.mubr.f32.gmra.mrb[0].mxu0 %v520
    %v522 = vpop.f32.mrb[0].mxu0
    %v523 = vadd.f32 %v427, %v522
    %v524 = vpop.f32.mrb[0].mxu0
    %525 = vmatprep.mubr.f32.mxu0 0.0
    %v526 = vand.u32 %v140, 4294901760
    %v527 = vsub.f32 %v140, %v526
    %v528 = vand.u32 %v527, 4294901760
    %529 = vmatmul.mubr.f32.gmra.mrb[0].mxu0 %v528
    %v530 = vpop.f32.mrb[0].mxu0
    %v531 = vadd.f32 %v434, %v530
    %v532 = vpop.f32.mrb[0].mxu0
    %533 = vmatprep.mubr.f32.mxu0 0.0
    %v534 = vand.u32 %v143, 4294901760
    %v535 = vsub.f32 %v143, %v534
    %v536 = vand.u32 %v535, 4294901760
    %537 = vmatmul.mubr.f32.gmra.mrb[0].mxu0 %v536
    %v538 = vpop.f32.mrb[0].mxu0
    %v539 = vadd.f32 %v441, %v538
    %v540 = vpop.f32.mrb[0].mxu0
    %541 = vmatprep.mubr.f32.mxu0 0.0
    %v542 = vand.u32 %v146, 4294901760
    %v543 = vsub.f32 %v146, %v542
    %v544 = vand.u32 %v543, 4294901760
    %545 = vmatmul.mubr.f32.gmra.mrb[0].mxu0 %v544
    %v546 = vpop.f32.mrb[0].mxu0
    %v547 = vadd.f32 %v448, %v546
    %v548 = vpop.f32.mrb[0].mxu0
    %549 = vdwg.mxu0
    %550 = vmatprep.subr.mxu0 0.0
    %v551 = vand.u32 %v126, 4294901760
    %v552 = vsub.f32 %v126, %v551
    %v553 = vand.u32 %v552, 4294901760
    %554 = vmatpush1.msra.mxu0 %v553
    %555 = vmatprep.subr.mxu0 0.0
    %v556 = vand.u32 %v127, 4294901760
    %v557 = vsub.f32 %v127, %v556
    %v558 = vand.u32 %v557, 4294901760
    %559 = vmatpush1.msra.mxu0 %v558
    %560 = vmatprep.subr.mxu0 0.0
    %561 = vmatpush1.msra.mxu0 0.0
    %562 = vmatprep.subr.mxu0 0.0
    %563 = vmatpush1.msra.mxu0 0.0
    %564 = vmatprep.subr.mxu0 0.0
    %565 = vmatpush1.msra.mxu0 0.0
    %566 = vmatprep.subr.mxu0 0.0
    %567 = vmatpush1.msra.mxu0 0.0
    %568 = vmatprep.subr.mxu0 0.0
    %569 = vmatpush1.msra.mxu0 0.0
    %570 = vmatprep.subr.mxu0 0.0
    %571 = vmatpush1.msra.mxu0 0.0
    %572 = vmatprep.subr.mxu0 0.0
    %573 = vmatpush1.msra.mxu0 0.0
    %574 = vmatprep.subr.mxu0 0.0
    %575 = vmatpush1.msra.mxu0 0.0
    %576 = vmatprep.subr.mxu0 0.0
    %577 = vmatpush1.msra.mxu0 0.0
    %578 = vmatprep.subr.mxu0 0.0
    %579 = vmatpush1.msra.mxu0 0.0
    %580 = vmatprep.subr.mxu0 0.0
    %581 = vmatpush1.msra.mxu0 0.0
    %582 = vmatprep.subr.mxu0 0.0
    %583 = vmatpush1.msra.mxu0 0.0
    %584 = vmatprep.subr.mxu0 0.0
    %585 = vmatpush1.msra.mxu0 0.0
    %586 = vmatprep.subr.mxu0 0.0
    %587 = vmatpush1.msra.mxu0 0.0
    %588 = vmatprep.subr.mxu0 0.0
    %589 = vmatpush1.msra.mxu0 0.0
    %590 = vmatprep.subr.mxu0 0.0
    %591 = vmatpush1.msra.mxu0 0.0
    %592 = vmatprep.subr.mxu0 0.0
    %593 = vmatpush1.msra.mxu0 0.0
    %594 = vmatprep.subr.mxu0 0.0
    %595 = vmatpush1.msra.mxu0 0.0
    %596 = vmatprep.subr.mxu0 0.0
    %597 = vmatpush1.msra.mxu0 0.0
    %598 = vmatprep.subr.mxu0 0.0
    %599 = vmatpush1.msra.mxu0 0.0
    %600 = vmatprep.subr.mxu0 0.0
    %601 = vmatpush1.msra.mxu0 0.0
    %602 = vmatprep.subr.mxu0 0.0
    %603 = vmatpush1.msra.mxu0 0.0
    %604 = vmatprep.subr.mxu0 0.0
    %605 = vmatpush1.msra.mxu0 0.0
    %606 = vmatprep.subr.mxu0 0.0
    %607 = vmatpush1.msra.mxu0 0.0
    %608 = vmatprep.subr.mxu0 0.0
    %609 = vmatpush1.msra.mxu0 0.0
    %610 = vmatprep.subr.mxu0 0.0
    %611 = vmatpush1.msra.mxu0 0.0
    %612 = vmatprep.subr.mxu0 0.0
    %613 = vmatpush1.msra.mxu0 0.0
    %614 = vmatprep.subr.mxu0 0.0
    %615 = vmatpush1.msra.mxu0 0.0
    %616 = vmatprep.subr.mxu0 0.0
    %617 = vmatpush1.msra.mxu0 0.0
    %618 = vmatprep.subr.mxu0 0.0
    %619 = vmatpush1.msra.mxu0 0.0
    %620 = vmatprep.mubr.f32.mxu0 0.0
    %v621 = vand.u32 %v137, 4294901760
    %622 = vmatmul.mubr.f32.gmra.mrb[0].mxu0 %v621
    %v623 = vpop.f32.mrb[0].mxu0
    %v624 = vadd.f32 %v523, %v623
    %v625 = vpop.f32.mrb[0].mxu0
    %626 = vmatprep.mubr.f32.mxu0 0.0
    %v627 = vand.u32 %v140, 4294901760
    %628 = vmatmul.mubr.f32.gmra.mrb[0].mxu0 %v627
    %v629 = vpop.f32.mrb[0].mxu0
    %v630 = vadd.f32 %v531, %v629
    %v631 = vpop.f32.mrb[0].mxu0
    %632 = vmatprep.mubr.f32.mxu0 0.0
    %v633 = vand.u32 %v143, 4294901760
    %634 = vmatmul.mubr.f32.gmra.mrb[0].mxu0 %v633
    %v635 = vpop.f32.mrb[0].mxu0
    %v636 = vadd.f32 %v539, %v635
    %v637 = vpop.f32.mrb[0].mxu0
    %638 = vmatprep.mubr.f32.mxu0 0.0
    %v639 = vand.u32 %v146, 4294901760
    %640 = vmatmul.mubr.f32.gmra.mrb[0].mxu0 %v639
    %v641 = vpop.f32.mrb[0].mxu0
    %v642 = vadd.f32 %v547, %v641
    %v643 = vpop.f32.mrb[0].mxu0
    %644 = vdwg.mxu0
    %645 = vmatprep.subr.mxu0 0.0
    %v646 = vand.u32 %v126, 4294901760
    %647 = vmatpush1.msra.mxu0 %v646
    %648 = vmatprep.subr.mxu0 0.0
    %v649 = vand.u32 %v127, 4294901760
    %650 = vmatpush1.msra.mxu0 %v649
    %651 = vmatprep.subr.mxu0 0.0
    %652 = vmatpush1.msra.mxu0 0.0
    %653 = vmatprep.subr.mxu0 0.0
    %654 = vmatpush1.msra.mxu0 0.0
    %655 = vmatprep.subr.mxu0 0.0
    %656 = vmatpush1.msra.mxu0 0.0
    %657 = vmatprep.subr.mxu0 0.0
    %658 = vmatpush1.msra.mxu0 0.0
    %659 = vmatprep.subr.mxu0 0.0
    %660 = vmatpush1.msra.mxu0 0.0
    %661 = vmatprep.subr.mxu0 0.0
    %662 = vmatpush1.msra.mxu0 0.0
    %663 = vmatprep.subr.mxu0 0.0
    %664 = vmatpush1.msra.mxu0 0.0
    %665 = vmatprep.subr.mxu0 0.0
    %666 = vmatpush1.msra.mxu0 0.0
    %667 = vmatprep.subr.mxu0 0.0
    %668 = vmatpush1.msra.mxu0 0.0
    %669 = vmatprep.subr.mxu0 0.0
    %670 = vmatpush1.msra.mxu0 0.0
    %671 = vmatprep.subr.mxu0 0.0
    %672 = vmatpush1.msra.mxu0 0.0
    %673 = vmatprep.subr.mxu0 0.0
    %674 = vmatpush1.msra.mxu0 0.0
    %675 = vmatprep.subr.mxu0 0.0
    %676 = vmatpush1.msra.mxu0 0.0
    %677 = vmatprep.subr.mxu0 0.0
    %678 = vmatpush1.msra.mxu0 0.0
    %679 = vmatprep.subr.mxu0 0.0
    %680 = vmatpush1.msra.mxu0 0.0
    %681 = vmatprep.subr.mxu0 0.0
    %682 = vmatpush1.msra.mxu0 0.0
    %683 = vmatprep.subr.mxu0 0.0
    %684 = vmatpush1.msra.mxu0 0.0
    %685 = vmatprep.subr.mxu0 0.0
    %686 = vmatpush1.msra.mxu0 0.0
    %687 = vmatprep.subr.mxu0 0.0
    %688 = vmatpush1.msra.mxu0 0.0
    %689 = vmatprep.subr.mxu0 0.0
    %690 = vmatpush1.msra.mxu0 0.0
    %691 = vmatprep.subr.mxu0 0.0
    %692 = vmatpush1.msra.mxu0 0.0
    %693 = vmatprep.subr.mxu0 0.0
    %694 = vmatpush1.msra.mxu0 0.0
    %695 = vmatprep.subr.mxu0 0.0
    %696 = vmatpush1.msra.mxu0 0.0
    %697 = vmatprep.subr.mxu0 0.0
    %698 = vmatpush1.msra.mxu0 0.0
    %699 = vmatprep.subr.mxu0 0.0
    %700 = vmatpush1.msra.mxu0 0.0
    %701 = vmatprep.subr.mxu0 0.0
    %702 = vmatpush1.msra.mxu0 0.0
    %703 = vmatprep.subr.mxu0 0.0
    %704 = vmatpush1.msra.mxu0 0.0
    %705 = vmatprep.subr.mxu0 0.0
    %706 = vmatpush1.msra.mxu0 0.0
    %707 = vmatprep.subr.mxu0 0.0
    %708 = vmatpush1.msra.mxu0 0.0
    %709 = vmatprep.subr.mxu0 0.0
    %710 = vmatpush1.msra.mxu0 0.0
    %711 = vmatprep.mubr.f32.mxu0 0.0
    %v712 = vand.u32 %v137, 4294901760
    %713 = vmatmul.mubr.f32.gmra.mrb[0].mxu0 %v712
    %v714 = vpop.f32.mrb[0].mxu0
    %v715 = vadd.f32 %v624, %v714
    %v716 = vpop.f32.mrb[0].mxu0
    %717 = vmatprep.mubr.f32.mxu0 0.0
    %v718 = vand.u32 %v140, 4294901760
    %719 = vmatmul.mubr.f32.gmra.mrb[0].mxu0 %v718
    %v720 = vpop.f32.mrb[0].mxu0
    %v721 = vadd.f32 %v630, %v720
    %v722 = vpop.f32.mrb[0].mxu0
    %723 = vmatprep.mubr.f32.mxu0 0.0
    %v724 = vand.u32 %v143, 4294901760
    %725 = vmatmul.mubr.f32.gmra.mrb[0].mxu0 %v724
    %v726 = vpop.f32.mrb[0].mxu0
    %v727 = vadd.f32 %v636, %v726
    %v728 = vpop.f32.mrb[0].mxu0
    %729 = vmatprep.mubr.f32.mxu0 0.0
    %v730 = vand.u32 %v146, 4294901760
    %731 = vmatmul.mubr.f32.gmra.mrb[0].mxu0 %v730
    %v732 = vpop.f32.mrb[0].mxu0
    %v733 = vadd.f32 %v642, %v732
    %v734 = vpop.f32.mrb[0].mxu0
    %735 = vdwg.mxu0
    %vm736 = vcmp.ge.f32.partialorder %v715, 0.0
    %vm737 = vcmp.ge.f32.partialorder %v721, 0.0
    %vm738 = vcmp.ge.f32.partialorder %v727, 0.0
    %vm739 = vcmp.ge.f32.partialorder %v733, 0.0
    %v740 = vmul.f32 %v715, 0.33
    %v741 = vmul.f32 %v721, 0.33
    %v742 = vmul.f32 %v727, 0.33
    %v743 = vmul.f32 %v733, 0.33
    %v744 = vsel %vm736, %v715, %v740
    %v745 = vsel %vm737, %v721, %v741
    %v746 = vsel %vm738, %v727, %v742
    %v747 = vsel %vm739, %v733, %v743
    %v748 = vld [vmem:[%s9] sm:$0xf]
    %v749 = vld [vmem:[%s11] sm:$0xff]
    %v750 = vld [vmem:[%s11 + $0x8] sm:$0xff]
    %v751 = vld [vmem:[%s11 + $0x10] sm:$0xff]
    %v752 = vld [vmem:[%s11 + $0x18] sm:$0xff]
    %v753 = vld [vmem:[%s11 + $0x20] sm:$0xff]
    %v754 = vld [vmem:[%s11 + $0x28] sm:$0xff]
    %v755 = vld [vmem:[%s11 + $0x30] sm:$0xff]
    %v756 = vld [vmem:[%s11 + $0x38] sm:$0xff]
    %v757 = vld [vmem:[%s13] sm:$0x1]
    %759 = vset.pattern.permute.xlu0 0
    %760 = vperm.xlu0 %759, %v744
    %v761 = vpop.permute.xlu0 %760
    %764 = vset.pattern.permute.xlu0 0
    %765 = vperm.xlu0 %764, %v745
    %v766 = vpop.permute.xlu0 %765
    %769 = vset.pattern.permute.xlu0 0
    %770 = vperm.xlu0 %769, %v746
    %v771 = vpop.permute.xlu0 %770
    %774 = vset.pattern.permute.xlu0 0
    %775 = vperm.xlu0 %774, %v747
    %v776 = vpop.permute.xlu0 %775
    %v778 = vmul.f32 %v761, %v749
    %v779 = vmul.f32 %v766, %v750
    %v780 = vmul.f32 %v771, %v749
    %v781 = vmul.f32 %v776, %v750
    %vm782 = vcmask 31744
    %v783 = vsel %vm782, %v778, 0.0
    %v784 = vsel %vm782, %v779, 0.0
    %v785 = vadd.f32 %v783, %v784
    %v786 = vrot.slane %v785, 4
    %v787 = vadd.f32 %v785, %v786
    %v788 = vrot.slane %v787, 2
    %v789 = vadd.f32 %v787, %v788
    %v790 = vrot.slane %v789, 1
    %v791 = vadd.f32 %v789, %v790
    %v792 = vsel %vm782, %v780, 0.0
    %v793 = vsel %vm782, %v781, 0.0
    %v794 = vadd.f32 %v792, %v793
    %v795 = vrot.slane %v794, 4
    %v796 = vadd.f32 %v794, %v795
    %v797 = vrot.slane %v796, 2
    %v798 = vadd.f32 %v796, %v797
    %v799 = vrot.slane %v798, 1
    %v800 = vadd.f32 %v798, %v799
    %v801 = vadd.f32 %v791, 0.0
    %v802 = vadd.f32 %v800, 0.0
    %803 = vset.pattern.permute.xlu0 1
    %804 = vperm.xlu0 %803, %v744
    %v805 = vpop.permute.xlu0 %804
    %807 = vset.pattern.permute.xlu0 1
    %808 = vperm.xlu0 %807, %v745
    %v809 = vpop.permute.xlu0 %808
    %811 = vset.pattern.permute.xlu0 1
    %812 = vperm.xlu0 %811, %v746
    %v813 = vpop.permute.xlu0 %812
    %815 = vset.pattern.permute.xlu0 1
    %816 = vperm.xlu0 %815, %v747
    %v817 = vpop.permute.xlu0 %816
    %v819 = vmul.f32 %v805, %v751
    %v820 = vmul.f32 %v809, %v752
    %v821 = vmul.f32 %v813, %v751
    %v822 = vmul.f32 %v817, %v752
    %v823 = vsel %vm782, %v819, 0.0
    %v824 = vsel %vm782, %v820, 0.0
    %v825 = vadd.f32 %v823, %v824
    %v826 = vrot.slane %v825, 4
    %v827 = vadd.f32 %v825, %v826
    %v828 = vrot.slane %v827, 2
    %v829 = vadd.f32 %v827, %v828
    %v830 = vrot.slane %v829, 1
    %v831 = vadd.f32 %v829, %v830
    %v832 = vsel %vm782, %v821, 0.0
    %v833 = vsel %vm782, %v822, 0.0
    %v834 = vadd.f32 %v832, %v833
    %v835 = vrot.slane %v834, 4
    %v836 = vadd.f32 %v834, %v835
    %v837 = vrot.slane %v836, 2
    %v838 = vadd.f32 %v836, %v837
    %v839 = vrot.slane %v838, 1
    %v840 = vadd.f32 %v838, %v839
    %v841 = vadd.f32 %v801, %v831
    %v842 = vadd.f32 %v802, %v840
    %843 = vset.pattern.permute.xlu0 2
    %844 = vperm.xlu0 %843, %v744
    %v845 = vpop.permute.xlu0 %844
    %847 = vset.pattern.permute.xlu0 2
    %848 = vperm.xlu0 %847, %v745
    %v849 = vpop.permute.xlu0 %848
    %851 = vset.pattern.permute.xlu0 2
    %852 = vperm.xlu0 %851, %v746
    %v853 = vpop.permute.xlu0 %852
    %855 = vset.pattern.permute.xlu0 2
    %856 = vperm.xlu0 %855, %v747
    %v857 = vpop.permute.xlu0 %856
    %v859 = vmul.f32 %v845, %v753
    %v860 = vmul.f32 %v849, %v754
    %v861 = vmul.f32 %v853, %v753
    %v862 = vmul.f32 %v857, %v754
    %v863 = vsel %vm782, %v859, 0.0
    %v864 = vsel %vm782, %v860, 0.0
    %v865 = vadd.f32 %v863, %v864
    %v866 = vrot.slane %v865, 4
    %v867 = vadd.f32 %v865, %v866
    %v868 = vrot.slane %v867, 2
    %v869 = vadd.f32 %v867, %v868
    %v870 = vrot.slane %v869, 1
    %v871 = vadd.f32 %v869, %v870
    %v872 = vsel %vm782, %v861, 0.0
    %v873 = vsel %vm782, %v862, 0.0
    %v874 = vadd.f32 %v872, %v873
    %v875 = vrot.slane %v874, 4
    %v876 = vadd.f32 %v874, %v875
    %v877 = vrot.slane %v876, 2
    %v878 = vadd.f32 %v876, %v877
    %v879 = vrot.slane %v878, 1
    %v880 = vadd.f32 %v878, %v879
    %v881 = vadd.f32 %v841, %v871
    %v882 = vadd.f32 %v842, %v880
    %883 = vset.pattern.permute.xlu0 3
    %884 = vperm.xlu0 %883, %v744
    %v885 = vpop.permute.xlu0 %884
    %887 = vset.pattern.permute.xlu0 3
    %888 = vperm.xlu0 %887, %v745
    %v889 = vpop.permute.xlu0 %888
    %891 = vset.pattern.permute.xlu0 3
    %892 = vperm.xlu0 %891, %v746
    %v893 = vpop.permute.xlu0 %892
    %895 = vset.pattern.permute.xlu0 3
    %896 = vperm.xlu0 %895, %v747
    %v897 = vpop.permute.xlu0 %896
    %v899 = vmul.f32 %v885, %v755
    %v900 = vmul.f32 %v889, %v756
    %v901 = vmul.f32 %v893, %v755
    %v902 = vmul.f32 %v897, %v756
    %v903 = vsel %vm782, %v899, 0.0
    %v904 = vsel %vm782, %v900, 0.0
    %v905 = vadd.f32 %v903, %v904
    %v906 = vrot.slane %v905, 4
    %v907 = vadd.f32 %v905, %v906
    %v908 = vrot.slane %v907, 2
    %v909 = vadd.f32 %v907, %v908
    %v910 = vrot.slane %v909, 1
    %v911 = vadd.f32 %v909, %v910
    %v912 = vsel %vm782, %v901, 0.0
    %v913 = vsel %vm782, %v902, 0.0
    %v914 = vadd.f32 %v912, %v913
    %v915 = vrot.slane %v914, 4
    %v916 = vadd.f32 %v914, %v915
    %v917 = vrot.slane %v916, 2
    %v918 = vadd.f32 %v916, %v917
    %v919 = vrot.slane %v918, 1
    %v920 = vadd.f32 %v918, %v919
    %v921 = vadd.f32 %v881, %v911
    %v922 = vadd.f32 %v882, %v920
    %v924 = vlaneseq
    %v925 = vshrl.u32 %v924, 7
    %v926 = vsub.s32 0, %v925
    %v927 = vrot.slane %v757, %v926
    %vm931 = vcmask 1041409
    %v932 = vsel %vm931, %v922, %v921
    %v934 = vadd.f32 %v927, %v932
    %v937 = vunpack.c.l.s4 1966171168
    %v938 = vunpack.c.0.s8 %v937
    %v939 = vlaneseq
    %v940 = vshrl.u32 %v939, 7
    %v941 = vsub.s32 %v938, %v940
    %v942 = vrot.slane %v934, %v941
    %v943 = vcombine.high %v942, %v942
    %v945 = vunpack.c.l.s4 1966171168
    %v946 = vunpack.c.0.s8 %v945
    %v947 = vlaneseq
    %v948 = vshrl.u32 %v947, 7
    %v949 = vsub.s32 %v946, %v948
    %v950 = vrot.slane %v942, %v949
    %v952 = vunpack.c.l.s4 1966171168
    %v953 = vunpack.c.0.s8 %v952
    %v954 = vlaneseq
    %v955 = vshrl.u32 %v954, 7
    %v956 = vsub.s32 %v953, %v955
    %v957 = vrot.slane %v943, %v956
    %v958 = vlaneseq
    %v959 = vshrl.u32 %v958, 7
    %v960 = vsub.s32 0, %v959
    %v961 = vrot.slane %v950, %v960
    %v962 = vlaneseq
    %v963 = vshrl.u32 %v962, 7
    %v964 = vsub.s32 0, %v963
    %v965 = vrot.slane %v957, %v964
    %v968 = vsel %vm782, %v744, 0
    %v970 = vsel %vm782, %v745, 0
    %v972 = vsel %vm782, %v746, 0
    %v974 = vsel %vm782, %v747, 0
    %vm976 = vcmask 1043456
    %v978 = vsel %vm976, %v748, 0
    %980 = vmatprep.subr.mxu0 0.0
    %v981 = vand.u32 %v978, 4294901760
    %982 = vmatpush1.msra.mxu0 %v981
    %983 = vmatprep.subr.mxu0 0.0
    %984 = vmatpush1.msra.mxu0 0.0
    %985 = vmatprep.subr.mxu0 0.0
    %986 = vmatpush1.msra.mxu0 0.0
    %987 = vmatprep.subr.mxu0 0.0
    %988 = vmatpush1.msra.mxu0 0.0
    %989 = vmatprep.subr.mxu0 0.0
    %990 = vmatpush1.msra.mxu0 0.0
    %991 = vmatprep.subr.mxu0 0.0
    %992 = vmatpush1.msra.mxu0 0.0
    %993 = vmatprep.subr.mxu0 0.0
    %994 = vmatpush1.msra.mxu0 0.0
    %995 = vmatprep.subr.mxu0 0.0
    %996 = vmatpush1.msra.mxu0 0.0
    %997 = vmatprep.subr.mxu0 0.0
    %998 = vmatpush1.msra.mxu0 0.0
    %999 = vmatprep.subr.mxu0 0.0
    %1000 = vmatpush1.msra.mxu0 0.0
    %1001 = vmatprep.subr.mxu0 0.0
    %1002 = vmatpush1.msra.mxu0 0.0
    %1003 = vmatprep.subr.mxu0 0.0
    %1004 = vmatpush1.msra.mxu0 0.0
    %1005 = vmatprep.subr.mxu0 0.0
    %1006 = vmatpush1.msra.mxu0 0.0
    %1007 = vmatprep.subr.mxu0 0.0
    %1008 = vmatpush1.msra.mxu0 0.0
    %1009 = vmatprep.subr.mxu0 0.0
    %1010 = vmatpush1.msra.mxu0 0.0
    %1011 = vmatprep.subr.mxu0 0.0
    %1012 = vmatpush1.msra.mxu0 0.0
    %1013 = vmatprep.subr.mxu0 0.0
    %1014 = vmatpush1.msra.mxu0 0.0
    %1015 = vmatprep.subr.mxu0 0.0
    %1016 = vmatpush1.msra.mxu0 0.0
    %1017 = vmatprep.subr.mxu0 0.0
    %1018 = vmatpush1.msra.mxu0 0.0
    %1019 = vmatprep.subr.mxu0 0.0
    %1020 = vmatpush1.msra.mxu0 0.0
    %1021 = vmatprep.subr.mxu0 0.0
    %1022 = vmatpush1.msra.mxu0 0.0
    %1023 = vmatprep.subr.mxu0 0.0
    %1024 = vmatpush1.msra.mxu0 0.0
    %1025 = vmatprep.subr.mxu0 0.0
    %1026 = vmatpush1.msra.mxu0 0.0
    %1027 = vmatprep.subr.mxu0 0.0
    %1028 = vmatpush1.msra.mxu0 0.0
    %1029 = vmatprep.subr.mxu0 0.0
    %1030 = vmatpush1.msra.mxu0 0.0
    %1031 = vmatprep.subr.mxu0 0.0
    %1032 = vmatpush1.msra.mxu0 0.0
    %1033 = vmatprep.subr.mxu0 0.0
    %1034 = vmatpush1.msra.mxu0 0.0
    %1035 = vmatprep.subr.mxu0 0.0
    %1036 = vmatpush1.msra.mxu0 0.0
    %1037 = vmatprep.subr.mxu0 0.0
    %1038 = vmatpush1.msra.mxu0 0.0
    %1039 = vmatprep.subr.mxu0 0.0
    %1040 = vmatpush1.msra.mxu0 0.0
    %1041 = vmatprep.subr.mxu0 0.0
    %1042 = vmatpush1.msra.mxu0 0.0
    %1043 = vmatprep.subr.mxu0 0.0
    %1044 = vmatpush1.msra.mxu0 0.0
    %1045 = vmatprep.mubr.f32.mxu0 0.0
    %v1046 = vand.u32 %v968, 4294901760
    %v1047 = vsub.f32 %v968, %v1046
    %v1048 = vand.u32 %v1047, 4294901760
    %v1049 = vsub.f32 %v1047, %v1048
    %v1050 = vand.u32 %v1049, 4294901760
    %1051 = vmatmul.mubr.f32.gmra.mrb[0].mxu0 %v1050
    %v1052 = vpop.f32.mrb[0].mxu0
    %v1053 = vadd.f32 %v961, %v1052
    %v1054 = vpop.f32.mrb[0].mxu0
    %1055 = vmatprep.mubr.f32.mxu0 0.0
    %v1056 = vand.u32 %v970, 4294901760
    %v1057 = vsub.f32 %v970, %v1056
    %v1058 = vand.u32 %v1057, 4294901760
    %v1059 = vsub.f32 %v1057, %v1058
    %v1060 = vand.u32 %v1059, 4294901760
    %1061 = vmatmul.mubr.f32.gmra.mrb[0].mxu0 %v1060
    %v1062 = vpop.f32.mrb[0].mxu0
    %v1063 = vadd.f32 %v961, %v1062
    %v1064 = vpop.f32.mrb[0].mxu0
    %1065 = vmatprep.mubr.f32.mxu0 0.0
    %v1066 = vand.u32 %v972, 4294901760
    %v1067 = vsub.f32 %v972, %v1066
    %v1068 = vand.u32 %v1067, 4294901760
    %v1069 = vsub.f32 %v1067, %v1068
    %v1070 = vand.u32 %v1069, 4294901760
    %1071 = vmatmul.mubr.f32.gmra.mrb[0].mxu0 %v1070
    %v1072 = vpop.f32.mrb[0].mxu0
    %v1073 = vadd.f32 %v965, %v1072
    %v1074 = vpop.f32.mrb[0].mxu0
    %1075 = vmatprep.mubr.f32.mxu0 0.0
    %v1076 = vand.u32 %v974, 4294901760
    %v1077 = vsub.f32 %v974, %v1076
    %v1078 = vand.u32 %v1077, 4294901760
    %v1079 = vsub.f32 %v1077, %v1078
    %v1080 = vand.u32 %v1079, 4294901760
    %1081 = vmatmul.mubr.f32.gmra.mrb[0].mxu0 %v1080
    %v1082 = vpop.f32.mrb[0].mxu0
    %v1083 = vadd.f32 %v965, %v1082
    %v1084 = vpop.f32.mrb[0].mxu0
    %1085 = vdwg.mxu0
    %1086 = vmatprep.subr.mxu0 0.0
    %v1087 = vand.u32 %v978, 4294901760
    %v1088 = vsub.f32 %v978, %v1087
    %v1089 = vand.u32 %v1088, 4294901760
    %v1090 = vsub.f32 %v1088, %v1089
    %v1091 = vand.u32 %v1090, 4294901760
    %1092 = vmatpush1.msra.mxu0 %v1091
    %1093 = vmatprep.subr.mxu0 0.0
    %1094 = vmatpush1.msra.mxu0 0.0
    %1095 = vmatprep.subr.mxu0 0.0
    %1096 = vmatpush1.msra.mxu0 0.0
    %1097 = vmatprep.subr.mxu0 0.0
    %1098 = vmatpush1.msra.mxu0 0.0
    %1099 = vmatprep.subr.mxu0 0.0
    %1100 = vmatpush1.msra.mxu0 0.0
    %1101 = vmatprep.subr.mxu0 0.0
    %1102 = vmatpush1.msra.mxu0 0.0
    %1103 = vmatprep.subr.mxu0 0.0
    %1104 = vmatpush1.msra.mxu0 0.0
    %1105 = vmatprep.subr.mxu0 0.0
    %1106 = vmatpush1.msra.mxu0 0.0
    %1107 = vmatprep.subr.mxu0 0.0
    %1108 = vmatpush1.msra.mxu0 0.0
    %1109 = vmatprep.subr.mxu0 0.0
    %1110 = vmatpush1.msra.mxu0 0.0
    %1111 = vmatprep.subr.mxu0 0.0
    %1112 = vmatpush1.msra.mxu0 0.0
    %1113 = vmatprep.subr.mxu0 0.0
    %1114 = vmatpush1.msra.mxu0 0.0
    %1115 = vmatprep.subr.mxu0 0.0
    %1116 = vmatpush1.msra.mxu0 0.0
    %1117 = vmatprep.subr.mxu0 0.0
    %1118 = vmatpush1.msra.mxu0 0.0
    %1119 = vmatprep.subr.mxu0 0.0
    %1120 = vmatpush1.msra.mxu0 0.0
    %1121 = vmatprep.subr.mxu0 0.0
    %1122 = vmatpush1.msra.mxu0 0.0
    %1123 = vmatprep.subr.mxu0 0.0
    %1124 = vmatpush1.msra.mxu0 0.0
    %1125 = vmatprep.subr.mxu0 0.0
    %1126 = vmatpush1.msra.mxu0 0.0
    %1127 = vmatprep.subr.mxu0 0.0
    %1128 = vmatpush1.msra.mxu0 0.0
    %1129 = vmatprep.subr.mxu0 0.0
    %1130 = vmatpush1.msra.mxu0 0.0
    %1131 = vmatprep.subr.mxu0 0.0
    %1132 = vmatpush1.msra.mxu0 0.0
    %1133 = vmatprep.subr.mxu0 0.0
    %1134 = vmatpush1.msra.mxu0 0.0
    %1135 = vmatprep.subr.mxu0 0.0
    %1136 = vmatpush1.msra.mxu0 0.0
    %1137 = vmatprep.subr.mxu0 0.0
    %1138 = vmatpush1.msra.mxu0 0.0
    %1139 = vmatprep.subr.mxu0 0.0
    %1140 = vmatpush1.msra.mxu0 0.0
    %1141 = vmatprep.subr.mxu0 0.0
    %1142 = vmatpush1.msra.mxu0 0.0
    %1143 = vmatprep.subr.mxu0 0.0
    %1144 = vmatpush1.msra.mxu0 0.0
    %1145 = vmatprep.subr.mxu0 0.0
    %1146 = vmatpush1.msra.mxu0 0.0
    %1147 = vmatprep.subr.mxu0 0.0
    %1148 = vmatpush1.msra.mxu0 0.0
    %1149 = vmatprep.subr.mxu0 0.0
    %1150 = vmatpush1.msra.mxu0 0.0
    %1151 = vmatprep.subr.mxu0 0.0
    %1152 = vmatpush1.msra.mxu0 0.0
    %1153 = vmatprep.subr.mxu0 0.0
    %1154 = vmatpush1.msra.mxu0 0.0
    %1155 = vmatprep.mubr.f32.mxu0 0.0
    %v1156 = vand.u32 %v968, 4294901760
    %1157 = vmatmul.mubr.f32.gmra.mrb[0].mxu0 %v1156
    %v1158 = vpop.f32.mrb[0].mxu0
    %v1159 = vadd.f32 %v1053, %v1158
    %v1160 = vpop.f32.mrb[0].mxu0
    %1161 = vmatprep.mubr.f32.mxu0 0.0
    %v1162 = vand.u32 %v970, 4294901760
    %1163 = vmatmul.mubr.f32.gmra.mrb[0].mxu0 %v1162
    %v1164 = vpop.f32.mrb[0].mxu0
    %v1165 = vadd.f32 %v1063, %v1164
    %v1166 = vpop.f32.mrb[0].mxu0
    %1167 = vmatprep.mubr.f32.mxu0 0.0
    %v1168 = vand.u32 %v972, 4294901760
    %1169 = vmatmul.mubr.f32.gmra.mrb[0].mxu0 %v1168
    %v1170 = vpop.f32.mrb[0].mxu0
    %v1171 = vadd.f32 %v1073, %v1170
    %v1172 = vpop.f32.mrb[0].mxu0
    %1173 = vmatprep.mubr.f32.mxu0 0.0
    %v1174 = vand.u32 %v974, 4294901760
    %1175 = vmatmul.mubr.f32.gmra.mrb[0].mxu0 %v1174
    %v1176 = vpop.f32.mrb[0].mxu0
    %v1177 = vadd.f32 %v1083, %v1176
    %v1178 = vpop.f32.mrb[0].mxu0
    %1179 = vdwg.mxu0
    %1180 = vmatprep.subr.mxu0 0.0
    %v1181 = vand.u32 %v978, 4294901760
    %v1182 = vsub.f32 %v978, %v1181
    %1183 = vmatpush1.msra.mxu0 %v1182
    %1184 = vmatprep.subr.mxu0 0.0
    %1185 = vmatpush1.msra.mxu0 0.0
    %1186 = vmatprep.subr.mxu0 0.0
    %1187 = vmatpush1.msra.mxu0 0.0
    %1188 = vmatprep.subr.mxu0 0.0
    %1189 = vmatpush1.msra.mxu0 0.0
    %1190 = vmatprep.subr.mxu0 0.0
    %1191 = vmatpush1.msra.mxu0 0.0
    %1192 = vmatprep.subr.mxu0 0.0
    %1193 = vmatpush1.msra.mxu0 0.0
    %1194 = vmatprep.subr.mxu0 0.0
    %1195 = vmatpush1.msra.mxu0 0.0
    %1196 = vmatprep.subr.mxu0 0.0
    %1197 = vmatpush1.msra.mxu0 0.0
    %1198 = vmatprep.subr.mxu0 0.0
    %1199 = vmatpush1.msra.mxu0 0.0
    %1200 = vmatprep.subr.mxu0 0.0
    %1201 = vmatpush1.msra.mxu0 0.0
    %1202 = vmatprep.subr.mxu0 0.0
    %1203 = vmatpush1.msra.mxu0 0.0
    %1204 = vmatprep.subr.mxu0 0.0
    %1205 = vmatpush1.msra.mxu0 0.0
    %1206 = vmatprep.subr.mxu0 0.0
    %1207 = vmatpush1.msra.mxu0 0.0
    %1208 = vmatprep.subr.mxu0 0.0
    %1209 = vmatpush1.msra.mxu0 0.0
    %1210 = vmatprep.subr.mxu0 0.0
    %1211 = vmatpush1.msra.mxu0 0.0
    %1212 = vmatprep.subr.mxu0 0.0
    %1213 = vmatpush1.msra.mxu0 0.0
    %1214 = vmatprep.subr.mxu0 0.0
    %1215 = vmatpush1.msra.mxu0 0.0
    %1216 = vmatprep.subr.mxu0 0.0
    %1217 = vmatpush1.msra.mxu0 0.0
    %1218 = vmatprep.subr.mxu0 0.0
    %1219 = vmatpush1.msra.mxu0 0.0
    %1220 = vmatprep.subr.mxu0 0.0
    %1221 = vmatpush1.msra.mxu0 0.0
    %1222 = vmatprep.subr.mxu0 0.0
    %1223 = vmatpush1.msra.mxu0 0.0
    %1224 = vmatprep.subr.mxu0 0.0
    %1225 = vmatpush1.msra.mxu0 0.0
    %1226 = vmatprep.subr.mxu0 0.0
    %1227 = vmatpush1.msra.mxu0 0.0
    %1228 = vmatprep.subr.mxu0 0.0
    %1229 = vmatpush1.msra.mxu0 0.0
    %1230 = vmatprep.subr.mxu0 0.0
    %1231 = vmatpush1.msra.mxu0 0.0
    %1232 = vmatprep.subr.mxu0 0.0
    %1233 = vmatpush1.msra.mxu0 0.0
    %1234 = vmatprep.subr.mxu0 0.0
    %1235 = vmatpush1.msra.mxu0 0.0
    %1236 = vmatprep.subr.mxu0 0.0
    %1237 = vmatpush1.msra.mxu0 0.0
    %1238 = vmatprep.subr.mxu0 0.0
    %1239 = vmatpush1.msra.mxu0 0.0
    %1240 = vmatprep.subr.mxu0 0.0
    %1241 = vmatpush1.msra.mxu0 0.0
    %1242 = vmatprep.subr.mxu0 0.0
    %1243 = vmatpush1.msra.mxu0 0.0
    %1244 = vmatprep.subr.mxu0 0.0
    %1245 = vmatpush1.msra.mxu0 0.0
    %1246 = vmatprep.mubr.f32.mxu0 0.0
    %v1247 = vand.u32 %v968, 4294901760
    %v1248 = vsub.f32 %v968, %v1247
    %1249 = vmatmul.mubr.f32.gmra.mrb[0].mxu0 %v1248
    %v1250 = vpop.f32.mrb[0].mxu0
    %v1251 = vadd.f32 %v1159, %v1250
    %v1252 = vpop.f32.mrb[0].mxu0
    %1253 = vmatprep.mubr.f32.mxu0 0.0
    %v1254 = vand.u32 %v970, 4294901760
    %v1255 = vsub.f32 %v970, %v1254
    %1256 = vmatmul.mubr.f32.gmra.mrb[0].mxu0 %v1255
    %v1257 = vpop.f32.mrb[0].mxu0
    %v1258 = vadd.f32 %v1165, %v1257
    %v1259 = vpop.f32.mrb[0].mxu0
    %1260 = vmatprep.mubr.f32.mxu0 0.0
    %v1261 = vand.u32 %v972, 4294901760
    %v1262 = vsub.f32 %v972, %v1261
    %1263 = vmatmul.mubr.f32.gmra.mrb[0].mxu0 %v1262
    %v1264 = vpop.f32.mrb[0].mxu0
    %v1265 = vadd.f32 %v1171, %v1264
    %v1266 = vpop.f32.mrb[0].mxu0
    %1267 = vmatprep.mubr.f32.mxu0 0.0
    %v1268 = vand.u32 %v974, 4294901760
    %v1269 = vsub.f32 %v974, %v1268
    %1270 = vmatmul.mubr.f32.gmra.mrb[0].mxu0 %v1269
    %v1271 = vpop.f32.mrb[0].mxu0
    %v1272 = vadd.f32 %v1177, %v1271
    %v1273 = vpop.f32.mrb[0].mxu0
    %1274 = vdwg.mxu0
    %1275 = vmatprep.subr.mxu0 0.0
    %v1276 = vand.u32 %v978, 4294901760
    %1277 = vmatpush1.msra.mxu0 %v1276
    %1278 = vmatprep.subr.mxu0 0.0
    %1279 = vmatpush1.msra.mxu0 0.0
    %1280 = vmatprep.subr.mxu0 0.0
    %1281 = vmatpush1.msra.mxu0 0.0
    %1282 = vmatprep.subr.mxu0 0.0
    %1283 = vmatpush1.msra.mxu0 0.0
    %1284 = vmatprep.subr.mxu0 0.0
    %1285 = vmatpush1.msra.mxu0 0.0
    %1286 = vmatprep.subr.mxu0 0.0
    %1287 = vmatpush1.msra.mxu0 0.0
    %1288 = vmatprep.subr.mxu0 0.0
    %1289 = vmatpush1.msra.mxu0 0.0
    %1290 = vmatprep.subr.mxu0 0.0
    %1291 = vmatpush1.msra.mxu0 0.0
    %1292 = vmatprep.subr.mxu0 0.0
    %1293 = vmatpush1.msra.mxu0 0.0
    %1294 = vmatprep.subr.mxu0 0.0
    %1295 = vmatpush1.msra.mxu0 0.0
    %1296 = vmatprep.subr.mxu0 0.0
    %1297 = vmatpush1.msra.mxu0 0.0
    %1298 = vmatprep.subr.mxu0 0.0
    %1299 = vmatpush1.msra.mxu0 0.0
    %1300 = vmatprep.subr.mxu0 0.0
    %1301 = vmatpush1.msra.mxu0 0.0
    %1302 = vmatprep.subr.mxu0 0.0
    %1303 = vmatpush1.msra.mxu0 0.0
    %1304 = vmatprep.subr.mxu0 0.0
    %1305 = vmatpush1.msra.mxu0 0.0
    %1306 = vmatprep.subr.mxu0 0.0
    %1307 = vmatpush1.msra.mxu0 0.0
    %1308 = vmatprep.subr.mxu0 0.0
    %1309 = vmatpush1.msra.mxu0 0.0
    %1310 = vmatprep.subr.mxu0 0.0
    %1311 = vmatpush1.msra.mxu0 0.0
    %1312 = vmatprep.subr.mxu0 0.0
    %1313 = vmatpush1.msra.mxu0 0.0
    %1314 = vmatprep.subr.mxu0 0.0
    %1315 = vmatpush1.msra.mxu0 0.0
    %1316 = vmatprep.subr.mxu0 0.0
    %1317 = vmatpush1.msra.mxu0 0.0
    %1318 = vmatprep.subr.mxu0 0.0
    %1319 = vmatpush1.msra.mxu0 0.0
    %1320 = vmatprep.subr.mxu0 0.0
    %1321 = vmatpush1.msra.mxu0 0.0
    %1322 = vmatprep.subr.mxu0 0.0
    %1323 = vmatpush1.msra.mxu0 0.0
    %1324 = vmatprep.subr.mxu0 0.0
    %1325 = vmatpush1.msra.mxu0 0.0
    %1326 = vmatprep.subr.mxu0 0.0
    %1327 = vmatpush1.msra.mxu0 0.0
    %1328 = vmatprep.subr.mxu0 0.0
    %1329 = vmatpush1.msra.mxu0 0.0
    %1330 = vmatprep.subr.mxu0 0.0
    %1331 = vmatpush1.msra.mxu0 0.0
    %1332 = vmatprep.subr.mxu0 0.0
    %1333 = vmatpush1.msra.mxu0 0.0
    %1334 = vmatprep.subr.mxu0 0.0
    %1335 = vmatpush1.msra.mxu0 0.0
    %1336 = vmatprep.subr.mxu0 0.0
    %1337 = vmatpush1.msra.mxu0 0.0
    %1338 = vmatprep.subr.mxu0 0.0
    %1339 = vmatpush1.msra.mxu0 0.0
    %1340 = vmatprep.mubr.f32.mxu0 0.0
    %v1341 = vand.u32 %v968, 4294901760
    %v1342 = vsub.f32 %v968, %v1341
    %v1343 = vand.u32 %v1342, 4294901760
    %1344 = vmatmul.mubr.f32.gmra.mrb[0].mxu0 %v1343
    %v1345 = vpop.f32.mrb[0].mxu0
    %v1346 = vadd.f32 %v1251, %v1345
    %v1347 = vpop.f32.mrb[0].mxu0
    %1348 = vmatprep.mubr.f32.mxu0 0.0
    %v1349 = vand.u32 %v970, 4294901760
    %v1350 = vsub.f32 %v970, %v1349
    %v1351 = vand.u32 %v1350, 4294901760
    %1352 = vmatmul.mubr.f32.gmra.mrb[0].mxu0 %v1351
    %v1353 = vpop.f32.mrb[0].mxu0
    %v1354 = vadd.f32 %v1258, %v1353
    %v1355 = vpop.f32.mrb[0].mxu0
    %1356 = vmatprep.mubr.f32.mxu0 0.0
    %v1357 = vand.u32 %v972, 4294901760
    %v1358 = vsub.f32 %v972, %v1357
    %v1359 = vand.u32 %v1358, 4294901760
    %1360 = vmatmul.mubr.f32.gmra.mrb[0].mxu0 %v1359
    %v1361 = vpop.f32.mrb[0].mxu0
    %v1362 = vadd.f32 %v1265, %v1361
    %v1363 = vpop.f32.mrb[0].mxu0
    %1364 = vmatprep.mubr.f32.mxu0 0.0
    %v1365 = vand.u32 %v974, 4294901760
    %v1366 = vsub.f32 %v974, %v1365
    %v1367 = vand.u32 %v1366, 4294901760
    %1368 = vmatmul.mubr.f32.gmra.mrb[0].mxu0 %v1367
    %v1369 = vpop.f32.mrb[0].mxu0
    %v1370 = vadd.f32 %v1272, %v1369
    %v1371 = vpop.f32.mrb[0].mxu0
    %1372 = vdwg.mxu0
    %1373 = vmatprep.subr.mxu0 0.0
    %v1374 = vand.u32 %v978, 4294901760
    %v1375 = vsub.f32 %v978, %v1374
    %v1376 = vand.u32 %v1375, 4294901760
    %1377 = vmatpush1.msra.mxu0 %v1376
    %1378 = vmatprep.subr.mxu0 0.0
    %1379 = vmatpush1.msra.mxu0 0.0
    %1380 = vmatprep.subr.mxu0 0.0
    %1381 = vmatpush1.msra.mxu0 0.0
    %1382 = vmatprep.subr.mxu0 0.0
    %1383 = vmatpush1.msra.mxu0 0.0
    %1384 = vmatprep.subr.mxu0 0.0
    %1385 = vmatpush1.msra.mxu0 0.0
    %1386 = vmatprep.subr.mxu0 0.0
    %1387 = vmatpush1.msra.mxu0 0.0
    %1388 = vmatprep.subr.mxu0 0.0
    %1389 = vmatpush1.msra.mxu0 0.0
    %1390 = vmatprep.subr.mxu0 0.0
    %1391 = vmatpush1.msra.mxu0 0.0
    %1392 = vmatprep.subr.mxu0 0.0
    %1393 = vmatpush1.msra.mxu0 0.0
    %1394 = vmatprep.subr.mxu0 0.0
    %1395 = vmatpush1.msra.mxu0 0.0
    %1396 = vmatprep.subr.mxu0 0.0
    %1397 = vmatpush1.msra.mxu0 0.0
    %1398 = vmatprep.subr.mxu0 0.0
    %1399 = vmatpush1.msra.mxu0 0.0
    %1400 = vmatprep.subr.mxu0 0.0
    %1401 = vmatpush1.msra.mxu0 0.0
    %1402 = vmatprep.subr.mxu0 0.0
    %1403 = vmatpush1.msra.mxu0 0.0
    %1404 = vmatprep.subr.mxu0 0.0
    %1405 = vmatpush1.msra.mxu0 0.0
    %1406 = vmatprep.subr.mxu0 0.0
    %1407 = vmatpush1.msra.mxu0 0.0
    %1408 = vmatprep.subr.mxu0 0.0
    %1409 = vmatpush1.msra.mxu0 0.0
    %1410 = vmatprep.subr.mxu0 0.0
    %1411 = vmatpush1.msra.mxu0 0.0
    %1412 = vmatprep.subr.mxu0 0.0
    %1413 = vmatpush1.msra.mxu0 0.0
    %1414 = vmatprep.subr.mxu0 0.0
    %1415 = vmatpush1.msra.mxu0 0.0
    %1416 = vmatprep.subr.mxu0 0.0
    %1417 = vmatpush1.msra.mxu0 0.0
    %1418 = vmatprep.subr.mxu0 0.0
    %1419 = vmatpush1.msra.mxu0 0.0
    %1420 = vmatprep.subr.mxu0 0.0
    %1421 = vmatpush1.msra.mxu0 0.0
    %1422 = vmatprep.subr.mxu0 0.0
    %1423 = vmatpush1.msra.mxu0 0.0
    %1424 = vmatprep.subr.mxu0 0.0
    %1425 = vmatpush1.msra.mxu0 0.0
    %1426 = vmatprep.subr.mxu0 0.0
    %1427 = vmatpush1.msra.mxu0 0.0
    %1428 = vmatprep.subr.mxu0 0.0
    %1429 = vmatpush1.msra.mxu0 0.0
    %1430 = vmatprep.subr.mxu0 0.0
    %1431 = vmatpush1.msra.mxu0 0.0
    %1432 = vmatprep.subr.mxu0 0.0
    %1433 = vmatpush1.msra.mxu0 0.0
    %1434 = vmatprep.subr.mxu0 0.0
    %1435 = vmatpush1.msra.mxu0 0.0
    %1436 = vmatprep.subr.mxu0 0.0
    %1437 = vmatpush1.msra.mxu0 0.0
    %1438 = vmatprep.subr.mxu0 0.0
    %1439 = vmatpush1.msra.mxu0 0.0
    %1440 = vmatprep.mubr.f32.mxu0 0.0
    %v1441 = vand.u32 %v968, 4294901760
    %1442 = vmatmul.mubr.f32.gmra.mrb[0].mxu0 %v1441
    %v1443 = vpop.f32.mrb[0].mxu0
    %v1444 = vadd.f32 %v1346, %v1443
    %v1445 = vpop.f32.mrb[0].mxu0
    %1446 = vmatprep.mubr.f32.mxu0 0.0
    %v1447 = vand.u32 %v970, 4294901760
    %1448 = vmatmul.mubr.f32.gmra.mrb[0].mxu0 %v1447
    %v1449 = vpop.f32.mrb[0].mxu0
    %v1450 = vadd.f32 %v1354, %v1449
    %v1451 = vpop.f32.mrb[0].mxu0
    %1452 = vmatprep.mubr.f32.mxu0 0.0
    %v1453 = vand.u32 %v972, 4294901760
    %1454 = vmatmul.mubr.f32.gmra.mrb[0].mxu0 %v1453
    %v1455 = vpop.f32.mrb[0].mxu0
    %v1456 = vadd.f32 %v1362, %v1455
    %v1457 = vpop.f32.mrb[0].mxu0
    %1458 = vmatprep.mubr.f32.mxu0 0.0
    %v1459 = vand.u32 %v974, 4294901760
    %1460 = vmatmul.mubr.f32.gmra.mrb[0].mxu0 %v1459
    %v1461 = vpop.f32.mrb[0].mxu0
    %v1462 = vadd.f32 %v1370, %v1461
    %v1463 = vpop.f32.mrb[0].mxu0
    %1464 = vdwg.mxu0
    %1465 = vmatprep.subr.mxu0 0.0
    %v1466 = vand.u32 %v978, 4294901760
    %1467 = vmatpush1.msra.mxu0 %v1466
    %1468 = vmatprep.subr.mxu0 0.0
    %1469 = vmatpush1.msra.mxu0 0.0
    %1470 = vmatprep.subr.mxu0 0.0
    %1471 = vmatpush1.msra.mxu0 0.0
    %1472 = vmatprep.subr.mxu0 0.0
    %1473 = vmatpush1.msra.mxu0 0.0
    %1474 = vmatprep.subr.mxu0 0.0
    %1475 = vmatpush1.msra.mxu0 0.0
    %1476 = vmatprep.subr.mxu0 0.0
    %1477 = vmatpush1.msra.mxu0 0.0
    %1478 = vmatprep.subr.mxu0 0.0
    %1479 = vmatpush1.msra.mxu0 0.0
    %1480 = vmatprep.subr.mxu0 0.0
    %1481 = vmatpush1.msra.mxu0 0.0
    %1482 = vmatprep.subr.mxu0 0.0
    %1483 = vmatpush1.msra.mxu0 0.0
    %1484 = vmatprep.subr.mxu0 0.0
    %1485 = vmatpush1.msra.mxu0 0.0
    %1486 = vmatprep.subr.mxu0 0.0
    %1487 = vmatpush1.msra.mxu0 0.0
    %1488 = vmatprep.subr.mxu0 0.0
    %1489 = vmatpush1.msra.mxu0 0.0
    %1490 = vmatprep.subr.mxu0 0.0
    %1491 = vmatpush1.msra.mxu0 0.0
    %1492 = vmatprep.subr.mxu0 0.0
    %1493 = vmatpush1.msra.mxu0 0.0
    %1494 = vmatprep.subr.mxu0 0.0
    %1495 = vmatpush1.msra.mxu0 0.0
    %1496 = vmatprep.subr.mxu0 0.0
    %1497 = vmatpush1.msra.mxu0 0.0
    %1498 = vmatprep.subr.mxu0 0.0
    %1499 = vmatpush1.msra.mxu0 0.0
    %1500 = vmatprep.subr.mxu0 0.0
    %1501 = vmatpush1.msra.mxu0 0.0
    %1502 = vmatprep.subr.mxu0 0.0
    %1503 = vmatpush1.msra.mxu0 0.0
    %1504 = vmatprep.subr.mxu0 0.0
    %1505 = vmatpush1.msra.mxu0 0.0
    %1506 = vmatprep.subr.mxu0 0.0
    %1507 = vmatpush1.msra.mxu0 0.0
    %1508 = vmatprep.subr.mxu0 0.0
    %1509 = vmatpush1.msra.mxu0 0.0
    %1510 = vmatprep.subr.mxu0 0.0
    %1511 = vmatpush1.msra.mxu0 0.0
    %1512 = vmatprep.subr.mxu0 0.0
    %1513 = vmatpush1.msra.mxu0 0.0
    %1514 = vmatprep.subr.mxu0 0.0
    %1515 = vmatpush1.msra.mxu0 0.0
    %1516 = vmatprep.subr.mxu0 0.0
    %1517 = vmatpush1.msra.mxu0 0.0
    %1518 = vmatprep.subr.mxu0 0.0
    %1519 = vmatpush1.msra.mxu0 0.0
    %1520 = vmatprep.subr.mxu0 0.0
    %1521 = vmatpush1.msra.mxu0 0.0
    %1522 = vmatprep.subr.mxu0 0.0
    %1523 = vmatpush1.msra.mxu0 0.0
    %1524 = vmatprep.subr.mxu0 0.0
    %1525 = vmatpush1.msra.mxu0 0.0
    %1526 = vmatprep.subr.mxu0 0.0
    %1527 = vmatpush1.msra.mxu0 0.0
    %1528 = vmatprep.subr.mxu0 0.0
    %1529 = vmatpush1.msra.mxu0 0.0
    %1530 = vmatprep.mubr.f32.mxu0 0.0
    %v1531 = vand.u32 %v968, 4294901760
    %1532 = vmatmul.mubr.f32.gmra.mrb[0].mxu0 %v1531
    %v1533 = vpop.f32.mrb[0].mxu0
    %v1534 = vadd.f32 %v1444, %v1533
    %v1535 = vpop.f32.mrb[0].mxu0
    %1536 = vmatprep.mubr.f32.mxu0 0.0
    %v1537 = vand.u32 %v970, 4294901760
    %1538 = vmatmul.mubr.f32.gmra.mrb[0].mxu0 %v1537
    %v1539 = vpop.f32.mrb[0].mxu0
    %v1540 = vadd.f32 %v1450, %v1539
    %v1541 = vpop.f32.mrb[0].mxu0
    %1542 = vmatprep.mubr.f32.mxu0 0.0
    %v1543 = vand.u32 %v972, 4294901760
    %1544 = vmatmul.mubr.f32.gmra.mrb[0].mxu0 %v1543
    %v1545 = vpop.f32.mrb[0].mxu0
    %v1546 = vadd.f32 %v1456, %v1545
    %v1547 = vpop.f32.mrb[0].mxu0
    %1548 = vmatprep.mubr.f32.mxu0 0.0
    %v1549 = vand.u32 %v974, 4294901760
    %1550 = vmatmul.mubr.f32.gmra.mrb[0].mxu0 %v1549
    %v1551 = vpop.f32.mrb[0].mxu0
    %v1552 = vadd.f32 %v1462, %v1551
    %v1553 = vpop.f32.mrb[0].mxu0
    %1554 = vdwg.mxu0
    %vm1555 = vcmp.ge.f32.partialorder %v1534, 0.0
    %vm1556 = vcmp.ge.f32.partialorder %v1540, 0.0
    %vm1557 = vcmp.ge.f32.partialorder %v1546, 0.0
    %vm1558 = vcmp.ge.f32.partialorder %v1552, 0.0
    %v1559 = vmul.f32 %v1534, 0.33
    %v1560 = vmul.f32 %v1540, 0.33
    %v1561 = vmul.f32 %v1546, 0.33
    %v1562 = vmul.f32 %v1552, 0.33
    %v1563 = vsel %vm1555, %v1534, %v1559
    %v1564 = vsel %vm1556, %v1540, %v1560
    %v1565 = vsel %vm1557, %v1546, %v1561
    %v1566 = vsel %vm1558, %v1552, %v1562
    %v1567 = vld [vmem:[%s15] sm:$0xf]
    %v1568 = vld [vmem:[%s17] sm:$0xff]
    %v1569 = vld [vmem:[%s17 + $0x8] sm:$0xff]
    %v1570 = vld [vmem:[%s17 + $0x10] sm:$0xff]
    %v1571 = vld [vmem:[%s17 + $0x18] sm:$0xff]
    %v1572 = vld [vmem:[%s17 + $0x20] sm:$0xff]
    %v1573 = vld [vmem:[%s17 + $0x28] sm:$0xff]
    %v1574 = vld [vmem:[%s17 + $0x30] sm:$0xff]
    %v1575 = vld [vmem:[%s17 + $0x38] sm:$0xff]
    %v1576 = vld [vmem:[%s19] sm:$0x1]
    %1578 = vset.pattern.permute.xlu0 0
    %1579 = vperm.xlu0 %1578, %v1563
    %v1580 = vpop.permute.xlu0 %1579
    %1583 = vset.pattern.permute.xlu0 0
    %1584 = vperm.xlu0 %1583, %v1564
    %v1585 = vpop.permute.xlu0 %1584
    %1588 = vset.pattern.permute.xlu0 0
    %1589 = vperm.xlu0 %1588, %v1565
    %v1590 = vpop.permute.xlu0 %1589
    %1593 = vset.pattern.permute.xlu0 0
    %1594 = vperm.xlu0 %1593, %v1566
    %v1595 = vpop.permute.xlu0 %1594
    %v1597 = vmul.f32 %v1580, %v1568
    %v1598 = vmul.f32 %v1585, %v1569
    %v1599 = vmul.f32 %v1590, %v1568
    %v1600 = vmul.f32 %v1595, %v1569
    %vm1601 = vcmask 64512
    %v1602 = vsel %vm1601, %v1597, 0.0
    %v1603 = vsel %vm1601, %v1598, 0.0
    %v1604 = vadd.f32 %v1602, %v1603
    %v1605 = vrot.slane %v1604, 4
    %v1606 = vadd.f32 %v1604, %v1605
    %v1607 = vrot.slane %v1606, 2
    %v1608 = vadd.f32 %v1606, %v1607
    %v1609 = vrot.slane %v1608, 1
    %v1610 = vadd.f32 %v1608, %v1609
    %v1611 = vsel %vm1601, %v1599, 0.0
    %v1612 = vsel %vm1601, %v1600, 0.0
    %v1613 = vadd.f32 %v1611, %v1612
    %v1614 = vrot.slane %v1613, 4
    %v1615 = vadd.f32 %v1613, %v1614
    %v1616 = vrot.slane %v1615, 2
    %v1617 = vadd.f32 %v1615, %v1616
    %v1618 = vrot.slane %v1617, 1
    %v1619 = vadd.f32 %v1617, %v1618
    %v1620 = vadd.f32 %v1610, 0.0
    %v1621 = vadd.f32 %v1619, 0.0
    %1622 = vset.pattern.permute.xlu0 1
    %1623 = vperm.xlu0 %1622, %v1563
    %v1624 = vpop.permute.xlu0 %1623
    %1626 = vset.pattern.permute.xlu0 1
    %1627 = vperm.xlu0 %1626, %v1564
    %v1628 = vpop.permute.xlu0 %1627
    %1630 = vset.pattern.permute.xlu0 1
    %1631 = vperm.xlu0 %1630, %v1565
    %v1632 = vpop.permute.xlu0 %1631
    %1634 = vset.pattern.permute.xlu0 1
    %1635 = vperm.xlu0 %1634, %v1566
    %v1636 = vpop.permute.xlu0 %1635
    %v1638 = vmul.f32 %v1624, %v1570
    %v1639 = vmul.f32 %v1628, %v1571
    %v1640 = vmul.f32 %v1632, %v1570
    %v1641 = vmul.f32 %v1636, %v1571
    %v1642 = vsel %vm1601, %v1638, 0.0
    %v1643 = vsel %vm1601, %v1639, 0.0
    %v1644 = vadd.f32 %v1642, %v1643
    %v1645 = vrot.slane %v1644, 4
    %v1646 = vadd.f32 %v1644, %v1645
    %v1647 = vrot.slane %v1646, 2
    %v1648 = vadd.f32 %v1646, %v1647
    %v1649 = vrot.slane %v1648, 1
    %v1650 = vadd.f32 %v1648, %v1649
    %v1651 = vsel %vm1601, %v1640, 0.0
    %v1652 = vsel %vm1601, %v1641, 0.0
    %v1653 = vadd.f32 %v1651, %v1652
    %v1654 = vrot.slane %v1653, 4
    %v1655 = vadd.f32 %v1653, %v1654
    %v1656 = vrot.slane %v1655, 2
    %v1657 = vadd.f32 %v1655, %v1656
    %v1658 = vrot.slane %v1657, 1
    %v1659 = vadd.f32 %v1657, %v1658
    %v1660 = vadd.f32 %v1620, %v1650
    %v1661 = vadd.f32 %v1621, %v1659
    %1662 = vset.pattern.permute.xlu0 2
    %1663 = vperm.xlu0 %1662, %v1563
    %v1664 = vpop.permute.xlu0 %1663
    %1666 = vset.pattern.permute.xlu0 2
    %1667 = vperm.xlu0 %1666, %v1564
    %v1668 = vpop.permute.xlu0 %1667
    %1670 = vset.pattern.permute.xlu0 2
    %1671 = vperm.xlu0 %1670, %v1565
    %v1672 = vpop.permute.xlu0 %1671
    %1674 = vset.pattern.permute.xlu0 2
    %1675 = vperm.xlu0 %1674, %v1566
    %v1676 = vpop.permute.xlu0 %1675
    %v1678 = vmul.f32 %v1664, %v1572
    %v1679 = vmul.f32 %v1668, %v1573
    %v1680 = vmul.f32 %v1672, %v1572
    %v1681 = vmul.f32 %v1676, %v1573
    %v1682 = vsel %vm1601, %v1678, 0.0
    %v1683 = vsel %vm1601, %v1679, 0.0
    %v1684 = vadd.f32 %v1682, %v1683
    %v1685 = vrot.slane %v1684, 4
    %v1686 = vadd.f32 %v1684, %v1685
    %v1687 = vrot.slane %v1686, 2
    %v1688 = vadd.f32 %v1686, %v1687
    %v1689 = vrot.slane %v1688, 1
    %v1690 = vadd.f32 %v1688, %v1689
    %v1691 = vsel %vm1601, %v1680, 0.0
    %v1692 = vsel %vm1601, %v1681, 0.0
    %v1693 = vadd.f32 %v1691, %v1692
    %v1694 = vrot.slane %v1693, 4
    %v1695 = vadd.f32 %v1693, %v1694
    %v1696 = vrot.slane %v1695, 2
    %v1697 = vadd.f32 %v1695, %v1696
    %v1698 = vrot.slane %v1697, 1
    %v1699 = vadd.f32 %v1697, %v1698
    %v1700 = vadd.f32 %v1660, %v1690
    %v1701 = vadd.f32 %v1661, %v1699
    %1702 = vset.pattern.permute.xlu0 3
    %1703 = vperm.xlu0 %1702, %v1563
    %v1704 = vpop.permute.xlu0 %1703
    %1706 = vset.pattern.permute.xlu0 3
    %1707 = vperm.xlu0 %1706, %v1564
    %v1708 = vpop.permute.xlu0 %1707
    %1710 = vset.pattern.permute.xlu0 3
    %1711 = vperm.xlu0 %1710, %v1565
    %v1712 = vpop.permute.xlu0 %1711
    %1714 = vset.pattern.permute.xlu0 3
    %1715 = vperm.xlu0 %1714, %v1566
    %v1716 = vpop.permute.xlu0 %1715
    %v1718 = vmul.f32 %v1704, %v1574
    %v1719 = vmul.f32 %v1708, %v1575
    %v1720 = vmul.f32 %v1712, %v1574
    %v1721 = vmul.f32 %v1716, %v1575
    %v1722 = vsel %vm1601, %v1718, 0.0
    %v1723 = vsel %vm1601, %v1719, 0.0
    %v1724 = vadd.f32 %v1722, %v1723
    %v1725 = vrot.slane %v1724, 4
    %v1726 = vadd.f32 %v1724, %v1725
    %v1727 = vrot.slane %v1726, 2
    %v1728 = vadd.f32 %v1726, %v1727
    %v1729 = vrot.slane %v1728, 1
    %v1730 = vadd.f32 %v1728, %v1729
    %v1731 = vsel %vm1601, %v1720, 0.0
    %v1732 = vsel %vm1601, %v1721, 0.0
    %v1733 = vadd.f32 %v1731, %v1732
    %v1734 = vrot.slane %v1733, 4
    %v1735 = vadd.f32 %v1733, %v1734
    %v1736 = vrot.slane %v1735, 2
    %v1737 = vadd.f32 %v1735, %v1736
    %v1738 = vrot.slane %v1737, 1
    %v1739 = vadd.f32 %v1737, %v1738
    %v1740 = vadd.f32 %v1700, %v1730
    %v1741 = vadd.f32 %v1701, %v1739
    %v1743 = vlaneseq
    %v1744 = vshrl.u32 %v1743, 7
    %v1745 = vsub.s32 0, %v1744
    %v1746 = vrot.slane %v1576, %v1745
    %v1750 = vsel %vm931, %v1741, %v1740
    %v1752 = vadd.f32 %v1746, %v1750
    %v1755 = vunpack.c.l.s4 1966171168
    %v1756 = vunpack.c.0.s8 %v1755
    %v1757 = vlaneseq
    %v1758 = vshrl.u32 %v1757, 7
    %v1759 = vsub.s32 %v1756, %v1758
    %v1760 = vrot.slane %v1752, %v1759
    %v1761 = vcombine.high %v1760, %v1760
    %v1763 = vunpack.c.l.s4 1966171168
    %v1764 = vunpack.c.0.s8 %v1763
    %v1765 = vlaneseq
    %v1766 = vshrl.u32 %v1765, 7
    %v1767 = vsub.s32 %v1764, %v1766
    %v1768 = vrot.slane %v1760, %v1767
    %v1770 = vunpack.c.l.s4 1966171168
    %v1771 = vunpack.c.0.s8 %v1770
    %v1772 = vlaneseq
    %v1773 = vshrl.u32 %v1772, 7
    %v1774 = vsub.s32 %v1771, %v1773
    %v1775 = vrot.slane %v1761, %v1774
    %v1776 = vlaneseq
    %v1777 = vshrl.u32 %v1776, 7
    %v1778 = vsub.s32 0, %v1777
    %v1779 = vrot.slane %v1768, %v1778
    %v1780 = vlaneseq
    %v1781 = vshrl.u32 %v1780, 7
    %v1782 = vsub.s32 0, %v1781
    %v1783 = vrot.slane %v1775, %v1782
    %v1786 = vsel %vm782, %v1563, 0
    %v1788 = vsel %vm782, %v1564, 0
    %v1790 = vsel %vm782, %v1565, 0
    %v1792 = vsel %vm782, %v1566, 0
    %v1795 = vsel %vm976, %v1567, 0
    %1797 = vmatprep.subr.mxu0 0.0
    %v1798 = vand.u32 %v1795, 4294901760
    %1799 = vmatpush1.msra.mxu0 %v1798
    %1800 = vmatprep.subr.mxu0 0.0
    %1801 = vmatpush1.msra.mxu0 0.0
    %1802 = vmatprep.subr.mxu0 0.0
    %1803 = vmatpush1.msra.mxu0 0.0
    %1804 = vmatprep.subr.mxu0 0.0
    %1805 = vmatpush1.msra.mxu0 0.0
    %1806 = vmatprep.subr.mxu0 0.0
    %1807 = vmatpush1.msra.mxu0 0.0
    %1808 = vmatprep.subr.mxu0 0.0
    %1809 = vmatpush1.msra.mxu0 0.0
    %1810 = vmatprep.subr.mxu0 0.0
    %1811 = vmatpush1.msra.mxu0 0.0
    %1812 = vmatprep.subr.mxu0 0.0
    %1813 = vmatpush1.msra.mxu0 0.0
    %1814 = vmatprep.subr.mxu0 0.0
    %1815 = vmatpush1.msra.mxu0 0.0
    %1816 = vmatprep.subr.mxu0 0.0
    %1817 = vmatpush1.msra.mxu0 0.0
    %1818 = vmatprep.subr.mxu0 0.0
    %1819 = vmatpush1.msra.mxu0 0.0
    %1820 = vmatprep.subr.mxu0 0.0
    %1821 = vmatpush1.msra.mxu0 0.0
    %1822 = vmatprep.subr.mxu0 0.0
    %1823 = vmatpush1.msra.mxu0 0.0
    %1824 = vmatprep.subr.mxu0 0.0
    %1825 = vmatpush1.msra.mxu0 0.0
    %1826 = vmatprep.subr.mxu0 0.0
    %1827 = vmatpush1.msra.mxu0 0.0
    %1828 = vmatprep.subr.mxu0 0.0
    %1829 = vmatpush1.msra.mxu0 0.0
    %1830 = vmatprep.subr.mxu0 0.0
    %1831 = vmatpush1.msra.mxu0 0.0
    %1832 = vmatprep.subr.mxu0 0.0
    %1833 = vmatpush1.msra.mxu0 0.0
    %1834 = vmatprep.subr.mxu0 0.0
    %1835 = vmatpush1.msra.mxu0 0.0
    %1836 = vmatprep.subr.mxu0 0.0
    %1837 = vmatpush1.msra.mxu0 0.0
    %1838 = vmatprep.subr.mxu0 0.0
    %1839 = vmatpush1.msra.mxu0 0.0
    %1840 = vmatprep.subr.mxu0 0.0
    %1841 = vmatpush1.msra.mxu0 0.0
    %1842 = vmatprep.subr.mxu0 0.0
    %1843 = vmatpush1.msra.mxu0 0.0
    %1844 = vmatprep.subr.mxu0 0.0
    %1845 = vmatpush1.msra.mxu0 0.0
    %1846 = vmatprep.subr.mxu0 0.0
    %1847 = vmatpush1.msra.mxu0 0.0
    %1848 = vmatprep.subr.mxu0 0.0
    %1849 = vmatpush1.msra.mxu0 0.0
    %1850 = vmatprep.subr.mxu0 0.0
    %1851 = vmatpush1.msra.mxu0 0.0
    %1852 = vmatprep.subr.mxu0 0.0
    %1853 = vmatpush1.msra.mxu0 0.0
    %1854 = vmatprep.subr.mxu0 0.0
    %1855 = vmatpush1.msra.mxu0 0.0
    %1856 = vmatprep.subr.mxu0 0.0
    %1857 = vmatpush1.msra.mxu0 0.0
    %1858 = vmatprep.subr.mxu0 0.0
    %1859 = vmatpush1.msra.mxu0 0.0
    %1860 = vmatprep.subr.mxu0 0.0
    %1861 = vmatpush1.msra.mxu0 0.0
    %1862 = vmatprep.mubr.f32.mxu0 0.0
    %v1863 = vand.u32 %v1786, 4294901760
    %v1864 = vsub.f32 %v1786, %v1863
    %v1865 = vand.u32 %v1864, 4294901760
    %v1866 = vsub.f32 %v1864, %v1865
    %v1867 = vand.u32 %v1866, 4294901760
    %1868 = vmatmul.mubr.f32.gmra.mrb[0].mxu0 %v1867
    %v1869 = vpop.f32.mrb[0].mxu0
    %v1870 = vadd.f32 %v1779, %v1869
    %v1871 = vpop.f32.mrb[0].mxu0
    %1872 = vmatprep.mubr.f32.mxu0 0.0
    %v1873 = vand.u32 %v1788, 4294901760
    %v1874 = vsub.f32 %v1788, %v1873
    %v1875 = vand.u32 %v1874, 4294901760
    %v1876 = vsub.f32 %v1874, %v1875
    %v1877 = vand.u32 %v1876, 4294901760
    %1878 = vmatmul.mubr.f32.gmra.mrb[0].mxu0 %v1877
    %v1879 = vpop.f32.mrb[0].mxu0
    %v1880 = vadd.f32 %v1779, %v1879
    %v1881 = vpop.f32.mrb[0].mxu0
    %1882 = vmatprep.mubr.f32.mxu0 0.0
    %v1883 = vand.u32 %v1790, 4294901760
    %v1884 = vsub.f32 %v1790, %v1883
    %v1885 = vand.u32 %v1884, 4294901760
    %v1886 = vsub.f32 %v1884, %v1885
    %v1887 = vand.u32 %v1886, 4294901760
    %1888 = vmatmul.mubr.f32.gmra.mrb[0].mxu0 %v1887
    %v1889 = vpop.f32.mrb[0].mxu0
    %v1890 = vadd.f32 %v1783, %v1889
    %v1891 = vpop.f32.mrb[0].mxu0
    %1892 = vmatprep.mubr.f32.mxu0 0.0
    %v1893 = vand.u32 %v1792, 4294901760
    %v1894 = vsub.f32 %v1792, %v1893
    %v1895 = vand.u32 %v1894, 4294901760
    %v1896 = vsub.f32 %v1894, %v1895
    %v1897 = vand.u32 %v1896, 4294901760
    %1898 = vmatmul.mubr.f32.gmra.mrb[0].mxu0 %v1897
    %v1899 = vpop.f32.mrb[0].mxu0
    %v1900 = vadd.f32 %v1783, %v1899
    %v1901 = vpop.f32.mrb[0].mxu0
    %1902 = vdwg.mxu0
    %1903 = vmatprep.subr.mxu0 0.0
    %v1904 = vand.u32 %v1795, 4294901760
    %v1905 = vsub.f32 %v1795, %v1904
    %v1906 = vand.u32 %v1905, 4294901760
    %v1907 = vsub.f32 %v1905, %v1906
    %v1908 = vand.u32 %v1907, 4294901760
    %1909 = vmatpush1.msra.mxu0 %v1908
    %1910 = vmatprep.subr.mxu0 0.0
    %1911 = vmatpush1.msra.mxu0 0.0
    %1912 = vmatprep.subr.mxu0 0.0
    %1913 = vmatpush1.msra.mxu0 0.0
    %1914 = vmatprep.subr.mxu0 0.0
    %1915 = vmatpush1.msra.mxu0 0.0
    %1916 = vmatprep.subr.mxu0 0.0
    %1917 = vmatpush1.msra.mxu0 0.0
    %1918 = vmatprep.subr.mxu0 0.0
    %1919 = vmatpush1.msra.mxu0 0.0
    %1920 = vmatprep.subr.mxu0 0.0
    %1921 = vmatpush1.msra.mxu0 0.0
    %1922 = vmatprep.subr.mxu0 0.0
    %1923 = vmatpush1.msra.mxu0 0.0
    %1924 = vmatprep.subr.mxu0 0.0
    %1925 = vmatpush1.msra.mxu0 0.0
    %1926 = vmatprep.subr.mxu0 0.0
    %1927 = vmatpush1.msra.mxu0 0.0
    %1928 = vmatprep.subr.mxu0 0.0
    %1929 = vmatpush1.msra.mxu0 0.0
    %1930 = vmatprep.subr.mxu0 0.0
    %1931 = vmatpush1.msra.mxu0 0.0
    %1932 = vmatprep.subr.mxu0 0.0
    %1933 = vmatpush1.msra.mxu0 0.0
    %1934 = vmatprep.subr.mxu0 0.0
    %1935 = vmatpush1.msra.mxu0 0.0
    %1936 = vmatprep.subr.mxu0 0.0
    %1937 = vmatpush1.msra.mxu0 0.0
    %1938 = vmatprep.subr.mxu0 0.0
    %1939 = vmatpush1.msra.mxu0 0.0
    %1940 = vmatprep.subr.mxu0 0.0
    %1941 = vmatpush1.msra.mxu0 0.0
    %1942 = vmatprep.subr.mxu0 0.0
    %1943 = vmatpush1.msra.mxu0 0.0
    %1944 = vmatprep.subr.mxu0 0.0
    %1945 = vmatpush1.msra.mxu0 0.0
    %1946 = vmatprep.subr.mxu0 0.0
    %1947 = vmatpush1.msra.mxu0 0.0
    %1948 = vmatprep.subr.mxu0 0.0
    %1949 = vmatpush1.msra.mxu0 0.0
    %1950 = vmatprep.subr.mxu0 0.0
    %1951 = vmatpush1.msra.mxu0 0.0
    %1952 = vmatprep.subr.mxu0 0.0
    %1953 = vmatpush1.msra.mxu0 0.0
    %1954 = vmatprep.subr.mxu0 0.0
    %1955 = vmatpush1.msra.mxu0 0.0
    %1956 = vmatprep.subr.mxu0 0.0
    %1957 = vmatpush1.msra.mxu0 0.0
    %1958 = vmatprep.subr.mxu0 0.0
    %1959 = vmatpush1.msra.mxu0 0.0
    %1960 = vmatprep.subr.mxu0 0.0
    %1961 = vmatpush1.msra.mxu0 0.0
    %1962 = vmatprep.subr.mxu0 0.0
    %1963 = vmatpush1.msra.mxu0 0.0
    %1964 = vmatprep.subr.mxu0 0.0
    %1965 = vmatpush1.msra.mxu0 0.0
    %1966 = vmatprep.subr.mxu0 0.0
    %1967 = vmatpush1.msra.mxu0 0.0
    %1968 = vmatprep.subr.mxu0 0.0
    %1969 = vmatpush1.msra.mxu0 0.0
    %1970 = vmatprep.subr.mxu0 0.0
    %1971 = vmatpush1.msra.mxu0 0.0
    %1972 = vmatprep.mubr.f32.mxu0 0.0
    %v1973 = vand.u32 %v1786, 4294901760
    %1974 = vmatmul.mubr.f32.gmra.mrb[0].mxu0 %v1973
    %v1975 = vpop.f32.mrb[0].mxu0
    %v1976 = vadd.f32 %v1870, %v1975
    %v1977 = vpop.f32.mrb[0].mxu0
    %1978 = vmatprep.mubr.f32.mxu0 0.0
    %v1979 = vand.u32 %v1788, 4294901760
    %1980 = vmatmul.mubr.f32.gmra.mrb[0].mxu0 %v1979
    %v1981 = vpop.f32.mrb[0].mxu0
    %v1982 = vadd.f32 %v1880, %v1981
    %v1983 = vpop.f32.mrb[0].mxu0
    %1984 = vmatprep.mubr.f32.mxu0 0.0
    %v1985 = vand.u32 %v1790, 4294901760
    %1986 = vmatmul.mubr.f32.gmra.mrb[0].mxu0 %v1985
    %v1987 = vpop.f32.mrb[0].mxu0
    %v1988 = vadd.f32 %v1890, %v1987
    %v1989 = vpop.f32.mrb[0].mxu0
    %1990 = vmatprep.mubr.f32.mxu0 0.0
    %v1991 = vand.u32 %v1792, 4294901760
    %1992 = vmatmul.mubr.f32.gmra.mrb[0].mxu0 %v1991
    %v1993 = vpop.f32.mrb[0].mxu0
    %v1994 = vadd.f32 %v1900, %v1993
    %v1995 = vpop.f32.mrb[0].mxu0
    %1996 = vdwg.mxu0
    %1997 = vmatprep.subr.mxu0 0.0
    %v1998 = vand.u32 %v1795, 4294901760
    %v1999 = vsub.f32 %v1795, %v1998
    %2000 = vmatpush1.msra.mxu0 %v1999
    %2001 = vmatprep.subr.mxu0 0.0
    %2002 = vmatpush1.msra.mxu0 0.0
    %2003 = vmatprep.subr.mxu0 0.0
    %2004 = vmatpush1.msra.mxu0 0.0
    %2005 = vmatprep.subr.mxu0 0.0
    %2006 = vmatpush1.msra.mxu0 0.0
    %2007 = vmatprep.subr.mxu0 0.0
    %2008 = vmatpush1.msra.mxu0 0.0
    %2009 = vmatprep.subr.mxu0 0.0
    %2010 = vmatpush1.msra.mxu0 0.0
    %2011 = vmatprep.subr.mxu0 0.0
    %2012 = vmatpush1.msra.mxu0 0.0
    %2013 = vmatprep.subr.mxu0 0.0
    %2014 = vmatpush1.msra.mxu0 0.0
    %2015 = vmatprep.subr.mxu0 0.0
    %2016 = vmatpush1.msra.mxu0 0.0
    %2017 = vmatprep.subr.mxu0 0.0
    %2018 = vmatpush1.msra.mxu0 0.0
    %2019 = vmatprep.subr.mxu0 0.0
    %2020 = vmatpush1.msra.mxu0 0.0
    %2021 = vmatprep.subr.mxu0 0.0
    %2022 = vmatpush1.msra.mxu0 0.0
    %2023 = vmatprep.subr.mxu0 0.0
    %2024 = vmatpush1.msra.mxu0 0.0
    %2025 = vmatprep.subr.mxu0 0.0
    %2026 = vmatpush1.msra.mxu0 0.0
    %2027 = vmatprep.subr.mxu0 0.0
    %2028 = vmatpush1.msra.mxu0 0.0
    %2029 = vmatprep.subr.mxu0 0.0
    %2030 = vmatpush1.msra.mxu0 0.0
    %2031 = vmatprep.subr.mxu0 0.0
    %2032 = vmatpush1.msra.mxu0 0.0
    %2033 = vmatprep.subr.mxu0 0.0
    %2034 = vmatpush1.msra.mxu0 0.0
    %2035 = vmatprep.subr.mxu0 0.0
    %2036 = vmatpush1.msra.mxu0 0.0
    %2037 = vmatprep.subr.mxu0 0.0
    %2038 = vmatpush1.msra.mxu0 0.0
    %2039 = vmatprep.subr.mxu0 0.0
    %2040 = vmatpush1.msra.mxu0 0.0
    %2041 = vmatprep.subr.mxu0 0.0
    %2042 = vmatpush1.msra.mxu0 0.0
    %2043 = vmatprep.subr.mxu0 0.0
    %2044 = vmatpush1.msra.mxu0 0.0
    %2045 = vmatprep.subr.mxu0 0.0
    %2046 = vmatpush1.msra.mxu0 0.0
    %2047 = vmatprep.subr.mxu0 0.0
    %2048 = vmatpush1.msra.mxu0 0.0
    %2049 = vmatprep.subr.mxu0 0.0
    %2050 = vmatpush1.msra.mxu0 0.0
    %2051 = vmatprep.subr.mxu0 0.0
    %2052 = vmatpush1.msra.mxu0 0.0
    %2053 = vmatprep.subr.mxu0 0.0
    %2054 = vmatpush1.msra.mxu0 0.0
    %2055 = vmatprep.subr.mxu0 0.0
    %2056 = vmatpush1.msra.mxu0 0.0
    %2057 = vmatprep.subr.mxu0 0.0
    %2058 = vmatpush1.msra.mxu0 0.0
    %2059 = vmatprep.subr.mxu0 0.0
    %2060 = vmatpush1.msra.mxu0 0.0
    %2061 = vmatprep.subr.mxu0 0.0
    %2062 = vmatpush1.msra.mxu0 0.0
    %2063 = vmatprep.mubr.f32.mxu0 0.0
    %v2064 = vand.u32 %v1786, 4294901760
    %v2065 = vsub.f32 %v1786, %v2064
    %2066 = vmatmul.mubr.f32.gmra.mrb[0].mxu0 %v2065
    %v2067 = vpop.f32.mrb[0].mxu0
    %v2068 = vadd.f32 %v1976, %v2067
    %v2069 = vpop.f32.mrb[0].mxu0
    %2070 = vmatprep.mubr.f32.mxu0 0.0
    %v2071 = vand.u32 %v1788, 4294901760
    %v2072 = vsub.f32 %v1788, %v2071
    %2073 = vmatmul.mubr.f32.gmra.mrb[0].mxu0 %v2072
    %v2074 = vpop.f32.mrb[0].mxu0
    %v2075 = vadd.f32 %v1982, %v2074
    %v2076 = vpop.f32.mrb[0].mxu0
    %2077 = vmatprep.mubr.f32.mxu0 0.0
    %v2078 = vand.u32 %v1790, 4294901760
    %v2079 = vsub.f32 %v1790, %v2078
    %2080 = vmatmul.mubr.f32.gmra.mrb[0].mxu0 %v2079
    %v2081 = vpop.f32.mrb[0].mxu0
    %v2082 = vadd.f32 %v1988, %v2081
    %v2083 = vpop.f32.mrb[0].mxu0
    %2084 = vmatprep.mubr.f32.mxu0 0.0
    %v2085 = vand.u32 %v1792, 4294901760
    %v2086 = vsub.f32 %v1792, %v2085
    %2087 = vmatmul.mubr.f32.gmra.mrb[0].mxu0 %v2086
    %v2088 = vpop.f32.mrb[0].mxu0
    %v2089 = vadd.f32 %v1994, %v2088
    %v2090 = vpop.f32.mrb[0].mxu0
    %2091 = vdwg.mxu0
    %2092 = vmatprep.subr.mxu0 0.0
    %v2093 = vand.u32 %v1795, 4294901760
    %2094 = vmatpush1.msra.mxu0 %v2093
    %2095 = vmatprep.subr.mxu0 0.0
    %2096 = vmatpush1.msra.mxu0 0.0
    %2097 = vmatprep.subr.mxu0 0.0
    %2098 = vmatpush1.msra.mxu0 0.0
    %2099 = vmatprep.subr.mxu0 0.0
    %2100 = vmatpush1.msra.mxu0 0.0
    %2101 = vmatprep.subr.mxu0 0.0
    %2102 = vmatpush1.msra.mxu0 0.0
    %2103 = vmatprep.subr.mxu0 0.0
    %2104 = vmatpush1.msra.mxu0 0.0
    %2105 = vmatprep.subr.mxu0 0.0
    %2106 = vmatpush1.msra.mxu0 0.0
    %2107 = vmatprep.subr.mxu0 0.0
    %2108 = vmatpush1.msra.mxu0 0.0
    %2109 = vmatprep.subr.mxu0 0.0
    %2110 = vmatpush1.msra.mxu0 0.0
    %2111 = vmatprep.subr.mxu0 0.0
    %2112 = vmatpush1.msra.mxu0 0.0
    %2113 = vmatprep.subr.mxu0 0.0
    %2114 = vmatpush1.msra.mxu0 0.0
    %2115 = vmatprep.subr.mxu0 0.0
    %2116 = vmatpush1.msra.mxu0 0.0
    %2117 = vmatprep.subr.mxu0 0.0
    %2118 = vmatpush1.msra.mxu0 0.0
    %2119 = vmatprep.subr.mxu0 0.0
    %2120 = vmatpush1.msra.mxu0 0.0
    %2121 = vmatprep.subr.mxu0 0.0
    %2122 = vmatpush1.msra.mxu0 0.0
    %2123 = vmatprep.subr.mxu0 0.0
    %2124 = vmatpush1.msra.mxu0 0.0
    %2125 = vmatprep.subr.mxu0 0.0
    %2126 = vmatpush1.msra.mxu0 0.0
    %2127 = vmatprep.subr.mxu0 0.0
    %2128 = vmatpush1.msra.mxu0 0.0
    %2129 = vmatprep.subr.mxu0 0.0
    %2130 = vmatpush1.msra.mxu0 0.0
    %2131 = vmatprep.subr.mxu0 0.0
    %2132 = vmatpush1.msra.mxu0 0.0
    %2133 = vmatprep.subr.mxu0 0.0
    %2134 = vmatpush1.msra.mxu0 0.0
    %2135 = vmatprep.subr.mxu0 0.0
    %2136 = vmatpush1.msra.mxu0 0.0
    %2137 = vmatprep.subr.mxu0 0.0
    %2138 = vmatpush1.msra.mxu0 0.0
    %2139 = vmatprep.subr.mxu0 0.0
    %2140 = vmatpush1.msra.mxu0 0.0
    %2141 = vmatprep.subr.mxu0 0.0
    %2142 = vmatpush1.msra.mxu0 0.0
    %2143 = vmatprep.subr.mxu0 0.0
    %2144 = vmatpush1.msra.mxu0 0.0
    %2145 = vmatprep.subr.mxu0 0.0
    %2146 = vmatpush1.msra.mxu0 0.0
    %2147 = vmatprep.subr.mxu0 0.0
    %2148 = vmatpush1.msra.mxu0 0.0
    %2149 = vmatprep.subr.mxu0 0.0
    %2150 = vmatpush1.msra.mxu0 0.0
    %2151 = vmatprep.subr.mxu0 0.0
    %2152 = vmatpush1.msra.mxu0 0.0
    %2153 = vmatprep.subr.mxu0 0.0
    %2154 = vmatpush1.msra.mxu0 0.0
    %2155 = vmatprep.subr.mxu0 0.0
    %2156 = vmatpush1.msra.mxu0 0.0
    %2157 = vmatprep.mubr.f32.mxu0 0.0
    %v2158 = vand.u32 %v1786, 4294901760
    %v2159 = vsub.f32 %v1786, %v2158
    %v2160 = vand.u32 %v2159, 4294901760
    %2161 = vmatmul.mubr.f32.gmra.mrb[0].mxu0 %v2160
    %v2162 = vpop.f32.mrb[0].mxu0
    %v2163 = vadd.f32 %v2068, %v2162
    %v2164 = vpop.f32.mrb[0].mxu0
    %2165 = vmatprep.mubr.f32.mxu0 0.0
    %v2166 = vand.u32 %v1788, 4294901760
    %v2167 = vsub.f32 %v1788, %v2166
    %v2168 = vand.u32 %v2167, 4294901760
    %2169 = vmatmul.mubr.f32.gmra.mrb[0].mxu0 %v2168
    %v2170 = vpop.f32.mrb[0].mxu0
    %v2171 = vadd.f32 %v2075, %v2170
    %v2172 = vpop.f32.mrb[0].mxu0
    %2173 = vmatprep.mubr.f32.mxu0 0.0
    %v2174 = vand.u32 %v1790, 4294901760
    %v2175 = vsub.f32 %v1790, %v2174
    %v2176 = vand.u32 %v2175, 4294901760
    %2177 = vmatmul.mubr.f32.gmra.mrb[0].mxu0 %v2176
    %v2178 = vpop.f32.mrb[0].mxu0
    %v2179 = vadd.f32 %v2082, %v2178
    %v2180 = vpop.f32.mrb[0].mxu0
    %2181 = vmatprep.mubr.f32.mxu0 0.0
    %v2182 = vand.u32 %v1792, 4294901760
    %v2183 = vsub.f32 %v1792, %v2182
    %v2184 = vand.u32 %v2183, 4294901760
    %2185 = vmatmul.mubr.f32.gmra.mrb[0].mxu0 %v2184
    %v2186 = vpop.f32.mrb[0].mxu0
    %v2187 = vadd.f32 %v2089, %v2186
    %v2188 = vpop.f32.mrb[0].mxu0
    %2189 = vdwg.mxu0
    %2190 = vmatprep.subr.mxu0 0.0
    %v2191 = vand.u32 %v1795, 4294901760
    %v2192 = vsub.f32 %v1795, %v2191
    %v2193 = vand.u32 %v2192, 4294901760
    %2194 = vmatpush1.msra.mxu0 %v2193
    %2195 = vmatprep.subr.mxu0 0.0
    %2196 = vmatpush1.msra.mxu0 0.0
    %2197 = vmatprep.subr.mxu0 0.0
    %2198 = vmatpush1.msra.mxu0 0.0
    %2199 = vmatprep.subr.mxu0 0.0
    %2200 = vmatpush1.msra.mxu0 0.0
    %2201 = vmatprep.subr.mxu0 0.0
    %2202 = vmatpush1.msra.mxu0 0.0
    %2203 = vmatprep.subr.mxu0 0.0
    %2204 = vmatpush1.msra.mxu0 0.0
    %2205 = vmatprep.subr.mxu0 0.0
    %2206 = vmatpush1.msra.mxu0 0.0
    %2207 = vmatprep.subr.mxu0 0.0
    %2208 = vmatpush1.msra.mxu0 0.0
    %2209 = vmatprep.subr.mxu0 0.0
    %2210 = vmatpush1.msra.mxu0 0.0
    %2211 = vmatprep.subr.mxu0 0.0
    %2212 = vmatpush1.msra.mxu0 0.0
    %2213 = vmatprep.subr.mxu0 0.0
    %2214 = vmatpush1.msra.mxu0 0.0
    %2215 = vmatprep.subr.mxu0 0.0
    %2216 = vmatpush1.msra.mxu0 0.0
    %2217 = vmatprep.subr.mxu0 0.0
    %2218 = vmatpush1.msra.mxu0 0.0
    %2219 = vmatprep.subr.mxu0 0.0
    %2220 = vmatpush1.msra.mxu0 0.0
    %2221 = vmatprep.subr.mxu0 0.0
    %2222 = vmatpush1.msra.mxu0 0.0
    %2223 = vmatprep.subr.mxu0 0.0
    %2224 = vmatpush1.msra.mxu0 0.0
    %2225 = vmatprep.subr.mxu0 0.0
    %2226 = vmatpush1.msra.mxu0 0.0
    %2227 = vmatprep.subr.mxu0 0.0
    %2228 = vmatpush1.msra.mxu0 0.0
    %2229 = vmatprep.subr.mxu0 0.0
    %2230 = vmatpush1.msra.mxu0 0.0
    %2231 = vmatprep.subr.mxu0 0.0
    %2232 = vmatpush1.msra.mxu0 0.0
    %2233 = vmatprep.subr.mxu0 0.0
    %2234 = vmatpush1.msra.mxu0 0.0
    %2235 = vmatprep.subr.mxu0 0.0
    %2236 = vmatpush1.msra.mxu0 0.0
    %2237 = vmatprep.subr.mxu0 0.0
    %2238 = vmatpush1.msra.mxu0 0.0
    %2239 = vmatprep.subr.mxu0 0.0
    %2240 = vmatpush1.msra.mxu0 0.0
    %2241 = vmatprep.subr.mxu0 0.0
    %2242 = vmatpush1.msra.mxu0 0.0
    %2243 = vmatprep.subr.mxu0 0.0
    %2244 = vmatpush1.msra.mxu0 0.0
    %2245 = vmatprep.subr.mxu0 0.0
    %2246 = vmatpush1.msra.mxu0 0.0
    %2247 = vmatprep.subr.mxu0 0.0
    %2248 = vmatpush1.msra.mxu0 0.0
    %2249 = vmatprep.subr.mxu0 0.0
    %2250 = vmatpush1.msra.mxu0 0.0
    %2251 = vmatprep.subr.mxu0 0.0
    %2252 = vmatpush1.msra.mxu0 0.0
    %2253 = vmatprep.subr.mxu0 0.0
    %2254 = vmatpush1.msra.mxu0 0.0
    %2255 = vmatprep.subr.mxu0 0.0
    %2256 = vmatpush1.msra.mxu0 0.0
    %2257 = vmatprep.mubr.f32.mxu0 0.0
    %v2258 = vand.u32 %v1786, 4294901760
    %2259 = vmatmul.mubr.f32.gmra.mrb[0].mxu0 %v2258
    %v2260 = vpop.f32.mrb[0].mxu0
    %v2261 = vadd.f32 %v2163, %v2260
    %v2262 = vpop.f32.mrb[0].mxu0
    %2263 = vmatprep.mubr.f32.mxu0 0.0
    %v2264 = vand.u32 %v1788, 4294901760
    %2265 = vmatmul.mubr.f32.gmra.mrb[0].mxu0 %v2264
    %v2266 = vpop.f32.mrb[0].mxu0
    %v2267 = vadd.f32 %v2171, %v2266
    %v2268 = vpop.f32.mrb[0].mxu0
    %2269 = vmatprep.mubr.f32.mxu0 0.0
    %v2270 = vand.u32 %v1790, 4294901760
    %2271 = vmatmul.mubr.f32.gmra.mrb[0].mxu0 %v2270
    %v2272 = vpop.f32.mrb[0].mxu0
    %v2273 = vadd.f32 %v2179, %v2272
    %v2274 = vpop.f32.mrb[0].mxu0
    %2275 = vmatprep.mubr.f32.mxu0 0.0
    %v2276 = vand.u32 %v1792, 4294901760
    %2277 = vmatmul.mubr.f32.gmra.mrb[0].mxu0 %v2276
    %v2278 = vpop.f32.mrb[0].mxu0
    %v2279 = vadd.f32 %v2187, %v2278
    %v2280 = vpop.f32.mrb[0].mxu0
    %2281 = vdwg.mxu0
    %2282 = vmatprep.subr.mxu0 0.0
    %v2283 = vand.u32 %v1795, 4294901760
    %2284 = vmatpush1.msra.mxu0 %v2283
    %2285 = vmatprep.subr.mxu0 0.0
    %2286 = vmatpush1.msra.mxu0 0.0
    %2287 = vmatprep.subr.mxu0 0.0
    %2288 = vmatpush1.msra.mxu0 0.0
    %2289 = vmatprep.subr.mxu0 0.0
    %2290 = vmatpush1.msra.mxu0 0.0
    %2291 = vmatprep.subr.mxu0 0.0
    %2292 = vmatpush1.msra.mxu0 0.0
    %2293 = vmatprep.subr.mxu0 0.0
    %2294 = vmatpush1.msra.mxu0 0.0
    %2295 = vmatprep.subr.mxu0 0.0
    %2296 = vmatpush1.msra.mxu0 0.0
    %2297 = vmatprep.subr.mxu0 0.0
    %2298 = vmatpush1.msra.mxu0 0.0
    %2299 = vmatprep.subr.mxu0 0.0
    %2300 = vmatpush1.msra.mxu0 0.0
    %2301 = vmatprep.subr.mxu0 0.0
    %2302 = vmatpush1.msra.mxu0 0.0
    %2303 = vmatprep.subr.mxu0 0.0
    %2304 = vmatpush1.msra.mxu0 0.0
    %2305 = vmatprep.subr.mxu0 0.0
    %2306 = vmatpush1.msra.mxu0 0.0
    %2307 = vmatprep.subr.mxu0 0.0
    %2308 = vmatpush1.msra.mxu0 0.0
    %2309 = vmatprep.subr.mxu0 0.0
    %2310 = vmatpush1.msra.mxu0 0.0
    %2311 = vmatprep.subr.mxu0 0.0
    %2312 = vmatpush1.msra.mxu0 0.0
    %2313 = vmatprep.subr.mxu0 0.0
    %2314 = vmatpush1.msra.mxu0 0.0
    %2315 = vmatprep.subr.mxu0 0.0
    %2316 = vmatpush1.msra.mxu0 0.0
    %2317 = vmatprep.subr.mxu0 0.0
    %2318 = vmatpush1.msra.mxu0 0.0
    %2319 = vmatprep.subr.mxu0 0.0
    %2320 = vmatpush1.msra.mxu0 0.0
    %2321 = vmatprep.subr.mxu0 0.0
    %2322 = vmatpush1.msra.mxu0 0.0
    %2323 = vmatprep.subr.mxu0 0.0
    %2324 = vmatpush1.msra.mxu0 0.0
    %2325 = vmatprep.subr.mxu0 0.0
    %2326 = vmatpush1.msra.mxu0 0.0
    %2327 = vmatprep.subr.mxu0 0.0
    %2328 = vmatpush1.msra.mxu0 0.0
    %2329 = vmatprep.subr.mxu0 0.0
    %2330 = vmatpush1.msra.mxu0 0.0
    %2331 = vmatprep.subr.mxu0 0.0
    %2332 = vmatpush1.msra.mxu0 0.0
    %2333 = vmatprep.subr.mxu0 0.0
    %2334 = vmatpush1.msra.mxu0 0.0
    %2335 = vmatprep.subr.mxu0 0.0
    %2336 = vmatpush1.msra.mxu0 0.0
    %2337 = vmatprep.subr.mxu0 0.0
    %2338 = vmatpush1.msra.mxu0 0.0
    %2339 = vmatprep.subr.mxu0 0.0
    %2340 = vmatpush1.msra.mxu0 0.0
    %2341 = vmatprep.subr.mxu0 0.0
    %2342 = vmatpush1.msra.mxu0 0.0
    %2343 = vmatprep.subr.mxu0 0.0
    %2344 = vmatpush1.msra.mxu0 0.0
    %2345 = vmatprep.subr.mxu0 0.0
    %2346 = vmatpush1.msra.mxu0 0.0
    %2347 = vmatprep.mubr.f32.mxu0 0.0
    %v2348 = vand.u32 %v1786, 4294901760
    %2349 = vmatmul.mubr.f32.gmra.mrb[0].mxu0 %v2348
    %v2350 = vpop.f32.mrb[0].mxu0
    %v2351 = vadd.f32 %v2261, %v2350
    %v2352 = vpop.f32.mrb[0].mxu0
    %2353 = vmatprep.mubr.f32.mxu0 0.0
    %v2354 = vand.u32 %v1788, 4294901760
    %2355 = vmatmul.mubr.f32.gmra.mrb[0].mxu0 %v2354
    %v2356 = vpop.f32.mrb[0].mxu0
    %v2357 = vadd.f32 %v2267, %v2356
    %v2358 = vpop.f32.mrb[0].mxu0
    %2359 = vmatprep.mubr.f32.mxu0 0.0
    %v2360 = vand.u32 %v1790, 4294901760
    %2361 = vmatmul.mubr.f32.gmra.mrb[0].mxu0 %v2360
    %v2362 = vpop.f32.mrb[0].mxu0
    %v2363 = vadd.f32 %v2273, %v2362
    %v2364 = vpop.f32.mrb[0].mxu0
    %2365 = vmatprep.mubr.f32.mxu0 0.0
    %v2366 = vand.u32 %v1792, 4294901760
    %2367 = vmatmul.mubr.f32.gmra.mrb[0].mxu0 %v2366
    %v2368 = vpop.f32.mrb[0].mxu0
    %v2369 = vadd.f32 %v2279, %v2368
    %v2370 = vpop.f32.mrb[0].mxu0
    %2371 = vdwg.mxu0
    %vm2372 = vcmp.ge.f32.partialorder %v2351, 0.0
    %vm2373 = vcmp.ge.f32.partialorder %v2357, 0.0
    %vm2374 = vcmp.ge.f32.partialorder %v2363, 0.0
    %vm2375 = vcmp.ge.f32.partialorder %v2369, 0.0
    %v2376 = vmul.f32 %v2351, 0.33
    %v2377 = vmul.f32 %v2357, 0.33
    %v2378 = vmul.f32 %v2363, 0.33
    %v2379 = vmul.f32 %v2369, 0.33
    %v2380 = vsel %vm2372, %v2351, %v2376
    %v2381 = vsel %vm2373, %v2357, %v2377
    %v2382 = vsel %vm2374, %v2363, %v2378
    %v2383 = vsel %vm2375, %v2369, %v2379
    %v2384 = vld [vmem:[%s21] sm:$0xf]
    %v2385 = vld [vmem:[%s23] sm:$0xff]
    %v2386 = vld [vmem:[%s23 + $0x8] sm:$0xff]
    %v2387 = vld [vmem:[%s23 + $0x10] sm:$0xff]
    %v2388 = vld [vmem:[%s23 + $0x18] sm:$0xff]
    %v2389 = vld [vmem:[%s23 + $0x20] sm:$0xff]
    %v2390 = vld [vmem:[%s23 + $0x28] sm:$0xff]
    %v2391 = vld [vmem:[%s23 + $0x30] sm:$0xff]
    %v2392 = vld [vmem:[%s23 + $0x38] sm:$0xff]
    %v2393 = vld [vmem:[%s25] sm:$0x1]
    %v2394 = vmul.f32 %v761, %v2385
    %v2395 = vmul.f32 %v766, %v2386
    %v2396 = vmul.f32 %v771, %v2385
    %v2397 = vmul.f32 %v776, %v2386
    %v2398 = vsel %vm1601, %v2394, 0.0
    %v2399 = vsel %vm1601, %v2395, 0.0
    %v2400 = vadd.f32 %v2398, %v2399
    %v2401 = vrot.slane %v2400, 4
    %v2402 = vadd.f32 %v2400, %v2401
    %v2403 = vrot.slane %v2402, 2
    %v2404 = vadd.f32 %v2402, %v2403
    %v2405 = vrot.slane %v2404, 1
    %v2406 = vadd.f32 %v2404, %v2405
    %v2407 = vsel %vm1601, %v2396, 0.0
    %v2408 = vsel %vm1601, %v2397, 0.0
    %v2409 = vadd.f32 %v2407, %v2408
    %v2410 = vrot.slane %v2409, 4
    %v2411 = vadd.f32 %v2409, %v2410
    %v2412 = vrot.slane %v2411, 2
    %v2413 = vadd.f32 %v2411, %v2412
    %v2414 = vrot.slane %v2413, 1
    %v2415 = vadd.f32 %v2413, %v2414
    %v2416 = vadd.f32 %v2406, 0.0
    %v2417 = vadd.f32 %v2415, 0.0
    %v2418 = vmul.f32 %v805, %v2387
    %v2419 = vmul.f32 %v809, %v2388
    %v2420 = vmul.f32 %v813, %v2387
    %v2421 = vmul.f32 %v817, %v2388
    %v2422 = vsel %vm1601, %v2418, 0.0
    %v2423 = vsel %vm1601, %v2419, 0.0
    %v2424 = vadd.f32 %v2422, %v2423
    %v2425 = vrot.slane %v2424, 4
    %v2426 = vadd.f32 %v2424, %v2425
    %v2427 = vrot.slane %v2426, 2
    %v2428 = vadd.f32 %v2426, %v2427
    %v2429 = vrot.slane %v2428, 1
    %v2430 = vadd.f32 %v2428, %v2429
    %v2431 = vsel %vm1601, %v2420, 0.0
    %v2432 = vsel %vm1601, %v2421, 0.0
    %v2433 = vadd.f32 %v2431, %v2432
    %v2434 = vrot.slane %v2433, 4
    %v2435 = vadd.f32 %v2433, %v2434
    %v2436 = vrot.slane %v2435, 2
    %v2437 = vadd.f32 %v2435, %v2436
    %v2438 = vrot.slane %v2437, 1
    %v2439 = vadd.f32 %v2437, %v2438
    %v2440 = vadd.f32 %v2416, %v2430
    %v2441 = vadd.f32 %v2417, %v2439
    %v2442 = vmul.f32 %v845, %v2389
    %v2443 = vmul.f32 %v849, %v2390
    %v2444 = vmul.f32 %v853, %v2389
    %v2445 = vmul.f32 %v857, %v2390
    %v2446 = vsel %vm1601, %v2442, 0.0
    %v2447 = vsel %vm1601, %v2443, 0.0
    %v2448 = vadd.f32 %v2446, %v2447
    %v2449 = vrot.slane %v2448, 4
    %v2450 = vadd.f32 %v2448, %v2449
    %v2451 = vrot.slane %v2450, 2
    %v2452 = vadd.f32 %v2450, %v2451
    %v2453 = vrot.slane %v2452, 1
    %v2454 = vadd.f32 %v2452, %v2453
    %v2455 = vsel %vm1601, %v2444, 0.0
    %v2456 = vsel %vm1601, %v2445, 0.0
    %v2457 = vadd.f32 %v2455, %v2456
    %v2458 = vrot.slane %v2457, 4
    %v2459 = vadd.f32 %v2457, %v2458
    %v2460 = vrot.slane %v2459, 2
    %v2461 = vadd.f32 %v2459, %v2460
    %v2462 = vrot.slane %v2461, 1
    %v2463 = vadd.f32 %v2461, %v2462
    %v2464 = vadd.f32 %v2440, %v2454
    %v2465 = vadd.f32 %v2441, %v2463
    %v2466 = vmul.f32 %v885, %v2391
    %v2467 = vmul.f32 %v889, %v2392
    %v2468 = vmul.f32 %v893, %v2391
    %v2469 = vmul.f32 %v897, %v2392
    %v2470 = vsel %vm1601, %v2466, 0.0
    %v2471 = vsel %vm1601, %v2467, 0.0
    %v2472 = vadd.f32 %v2470, %v2471
    %v2473 = vrot.slane %v2472, 4
    %v2474 = vadd.f32 %v2472, %v2473
    %v2475 = vrot.slane %v2474, 2
    %v2476 = vadd.f32 %v2474, %v2475
    %v2477 = vrot.slane %v2476, 1
    %v2478 = vadd.f32 %v2476, %v2477
    %v2479 = vsel %vm1601, %v2468, 0.0
    %v2480 = vsel %vm1601, %v2469, 0.0
    %v2481 = vadd.f32 %v2479, %v2480
    %v2482 = vrot.slane %v2481, 4
    %v2483 = vadd.f32 %v2481, %v2482
    %v2484 = vrot.slane %v2483, 2
    %v2485 = vadd.f32 %v2483, %v2484
    %v2486 = vrot.slane %v2485, 1
    %v2487 = vadd.f32 %v2485, %v2486
    %v2488 = vadd.f32 %v2464, %v2478
    %v2489 = vadd.f32 %v2465, %v2487
    %v2491 = vlaneseq
    %v2492 = vshrl.u32 %v2491, 7
    %v2493 = vsub.s32 0, %v2492
    %v2494 = vrot.slane %v2393, %v2493
    %v2498 = vsel %vm931, %v2489, %v2488
    %v2500 = vadd.f32 %v2494, %v2498
    %v2503 = vunpack.c.l.s4 1966171168
    %v2504 = vunpack.c.0.s8 %v2503
    %v2505 = vlaneseq
    %v2506 = vshrl.u32 %v2505, 7
    %v2507 = vsub.s32 %v2504, %v2506
    %v2508 = vrot.slane %v2500, %v2507
    %v2509 = vcombine.high %v2508, %v2508
    %v2511 = vunpack.c.l.s4 1966171168
    %v2512 = vunpack.c.0.s8 %v2511
    %v2513 = vlaneseq
    %v2514 = vshrl.u32 %v2513, 7
    %v2515 = vsub.s32 %v2512, %v2514
    %v2516 = vrot.slane %v2508, %v2515
    %v2518 = vunpack.c.l.s4 1966171168
    %v2519 = vunpack.c.0.s8 %v2518
    %v2520 = vlaneseq
    %v2521 = vshrl.u32 %v2520, 7
    %v2522 = vsub.s32 %v2519, %v2521
    %v2523 = vrot.slane %v2509, %v2522
    %v2524 = vlaneseq
    %v2525 = vshrl.u32 %v2524, 7
    %v2526 = vsub.s32 0, %v2525
    %v2527 = vrot.slane %v2516, %v2526
    %v2528 = vlaneseq
    %v2529 = vshrl.u32 %v2528, 7
    %v2530 = vsub.s32 0, %v2529
    %v2531 = vrot.slane %v2523, %v2530
    %v2535 = vsel %vm976, %v2384, 0
    %2537 = vmatprep.subr.mxu0 0.0
    %v2538 = vand.u32 %v2535, 4294901760
    %2539 = vmatpush1.msra.mxu0 %v2538
    %2540 = vmatprep.subr.mxu0 0.0
    %2541 = vmatpush1.msra.mxu0 0.0
    %2542 = vmatprep.subr.mxu0 0.0
    %2543 = vmatpush1.msra.mxu0 0.0
    %2544 = vmatprep.subr.mxu0 0.0
    %2545 = vmatpush1.msra.mxu0 0.0
    %2546 = vmatprep.subr.mxu0 0.0
    %2547 = vmatpush1.msra.mxu0 0.0
    %2548 = vmatprep.subr.mxu0 0.0
    %2549 = vmatpush1.msra.mxu0 0.0
    %2550 = vmatprep.subr.mxu0 0.0
    %2551 = vmatpush1.msra.mxu0 0.0
    %2552 = vmatprep.subr.mxu0 0.0
    %2553 = vmatpush1.msra.mxu0 0.0
    %2554 = vmatprep.subr.mxu0 0.0
    %2555 = vmatpush1.msra.mxu0 0.0
    %2556 = vmatprep.subr.mxu0 0.0
    %2557 = vmatpush1.msra.mxu0 0.0
    %2558 = vmatprep.subr.mxu0 0.0
    %2559 = vmatpush1.msra.mxu0 0.0
    %2560 = vmatprep.subr.mxu0 0.0
    %2561 = vmatpush1.msra.mxu0 0.0
    %2562 = vmatprep.subr.mxu0 0.0
    %2563 = vmatpush1.msra.mxu0 0.0
    %2564 = vmatprep.subr.mxu0 0.0
    %2565 = vmatpush1.msra.mxu0 0.0
    %2566 = vmatprep.subr.mxu0 0.0
    %2567 = vmatpush1.msra.mxu0 0.0
    %2568 = vmatprep.subr.mxu0 0.0
    %2569 = vmatpush1.msra.mxu0 0.0
    %2570 = vmatprep.subr.mxu0 0.0
    %2571 = vmatpush1.msra.mxu0 0.0
    %2572 = vmatprep.subr.mxu0 0.0
    %2573 = vmatpush1.msra.mxu0 0.0
    %2574 = vmatprep.subr.mxu0 0.0
    %2575 = vmatpush1.msra.mxu0 0.0
    %2576 = vmatprep.subr.mxu0 0.0
    %2577 = vmatpush1.msra.mxu0 0.0
    %2578 = vmatprep.subr.mxu0 0.0
    %2579 = vmatpush1.msra.mxu0 0.0
    %2580 = vmatprep.subr.mxu0 0.0
    %2581 = vmatpush1.msra.mxu0 0.0
    %2582 = vmatprep.subr.mxu0 0.0
    %2583 = vmatpush1.msra.mxu0 0.0
    %2584 = vmatprep.subr.mxu0 0.0
    %2585 = vmatpush1.msra.mxu0 0.0
    %2586 = vmatprep.subr.mxu0 0.0
    %2587 = vmatpush1.msra.mxu0 0.0
    %2588 = vmatprep.subr.mxu0 0.0
    %2589 = vmatpush1.msra.mxu0 0.0
    %2590 = vmatprep.subr.mxu0 0.0
    %2591 = vmatpush1.msra.mxu0 0.0
    %2592 = vmatprep.subr.mxu0 0.0
    %2593 = vmatpush1.msra.mxu0 0.0
    %2594 = vmatprep.subr.mxu0 0.0
    %2595 = vmatpush1.msra.mxu0 0.0
    %2596 = vmatprep.subr.mxu0 0.0
    %2597 = vmatpush1.msra.mxu0 0.0
    %2598 = vmatprep.subr.mxu0 0.0
    %2599 = vmatpush1.msra.mxu0 0.0
    %2600 = vmatprep.subr.mxu0 0.0
    %2601 = vmatpush1.msra.mxu0 0.0
    %2602 = vmatprep.mubr.f32.mxu0 0.0
    %v2603 = vand.u32 %v968, 4294901760
    %v2604 = vsub.f32 %v968, %v2603
    %v2605 = vand.u32 %v2604, 4294901760
    %v2606 = vsub.f32 %v2604, %v2605
    %v2607 = vand.u32 %v2606, 4294901760
    %2608 = vmatmul.mubr.f32.gmra.mrb[0].mxu0 %v2607
    %v2609 = vpop.f32.mrb[0].mxu0
    %v2610 = vadd.f32 %v2527, %v2609
    %v2611 = vpop.f32.mrb[0].mxu0
    %2612 = vmatprep.mubr.f32.mxu0 0.0
    %v2613 = vand.u32 %v970, 4294901760
    %v2614 = vsub.f32 %v970, %v2613
    %v2615 = vand.u32 %v2614, 4294901760
    %v2616 = vsub.f32 %v2614, %v2615
    %v2617 = vand.u32 %v2616, 4294901760
    %2618 = vmatmul.mubr.f32.gmra.mrb[0].mxu0 %v2617
    %v2619 = vpop.f32.mrb[0].mxu0
    %v2620 = vadd.f32 %v2527, %v2619
    %v2621 = vpop.f32.mrb[0].mxu0
    %2622 = vmatprep.mubr.f32.mxu0 0.0
    %v2623 = vand.u32 %v972, 4294901760
    %v2624 = vsub.f32 %v972, %v2623
    %v2625 = vand.u32 %v2624, 4294901760
    %v2626 = vsub.f32 %v2624, %v2625
    %v2627 = vand.u32 %v2626, 4294901760
    %2628 = vmatmul.mubr.f32.gmra.mrb[0].mxu0 %v2627
    %v2629 = vpop.f32.mrb[0].mxu0
    %v2630 = vadd.f32 %v2531, %v2629
    %v2631 = vpop.f32.mrb[0].mxu0
    %2632 = vmatprep.mubr.f32.mxu0 0.0
    %v2633 = vand.u32 %v974, 4294901760
    %v2634 = vsub.f32 %v974, %v2633
    %v2635 = vand.u32 %v2634, 4294901760
    %v2636 = vsub.f32 %v2634, %v2635
    %v2637 = vand.u32 %v2636, 4294901760
    %2638 = vmatmul.mubr.f32.gmra.mrb[0].mxu0 %v2637
    %v2639 = vpop.f32.mrb[0].mxu0
    %v2640 = vadd.f32 %v2531, %v2639
    %v2641 = vpop.f32.mrb[0].mxu0
    %2642 = vdwg.mxu0
    %2643 = vmatprep.subr.mxu0 0.0
    %v2644 = vand.u32 %v2535, 4294901760
    %v2645 = vsub.f32 %v2535, %v2644
    %v2646 = vand.u32 %v2645, 4294901760
    %v2647 = vsub.f32 %v2645, %v2646
    %v2648 = vand.u32 %v2647, 4294901760
    %2649 = vmatpush1.msra.mxu0 %v2648
    %2650 = vmatprep.subr.mxu0 0.0
    %2651 = vmatpush1.msra.mxu0 0.0
    %2652 = vmatprep.subr.mxu0 0.0
    %2653 = vmatpush1.msra.mxu0 0.0
    %2654 = vmatprep.subr.mxu0 0.0
    %2655 = vmatpush1.msra.mxu0 0.0
    %2656 = vmatprep.subr.mxu0 0.0
    %2657 = vmatpush1.msra.mxu0 0.0
    %2658 = vmatprep.subr.mxu0 0.0
    %2659 = vmatpush1.msra.mxu0 0.0
    %2660 = vmatprep.subr.mxu0 0.0
    %2661 = vmatpush1.msra.mxu0 0.0
    %2662 = vmatprep.subr.mxu0 0.0
    %2663 = vmatpush1.msra.mxu0 0.0
    %2664 = vmatprep.subr.mxu0 0.0
    %2665 = vmatpush1.msra.mxu0 0.0
    %2666 = vmatprep.subr.mxu0 0.0
    %2667 = vmatpush1.msra.mxu0 0.0
    %2668 = vmatprep.subr.mxu0 0.0
    %2669 = vmatpush1.msra.mxu0 0.0
    %2670 = vmatprep.subr.mxu0 0.0
    %2671 = vmatpush1.msra.mxu0 0.0
    %2672 = vmatprep.subr.mxu0 0.0
    %2673 = vmatpush1.msra.mxu0 0.0
    %2674 = vmatprep.subr.mxu0 0.0
    %2675 = vmatpush1.msra.mxu0 0.0
    %2676 = vmatprep.subr.mxu0 0.0
    %2677 = vmatpush1.msra.mxu0 0.0
    %2678 = vmatprep.subr.mxu0 0.0
    %2679 = vmatpush1.msra.mxu0 0.0
    %2680 = vmatprep.subr.mxu0 0.0
    %2681 = vmatpush1.msra.mxu0 0.0
    %2682 = vmatprep.subr.mxu0 0.0
    %2683 = vmatpush1.msra.mxu0 0.0
    %2684 = vmatprep.subr.mxu0 0.0
    %2685 = vmatpush1.msra.mxu0 0.0
    %2686 = vmatprep.subr.mxu0 0.0
    %2687 = vmatpush1.msra.mxu0 0.0
    %2688 = vmatprep.subr.mxu0 0.0
    %2689 = vmatpush1.msra.mxu0 0.0
    %2690 = vmatprep.subr.mxu0 0.0
    %2691 = vmatpush1.msra.mxu0 0.0
    %2692 = vmatprep.subr.mxu0 0.0
    %2693 = vmatpush1.msra.mxu0 0.0
    %2694 = vmatprep.subr.mxu0 0.0
    %2695 = vmatpush1.msra.mxu0 0.0
    %2696 = vmatprep.subr.mxu0 0.0
    %2697 = vmatpush1.msra.mxu0 0.0
    %2698 = vmatprep.subr.mxu0 0.0
    %2699 = vmatpush1.msra.mxu0 0.0
    %2700 = vmatprep.subr.mxu0 0.0
    %2701 = vmatpush1.msra.mxu0 0.0
    %2702 = vmatprep.subr.mxu0 0.0
    %2703 = vmatpush1.msra.mxu0 0.0
    %2704 = vmatprep.subr.mxu0 0.0
    %2705 = vmatpush1.msra.mxu0 0.0
    %2706 = vmatprep.subr.mxu0 0.0
    %2707 = vmatpush1.msra.mxu0 0.0
    %2708 = vmatprep.subr.mxu0 0.0
    %2709 = vmatpush1.msra.mxu0 0.0
    %2710 = vmatprep.subr.mxu0 0.0
    %2711 = vmatpush1.msra.mxu0 0.0
    %2712 = vmatprep.mubr.f32.mxu0 0.0
    %v2713 = vand.u32 %v968, 4294901760
    %2714 = vmatmul.mubr.f32.gmra.mrb[0].mxu0 %v2713
    %v2715 = vpop.f32.mrb[0].mxu0
    %v2716 = vadd.f32 %v2610, %v2715
    %v2717 = vpop.f32.mrb[0].mxu0
    %2718 = vmatprep.mubr.f32.mxu0 0.0
    %v2719 = vand.u32 %v970, 4294901760
    %2720 = vmatmul.mubr.f32.gmra.mrb[0].mxu0 %v2719
    %v2721 = vpop.f32.mrb[0].mxu0
    %v2722 = vadd.f32 %v2620, %v2721
    %v2723 = vpop.f32.mrb[0].mxu0
    %2724 = vmatprep.mubr.f32.mxu0 0.0
    %v2725 = vand.u32 %v972, 4294901760
    %2726 = vmatmul.mubr.f32.gmra.mrb[0].mxu0 %v2725
    %v2727 = vpop.f32.mrb[0].mxu0
    %v2728 = vadd.f32 %v2630, %v2727
    %v2729 = vpop.f32.mrb[0].mxu0
    %2730 = vmatprep.mubr.f32.mxu0 0.0
    %v2731 = vand.u32 %v974, 4294901760
    %2732 = vmatmul.mubr.f32.gmra.mrb[0].mxu0 %v2731
    %v2733 = vpop.f32.mrb[0].mxu0
    %v2734 = vadd.f32 %v2640, %v2733
    %v2735 = vpop.f32.mrb[0].mxu0
    %2736 = vdwg.mxu0
    %2737 = vmatprep.subr.mxu0 0.0
    %v2738 = vand.u32 %v2535, 4294901760
    %v2739 = vsub.f32 %v2535, %v2738
    %2740 = vmatpush1.msra.mxu0 %v2739
    %2741 = vmatprep.subr.mxu0 0.0
    %2742 = vmatpush1.msra.mxu0 0.0
    %2743 = vmatprep.subr.mxu0 0.0
    %2744 = vmatpush1.msra.mxu0 0.0
    %2745 = vmatprep.subr.mxu0 0.0
    %2746 = vmatpush1.msra.mxu0 0.0
    %2747 = vmatprep.subr.mxu0 0.0
    %2748 = vmatpush1.msra.mxu0 0.0
    %2749 = vmatprep.subr.mxu0 0.0
    %2750 = vmatpush1.msra.mxu0 0.0
    %2751 = vmatprep.subr.mxu0 0.0
    %2752 = vmatpush1.msra.mxu0 0.0
    %2753 = vmatprep.subr.mxu0 0.0
    %2754 = vmatpush1.msra.mxu0 0.0
    %2755 = vmatprep.subr.mxu0 0.0
    %2756 = vmatpush1.msra.mxu0 0.0
    %2757 = vmatprep.subr.mxu0 0.0
    %2758 = vmatpush1.msra.mxu0 0.0
    %2759 = vmatprep.subr.mxu0 0.0
    %2760 = vmatpush1.msra.mxu0 0.0
    %2761 = vmatprep.subr.mxu0 0.0
    %2762 = vmatpush1.msra.mxu0 0.0
    %2763 = vmatprep.subr.mxu0 0.0
    %2764 = vmatpush1.msra.mxu0 0.0
    %2765 = vmatprep.subr.mxu0 0.0
    %2766 = vmatpush1.msra.mxu0 0.0
    %2767 = vmatprep.subr.mxu0 0.0
    %2768 = vmatpush1.msra.mxu0 0.0
    %2769 = vmatprep.subr.mxu0 0.0
    %2770 = vmatpush1.msra.mxu0 0.0
    %2771 = vmatprep.subr.mxu0 0.0
    %2772 = vmatpush1.msra.mxu0 0.0
    %2773 = vmatprep.subr.mxu0 0.0
    %2774 = vmatpush1.msra.mxu0 0.0
    %2775 = vmatprep.subr.mxu0 0.0
    %2776 = vmatpush1.msra.mxu0 0.0
    %2777 = vmatprep.subr.mxu0 0.0
    %2778 = vmatpush1.msra.mxu0 0.0
    %2779 = vmatprep.subr.mxu0 0.0
    %2780 = vmatpush1.msra.mxu0 0.0
    %2781 = vmatprep.subr.mxu0 0.0
    %2782 = vmatpush1.msra.mxu0 0.0
    %2783 = vmatprep.subr.mxu0 0.0
    %2784 = vmatpush1.msra.mxu0 0.0
    %2785 = vmatprep.subr.mxu0 0.0
    %2786 = vmatpush1.msra.mxu0 0.0
    %2787 = vmatprep.subr.mxu0 0.0
    %2788 = vmatpush1.msra.mxu0 0.0
    %2789 = vmatprep.subr.mxu0 0.0
    %2790 = vmatpush1.msra.mxu0 0.0
    %2791 = vmatprep.subr.mxu0 0.0
    %2792 = vmatpush1.msra.mxu0 0.0
    %2793 = vmatprep.subr.mxu0 0.0
    %2794 = vmatpush1.msra.mxu0 0.0
    %2795 = vmatprep.subr.mxu0 0.0
    %2796 = vmatpush1.msra.mxu0 0.0
    %2797 = vmatprep.subr.mxu0 0.0
    %2798 = vmatpush1.msra.mxu0 0.0
    %2799 = vmatprep.subr.mxu0 0.0
    %2800 = vmatpush1.msra.mxu0 0.0
    %2801 = vmatprep.subr.mxu0 0.0
    %2802 = vmatpush1.msra.mxu0 0.0
    %2803 = vmatprep.mubr.f32.mxu0 0.0
    %v2804 = vand.u32 %v968, 4294901760
    %v2805 = vsub.f32 %v968, %v2804
    %2806 = vmatmul.mubr.f32.gmra.mrb[0].mxu0 %v2805
    %v2807 = vpop.f32.mrb[0].mxu0
    %v2808 = vadd.f32 %v2716, %v2807
    %v2809 = vpop.f32.mrb[0].mxu0
    %2810 = vmatprep.mubr.f32.mxu0 0.0
    %v2811 = vand.u32 %v970, 4294901760
    %v2812 = vsub.f32 %v970, %v2811
    %2813 = vmatmul.mubr.f32.gmra.mrb[0].mxu0 %v2812
    %v2814 = vpop.f32.mrb[0].mxu0
    %v2815 = vadd.f32 %v2722, %v2814
    %v2816 = vpop.f32.mrb[0].mxu0
    %2817 = vmatprep.mubr.f32.mxu0 0.0
    %v2818 = vand.u32 %v972, 4294901760
    %v2819 = vsub.f32 %v972, %v2818
    %2820 = vmatmul.mubr.f32.gmra.mrb[0].mxu0 %v2819
    %v2821 = vpop.f32.mrb[0].mxu0
    %v2822 = vadd.f32 %v2728, %v2821
    %v2823 = vpop.f32.mrb[0].mxu0
    %2824 = vmatprep.mubr.f32.mxu0 0.0
    %v2825 = vand.u32 %v974, 4294901760
    %v2826 = vsub.f32 %v974, %v2825
    %2827 = vmatmul.mubr.f32.gmra.mrb[0].mxu0 %v2826
    %v2828 = vpop.f32.mrb[0].mxu0
    %v2829 = vadd.f32 %v2734, %v2828
    %v2830 = vpop.f32.mrb[0].mxu0
    %2831 = vdwg.mxu0
    %2832 = vmatprep.subr.mxu0 0.0
    %v2833 = vand.u32 %v2535, 4294901760
    %2834 = vmatpush1.msra.mxu0 %v2833
    %2835 = vmatprep.subr.mxu0 0.0
    %2836 = vmatpush1.msra.mxu0 0.0
    %2837 = vmatprep.subr.mxu0 0.0
    %2838 = vmatpush1.msra.mxu0 0.0
    %2839 = vmatprep.subr.mxu0 0.0
    %2840 = vmatpush1.msra.mxu0 0.0
    %2841 = vmatprep.subr.mxu0 0.0
    %2842 = vmatpush1.msra.mxu0 0.0
    %2843 = vmatprep.subr.mxu0 0.0
    %2844 = vmatpush1.msra.mxu0 0.0
    %2845 = vmatprep.subr.mxu0 0.0
    %2846 = vmatpush1.msra.mxu0 0.0
    %2847 = vmatprep.subr.mxu0 0.0
    %2848 = vmatpush1.msra.mxu0 0.0
    %2849 = vmatprep.subr.mxu0 0.0
    %2850 = vmatpush1.msra.mxu0 0.0
    %2851 = vmatprep.subr.mxu0 0.0
    %2852 = vmatpush1.msra.mxu0 0.0
    %2853 = vmatprep.subr.mxu0 0.0
    %2854 = vmatpush1.msra.mxu0 0.0
    %2855 = vmatprep.subr.mxu0 0.0
    %2856 = vmatpush1.msra.mxu0 0.0
    %2857 = vmatprep.subr.mxu0 0.0
    %2858 = vmatpush1.msra.mxu0 0.0
    %2859 = vmatprep.subr.mxu0 0.0
    %2860 = vmatpush1.msra.mxu0 0.0
    %2861 = vmatprep.subr.mxu0 0.0
    %2862 = vmatpush1.msra.mxu0 0.0
    %2863 = vmatprep.subr.mxu0 0.0
    %2864 = vmatpush1.msra.mxu0 0.0
    %2865 = vmatprep.subr.mxu0 0.0
    %2866 = vmatpush1.msra.mxu0 0.0
    %2867 = vmatprep.subr.mxu0 0.0
    %2868 = vmatpush1.msra.mxu0 0.0
    %2869 = vmatprep.subr.mxu0 0.0
    %2870 = vmatpush1.msra.mxu0 0.0
    %2871 = vmatprep.subr.mxu0 0.0
    %2872 = vmatpush1.msra.mxu0 0.0
    %2873 = vmatprep.subr.mxu0 0.0
    %2874 = vmatpush1.msra.mxu0 0.0
    %2875 = vmatprep.subr.mxu0 0.0
    %2876 = vmatpush1.msra.mxu0 0.0
    %2877 = vmatprep.subr.mxu0 0.0
    %2878 = vmatpush1.msra.mxu0 0.0
    %2879 = vmatprep.subr.mxu0 0.0
    %2880 = vmatpush1.msra.mxu0 0.0
    %2881 = vmatprep.subr.mxu0 0.0
    %2882 = vmatpush1.msra.mxu0 0.0
    %2883 = vmatprep.subr.mxu0 0.0
    %2884 = vmatpush1.msra.mxu0 0.0
    %2885 = vmatprep.subr.mxu0 0.0
    %2886 = vmatpush1.msra.mxu0 0.0
    %2887 = vmatprep.subr.mxu0 0.0
    %2888 = vmatpush1.msra.mxu0 0.0
    %2889 = vmatprep.subr.mxu0 0.0
    %2890 = vmatpush1.msra.mxu0 0.0
    %2891 = vmatprep.subr.mxu0 0.0
    %2892 = vmatpush1.msra.mxu0 0.0
    %2893 = vmatprep.subr.mxu0 0.0
    %2894 = vmatpush1.msra.mxu0 0.0
    %2895 = vmatprep.subr.mxu0 0.0
    %2896 = vmatpush1.msra.mxu0 0.0
    %2897 = vmatprep.mubr.f32.mxu0 0.0
    %v2898 = vand.u32 %v968, 4294901760
    %v2899 = vsub.f32 %v968, %v2898
    %v2900 = vand.u32 %v2899, 4294901760
    %2901 = vmatmul.mubr.f32.gmra.mrb[0].mxu0 %v2900
    %v2902 = vpop.f32.mrb[0].mxu0
    %v2903 = vadd.f32 %v2808, %v2902
    %v2904 = vpop.f32.mrb[0].mxu0
    %2905 = vmatprep.mubr.f32.mxu0 0.0
    %v2906 = vand.u32 %v970, 4294901760
    %v2907 = vsub.f32 %v970, %v2906
    %v2908 = vand.u32 %v2907, 4294901760
    %2909 = vmatmul.mubr.f32.gmra.mrb[0].mxu0 %v2908
    %v2910 = vpop.f32.mrb[0].mxu0
    %v2911 = vadd.f32 %v2815, %v2910
    %v2912 = vpop.f32.mrb[0].mxu0
    %2913 = vmatprep.mubr.f32.mxu0 0.0
    %v2914 = vand.u32 %v972, 4294901760
    %v2915 = vsub.f32 %v972, %v2914
    %v2916 = vand.u32 %v2915, 4294901760
    %2917 = vmatmul.mubr.f32.gmra.mrb[0].mxu0 %v2916
    %v2918 = vpop.f32.mrb[0].mxu0
    %v2919 = vadd.f32 %v2822, %v2918
    %v2920 = vpop.f32.mrb[0].mxu0
    %2921 = vmatprep.mubr.f32.mxu0 0.0
    %v2922 = vand.u32 %v974, 4294901760
    %v2923 = vsub.f32 %v974, %v2922
    %v2924 = vand.u32 %v2923, 4294901760
    %2925 = vmatmul.mubr.f32.gmra.mrb[0].mxu0 %v2924
    %v2926 = vpop.f32.mrb[0].mxu0
    %v2927 = vadd.f32 %v2829, %v2926
    %v2928 = vpop.f32.mrb[0].mxu0
    %2929 = vdwg.mxu0
    %2930 = vmatprep.subr.mxu0 0.0
    %v2931 = vand.u32 %v2535, 4294901760
    %v2932 = vsub.f32 %v2535, %v2931
    %v2933 = vand.u32 %v2932, 4294901760
    %2934 = vmatpush1.msra.mxu0 %v2933
    %2935 = vmatprep.subr.mxu0 0.0
    %2936 = vmatpush1.msra.mxu0 0.0
    %2937 = vmatprep.subr.mxu0 0.0
    %2938 = vmatpush1.msra.mxu0 0.0
    %2939 = vmatprep.subr.mxu0 0.0
    %2940 = vmatpush1.msra.mxu0 0.0
    %2941 = vmatprep.subr.mxu0 0.0
    %2942 = vmatpush1.msra.mxu0 0.0
    %2943 = vmatprep.subr.mxu0 0.0
    %2944 = vmatpush1.msra.mxu0 0.0
    %2945 = vmatprep.subr.mxu0 0.0
    %2946 = vmatpush1.msra.mxu0 0.0
    %2947 = vmatprep.subr.mxu0 0.0
    %2948 = vmatpush1.msra.mxu0 0.0
    %2949 = vmatprep.subr.mxu0 0.0
    %2950 = vmatpush1.msra.mxu0 0.0
    %2951 = vmatprep.subr.mxu0 0.0
    %2952 = vmatpush1.msra.mxu0 0.0
    %2953 = vmatprep.subr.mxu0 0.0
    %2954 = vmatpush1.msra.mxu0 0.0
    %2955 = vmatprep.subr.mxu0 0.0
    %2956 = vmatpush1.msra.mxu0 0.0
    %2957 = vmatprep.subr.mxu0 0.0
    %2958 = vmatpush1.msra.mxu0 0.0
    %2959 = vmatprep.subr.mxu0 0.0
    %2960 = vmatpush1.msra.mxu0 0.0
    %2961 = vmatprep.subr.mxu0 0.0
    %2962 = vmatpush1.msra.mxu0 0.0
    %2963 = vmatprep.subr.mxu0 0.0
    %2964 = vmatpush1.msra.mxu0 0.0
    %2965 = vmatprep.subr.mxu0 0.0
    %2966 = vmatpush1.msra.mxu0 0.0
    %2967 = vmatprep.subr.mxu0 0.0
    %2968 = vmatpush1.msra.mxu0 0.0
    %2969 = vmatprep.subr.mxu0 0.0
    %2970 = vmatpush1.msra.mxu0 0.0
    %2971 = vmatprep.subr.mxu0 0.0
    %2972 = vmatpush1.msra.mxu0 0.0
    %2973 = vmatprep.subr.mxu0 0.0
    %2974 = vmatpush1.msra.mxu0 0.0
    %2975 = vmatprep.subr.mxu0 0.0
    %2976 = vmatpush1.msra.mxu0 0.0
    %2977 = vmatprep.subr.mxu0 0.0
    %2978 = vmatpush1.msra.mxu0 0.0
    %2979 = vmatprep.subr.mxu0 0.0
    %2980 = vmatpush1.msra.mxu0 0.0
    %2981 = vmatprep.subr.mxu0 0.0
    %2982 = vmatpush1.msra.mxu0 0.0
    %2983 = vmatprep.subr.mxu0 0.0
    %2984 = vmatpush1.msra.mxu0 0.0
    %2985 = vmatprep.subr.mxu0 0.0
    %2986 = vmatpush1.msra.mxu0 0.0
    %2987 = vmatprep.subr.mxu0 0.0
    %2988 = vmatpush1.msra.mxu0 0.0
    %2989 = vmatprep.subr.mxu0 0.0
    %2990 = vmatpush1.msra.mxu0 0.0
    %2991 = vmatprep.subr.mxu0 0.0
    %2992 = vmatpush1.msra.mxu0 0.0
    %2993 = vmatprep.subr.mxu0 0.0
    %2994 = vmatpush1.msra.mxu0 0.0
    %2995 = vmatprep.subr.mxu0 0.0
    %2996 = vmatpush1.msra.mxu0 0.0
    %2997 = vmatprep.mubr.f32.mxu0 0.0
    %v2998 = vand.u32 %v968, 4294901760
    %2999 = vmatmul.mubr.f32.gmra.mrb[0].mxu0 %v2998
    %v3000 = vpop.f32.mrb[0].mxu0
    %v3001 = vadd.f32 %v2903, %v3000
    %v3002 = vpop.f32.mrb[0].mxu0
    %3003 = vmatprep.mubr.f32.mxu0 0.0
    %v3004 = vand.u32 %v970, 4294901760
    %3005 = vmatmul.mubr.f32.gmra.mrb[0].mxu0 %v3004
    %v3006 = vpop.f32.mrb[0].mxu0
    %v3007 = vadd.f32 %v2911, %v3006
    %v3008 = vpop.f32.mrb[0].mxu0
    %3009 = vmatprep.mubr.f32.mxu0 0.0
    %v3010 = vand.u32 %v972, 4294901760
    %3011 = vmatmul.mubr.f32.gmra.mrb[0].mxu0 %v3010
    %v3012 = vpop.f32.mrb[0].mxu0
    %v3013 = vadd.f32 %v2919, %v3012
    %v3014 = vpop.f32.mrb[0].mxu0
    %3015 = vmatprep.mubr.f32.mxu0 0.0
    %v3016 = vand.u32 %v974, 4294901760
    %3017 = vmatmul.mubr.f32.gmra.mrb[0].mxu0 %v3016
    %v3018 = vpop.f32.mrb[0].mxu0
    %v3019 = vadd.f32 %v2927, %v3018
    %v3020 = vpop.f32.mrb[0].mxu0
    %3021 = vdwg.mxu0
    %3022 = vmatprep.subr.mxu0 0.0
    %v3023 = vand.u32 %v2535, 4294901760
    %3024 = vmatpush1.msra.mxu0 %v3023
    %3025 = vmatprep.subr.mxu0 0.0
    %3026 = vmatpush1.msra.mxu0 0.0
    %3027 = vmatprep.subr.mxu0 0.0
    %3028 = vmatpush1.msra.mxu0 0.0
    %3029 = vmatprep.subr.mxu0 0.0
    %3030 = vmatpush1.msra.mxu0 0.0
    %3031 = vmatprep.subr.mxu0 0.0
    %3032 = vmatpush1.msra.mxu0 0.0
    %3033 = vmatprep.subr.mxu0 0.0
    %3034 = vmatpush1.msra.mxu0 0.0
    %3035 = vmatprep.subr.mxu0 0.0
    %3036 = vmatpush1.msra.mxu0 0.0
    %3037 = vmatprep.subr.mxu0 0.0
    %3038 = vmatpush1.msra.mxu0 0.0
    %3039 = vmatprep.subr.mxu0 0.0
    %3040 = vmatpush1.msra.mxu0 0.0
    %3041 = vmatprep.subr.mxu0 0.0
    %3042 = vmatpush1.msra.mxu0 0.0
    %3043 = vmatprep.subr.mxu0 0.0
    %3044 = vmatpush1.msra.mxu0 0.0
    %3045 = vmatprep.subr.mxu0 0.0
    %3046 = vmatpush1.msra.mxu0 0.0
    %3047 = vmatprep.subr.mxu0 0.0
    %3048 = vmatpush1.msra.mxu0 0.0
    %3049 = vmatprep.subr.mxu0 0.0
    %3050 = vmatpush1.msra.mxu0 0.0
    %3051 = vmatprep.subr.mxu0 0.0
    %3052 = vmatpush1.msra.mxu0 0.0
    %3053 = vmatprep.subr.mxu0 0.0
    %3054 = vmatpush1.msra.mxu0 0.0
    %3055 = vmatprep.subr.mxu0 0.0
    %3056 = vmatpush1.msra.mxu0 0.0
    %3057 = vmatprep.subr.mxu0 0.0
    %3058 = vmatpush1.msra.mxu0 0.0
    %3059 = vmatprep.subr.mxu0 0.0
    %3060 = vmatpush1.msra.mxu0 0.0
    %3061 = vmatprep.subr.mxu0 0.0
    %3062 = vmatpush1.msra.mxu0 0.0
    %3063 = vmatprep.subr.mxu0 0.0
    %3064 = vmatpush1.msra.mxu0 0.0
    %3065 = vmatprep.subr.mxu0 0.0
    %3066 = vmatpush1.msra.mxu0 0.0
    %3067 = vmatprep.subr.mxu0 0.0
    %3068 = vmatpush1.msra.mxu0 0.0
    %3069 = vmatprep.subr.mxu0 0.0
    %3070 = vmatpush1.msra.mxu0 0.0
    %3071 = vmatprep.subr.mxu0 0.0
    %3072 = vmatpush1.msra.mxu0 0.0
    %3073 = vmatprep.subr.mxu0 0.0
    %3074 = vmatpush1.msra.mxu0 0.0
    %3075 = vmatprep.subr.mxu0 0.0
    %3076 = vmatpush1.msra.mxu0 0.0
    %3077 = vmatprep.subr.mxu0 0.0
    %3078 = vmatpush1.msra.mxu0 0.0
    %3079 = vmatprep.subr.mxu0 0.0
    %3080 = vmatpush1.msra.mxu0 0.0
    %3081 = vmatprep.subr.mxu0 0.0
    %3082 = vmatpush1.msra.mxu0 0.0
    %3083 = vmatprep.subr.mxu0 0.0
    %3084 = vmatpush1.msra.mxu0 0.0
    %3085 = vmatprep.subr.mxu0 0.0
    %3086 = vmatpush1.msra.mxu0 0.0
    %3087 = vmatprep.mubr.f32.mxu0 0.0
    %v3088 = vand.u32 %v968, 4294901760
    %3089 = vmatmul.mubr.f32.gmra.mrb[0].mxu0 %v3088
    %v3090 = vpop.f32.mrb[0].mxu0
    %v3091 = vadd.f32 %v3001, %v3090
    %v3092 = vpop.f32.mrb[0].mxu0
    %3093 = vmatprep.mubr.f32.mxu0 0.0
    %v3094 = vand.u32 %v970, 4294901760
    %3095 = vmatmul.mubr.f32.gmra.mrb[0].mxu0 %v3094
    %v3096 = vpop.f32.mrb[0].mxu0
    %v3097 = vadd.f32 %v3007, %v3096
    %v3098 = vpop.f32.mrb[0].mxu0
    %3099 = vmatprep.mubr.f32.mxu0 0.0
    %v3100 = vand.u32 %v972, 4294901760
    %3101 = vmatmul.mubr.f32.gmra.mrb[0].mxu0 %v3100
    %v3102 = vpop.f32.mrb[0].mxu0
    %v3103 = vadd.f32 %v3013, %v3102
    %v3104 = vpop.f32.mrb[0].mxu0
    %3105 = vmatprep.mubr.f32.mxu0 0.0
    %v3106 = vand.u32 %v974, 4294901760
    %3107 = vmatmul.mubr.f32.gmra.mrb[0].mxu0 %v3106
    %v3108 = vpop.f32.mrb[0].mxu0
    %v3109 = vadd.f32 %v3019, %v3108
    %v3110 = vpop.f32.mrb[0].mxu0
    %3111 = vdwg.mxu0
    %vm3112 = vcmp.ge.f32.partialorder %v3091, 0.0
    %vm3113 = vcmp.ge.f32.partialorder %v3097, 0.0
    %vm3114 = vcmp.ge.f32.partialorder %v3103, 0.0
    %vm3115 = vcmp.ge.f32.partialorder %v3109, 0.0
    %v3116 = vmul.f32 %v3091, 0.33
    %v3117 = vmul.f32 %v3097, 0.33
    %v3118 = vmul.f32 %v3103, 0.33
    %v3119 = vmul.f32 %v3109, 0.33
    %v3120 = vsel %vm3112, %v3091, %v3116
    %v3121 = vsel %vm3113, %v3097, %v3117
    %v3122 = vsel %vm3114, %v3103, %v3118
    %v3123 = vsel %vm3115, %v3109, %v3119
    %v3124 = vld [vmem:[%s27] sm:$0xff]
    %v3125 = vld [vmem:[%s29] sm:$0xff]
    %v3126 = vld [vmem:[%s29 + $0x8] sm:$0xff]
    %v3127 = vld [vmem:[%s29 + $0x10] sm:$0xff]
    %v3128 = vld [vmem:[%s29 + $0x18] sm:$0xff]
    %v3129 = vld [vmem:[%s29 + $0x20] sm:$0xff]
    %v3130 = vld [vmem:[%s29 + $0x28] sm:$0xff]
    %v3131 = vld [vmem:[%s29 + $0x30] sm:$0xff]
    %v3132 = vld [vmem:[%s29 + $0x38] sm:$0xff]
    %v3133 = vld [vmem:[%s29 + $0x40] sm:$0xff]
    %v3134 = vld [vmem:[%s29 + $0x48] sm:$0xff]
    %v3135 = vld [vmem:[%s29 + $0x50] sm:$0xff]
    %v3136 = vld [vmem:[%s29 + $0x58] sm:$0xff]
    %v3137 = vld [vmem:[%s29 + $0x60] sm:$0xff]
    %v3138 = vld [vmem:[%s29 + $0x68] sm:$0xff]
    %v3139 = vld [vmem:[%s29 + $0x70] sm:$0xff]
    %v3140 = vld [vmem:[%s29 + $0x78] sm:$0xff]
    %v3141 = vld [vmem:[%s31] sm:$0xff]
    %v3142 = vld [vmem:[%s33] sm:$0xff]
    %v3143 = vld [vmem:[%s33 + $0x8] sm:$0xff]
    %v3144 = vld [vmem:[%s33 + $0x10] sm:$0xff]
    %v3145 = vld [vmem:[%s33 + $0x18] sm:$0xff]
    %v3146 = vld [vmem:[%s33 + $0x20] sm:$0xff]
    %v3147 = vld [vmem:[%s33 + $0x28] sm:$0xff]
    %v3148 = vld [vmem:[%s33 + $0x30] sm:$0xff]
    %v3149 = vld [vmem:[%s33 + $0x38] sm:$0xff]
    %v3150 = vld [vmem:[%s33 + $0x40] sm:$0xff]
    %v3151 = vld [vmem:[%s33 + $0x48] sm:$0xff]
    %v3152 = vld [vmem:[%s33 + $0x50] sm:$0xff]
    %v3153 = vld [vmem:[%s33 + $0x58] sm:$0xff]
    %v3154 = vld [vmem:[%s33 + $0x60] sm:$0xff]
    %v3155 = vld [vmem:[%s33 + $0x68] sm:$0xff]
    %v3156 = vld [vmem:[%s33 + $0x70] sm:$0xff]
    %v3157 = vld [vmem:[%s33 + $0x78] sm:$0xff]
    %v3158 = vld [vmem:[%s35] sm:$0x1]
    %3160 = vset.pattern.permute.xlu0 0
    %3161 = vperm.xlu0 %3160, %v2380
    %v3162 = vpop.permute.xlu0 %3161
    %3165 = vset.pattern.permute.xlu0 0
    %3166 = vperm.xlu0 %3165, %v2381
    %v3167 = vpop.permute.xlu0 %3166
    %3170 = vset.pattern.permute.xlu0 0
    %3171 = vperm.xlu0 %3170, %v2382
    %v3172 = vpop.permute.xlu0 %3171
    %3175 = vset.pattern.permute.xlu0 0
    %3176 = vperm.xlu0 %3175, %v2383
    %v3177 = vpop.permute.xlu0 %3176
    %v3179 = vmul.f32 %v3162, %v3125
    %v3180 = vmul.f32 %v3167, %v3126
    %v3181 = vmul.f32 %v3172, %v3125
    %v3182 = vmul.f32 %v3177, %v3126
    %v3183 = vsel %vm1601, %v3179, 0.0
    %v3184 = vsel %vm1601, %v3180, 0.0
    %v3185 = vadd.f32 %v3183, %v3184
    %v3186 = vrot.slane %v3185, 4
    %v3187 = vadd.f32 %v3185, %v3186
    %v3188 = vrot.slane %v3187, 2
    %v3189 = vadd.f32 %v3187, %v3188
    %v3190 = vrot.slane %v3189, 1
    %v3191 = vadd.f32 %v3189, %v3190
    %v3192 = vsel %vm1601, %v3181, 0.0
    %v3193 = vsel %vm1601, %v3182, 0.0
    %v3194 = vadd.f32 %v3192, %v3193
    %v3195 = vrot.slane %v3194, 4
    %v3196 = vadd.f32 %v3194, %v3195
    %v3197 = vrot.slane %v3196, 2
    %v3198 = vadd.f32 %v3196, %v3197
    %v3199 = vrot.slane %v3198, 1
    %v3200 = vadd.f32 %v3198, %v3199
    %v3201 = vadd.f32 %v3191, 0.0
    %v3202 = vadd.f32 %v3200, 0.0
    %3203 = vset.pattern.permute.xlu0 1
    %3204 = vperm.xlu0 %3203, %v2380
    %v3205 = vpop.permute.xlu0 %3204
    %3207 = vset.pattern.permute.xlu0 1
    %3208 = vperm.xlu0 %3207, %v2381
    %v3209 = vpop.permute.xlu0 %3208
    %3211 = vset.pattern.permute.xlu0 1
    %3212 = vperm.xlu0 %3211, %v2382
    %v3213 = vpop.permute.xlu0 %3212
    %3215 = vset.pattern.permute.xlu0 1
    %3216 = vperm.xlu0 %3215, %v2383
    %v3217 = vpop.permute.xlu0 %3216
    %v3219 = vmul.f32 %v3205, %v3127
    %v3220 = vmul.f32 %v3209, %v3128
    %v3221 = vmul.f32 %v3213, %v3127
    %v3222 = vmul.f32 %v3217, %v3128
    %v3223 = vsel %vm1601, %v3219, 0.0
    %v3224 = vsel %vm1601, %v3220, 0.0
    %v3225 = vadd.f32 %v3223, %v3224
    %v3226 = vrot.slane %v3225, 4
    %v3227 = vadd.f32 %v3225, %v3226
    %v3228 = vrot.slane %v3227, 2
    %v3229 = vadd.f32 %v3227, %v3228
    %v3230 = vrot.slane %v3229, 1
    %v3231 = vadd.f32 %v3229, %v3230
    %v3232 = vsel %vm1601, %v3221, 0.0
    %v3233 = vsel %vm1601, %v3222, 0.0
    %v3234 = vadd.f32 %v3232, %v3233
    %v3235 = vrot.slane %v3234, 4
    %v3236 = vadd.f32 %v3234, %v3235
    %v3237 = vrot.slane %v3236, 2
    %v3238 = vadd.f32 %v3236, %v3237
    %v3239 = vrot.slane %v3238, 1
    %v3240 = vadd.f32 %v3238, %v3239
    %v3241 = vadd.f32 %v3201, %v3231
    %v3242 = vadd.f32 %v3202, %v3240
    %3243 = vset.pattern.permute.xlu0 2
    %3244 = vperm.xlu0 %3243, %v2380
    %v3245 = vpop.permute.xlu0 %3244
    %3247 = vset.pattern.permute.xlu0 2
    %3248 = vperm.xlu0 %3247, %v2381
    %v3249 = vpop.permute.xlu0 %3248
    %3251 = vset.pattern.permute.xlu0 2
    %3252 = vperm.xlu0 %3251, %v2382
    %v3253 = vpop.permute.xlu0 %3252
    %3255 = vset.pattern.permute.xlu0 2
    %3256 = vperm.xlu0 %3255, %v2383
    %v3257 = vpop.permute.xlu0 %3256
    %v3259 = vmul.f32 %v3245, %v3129
    %v3260 = vmul.f32 %v3249, %v3130
    %v3261 = vmul.f32 %v3253, %v3129
    %v3262 = vmul.f32 %v3257, %v3130
    %v3263 = vsel %vm1601, %v3259, 0.0
    %v3264 = vsel %vm1601, %v3260, 0.0
    %v3265 = vadd.f32 %v3263, %v3264
    %v3266 = vrot.slane %v3265, 4
    %v3267 = vadd.f32 %v3265, %v3266
    %v3268 = vrot.slane %v3267, 2
    %v3269 = vadd.f32 %v3267, %v3268
    %v3270 = vrot.slane %v3269, 1
    %v3271 = vadd.f32 %v3269, %v3270
    %v3272 = vsel %vm1601, %v3261, 0.0
    %v3273 = vsel %vm1601, %v3262, 0.0
    %v3274 = vadd.f32 %v3272, %v3273
    %v3275 = vrot.slane %v3274, 4
    %v3276 = vadd.f32 %v3274, %v3275
    %v3277 = vrot.slane %v3276, 2
    %v3278 = vadd.f32 %v3276, %v3277
    %v3279 = vrot.slane %v3278, 1
    %v3280 = vadd.f32 %v3278, %v3279
    %v3281 = vadd.f32 %v3241, %v3271
    %v3282 = vadd.f32 %v3242, %v3280
    %3283 = vset.pattern.permute.xlu0 3
    %3284 = vperm.xlu0 %3283, %v2380
    %v3285 = vpop.permute.xlu0 %3284
    %3287 = vset.pattern.permute.xlu0 3
    %3288 = vperm.xlu0 %3287, %v2381
    %v3289 = vpop.permute.xlu0 %3288
    %3291 = vset.pattern.permute.xlu0 3
    %3292 = vperm.xlu0 %3291, %v2382
    %v3293 = vpop.permute.xlu0 %3292
    %3295 = vset.pattern.permute.xlu0 3
    %3296 = vperm.xlu0 %3295, %v2383
    %v3297 = vpop.permute.xlu0 %3296
    %v3299 = vmul.f32 %v3285, %v3131
    %v3300 = vmul.f32 %v3289, %v3132
    %v3301 = vmul.f32 %v3293, %v3131
    %v3302 = vmul.f32 %v3297, %v3132
    %v3303 = vsel %vm1601, %v3299, 0.0
    %v3304 = vsel %vm1601, %v3300, 0.0
    %v3305 = vadd.f32 %v3303, %v3304
    %v3306 = vrot.slane %v3305, 4
    %v3307 = vadd.f32 %v3305, %v3306
    %v3308 = vrot.slane %v3307, 2
    %v3309 = vadd.f32 %v3307, %v3308
    %v3310 = vrot.slane %v3309, 1
    %v3311 = vadd.f32 %v3309, %v3310
    %v3312 = vsel %vm1601, %v3301, 0.0
    %v3313 = vsel %vm1601, %v3302, 0.0
    %v3314 = vadd.f32 %v3312, %v3313
    %v3315 = vrot.slane %v3314, 4
    %v3316 = vadd.f32 %v3314, %v3315
    %v3317 = vrot.slane %v3316, 2
    %v3318 = vadd.f32 %v3316, %v3317
    %v3319 = vrot.slane %v3318, 1
    %v3320 = vadd.f32 %v3318, %v3319
    %v3321 = vadd.f32 %v3281, %v3311
    %v3322 = vadd.f32 %v3282, %v3320
    %3323 = vset.pattern.permute.xlu0 4
    %3324 = vperm.xlu0 %3323, %v2380
    %v3325 = vpop.permute.xlu0 %3324
    %3327 = vset.pattern.permute.xlu0 4
    %3328 = vperm.xlu0 %3327, %v2381
    %v3329 = vpop.permute.xlu0 %3328
    %3331 = vset.pattern.permute.xlu0 4
    %3332 = vperm.xlu0 %3331, %v2382
    %v3333 = vpop.permute.xlu0 %3332
    %3335 = vset.pattern.permute.xlu0 4
    %3336 = vperm.xlu0 %3335, %v2383
    %v3337 = vpop.permute.xlu0 %3336
    %v3339 = vmul.f32 %v3325, %v3133
    %v3340 = vmul.f32 %v3329, %v3134
    %v3341 = vmul.f32 %v3333, %v3133
    %v3342 = vmul.f32 %v3337, %v3134
    %v3343 = vsel %vm1601, %v3339, 0.0
    %v3344 = vsel %vm1601, %v3340, 0.0
    %v3345 = vadd.f32 %v3343, %v3344
    %v3346 = vrot.slane %v3345, 4
    %v3347 = vadd.f32 %v3345, %v3346
    %v3348 = vrot.slane %v3347, 2
    %v3349 = vadd.f32 %v3347, %v3348
    %v3350 = vrot.slane %v3349, 1
    %v3351 = vadd.f32 %v3349, %v3350
    %v3352 = vsel %vm1601, %v3341, 0.0
    %v3353 = vsel %vm1601, %v3342, 0.0
    %v3354 = vadd.f32 %v3352, %v3353
    %v3355 = vrot.slane %v3354, 4
    %v3356 = vadd.f32 %v3354, %v3355
    %v3357 = vrot.slane %v3356, 2
    %v3358 = vadd.f32 %v3356, %v3357
    %v3359 = vrot.slane %v3358, 1
    %v3360 = vadd.f32 %v3358, %v3359
    %v3361 = vadd.f32 %v3321, %v3351
    %v3362 = vadd.f32 %v3322, %v3360
    %3363 = vset.pattern.permute.xlu0 5
    %3364 = vperm.xlu0 %3363, %v2380
    %v3365 = vpop.permute.xlu0 %3364
    %3367 = vset.pattern.permute.xlu0 5
    %3368 = vperm.xlu0 %3367, %v2381
    %v3369 = vpop.permute.xlu0 %3368
    %3371 = vset.pattern.permute.xlu0 5
    %3372 = vperm.xlu0 %3371, %v2382
    %v3373 = vpop.permute.xlu0 %3372
    %3375 = vset.pattern.permute.xlu0 5
    %3376 = vperm.xlu0 %3375, %v2383
    %v3377 = vpop.permute.xlu0 %3376
    %v3379 = vmul.f32 %v3365, %v3135
    %v3380 = vmul.f32 %v3369, %v3136
    %v3381 = vmul.f32 %v3373, %v3135
    %v3382 = vmul.f32 %v3377, %v3136
    %v3383 = vsel %vm1601, %v3379, 0.0
    %v3384 = vsel %vm1601, %v3380, 0.0
    %v3385 = vadd.f32 %v3383, %v3384
    %v3386 = vrot.slane %v3385, 4
    %v3387 = vadd.f32 %v3385, %v3386
    %v3388 = vrot.slane %v3387, 2
    %v3389 = vadd.f32 %v3387, %v3388
    %v3390 = vrot.slane %v3389, 1
    %v3391 = vadd.f32 %v3389, %v3390
    %v3392 = vsel %vm1601, %v3381, 0.0
    %v3393 = vsel %vm1601, %v3382, 0.0
    %v3394 = vadd.f32 %v3392, %v3393
    %v3395 = vrot.slane %v3394, 4
    %v3396 = vadd.f32 %v3394, %v3395
    %v3397 = vrot.slane %v3396, 2
    %v3398 = vadd.f32 %v3396, %v3397
    %v3399 = vrot.slane %v3398, 1
    %v3400 = vadd.f32 %v3398, %v3399
    %v3401 = vadd.f32 %v3361, %v3391
    %v3402 = vadd.f32 %v3362, %v3400
    %3403 = vset.pattern.permute.xlu0 6
    %3404 = vperm.xlu0 %3403, %v2380
    %v3405 = vpop.permute.xlu0 %3404
    %3407 = vset.pattern.permute.xlu0 6
    %3408 = vperm.xlu0 %3407, %v2381
    %v3409 = vpop.permute.xlu0 %3408
    %3411 = vset.pattern.permute.xlu0 6
    %3412 = vperm.xlu0 %3411, %v2382
    %v3413 = vpop.permute.xlu0 %3412
    %3415 = vset.pattern.permute.xlu0 6
    %3416 = vperm.xlu0 %3415, %v2383
    %v3417 = vpop.permute.xlu0 %3416
    %v3419 = vmul.f32 %v3405, %v3137
    %v3420 = vmul.f32 %v3409, %v3138
    %v3421 = vmul.f32 %v3413, %v3137
    %v3422 = vmul.f32 %v3417, %v3138
    %v3423 = vsel %vm1601, %v3419, 0.0
    %v3424 = vsel %vm1601, %v3420, 0.0
    %v3425 = vadd.f32 %v3423, %v3424
    %v3426 = vrot.slane %v3425, 4
    %v3427 = vadd.f32 %v3425, %v3426
    %v3428 = vrot.slane %v3427, 2
    %v3429 = vadd.f32 %v3427, %v3428
    %v3430 = vrot.slane %v3429, 1
    %v3431 = vadd.f32 %v3429, %v3430
    %v3432 = vsel %vm1601, %v3421, 0.0
    %v3433 = vsel %vm1601, %v3422, 0.0
    %v3434 = vadd.f32 %v3432, %v3433
    %v3435 = vrot.slane %v3434, 4
    %v3436 = vadd.f32 %v3434, %v3435
    %v3437 = vrot.slane %v3436, 2
    %v3438 = vadd.f32 %v3436, %v3437
    %v3439 = vrot.slane %v3438, 1
    %v3440 = vadd.f32 %v3438, %v3439
    %v3441 = vadd.f32 %v3401, %v3431
    %v3442 = vadd.f32 %v3402, %v3440
    %3443 = vset.pattern.permute.xlu0 7
    %3444 = vperm.xlu0 %3443, %v2380
    %v3445 = vpop.permute.xlu0 %3444
    %3447 = vset.pattern.permute.xlu0 7
    %3448 = vperm.xlu0 %3447, %v2381
    %v3449 = vpop.permute.xlu0 %3448
    %3451 = vset.pattern.permute.xlu0 7
    %3452 = vperm.xlu0 %3451, %v2382
    %v3453 = vpop.permute.xlu0 %3452
    %3455 = vset.pattern.permute.xlu0 7
    %3456 = vperm.xlu0 %3455, %v2383
    %v3457 = vpop.permute.xlu0 %3456
    %v3459 = vmul.f32 %v3445, %v3139
    %v3460 = vmul.f32 %v3449, %v3140
    %v3461 = vmul.f32 %v3453, %v3139
    %v3462 = vmul.f32 %v3457, %v3140
    %v3463 = vsel %vm1601, %v3459, 0.0
    %v3464 = vsel %vm1601, %v3460, 0.0
    %v3465 = vadd.f32 %v3463, %v3464
    %v3466 = vrot.slane %v3465, 4
    %v3467 = vadd.f32 %v3465, %v3466
    %v3468 = vrot.slane %v3467, 2
    %v3469 = vadd.f32 %v3467, %v3468
    %v3470 = vrot.slane %v3469, 1
    %v3471 = vadd.f32 %v3469, %v3470
    %v3472 = vsel %vm1601, %v3461, 0.0
    %v3473 = vsel %vm1601, %v3462, 0.0
    %v3474 = vadd.f32 %v3472, %v3473
    %v3475 = vrot.slane %v3474, 4
    %v3476 = vadd.f32 %v3474, %v3475
    %v3477 = vrot.slane %v3476, 2
    %v3478 = vadd.f32 %v3476, %v3477
    %v3479 = vrot.slane %v3478, 1
    %v3480 = vadd.f32 %v3478, %v3479
    %v3481 = vadd.f32 %v3441, %v3471
    %v3482 = vadd.f32 %v3442, %v3480
    %v3484 = vlaneseq
    %v3485 = vshrl.u32 %v3484, 7
    %v3486 = vsub.s32 0, %v3485
    %v3487 = vrot.slane %v3158, %v3486
    %v3491 = vsel %vm931, %v3482, %v3481
    %v3493 = vadd.f32 %v3487, %v3491
    %v3495 = vsel %vm1601, %v3120, 0
    %v3498 = vsel %vm1601, %v3121, 0
    %v3501 = vsel %vm1601, %v3122, 0
    %v3504 = vsel %vm1601, %v3123, 0
    %3506 = vmatprep.subr.mxu0 0.0
    %v3507 = vand.u32 %v3141, 4294901760
    %3508 = vmatpush1.msra.mxu0 %v3507
    %3509 = vmatprep.subr.mxu0 0.0
    %3510 = vmatpush1.msra.mxu0 0.0
    %3511 = vmatprep.subr.mxu0 0.0
    %3512 = vmatpush1.msra.mxu0 0.0
    %3513 = vmatprep.subr.mxu0 0.0
    %3514 = vmatpush1.msra.mxu0 0.0
    %3515 = vmatprep.subr.mxu0 0.0
    %3516 = vmatpush1.msra.mxu0 0.0
    %3517 = vmatprep.subr.mxu0 0.0
    %3518 = vmatpush1.msra.mxu0 0.0
    %3519 = vmatprep.subr.mxu0 0.0
    %3520 = vmatpush1.msra.mxu0 0.0
    %3521 = vmatprep.subr.mxu0 0.0
    %3522 = vmatpush1.msra.mxu0 0.0
    %3523 = vmatprep.subr.mxu0 0.0
    %3524 = vmatpush1.msra.mxu0 0.0
    %3525 = vmatprep.subr.mxu0 0.0
    %3526 = vmatpush1.msra.mxu0 0.0
    %3527 = vmatprep.subr.mxu0 0.0
    %3528 = vmatpush1.msra.mxu0 0.0
    %3529 = vmatprep.subr.mxu0 0.0
    %3530 = vmatpush1.msra.mxu0 0.0
    %3531 = vmatprep.subr.mxu0 0.0
    %3532 = vmatpush1.msra.mxu0 0.0
    %3533 = vmatprep.subr.mxu0 0.0
    %3534 = vmatpush1.msra.mxu0 0.0
    %3535 = vmatprep.subr.mxu0 0.0
    %3536 = vmatpush1.msra.mxu0 0.0
    %3537 = vmatprep.subr.mxu0 0.0
    %3538 = vmatpush1.msra.mxu0 0.0
    %3539 = vmatprep.subr.mxu0 0.0
    %3540 = vmatpush1.msra.mxu0 0.0
    %3541 = vmatprep.subr.mxu0 0.0
    %3542 = vmatpush1.msra.mxu0 0.0
    %3543 = vmatprep.subr.mxu0 0.0
    %3544 = vmatpush1.msra.mxu0 0.0
    %3545 = vmatprep.subr.mxu0 0.0
    %3546 = vmatpush1.msra.mxu0 0.0
    %3547 = vmatprep.subr.mxu0 0.0
    %3548 = vmatpush1.msra.mxu0 0.0
    %3549 = vmatprep.subr.mxu0 0.0
    %3550 = vmatpush1.msra.mxu0 0.0
    %3551 = vmatprep.subr.mxu0 0.0
    %3552 = vmatpush1.msra.mxu0 0.0
    %3553 = vmatprep.subr.mxu0 0.0
    %3554 = vmatpush1.msra.mxu0 0.0
    %3555 = vmatprep.subr.mxu0 0.0
    %3556 = vmatpush1.msra.mxu0 0.0
    %3557 = vmatprep.subr.mxu0 0.0
    %3558 = vmatpush1.msra.mxu0 0.0
    %3559 = vmatprep.subr.mxu0 0.0
    %3560 = vmatpush1.msra.mxu0 0.0
    %3561 = vmatprep.subr.mxu0 0.0
    %3562 = vmatpush1.msra.mxu0 0.0
    %3563 = vmatprep.subr.mxu0 0.0
    %3564 = vmatpush1.msra.mxu0 0.0
    %3565 = vmatprep.subr.mxu0 0.0
    %3566 = vmatpush1.msra.mxu0 0.0
    %3567 = vmatprep.subr.mxu0 0.0
    %3568 = vmatpush1.msra.mxu0 0.0
    %3569 = vmatprep.subr.mxu0 0.0
    %3570 = vmatpush1.msra.mxu0 0.0
    %3571 = vmatprep.mubr.f32.mxu0 0.0
    %v3572 = vand.u32 %v3495, 4294901760
    %v3573 = vsub.f32 %v3495, %v3572
    %v3574 = vand.u32 %v3573, 4294901760
    %v3575 = vsub.f32 %v3573, %v3574
    %v3576 = vand.u32 %v3575, 4294901760
    %3577 = vmatmul.mubr.f32.gmra.mrb[0].mxu0 %v3576
    %v3578 = vpop.f32.mrb[0].mxu0
    %v3579 = vadd.f32 0.0, %v3578
    %v3580 = vpop.f32.mrb[0].mxu0
    %3581 = vmatprep.mubr.f32.mxu0 0.0
    %v3582 = vand.u32 %v3498, 4294901760
    %v3583 = vsub.f32 %v3498, %v3582
    %v3584 = vand.u32 %v3583, 4294901760
    %v3585 = vsub.f32 %v3583, %v3584
    %v3586 = vand.u32 %v3585, 4294901760
    %3587 = vmatmul.mubr.f32.gmra.mrb[0].mxu0 %v3586
    %v3588 = vpop.f32.mrb[0].mxu0
    %v3589 = vadd.f32 0.0, %v3588
    %v3590 = vpop.f32.mrb[0].mxu0
    %3591 = vmatprep.mubr.f32.mxu0 0.0
    %v3592 = vand.u32 %v3501, 4294901760
    %v3593 = vsub.f32 %v3501, %v3592
    %v3594 = vand.u32 %v3593, 4294901760
    %v3595 = vsub.f32 %v3593, %v3594
    %v3596 = vand.u32 %v3595, 4294901760
    %3597 = vmatmul.mubr.f32.gmra.mrb[0].mxu0 %v3596
    %v3598 = vpop.f32.mrb[0].mxu0
    %v3599 = vadd.f32 0.0, %v3598
    %v3600 = vpop.f32.mrb[0].mxu0
    %3601 = vmatprep.mubr.f32.mxu0 0.0
    %v3602 = vand.u32 %v3504, 4294901760
    %v3603 = vsub.f32 %v3504, %v3602
    %v3604 = vand.u32 %v3603, 4294901760
    %v3605 = vsub.f32 %v3603, %v3604
    %v3606 = vand.u32 %v3605, 4294901760
    %3607 = vmatmul.mubr.f32.gmra.mrb[0].mxu0 %v3606
    %v3608 = vpop.f32.mrb[0].mxu0
    %v3609 = vadd.f32 0.0, %v3608
    %v3610 = vpop.f32.mrb[0].mxu0
    %3611 = vdwg.mxu0
    %3612 = vmatprep.subr.mxu0 0.0
    %v3613 = vand.u32 %v3141, 4294901760
    %v3614 = vsub.f32 %v3141, %v3613
    %v3615 = vand.u32 %v3614, 4294901760
    %v3616 = vsub.f32 %v3614, %v3615
    %v3617 = vand.u32 %v3616, 4294901760
    %3618 = vmatpush1.msra.mxu0 %v3617
    %3619 = vmatprep.subr.mxu0 0.0
    %3620 = vmatpush1.msra.mxu0 0.0
    %3621 = vmatprep.subr.mxu0 0.0
    %3622 = vmatpush1.msra.mxu0 0.0
    %3623 = vmatprep.subr.mxu0 0.0
    %3624 = vmatpush1.msra.mxu0 0.0
    %3625 = vmatprep.subr.mxu0 0.0
    %3626 = vmatpush1.msra.mxu0 0.0
    %3627 = vmatprep.subr.mxu0 0.0
    %3628 = vmatpush1.msra.mxu0 0.0
    %3629 = vmatprep.subr.mxu0 0.0
    %3630 = vmatpush1.msra.mxu0 0.0
    %3631 = vmatprep.subr.mxu0 0.0
    %3632 = vmatpush1.msra.mxu0 0.0
    %3633 = vmatprep.subr.mxu0 0.0
    %3634 = vmatpush1.msra.mxu0 0.0
    %3635 = vmatprep.subr.mxu0 0.0
    %3636 = vmatpush1.msra.mxu0 0.0
    %3637 = vmatprep.subr.mxu0 0.0
    %3638 = vmatpush1.msra.mxu0 0.0
    %3639 = vmatprep.subr.mxu0 0.0
    %3640 = vmatpush1.msra.mxu0 0.0
    %3641 = vmatprep.subr.mxu0 0.0
    %3642 = vmatpush1.msra.mxu0 0.0
    %3643 = vmatprep.subr.mxu0 0.0
    %3644 = vmatpush1.msra.mxu0 0.0
    %3645 = vmatprep.subr.mxu0 0.0
    %3646 = vmatpush1.msra.mxu0 0.0
    %3647 = vmatprep.subr.mxu0 0.0
    %3648 = vmatpush1.msra.mxu0 0.0
    %3649 = vmatprep.subr.mxu0 0.0
    %3650 = vmatpush1.msra.mxu0 0.0
    %3651 = vmatprep.subr.mxu0 0.0
    %3652 = vmatpush1.msra.mxu0 0.0
    %3653 = vmatprep.subr.mxu0 0.0
    %3654 = vmatpush1.msra.mxu0 0.0
    %3655 = vmatprep.subr.mxu0 0.0
    %3656 = vmatpush1.msra.mxu0 0.0
    %3657 = vmatprep.subr.mxu0 0.0
    %3658 = vmatpush1.msra.mxu0 0.0
    %3659 = vmatprep.subr.mxu0 0.0
    %3660 = vmatpush1.msra.mxu0 0.0
    %3661 = vmatprep.subr.mxu0 0.0
    %3662 = vmatpush1.msra.mxu0 0.0
    %3663 = vmatprep.subr.mxu0 0.0
    %3664 = vmatpush1.msra.mxu0 0.0
    %3665 = vmatprep.subr.mxu0 0.0
    %3666 = vmatpush1.msra.mxu0 0.0
    %3667 = vmatprep.subr.mxu0 0.0
    %3668 = vmatpush1.msra.mxu0 0.0
    %3669 = vmatprep.subr.mxu0 0.0
    %3670 = vmatpush1.msra.mxu0 0.0
    %3671 = vmatprep.subr.mxu0 0.0
    %3672 = vmatpush1.msra.mxu0 0.0
    %3673 = vmatprep.subr.mxu0 0.0
    %3674 = vmatpush1.msra.mxu0 0.0
    %3675 = vmatprep.subr.mxu0 0.0
    %3676 = vmatpush1.msra.mxu0 0.0
    %3677 = vmatprep.subr.mxu0 0.0
    %3678 = vmatpush1.msra.mxu0 0.0
    %3679 = vmatprep.subr.mxu0 0.0
    %3680 = vmatpush1.msra.mxu0 0.0
    %3681 = vmatprep.mubr.f32.mxu0 0.0
    %v3682 = vand.u32 %v3495, 4294901760
    %3683 = vmatmul.mubr.f32.gmra.mrb[0].mxu0 %v3682
    %v3684 = vpop.f32.mrb[0].mxu0
    %v3685 = vadd.f32 %v3579, %v3684
    %v3686 = vpop.f32.mrb[0].mxu0
    %3687 = vmatprep.mubr.f32.mxu0 0.0
    %v3688 = vand.u32 %v3498, 4294901760
    %3689 = vmatmul.mubr.f32.gmra.mrb[0].mxu0 %v3688
    %v3690 = vpop.f32.mrb[0].mxu0
    %v3691 = vadd.f32 %v3589, %v3690
    %v3692 = vpop.f32.mrb[0].mxu0
    %3693 = vmatprep.mubr.f32.mxu0 0.0
    %v3694 = vand.u32 %v3501, 4294901760
    %3695 = vmatmul.mubr.f32.gmra.mrb[0].mxu0 %v3694
    %v3696 = vpop.f32.mrb[0].mxu0
    %v3697 = vadd.f32 %v3599, %v3696
    %v3698 = vpop.f32.mrb[0].mxu0
    %3699 = vmatprep.mubr.f32.mxu0 0.0
    %v3700 = vand.u32 %v3504, 4294901760
    %3701 = vmatmul.mubr.f32.gmra.mrb[0].mxu0 %v3700
    %v3702 = vpop.f32.mrb[0].mxu0
    %v3703 = vadd.f32 %v3609, %v3702
    %v3704 = vpop.f32.mrb[0].mxu0
    %3705 = vdwg.mxu0
    %3706 = vmatprep.subr.mxu0 0.0
    %v3707 = vand.u32 %v3141, 4294901760
    %v3708 = vsub.f32 %v3141, %v3707
    %3709 = vmatpush1.msra.mxu0 %v3708
    %3710 = vmatprep.subr.mxu0 0.0
    %3711 = vmatpush1.msra.mxu0 0.0
    %3712 = vmatprep.subr.mxu0 0.0
    %3713 = vmatpush1.msra.mxu0 0.0
    %3714 = vmatprep.subr.mxu0 0.0
    %3715 = vmatpush1.msra.mxu0 0.0
    %3716 = vmatprep.subr.mxu0 0.0
    %3717 = vmatpush1.msra.mxu0 0.0
    %3718 = vmatprep.subr.mxu0 0.0
    %3719 = vmatpush1.msra.mxu0 0.0
    %3720 = vmatprep.subr.mxu0 0.0
    %3721 = vmatpush1.msra.mxu0 0.0
    %3722 = vmatprep.subr.mxu0 0.0
    %3723 = vmatpush1.msra.mxu0 0.0
    %3724 = vmatprep.subr.mxu0 0.0
    %3725 = vmatpush1.msra.mxu0 0.0
    %3726 = vmatprep.subr.mxu0 0.0
    %3727 = vmatpush1.msra.mxu0 0.0
    %3728 = vmatprep.subr.mxu0 0.0
    %3729 = vmatpush1.msra.mxu0 0.0
    %3730 = vmatprep.subr.mxu0 0.0
    %3731 = vmatpush1.msra.mxu0 0.0
    %3732 = vmatprep.subr.mxu0 0.0
    %3733 = vmatpush1.msra.mxu0 0.0
    %3734 = vmatprep.subr.mxu0 0.0
    %3735 = vmatpush1.msra.mxu0 0.0
    %3736 = vmatprep.subr.mxu0 0.0
    %3737 = vmatpush1.msra.mxu0 0.0
    %3738 = vmatprep.subr.mxu0 0.0
    %3739 = vmatpush1.msra.mxu0 0.0
    %3740 = vmatprep.subr.mxu0 0.0
    %3741 = vmatpush1.msra.mxu0 0.0
    %3742 = vmatprep.subr.mxu0 0.0
    %3743 = vmatpush1.msra.mxu0 0.0
    %3744 = vmatprep.subr.mxu0 0.0
    %3745 = vmatpush1.msra.mxu0 0.0
    %3746 = vmatprep.subr.mxu0 0.0
    %3747 = vmatpush1.msra.mxu0 0.0
    %3748 = vmatprep.subr.mxu0 0.0
    %3749 = vmatpush1.msra.mxu0 0.0
    %3750 = vmatprep.subr.mxu0 0.0
    %3751 = vmatpush1.msra.mxu0 0.0
    %3752 = vmatprep.subr.mxu0 0.0
    %3753 = vmatpush1.msra.mxu0 0.0
    %3754 = vmatprep.subr.mxu0 0.0
    %3755 = vmatpush1.msra.mxu0 0.0
    %3756 = vmatprep.subr.mxu0 0.0
    %3757 = vmatpush1.msra.mxu0 0.0
    %3758 = vmatprep.subr.mxu0 0.0
    %3759 = vmatpush1.msra.mxu0 0.0
    %3760 = vmatprep.subr.mxu0 0.0
    %3761 = vmatpush1.msra.mxu0 0.0
    %3762 = vmatprep.subr.mxu0 0.0
    %3763 = vmatpush1.msra.mxu0 0.0
    %3764 = vmatprep.subr.mxu0 0.0
    %3765 = vmatpush1.msra.mxu0 0.0
    %3766 = vmatprep.subr.mxu0 0.0
    %3767 = vmatpush1.msra.mxu0 0.0
    %3768 = vmatprep.subr.mxu0 0.0
    %3769 = vmatpush1.msra.mxu0 0.0
    %3770 = vmatprep.subr.mxu0 0.0
    %3771 = vmatpush1.msra.mxu0 0.0
    %3772 = vmatprep.mubr.f32.mxu0 0.0
    %v3773 = vand.u32 %v3495, 4294901760
    %v3774 = vsub.f32 %v3495, %v3773
    %3775 = vmatmul.mubr.f32.gmra.mrb[0].mxu0 %v3774
    %v3776 = vpop.f32.mrb[0].mxu0
    %v3777 = vadd.f32 %v3685, %v3776
    %v3778 = vpop.f32.mrb[0].mxu0
    %3779 = vmatprep.mubr.f32.mxu0 0.0
    %v3780 = vand.u32 %v3498, 4294901760
    %v3781 = vsub.f32 %v3498, %v3780
    %3782 = vmatmul.mubr.f32.gmra.mrb[0].mxu0 %v3781
    %v3783 = vpop.f32.mrb[0].mxu0
    %v3784 = vadd.f32 %v3691, %v3783
    %v3785 = vpop.f32.mrb[0].mxu0
    %3786 = vmatprep.mubr.f32.mxu0 0.0
    %v3787 = vand.u32 %v3501, 4294901760
    %v3788 = vsub.f32 %v3501, %v3787
    %3789 = vmatmul.mubr.f32.gmra.mrb[0].mxu0 %v3788
    %v3790 = vpop.f32.mrb[0].mxu0
    %v3791 = vadd.f32 %v3697, %v3790
    %v3792 = vpop.f32.mrb[0].mxu0
    %3793 = vmatprep.mubr.f32.mxu0 0.0
    %v3794 = vand.u32 %v3504, 4294901760
    %v3795 = vsub.f32 %v3504, %v3794
    %3796 = vmatmul.mubr.f32.gmra.mrb[0].mxu0 %v3795
    %v3797 = vpop.f32.mrb[0].mxu0
    %v3798 = vadd.f32 %v3703, %v3797
    %v3799 = vpop.f32.mrb[0].mxu0
    %3800 = vdwg.mxu0
    %3801 = vmatprep.subr.mxu0 0.0
    %v3802 = vand.u32 %v3141, 4294901760
    %3803 = vmatpush1.msra.mxu0 %v3802
    %3804 = vmatprep.subr.mxu0 0.0
    %3805 = vmatpush1.msra.mxu0 0.0
    %3806 = vmatprep.subr.mxu0 0.0
    %3807 = vmatpush1.msra.mxu0 0.0
    %3808 = vmatprep.subr.mxu0 0.0
    %3809 = vmatpush1.msra.mxu0 0.0
    %3810 = vmatprep.subr.mxu0 0.0
    %3811 = vmatpush1.msra.mxu0 0.0
    %3812 = vmatprep.subr.mxu0 0.0
    %3813 = vmatpush1.msra.mxu0 0.0
    %3814 = vmatprep.subr.mxu0 0.0
    %3815 = vmatpush1.msra.mxu0 0.0
    %3816 = vmatprep.subr.mxu0 0.0
    %3817 = vmatpush1.msra.mxu0 0.0
    %3818 = vmatprep.subr.mxu0 0.0
    %3819 = vmatpush1.msra.mxu0 0.0
    %3820 = vmatprep.subr.mxu0 0.0
    %3821 = vmatpush1.msra.mxu0 0.0
    %3822 = vmatprep.subr.mxu0 0.0
    %3823 = vmatpush1.msra.mxu0 0.0
    %3824 = vmatprep.subr.mxu0 0.0
    %3825 = vmatpush1.msra.mxu0 0.0
    %3826 = vmatprep.subr.mxu0 0.0
    %3827 = vmatpush1.msra.mxu0 0.0
    %3828 = vmatprep.subr.mxu0 0.0
    %3829 = vmatpush1.msra.mxu0 0.0
    %3830 = vmatprep.subr.mxu0 0.0
    %3831 = vmatpush1.msra.mxu0 0.0
    %3832 = vmatprep.subr.mxu0 0.0
    %3833 = vmatpush1.msra.mxu0 0.0
    %3834 = vmatprep.subr.mxu0 0.0
    %3835 = vmatpush1.msra.mxu0 0.0
    %3836 = vmatprep.subr.mxu0 0.0
    %3837 = vmatpush1.msra.mxu0 0.0
    %3838 = vmatprep.subr.mxu0 0.0
    %3839 = vmatpush1.msra.mxu0 0.0
    %3840 = vmatprep.subr.mxu0 0.0
    %3841 = vmatpush1.msra.mxu0 0.0
    %3842 = vmatprep.subr.mxu0 0.0
    %3843 = vmatpush1.msra.mxu0 0.0
    %3844 = vmatprep.subr.mxu0 0.0
    %3845 = vmatpush1.msra.mxu0 0.0
    %3846 = vmatprep.subr.mxu0 0.0
    %3847 = vmatpush1.msra.mxu0 0.0
    %3848 = vmatprep.subr.mxu0 0.0
    %3849 = vmatpush1.msra.mxu0 0.0
    %3850 = vmatprep.subr.mxu0 0.0
    %3851 = vmatpush1.msra.mxu0 0.0
    %3852 = vmatprep.subr.mxu0 0.0
    %3853 = vmatpush1.msra.mxu0 0.0
    %3854 = vmatprep.subr.mxu0 0.0
    %3855 = vmatpush1.msra.mxu0 0.0
    %3856 = vmatprep.subr.mxu0 0.0
    %3857 = vmatpush1.msra.mxu0 0.0
    %3858 = vmatprep.subr.mxu0 0.0
    %3859 = vmatpush1.msra.mxu0 0.0
    %3860 = vmatprep.subr.mxu0 0.0
    %3861 = vmatpush1.msra.mxu0 0.0
    %3862 = vmatprep.subr.mxu0 0.0
    %3863 = vmatpush1.msra.mxu0 0.0
    %3864 = vmatprep.subr.mxu0 0.0
    %3865 = vmatpush1.msra.mxu0 0.0
    %3866 = vmatprep.mubr.f32.mxu0 0.0
    %v3867 = vand.u32 %v3495, 4294901760
    %v3868 = vsub.f32 %v3495, %v3867
    %v3869 = vand.u32 %v3868, 4294901760
    %3870 = vmatmul.mubr.f32.gmra.mrb[0].mxu0 %v3869
    %v3871 = vpop.f32.mrb[0].mxu0
    %v3872 = vadd.f32 %v3777, %v3871
    %v3873 = vpop.f32.mrb[0].mxu0
    %3874 = vmatprep.mubr.f32.mxu0 0.0
    %v3875 = vand.u32 %v3498, 4294901760
    %v3876 = vsub.f32 %v3498, %v3875
    %v3877 = vand.u32 %v3876, 4294901760
    %3878 = vmatmul.mubr.f32.gmra.mrb[0].mxu0 %v3877
    %v3879 = vpop.f32.mrb[0].mxu0
    %v3880 = vadd.f32 %v3784, %v3879
    %v3881 = vpop.f32.mrb[0].mxu0
    %3882 = vmatprep.mubr.f32.mxu0 0.0
    %v3883 = vand.u32 %v3501, 4294901760
    %v3884 = vsub.f32 %v3501, %v3883
    %v3885 = vand.u32 %v3884, 4294901760
    %3886 = vmatmul.mubr.f32.gmra.mrb[0].mxu0 %v3885
    %v3887 = vpop.f32.mrb[0].mxu0
    %v3888 = vadd.f32 %v3791, %v3887
    %v3889 = vpop.f32.mrb[0].mxu0
    %3890 = vmatprep.mubr.f32.mxu0 0.0
    %v3891 = vand.u32 %v3504, 4294901760
    %v3892 = vsub.f32 %v3504, %v3891
    %v3893 = vand.u32 %v3892, 4294901760
    %3894 = vmatmul.mubr.f32.gmra.mrb[0].mxu0 %v3893
    %v3895 = vpop.f32.mrb[0].mxu0
    %v3896 = vadd.f32 %v3798, %v3895
    %v3897 = vpop.f32.mrb[0].mxu0
    %3898 = vdwg.mxu0
    %3899 = vmatprep.subr.mxu0 0.0
    %v3900 = vand.u32 %v3141, 4294901760
    %v3901 = vsub.f32 %v3141, %v3900
    %v3902 = vand.u32 %v3901, 4294901760
    %3903 = vmatpush1.msra.mxu0 %v3902
    %3904 = vmatprep.subr.mxu0 0.0
    %3905 = vmatpush1.msra.mxu0 0.0
    %3906 = vmatprep.subr.mxu0 0.0
    %3907 = vmatpush1.msra.mxu0 0.0
    %3908 = vmatprep.subr.mxu0 0.0
    %3909 = vmatpush1.msra.mxu0 0.0
    %3910 = vmatprep.subr.mxu0 0.0
    %3911 = vmatpush1.msra.mxu0 0.0
    %3912 = vmatprep.subr.mxu0 0.0
    %3913 = vmatpush1.msra.mxu0 0.0
    %3914 = vmatprep.subr.mxu0 0.0
    %3915 = vmatpush1.msra.mxu0 0.0
    %3916 = vmatprep.subr.mxu0 0.0
    %3917 = vmatpush1.msra.mxu0 0.0
    %3918 = vmatprep.subr.mxu0 0.0
    %3919 = vmatpush1.msra.mxu0 0.0
    %3920 = vmatprep.subr.mxu0 0.0
    %3921 = vmatpush1.msra.mxu0 0.0
    %3922 = vmatprep.subr.mxu0 0.0
    %3923 = vmatpush1.msra.mxu0 0.0
    %3924 = vmatprep.subr.mxu0 0.0
    %3925 = vmatpush1.msra.mxu0 0.0
    %3926 = vmatprep.subr.mxu0 0.0
    %3927 = vmatpush1.msra.mxu0 0.0
    %3928 = vmatprep.subr.mxu0 0.0
    %3929 = vmatpush1.msra.mxu0 0.0
    %3930 = vmatprep.subr.mxu0 0.0
    %3931 = vmatpush1.msra.mxu0 0.0
    %3932 = vmatprep.subr.mxu0 0.0
    %3933 = vmatpush1.msra.mxu0 0.0
    %3934 = vmatprep.subr.mxu0 0.0
    %3935 = vmatpush1.msra.mxu0 0.0
    %3936 = vmatprep.subr.mxu0 0.0
    %3937 = vmatpush1.msra.mxu0 0.0
    %3938 = vmatprep.subr.mxu0 0.0
    %3939 = vmatpush1.msra.mxu0 0.0
    %3940 = vmatprep.subr.mxu0 0.0
    %3941 = vmatpush1.msra.mxu0 0.0
    %3942 = vmatprep.subr.mxu0 0.0
    %3943 = vmatpush1.msra.mxu0 0.0
    %3944 = vmatprep.subr.mxu0 0.0
    %3945 = vmatpush1.msra.mxu0 0.0
    %3946 = vmatprep.subr.mxu0 0.0
    %3947 = vmatpush1.msra.mxu0 0.0
    %3948 = vmatprep.subr.mxu0 0.0
    %3949 = vmatpush1.msra.mxu0 0.0
    %3950 = vmatprep.subr.mxu0 0.0
    %3951 = vmatpush1.msra.mxu0 0.0
    %3952 = vmatprep.subr.mxu0 0.0
    %3953 = vmatpush1.msra.mxu0 0.0
    %3954 = vmatprep.subr.mxu0 0.0
    %3955 = vmatpush1.msra.mxu0 0.0
    %3956 = vmatprep.subr.mxu0 0.0
    %3957 = vmatpush1.msra.mxu0 0.0
    %3958 = vmatprep.subr.mxu0 0.0
    %3959 = vmatpush1.msra.mxu0 0.0
    %3960 = vmatprep.subr.mxu0 0.0
    %3961 = vmatpush1.msra.mxu0 0.0
    %3962 = vmatprep.subr.mxu0 0.0
    %3963 = vmatpush1.msra.mxu0 0.0
    %3964 = vmatprep.subr.mxu0 0.0
    %3965 = vmatpush1.msra.mxu0 0.0
    %3966 = vmatprep.mubr.f32.mxu0 0.0
    %v3967 = vand.u32 %v3495, 4294901760
    %3968 = vmatmul.mubr.f32.gmra.mrb[0].mxu0 %v3967
    %v3969 = vpop.f32.mrb[0].mxu0
    %v3970 = vadd.f32 %v3872, %v3969
    %v3971 = vpop.f32.mrb[0].mxu0
    %3972 = vmatprep.mubr.f32.mxu0 0.0
    %v3973 = vand.u32 %v3498, 4294901760
    %3974 = vmatmul.mubr.f32.gmra.mrb[0].mxu0 %v3973
    %v3975 = vpop.f32.mrb[0].mxu0
    %v3976 = vadd.f32 %v3880, %v3975
    %v3977 = vpop.f32.mrb[0].mxu0
    %3978 = vmatprep.mubr.f32.mxu0 0.0
    %v3979 = vand.u32 %v3501, 4294901760
    %3980 = vmatmul.mubr.f32.gmra.mrb[0].mxu0 %v3979
    %v3981 = vpop.f32.mrb[0].mxu0
    %v3982 = vadd.f32 %v3888, %v3981
    %v3983 = vpop.f32.mrb[0].mxu0
    %3984 = vmatprep.mubr.f32.mxu0 0.0
    %v3985 = vand.u32 %v3504, 4294901760
    %3986 = vmatmul.mubr.f32.gmra.mrb[0].mxu0 %v3985
    %v3987 = vpop.f32.mrb[0].mxu0
    %v3988 = vadd.f32 %v3896, %v3987
    %v3989 = vpop.f32.mrb[0].mxu0
    %3990 = vdwg.mxu0
    %3991 = vmatprep.subr.mxu0 0.0
    %v3992 = vand.u32 %v3141, 4294901760
    %3993 = vmatpush1.msra.mxu0 %v3992
    %3994 = vmatprep.subr.mxu0 0.0
    %3995 = vmatpush1.msra.mxu0 0.0
    %3996 = vmatprep.subr.mxu0 0.0
    %3997 = vmatpush1.msra.mxu0 0.0
    %3998 = vmatprep.subr.mxu0 0.0
    %3999 = vmatpush1.msra.mxu0 0.0
    %4000 = vmatprep.subr.mxu0 0.0
    %4001 = vmatpush1.msra.mxu0 0.0
    %4002 = vmatprep.subr.mxu0 0.0
    %4003 = vmatpush1.msra.mxu0 0.0
    %4004 = vmatprep.subr.mxu0 0.0
    %4005 = vmatpush1.msra.mxu0 0.0
    %4006 = vmatprep.subr.mxu0 0.0
    %4007 = vmatpush1.msra.mxu0 0.0
    %4008 = vmatprep.subr.mxu0 0.0
    %4009 = vmatpush1.msra.mxu0 0.0
    %4010 = vmatprep.subr.mxu0 0.0
    %4011 = vmatpush1.msra.mxu0 0.0
    %4012 = vmatprep.subr.mxu0 0.0
    %4013 = vmatpush1.msra.mxu0 0.0
    %4014 = vmatprep.subr.mxu0 0.0
    %4015 = vmatpush1.msra.mxu0 0.0
    %4016 = vmatprep.subr.mxu0 0.0
    %4017 = vmatpush1.msra.mxu0 0.0
    %4018 = vmatprep.subr.mxu0 0.0
    %4019 = vmatpush1.msra.mxu0 0.0
    %4020 = vmatprep.subr.mxu0 0.0
    %4021 = vmatpush1.msra.mxu0 0.0
    %4022 = vmatprep.subr.mxu0 0.0
    %4023 = vmatpush1.msra.mxu0 0.0
    %4024 = vmatprep.subr.mxu0 0.0
    %4025 = vmatpush1.msra.mxu0 0.0
    %4026 = vmatprep.subr.mxu0 0.0
    %4027 = vmatpush1.msra.mxu0 0.0
    %4028 = vmatprep.subr.mxu0 0.0
    %4029 = vmatpush1.msra.mxu0 0.0
    %4030 = vmatprep.subr.mxu0 0.0
    %4031 = vmatpush1.msra.mxu0 0.0
    %4032 = vmatprep.subr.mxu0 0.0
    %4033 = vmatpush1.msra.mxu0 0.0
    %4034 = vmatprep.subr.mxu0 0.0
    %4035 = vmatpush1.msra.mxu0 0.0
    %4036 = vmatprep.subr.mxu0 0.0
    %4037 = vmatpush1.msra.mxu0 0.0
    %4038 = vmatprep.subr.mxu0 0.0
    %4039 = vmatpush1.msra.mxu0 0.0
    %4040 = vmatprep.subr.mxu0 0.0
    %4041 = vmatpush1.msra.mxu0 0.0
    %4042 = vmatprep.subr.mxu0 0.0
    %4043 = vmatpush1.msra.mxu0 0.0
    %4044 = vmatprep.subr.mxu0 0.0
    %4045 = vmatpush1.msra.mxu0 0.0
    %4046 = vmatprep.subr.mxu0 0.0
    %4047 = vmatpush1.msra.mxu0 0.0
    %4048 = vmatprep.subr.mxu0 0.0
    %4049 = vmatpush1.msra.mxu0 0.0
    %4050 = vmatprep.subr.mxu0 0.0
    %4051 = vmatpush1.msra.mxu0 0.0
    %4052 = vmatprep.subr.mxu0 0.0
    %4053 = vmatpush1.msra.mxu0 0.0
    %4054 = vmatprep.subr.mxu0 0.0
    %4055 = vmatpush1.msra.mxu0 0.0
    %4056 = vmatprep.mubr.f32.mxu0 0.0
    %v4057 = vand.u32 %v3495, 4294901760
    %4058 = vmatmul.mubr.f32.gmra.mrb[0].mxu0 %v4057
    %v4059 = vpop.f32.mrb[0].mxu0
    %v4060 = vadd.f32 %v3970, %v4059
    %v4061 = vpop.f32.mrb[0].mxu0
    %4062 = vmatprep.mubr.f32.mxu0 0.0
    %v4063 = vand.u32 %v3498, 4294901760
    %4064 = vmatmul.mubr.f32.gmra.mrb[0].mxu0 %v4063
    %v4065 = vpop.f32.mrb[0].mxu0
    %v4066 = vadd.f32 %v3976, %v4065
    %v4067 = vpop.f32.mrb[0].mxu0
    %4068 = vmatprep.mubr.f32.mxu0 0.0
    %v4069 = vand.u32 %v3501, 4294901760
    %4070 = vmatmul.mubr.f32.gmra.mrb[0].mxu0 %v4069
    %v4071 = vpop.f32.mrb[0].mxu0
    %v4072 = vadd.f32 %v3982, %v4071
    %v4073 = vpop.f32.mrb[0].mxu0
    %4074 = vmatprep.mubr.f32.mxu0 0.0
    %v4075 = vand.u32 %v3504, 4294901760
    %4076 = vmatmul.mubr.f32.gmra.mrb[0].mxu0 %v4075
    %v4077 = vpop.f32.mrb[0].mxu0
    %v4078 = vadd.f32 %v3988, %v4077
    %v4079 = vpop.f32.mrb[0].mxu0
    %4080 = vdwg.mxu0
    %v4081 = vsel %vm1601, %v2380, 0
    %v4083 = vsel %vm1601, %v2381, 0
    %v4085 = vsel %vm1601, %v2382, 0
    %v4087 = vsel %vm1601, %v2383, 0
    %4089 = vmatprep.subr.mxu0 0.0
    %v4090 = vand.u32 %v3124, 4294901760
    %4091 = vmatpush1.msra.mxu0 %v4090
    %4092 = vmatprep.subr.mxu0 0.0
    %4093 = vmatpush1.msra.mxu0 0.0
    %4094 = vmatprep.subr.mxu0 0.0
    %4095 = vmatpush1.msra.mxu0 0.0
    %4096 = vmatprep.subr.mxu0 0.0
    %4097 = vmatpush1.msra.mxu0 0.0
    %4098 = vmatprep.subr.mxu0 0.0
    %4099 = vmatpush1.msra.mxu0 0.0
    %4100 = vmatprep.subr.mxu0 0.0
    %4101 = vmatpush1.msra.mxu0 0.0
    %4102 = vmatprep.subr.mxu0 0.0
    %4103 = vmatpush1.msra.mxu0 0.0
    %4104 = vmatprep.subr.mxu0 0.0
    %4105 = vmatpush1.msra.mxu0 0.0
    %4106 = vmatprep.subr.mxu0 0.0
    %4107 = vmatpush1.msra.mxu0 0.0
    %4108 = vmatprep.subr.mxu0 0.0
    %4109 = vmatpush1.msra.mxu0 0.0
    %4110 = vmatprep.subr.mxu0 0.0
    %4111 = vmatpush1.msra.mxu0 0.0
    %4112 = vmatprep.subr.mxu0 0.0
    %4113 = vmatpush1.msra.mxu0 0.0
    %4114 = vmatprep.subr.mxu0 0.0
    %4115 = vmatpush1.msra.mxu0 0.0
    %4116 = vmatprep.subr.mxu0 0.0
    %4117 = vmatpush1.msra.mxu0 0.0
    %4118 = vmatprep.subr.mxu0 0.0
    %4119 = vmatpush1.msra.mxu0 0.0
    %4120 = vmatprep.subr.mxu0 0.0
    %4121 = vmatpush1.msra.mxu0 0.0
    %4122 = vmatprep.subr.mxu0 0.0
    %4123 = vmatpush1.msra.mxu0 0.0
    %4124 = vmatprep.subr.mxu0 0.0
    %4125 = vmatpush1.msra.mxu0 0.0
    %4126 = vmatprep.subr.mxu0 0.0
    %4127 = vmatpush1.msra.mxu0 0.0
    %4128 = vmatprep.subr.mxu0 0.0
    %4129 = vmatpush1.msra.mxu0 0.0
    %4130 = vmatprep.subr.mxu0 0.0
    %4131 = vmatpush1.msra.mxu0 0.0
    %4132 = vmatprep.subr.mxu0 0.0
    %4133 = vmatpush1.msra.mxu0 0.0
    %4134 = vmatprep.subr.mxu0 0.0
    %4135 = vmatpush1.msra.mxu0 0.0
    %4136 = vmatprep.subr.mxu0 0.0
    %4137 = vmatpush1.msra.mxu0 0.0
    %4138 = vmatprep.subr.mxu0 0.0
    %4139 = vmatpush1.msra.mxu0 0.0
    %4140 = vmatprep.subr.mxu0 0.0
    %4141 = vmatpush1.msra.mxu0 0.0
    %4142 = vmatprep.subr.mxu0 0.0
    %4143 = vmatpush1.msra.mxu0 0.0
    %4144 = vmatprep.subr.mxu0 0.0
    %4145 = vmatpush1.msra.mxu0 0.0
    %4146 = vmatprep.subr.mxu0 0.0
    %4147 = vmatpush1.msra.mxu0 0.0
    %4148 = vmatprep.subr.mxu0 0.0
    %4149 = vmatpush1.msra.mxu0 0.0
    %4150 = vmatprep.subr.mxu0 0.0
    %4151 = vmatpush1.msra.mxu0 0.0
    %4152 = vmatprep.subr.mxu0 0.0
    %4153 = vmatpush1.msra.mxu0 0.0
    %4154 = vmatprep.mubr.f32.mxu0 0.0
    %v4155 = vand.u32 %v4081, 4294901760
    %v4156 = vsub.f32 %v4081, %v4155
    %v4157 = vand.u32 %v4156, 4294901760
    %v4158 = vsub.f32 %v4156, %v4157
    %v4159 = vand.u32 %v4158, 4294901760
    %4160 = vmatmul.mubr.f32.gmra.mrb[0].mxu0 %v4159
    %v4161 = vpop.f32.mrb[0].mxu0
    %v4162 = vadd.f32 %v4060, %v4161
    %v4163 = vpop.f32.mrb[0].mxu0
    %4164 = vmatprep.mubr.f32.mxu0 0.0
    %v4165 = vand.u32 %v4083, 4294901760
    %v4166 = vsub.f32 %v4083, %v4165
    %v4167 = vand.u32 %v4166, 4294901760
    %v4168 = vsub.f32 %v4166, %v4167
    %v4169 = vand.u32 %v4168, 4294901760
    %4170 = vmatmul.mubr.f32.gmra.mrb[0].mxu0 %v4169
    %v4171 = vpop.f32.mrb[0].mxu0
    %v4172 = vadd.f32 %v4066, %v4171
    %v4173 = vpop.f32.mrb[0].mxu0
    %4174 = vmatprep.mubr.f32.mxu0 0.0
    %v4175 = vand.u32 %v4085, 4294901760
    %v4176 = vsub.f32 %v4085, %v4175
    %v4177 = vand.u32 %v4176, 4294901760
    %v4178 = vsub.f32 %v4176, %v4177
    %v4179 = vand.u32 %v4178, 4294901760
    %4180 = vmatmul.mubr.f32.gmra.mrb[0].mxu0 %v4179
    %v4181 = vpop.f32.mrb[0].mxu0
    %v4182 = vadd.f32 %v4072, %v4181
    %v4183 = vpop.f32.mrb[0].mxu0
    %4184 = vmatprep.mubr.f32.mxu0 0.0
    %v4185 = vand.u32 %v4087, 4294901760
    %v4186 = vsub.f32 %v4087, %v4185
    %v4187 = vand.u32 %v4186, 4294901760
    %v4188 = vsub.f32 %v4186, %v4187
    %v4189 = vand.u32 %v4188, 4294901760
    %4190 = vmatmul.mubr.f32.gmra.mrb[0].mxu0 %v4189
    %v4191 = vpop.f32.mrb[0].mxu0
    %v4192 = vadd.f32 %v4078, %v4191
    %v4193 = vpop.f32.mrb[0].mxu0
    %4194 = vdwg.mxu0
    %4195 = vmatprep.subr.mxu0 0.0
    %v4196 = vand.u32 %v3124, 4294901760
    %v4197 = vsub.f32 %v3124, %v4196
    %v4198 = vand.u32 %v4197, 4294901760
    %v4199 = vsub.f32 %v4197, %v4198
    %v4200 = vand.u32 %v4199, 4294901760
    %4201 = vmatpush1.msra.mxu0 %v4200
    %4202 = vmatprep.subr.mxu0 0.0
    %4203 = vmatpush1.msra.mxu0 0.0
    %4204 = vmatprep.subr.mxu0 0.0
    %4205 = vmatpush1.msra.mxu0 0.0
    %4206 = vmatprep.subr.mxu0 0.0
    %4207 = vmatpush1.msra.mxu0 0.0
    %4208 = vmatprep.subr.mxu0 0.0
    %4209 = vmatpush1.msra.mxu0 0.0
    %4210 = vmatprep.subr.mxu0 0.0
    %4211 = vmatpush1.msra.mxu0 0.0
    %4212 = vmatprep.subr.mxu0 0.0
    %4213 = vmatpush1.msra.mxu0 0.0
    %4214 = vmatprep.subr.mxu0 0.0
    %4215 = vmatpush1.msra.mxu0 0.0
    %4216 = vmatprep.subr.mxu0 0.0
    %4217 = vmatpush1.msra.mxu0 0.0
    %4218 = vmatprep.subr.mxu0 0.0
    %4219 = vmatpush1.msra.mxu0 0.0
    %4220 = vmatprep.subr.mxu0 0.0
    %4221 = vmatpush1.msra.mxu0 0.0
    %4222 = vmatprep.subr.mxu0 0.0
    %4223 = vmatpush1.msra.mxu0 0.0
    %4224 = vmatprep.subr.mxu0 0.0
    %4225 = vmatpush1.msra.mxu0 0.0
    %4226 = vmatprep.subr.mxu0 0.0
    %4227 = vmatpush1.msra.mxu0 0.0
    %4228 = vmatprep.subr.mxu0 0.0
    %4229 = vmatpush1.msra.mxu0 0.0
    %4230 = vmatprep.subr.mxu0 0.0
    %4231 = vmatpush1.msra.mxu0 0.0
    %4232 = vmatprep.subr.mxu0 0.0
    %4233 = vmatpush1.msra.mxu0 0.0
    %4234 = vmatprep.subr.mxu0 0.0
    %4235 = vmatpush1.msra.mxu0 0.0
    %4236 = vmatprep.subr.mxu0 0.0
    %4237 = vmatpush1.msra.mxu0 0.0
    %4238 = vmatprep.subr.mxu0 0.0
    %4239 = vmatpush1.msra.mxu0 0.0
    %4240 = vmatprep.subr.mxu0 0.0
    %4241 = vmatpush1.msra.mxu0 0.0
    %4242 = vmatprep.subr.mxu0 0.0
    %4243 = vmatpush1.msra.mxu0 0.0
    %4244 = vmatprep.subr.mxu0 0.0
    %4245 = vmatpush1.msra.mxu0 0.0
    %4246 = vmatprep.subr.mxu0 0.0
    %4247 = vmatpush1.msra.mxu0 0.0
    %4248 = vmatprep.subr.mxu0 0.0
    %4249 = vmatpush1.msra.mxu0 0.0
    %4250 = vmatprep.subr.mxu0 0.0
    %4251 = vmatpush1.msra.mxu0 0.0
    %4252 = vmatprep.subr.mxu0 0.0
    %4253 = vmatpush1.msra.mxu0 0.0
    %4254 = vmatprep.subr.mxu0 0.0
    %4255 = vmatpush1.msra.mxu0 0.0
    %4256 = vmatprep.subr.mxu0 0.0
    %4257 = vmatpush1.msra.mxu0 0.0
    %4258 = vmatprep.subr.mxu0 0.0
    %4259 = vmatpush1.msra.mxu0 0.0
    %4260 = vmatprep.subr.mxu0 0.0
    %4261 = vmatpush1.msra.mxu0 0.0
    %4262 = vmatprep.subr.mxu0 0.0
    %4263 = vmatpush1.msra.mxu0 0.0
    %4264 = vmatprep.mubr.f32.mxu0 0.0
    %v4265 = vand.u32 %v4081, 4294901760
    %4266 = vmatmul.mubr.f32.gmra.mrb[0].mxu0 %v4265
    %v4267 = vpop.f32.mrb[0].mxu0
    %v4268 = vadd.f32 %v4162, %v4267
    %v4269 = vpop.f32.mrb[0].mxu0
    %4270 = vmatprep.mubr.f32.mxu0 0.0
    %v4271 = vand.u32 %v4083, 4294901760
    %4272 = vmatmul.mubr.f32.gmra.mrb[0].mxu0 %v4271
    %v4273 = vpop.f32.mrb[0].mxu0
    %v4274 = vadd.f32 %v4172, %v4273
    %v4275 = vpop.f32.mrb[0].mxu0
    %4276 = vmatprep.mubr.f32.mxu0 0.0
    %v4277 = vand.u32 %v4085, 4294901760
    %4278 = vmatmul.mubr.f32.gmra.mrb[0].mxu0 %v4277
    %v4279 = vpop.f32.mrb[0].mxu0
    %v4280 = vadd.f32 %v4182, %v4279
    %v4281 = vpop.f32.mrb[0].mxu0
    %4282 = vmatprep.mubr.f32.mxu0 0.0
    %v4283 = vand.u32 %v4087, 4294901760
    %4284 = vmatmul.mubr.f32.gmra.mrb[0].mxu0 %v4283
    %v4285 = vpop.f32.mrb[0].mxu0
    %v4286 = vadd.f32 %v4192, %v4285
    %v4287 = vpop.f32.mrb[0].mxu0
    %4288 = vdwg.mxu0
    %4289 = vmatprep.subr.mxu0 0.0
    %v4290 = vand.u32 %v3124, 4294901760
    %v4291 = vsub.f32 %v3124, %v4290
    %4292 = vmatpush1.msra.mxu0 %v4291
    %4293 = vmatprep.subr.mxu0 0.0
    %4294 = vmatpush1.msra.mxu0 0.0
    %4295 = vmatprep.subr.mxu0 0.0
    %4296 = vmatpush1.msra.mxu0 0.0
    %4297 = vmatprep.subr.mxu0 0.0
    %4298 = vmatpush1.msra.mxu0 0.0
    %4299 = vmatprep.subr.mxu0 0.0
    %4300 = vmatpush1.msra.mxu0 0.0
    %4301 = vmatprep.subr.mxu0 0.0
    %4302 = vmatpush1.msra.mxu0 0.0
    %4303 = vmatprep.subr.mxu0 0.0
    %4304 = vmatpush1.msra.mxu0 0.0
    %4305 = vmatprep.subr.mxu0 0.0
    %4306 = vmatpush1.msra.mxu0 0.0
    %4307 = vmatprep.subr.mxu0 0.0
    %4308 = vmatpush1.msra.mxu0 0.0
    %4309 = vmatprep.subr.mxu0 0.0
    %4310 = vmatpush1.msra.mxu0 0.0
    %4311 = vmatprep.subr.mxu0 0.0
    %4312 = vmatpush1.msra.mxu0 0.0
    %4313 = vmatprep.subr.mxu0 0.0
    %4314 = vmatpush1.msra.mxu0 0.0
    %4315 = vmatprep.subr.mxu0 0.0
    %4316 = vmatpush1.msra.mxu0 0.0
    %4317 = vmatprep.subr.mxu0 0.0
    %4318 = vmatpush1.msra.mxu0 0.0
    %4319 = vmatprep.subr.mxu0 0.0
    %4320 = vmatpush1.msra.mxu0 0.0
    %4321 = vmatprep.subr.mxu0 0.0
    %4322 = vmatpush1.msra.mxu0 0.0
    %4323 = vmatprep.subr.mxu0 0.0
    %4324 = vmatpush1.msra.mxu0 0.0
    %4325 = vmatprep.subr.mxu0 0.0
    %4326 = vmatpush1.msra.mxu0 0.0
    %4327 = vmatprep.subr.mxu0 0.0
    %4328 = vmatpush1.msra.mxu0 0.0
    %4329 = vmatprep.subr.mxu0 0.0
    %4330 = vmatpush1.msra.mxu0 0.0
    %4331 = vmatprep.subr.mxu0 0.0
    %4332 = vmatpush1.msra.mxu0 0.0
    %4333 = vmatprep.subr.mxu0 0.0
    %4334 = vmatpush1.msra.mxu0 0.0
    %4335 = vmatprep.subr.mxu0 0.0
    %4336 = vmatpush1.msra.mxu0 0.0
    %4337 = vmatprep.subr.mxu0 0.0
    %4338 = vmatpush1.msra.mxu0 0.0
    %4339 = vmatprep.subr.mxu0 0.0
    %4340 = vmatpush1.msra.mxu0 0.0
    %4341 = vmatprep.subr.mxu0 0.0
    %4342 = vmatpush1.msra.mxu0 0.0
    %4343 = vmatprep.subr.mxu0 0.0
    %4344 = vmatpush1.msra.mxu0 0.0
    %4345 = vmatprep.subr.mxu0 0.0
    %4346 = vmatpush1.msra.mxu0 0.0
    %4347 = vmatprep.subr.mxu0 0.0
    %4348 = vmatpush1.msra.mxu0 0.0
    %4349 = vmatprep.subr.mxu0 0.0
    %4350 = vmatpush1.msra.mxu0 0.0
    %4351 = vmatprep.subr.mxu0 0.0
    %4352 = vmatpush1.msra.mxu0 0.0
    %4353 = vmatprep.subr.mxu0 0.0
    %4354 = vmatpush1.msra.mxu0 0.0
    %4355 = vmatprep.mubr.f32.mxu0 0.0
    %v4356 = vand.u32 %v4081, 4294901760
    %v4357 = vsub.f32 %v4081, %v4356
    %4358 = vmatmul.mubr.f32.gmra.mrb[0].mxu0 %v4357
    %v4359 = vpop.f32.mrb[0].mxu0
    %v4360 = vadd.f32 %v4268, %v4359
    %v4361 = vpop.f32.mrb[0].mxu0
    %4362 = vmatprep.mubr.f32.mxu0 0.0
    %v4363 = vand.u32 %v4083, 4294901760
    %v4364 = vsub.f32 %v4083, %v4363
    %4365 = vmatmul.mubr.f32.gmra.mrb[0].mxu0 %v4364
    %v4366 = vpop.f32.mrb[0].mxu0
    %v4367 = vadd.f32 %v4274, %v4366
    %v4368 = vpop.f32.mrb[0].mxu0
    %4369 = vmatprep.mubr.f32.mxu0 0.0
    %v4370 = vand.u32 %v4085, 4294901760
    %v4371 = vsub.f32 %v4085, %v4370
    %4372 = vmatmul.mubr.f32.gmra.mrb[0].mxu0 %v4371
    %v4373 = vpop.f32.mrb[0].mxu0
    %v4374 = vadd.f32 %v4280, %v4373
    %v4375 = vpop.f32.mrb[0].mxu0
    %4376 = vmatprep.mubr.f32.mxu0 0.0
    %v4377 = vand.u32 %v4087, 4294901760
    %v4378 = vsub.f32 %v4087, %v4377
    %4379 = vmatmul.mubr.f32.gmra.mrb[0].mxu0 %v4378
    %v4380 = vpop.f32.mrb[0].mxu0
    %v4381 = vadd.f32 %v4286, %v4380
    %v4382 = vpop.f32.mrb[0].mxu0
    %4383 = vdwg.mxu0
    %4384 = vmatprep.subr.mxu0 0.0
    %v4385 = vand.u32 %v3124, 4294901760
    %4386 = vmatpush1.msra.mxu0 %v4385
    %4387 = vmatprep.subr.mxu0 0.0
    %4388 = vmatpush1.msra.mxu0 0.0
    %4389 = vmatprep.subr.mxu0 0.0
    %4390 = vmatpush1.msra.mxu0 0.0
    %4391 = vmatprep.subr.mxu0 0.0
    %4392 = vmatpush1.msra.mxu0 0.0
    %4393 = vmatprep.subr.mxu0 0.0
    %4394 = vmatpush1.msra.mxu0 0.0
    %4395 = vmatprep.subr.mxu0 0.0
    %4396 = vmatpush1.msra.mxu0 0.0
    %4397 = vmatprep.subr.mxu0 0.0
    %4398 = vmatpush1.msra.mxu0 0.0
    %4399 = vmatprep.subr.mxu0 0.0
    %4400 = vmatpush1.msra.mxu0 0.0
    %4401 = vmatprep.subr.mxu0 0.0
    %4402 = vmatpush1.msra.mxu0 0.0
    %4403 = vmatprep.subr.mxu0 0.0
    %4404 = vmatpush1.msra.mxu0 0.0
    %4405 = vmatprep.subr.mxu0 0.0
    %4406 = vmatpush1.msra.mxu0 0.0
    %4407 = vmatprep.subr.mxu0 0.0
    %4408 = vmatpush1.msra.mxu0 0.0
    %4409 = vmatprep.subr.mxu0 0.0
    %4410 = vmatpush1.msra.mxu0 0.0
    %4411 = vmatprep.subr.mxu0 0.0
    %4412 = vmatpush1.msra.mxu0 0.0
    %4413 = vmatprep.subr.mxu0 0.0
    %4414 = vmatpush1.msra.mxu0 0.0
    %4415 = vmatprep.subr.mxu0 0.0
    %4416 = vmatpush1.msra.mxu0 0.0
    %4417 = vmatprep.subr.mxu0 0.0
    %4418 = vmatpush1.msra.mxu0 0.0
    %4419 = vmatprep.subr.mxu0 0.0
    %4420 = vmatpush1.msra.mxu0 0.0
    %4421 = vmatprep.subr.mxu0 0.0
    %4422 = vmatpush1.msra.mxu0 0.0
    %4423 = vmatprep.subr.mxu0 0.0
    %4424 = vmatpush1.msra.mxu0 0.0
    %4425 = vmatprep.subr.mxu0 0.0
    %4426 = vmatpush1.msra.mxu0 0.0
    %4427 = vmatprep.subr.mxu0 0.0
    %4428 = vmatpush1.msra.mxu0 0.0
    %4429 = vmatprep.subr.mxu0 0.0
    %4430 = vmatpush1.msra.mxu0 0.0
    %4431 = vmatprep.subr.mxu0 0.0
    %4432 = vmatpush1.msra.mxu0 0.0
    %4433 = vmatprep.subr.mxu0 0.0
    %4434 = vmatpush1.msra.mxu0 0.0
    %4435 = vmatprep.subr.mxu0 0.0
    %4436 = vmatpush1.msra.mxu0 0.0
    %4437 = vmatprep.subr.mxu0 0.0
    %4438 = vmatpush1.msra.mxu0 0.0
    %4439 = vmatprep.subr.mxu0 0.0
    %4440 = vmatpush1.msra.mxu0 0.0
    %4441 = vmatprep.subr.mxu0 0.0
    %4442 = vmatpush1.msra.mxu0 0.0
    %4443 = vmatprep.subr.mxu0 0.0
    %4444 = vmatpush1.msra.mxu0 0.0
    %4445 = vmatprep.subr.mxu0 0.0
    %4446 = vmatpush1.msra.mxu0 0.0
    %4447 = vmatprep.subr.mxu0 0.0
    %4448 = vmatpush1.msra.mxu0 0.0
    %4449 = vmatprep.mubr.f32.mxu0 0.0
    %v4450 = vand.u32 %v4081, 4294901760
    %v4451 = vsub.f32 %v4081, %v4450
    %v4452 = vand.u32 %v4451, 4294901760
    %4453 = vmatmul.mubr.f32.gmra.mrb[0].mxu0 %v4452
    %v4454 = vpop.f32.mrb[0].mxu0
    %v4455 = vadd.f32 %v4360, %v4454
    %v4456 = vpop.f32.mrb[0].mxu0
    %4457 = vmatprep.mubr.f32.mxu0 0.0
    %v4458 = vand.u32 %v4083, 4294901760
    %v4459 = vsub.f32 %v4083, %v4458
    %v4460 = vand.u32 %v4459, 4294901760
    %4461 = vmatmul.mubr.f32.gmra.mrb[0].mxu0 %v4460
    %v4462 = vpop.f32.mrb[0].mxu0
    %v4463 = vadd.f32 %v4367, %v4462
    %v4464 = vpop.f32.mrb[0].mxu0
    %4465 = vmatprep.mubr.f32.mxu0 0.0
    %v4466 = vand.u32 %v4085, 4294901760
    %v4467 = vsub.f32 %v4085, %v4466
    %v4468 = vand.u32 %v4467, 4294901760
    %4469 = vmatmul.mubr.f32.gmra.mrb[0].mxu0 %v4468
    %v4470 = vpop.f32.mrb[0].mxu0
    %v4471 = vadd.f32 %v4374, %v4470
    %v4472 = vpop.f32.mrb[0].mxu0
    %4473 = vmatprep.mubr.f32.mxu0 0.0
    %v4474 = vand.u32 %v4087, 4294901760
    %v4475 = vsub.f32 %v4087, %v4474
    %v4476 = vand.u32 %v4475, 4294901760
    %4477 = vmatmul.mubr.f32.gmra.mrb[0].mxu0 %v4476
    %v4478 = vpop.f32.mrb[0].mxu0
    %v4479 = vadd.f32 %v4381, %v4478
    %v4480 = vpop.f32.mrb[0].mxu0
    %4481 = vdwg.mxu0
    %4482 = vmatprep.subr.mxu0 0.0
    %v4483 = vand.u32 %v3124, 4294901760
    %v4484 = vsub.f32 %v3124, %v4483
    %v4485 = vand.u32 %v4484, 4294901760
    %4486 = vmatpush1.msra.mxu0 %v4485
    %4487 = vmatprep.subr.mxu0 0.0
    %4488 = vmatpush1.msra.mxu0 0.0
    %4489 = vmatprep.subr.mxu0 0.0
    %4490 = vmatpush1.msra.mxu0 0.0
    %4491 = vmatprep.subr.mxu0 0.0
    %4492 = vmatpush1.msra.mxu0 0.0
    %4493 = vmatprep.subr.mxu0 0.0
    %4494 = vmatpush1.msra.mxu0 0.0
    %4495 = vmatprep.subr.mxu0 0.0
    %4496 = vmatpush1.msra.mxu0 0.0
    %4497 = vmatprep.subr.mxu0 0.0
    %4498 = vmatpush1.msra.mxu0 0.0
    %4499 = vmatprep.subr.mxu0 0.0
    %4500 = vmatpush1.msra.mxu0 0.0
    %4501 = vmatprep.subr.mxu0 0.0
    %4502 = vmatpush1.msra.mxu0 0.0
    %4503 = vmatprep.subr.mxu0 0.0
    %4504 = vmatpush1.msra.mxu0 0.0
    %4505 = vmatprep.subr.mxu0 0.0
    %4506 = vmatpush1.msra.mxu0 0.0
    %4507 = vmatprep.subr.mxu0 0.0
    %4508 = vmatpush1.msra.mxu0 0.0
    %4509 = vmatprep.subr.mxu0 0.0
    %4510 = vmatpush1.msra.mxu0 0.0
    %4511 = vmatprep.subr.mxu0 0.0
    %4512 = vmatpush1.msra.mxu0 0.0
    %4513 = vmatprep.subr.mxu0 0.0
    %4514 = vmatpush1.msra.mxu0 0.0
    %4515 = vmatprep.subr.mxu0 0.0
    %4516 = vmatpush1.msra.mxu0 0.0
    %4517 = vmatprep.subr.mxu0 0.0
    %4518 = vmatpush1.msra.mxu0 0.0
    %4519 = vmatprep.subr.mxu0 0.0
    %4520 = vmatpush1.msra.mxu0 0.0
    %4521 = vmatprep.subr.mxu0 0.0
    %4522 = vmatpush1.msra.mxu0 0.0
    %4523 = vmatprep.subr.mxu0 0.0
    %4524 = vmatpush1.msra.mxu0 0.0
    %4525 = vmatprep.subr.mxu0 0.0
    %4526 = vmatpush1.msra.mxu0 0.0
    %4527 = vmatprep.subr.mxu0 0.0
    %4528 = vmatpush1.msra.mxu0 0.0
    %4529 = vmatprep.subr.mxu0 0.0
    %4530 = vmatpush1.msra.mxu0 0.0
    %4531 = vmatprep.subr.mxu0 0.0
    %4532 = vmatpush1.msra.mxu0 0.0
    %4533 = vmatprep.subr.mxu0 0.0
    %4534 = vmatpush1.msra.mxu0 0.0
    %4535 = vmatprep.subr.mxu0 0.0
    %4536 = vmatpush1.msra.mxu0 0.0
    %4537 = vmatprep.subr.mxu0 0.0
    %4538 = vmatpush1.msra.mxu0 0.0
    %4539 = vmatprep.subr.mxu0 0.0
    %4540 = vmatpush1.msra.mxu0 0.0
    %4541 = vmatprep.subr.mxu0 0.0
    %4542 = vmatpush1.msra.mxu0 0.0
    %4543 = vmatprep.subr.mxu0 0.0
    %4544 = vmatpush1.msra.mxu0 0.0
    %4545 = vmatprep.subr.mxu0 0.0
    %4546 = vmatpush1.msra.mxu0 0.0
    %4547 = vmatprep.subr.mxu0 0.0
    %4548 = vmatpush1.msra.mxu0 0.0
    %4549 = vmatprep.mubr.f32.mxu0 0.0
    %v4550 = vand.u32 %v4081, 4294901760
    %4551 = vmatmul.mubr.f32.gmra.mrb[0].mxu0 %v4550
    %v4552 = vpop.f32.mrb[0].mxu0
    %v4553 = vadd.f32 %v4455, %v4552
    %v4554 = vpop.f32.mrb[0].mxu0
    %4555 = vmatprep.mubr.f32.mxu0 0.0
    %v4556 = vand.u32 %v4083, 4294901760
    %4557 = vmatmul.mubr.f32.gmra.mrb[0].mxu0 %v4556
    %v4558 = vpop.f32.mrb[0].mxu0
    %v4559 = vadd.f32 %v4463, %v4558
    %v4560 = vpop.f32.mrb[0].mxu0
    %4561 = vmatprep.mubr.f32.mxu0 0.0
    %v4562 = vand.u32 %v4085, 4294901760
    %4563 = vmatmul.mubr.f32.gmra.mrb[0].mxu0 %v4562
    %v4564 = vpop.f32.mrb[0].mxu0
    %v4565 = vadd.f32 %v4471, %v4564
    %v4566 = vpop.f32.mrb[0].mxu0
    %4567 = vmatprep.mubr.f32.mxu0 0.0
    %v4568 = vand.u32 %v4087, 4294901760
    %4569 = vmatmul.mubr.f32.gmra.mrb[0].mxu0 %v4568
    %v4570 = vpop.f32.mrb[0].mxu0
    %v4571 = vadd.f32 %v4479, %v4570
    %v4572 = vpop.f32.mrb[0].mxu0
    %4573 = vdwg.mxu0
    %4574 = vmatprep.subr.mxu0 0.0
    %v4575 = vand.u32 %v3124, 4294901760
    %4576 = vmatpush1.msra.mxu0 %v4575
    %4577 = vmatprep.subr.mxu0 0.0
    %4578 = vmatpush1.msra.mxu0 0.0
    %4579 = vmatprep.subr.mxu0 0.0
    %4580 = vmatpush1.msra.mxu0 0.0
    %4581 = vmatprep.subr.mxu0 0.0
    %4582 = vmatpush1.msra.mxu0 0.0
    %4583 = vmatprep.subr.mxu0 0.0
    %4584 = vmatpush1.msra.mxu0 0.0
    %4585 = vmatprep.subr.mxu0 0.0
    %4586 = vmatpush1.msra.mxu0 0.0
    %4587 = vmatprep.subr.mxu0 0.0
    %4588 = vmatpush1.msra.mxu0 0.0
    %4589 = vmatprep.subr.mxu0 0.0
    %4590 = vmatpush1.msra.mxu0 0.0
    %4591 = vmatprep.subr.mxu0 0.0
    %4592 = vmatpush1.msra.mxu0 0.0
    %4593 = vmatprep.subr.mxu0 0.0
    %4594 = vmatpush1.msra.mxu0 0.0
    %4595 = vmatprep.subr.mxu0 0.0
    %4596 = vmatpush1.msra.mxu0 0.0
    %4597 = vmatprep.subr.mxu0 0.0
    %4598 = vmatpush1.msra.mxu0 0.0
    %4599 = vmatprep.subr.mxu0 0.0
    %4600 = vmatpush1.msra.mxu0 0.0
    %4601 = vmatprep.subr.mxu0 0.0
    %4602 = vmatpush1.msra.mxu0 0.0
    %4603 = vmatprep.subr.mxu0 0.0
    %4604 = vmatpush1.msra.mxu0 0.0
    %4605 = vmatprep.subr.mxu0 0.0
    %4606 = vmatpush1.msra.mxu0 0.0
    %4607 = vmatprep.subr.mxu0 0.0
    %4608 = vmatpush1.msra.mxu0 0.0
    %4609 = vmatprep.subr.mxu0 0.0
    %4610 = vmatpush1.msra.mxu0 0.0
    %4611 = vmatprep.subr.mxu0 0.0
    %4612 = vmatpush1.msra.mxu0 0.0
    %4613 = vmatprep.subr.mxu0 0.0
    %4614 = vmatpush1.msra.mxu0 0.0
    %4615 = vmatprep.subr.mxu0 0.0
    %4616 = vmatpush1.msra.mxu0 0.0
    %4617 = vmatprep.subr.mxu0 0.0
    %4618 = vmatpush1.msra.mxu0 0.0
    %4619 = vmatprep.subr.mxu0 0.0
    %4620 = vmatpush1.msra.mxu0 0.0
    %4621 = vmatprep.subr.mxu0 0.0
    %4622 = vmatpush1.msra.mxu0 0.0
    %4623 = vmatprep.subr.mxu0 0.0
    %4624 = vmatpush1.msra.mxu0 0.0
    %4625 = vmatprep.subr.mxu0 0.0
    %4626 = vmatpush1.msra.mxu0 0.0
    %4627 = vmatprep.subr.mxu0 0.0
    %4628 = vmatpush1.msra.mxu0 0.0
    %4629 = vmatprep.subr.mxu0 0.0
    %4630 = vmatpush1.msra.mxu0 0.0
    %4631 = vmatprep.subr.mxu0 0.0
    %4632 = vmatpush1.msra.mxu0 0.0
    %4633 = vmatprep.subr.mxu0 0.0
    %4634 = vmatpush1.msra.mxu0 0.0
    %4635 = vmatprep.subr.mxu0 0.0
    %4636 = vmatpush1.msra.mxu0 0.0
    %4637 = vmatprep.subr.mxu0 0.0
    %4638 = vmatpush1.msra.mxu0 0.0
    %4639 = vmatprep.mubr.f32.mxu0 0.0
    %v4640 = vand.u32 %v4081, 4294901760
    %4641 = vmatmul.mubr.f32.gmra.mrb[0].mxu0 %v4640
    %v4642 = vpop.f32.mrb[0].mxu0
    %v4643 = vadd.f32 %v4553, %v4642
    %v4644 = vpop.f32.mrb[0].mxu0
    %4645 = vmatprep.mubr.f32.mxu0 0.0
    %v4646 = vand.u32 %v4083, 4294901760
    %4647 = vmatmul.mubr.f32.gmra.mrb[0].mxu0 %v4646
    %v4648 = vpop.f32.mrb[0].mxu0
    %v4649 = vadd.f32 %v4559, %v4648
    %v4650 = vpop.f32.mrb[0].mxu0
    %4651 = vmatprep.mubr.f32.mxu0 0.0
    %v4652 = vand.u32 %v4085, 4294901760
    %4653 = vmatmul.mubr.f32.gmra.mrb[0].mxu0 %v4652
    %v4654 = vpop.f32.mrb[0].mxu0
    %v4655 = vadd.f32 %v4565, %v4654
    %v4656 = vpop.f32.mrb[0].mxu0
    %4657 = vmatprep.mubr.f32.mxu0 0.0
    %v4658 = vand.u32 %v4087, 4294901760
    %4659 = vmatmul.mubr.f32.gmra.mrb[0].mxu0 %v4658
    %v4660 = vpop.f32.mrb[0].mxu0
    %v4661 = vadd.f32 %v4571, %v4660
    %v4662 = vpop.f32.mrb[0].mxu0
    %4663 = vdwg.mxu0
    %4664 = vset.pattern.permute.xlu0 0
    %4665 = vperm.xlu0 %4664, %v3120
    %v4666 = vpop.permute.xlu0 %4665
    %4668 = vset.pattern.permute.xlu0 0
    %4669 = vperm.xlu0 %4668, %v3121
    %v4670 = vpop.permute.xlu0 %4669
    %4672 = vset.pattern.permute.xlu0 0
    %4673 = vperm.xlu0 %4672, %v3122
    %v4674 = vpop.permute.xlu0 %4673
    %4676 = vset.pattern.permute.xlu0 0
    %4677 = vperm.xlu0 %4676, %v3123
    %v4678 = vpop.permute.xlu0 %4677
    %v4680 = vmul.f32 %v4666, %v3142
    %v4681 = vmul.f32 %v4670, %v3143
    %v4682 = vmul.f32 %v4674, %v3142
    %v4683 = vmul.f32 %v4678, %v3143
    %v4684 = vsel %vm1601, %v4680, 0.0
    %v4685 = vsel %vm1601, %v4681, 0.0
    %v4686 = vadd.f32 %v4684, %v4685
    %v4687 = vrot.slane %v4686, 4
    %v4688 = vadd.f32 %v4686, %v4687
    %v4689 = vrot.slane %v4688, 2
    %v4690 = vadd.f32 %v4688, %v4689
    %v4691 = vrot.slane %v4690, 1
    %v4692 = vadd.f32 %v4690, %v4691
    %v4693 = vsel %vm1601, %v4682, 0.0
    %v4694 = vsel %vm1601, %v4683, 0.0
    %v4695 = vadd.f32 %v4693, %v4694
    %v4696 = vrot.slane %v4695, 4
    %v4697 = vadd.f32 %v4695, %v4696
    %v4698 = vrot.slane %v4697, 2
    %v4699 = vadd.f32 %v4697, %v4698
    %v4700 = vrot.slane %v4699, 1
    %v4701 = vadd.f32 %v4699, %v4700
    %v4702 = vadd.f32 %v4692, 0.0
    %v4703 = vadd.f32 %v4701, 0.0
    %4704 = vset.pattern.permute.xlu0 1
    %4705 = vperm.xlu0 %4704, %v3120
    %v4706 = vpop.permute.xlu0 %4705
    %4708 = vset.pattern.permute.xlu0 1
    %4709 = vperm.xlu0 %4708, %v3121
    %v4710 = vpop.permute.xlu0 %4709
    %4712 = vset.pattern.permute.xlu0 1
    %4713 = vperm.xlu0 %4712, %v3122
    %v4714 = vpop.permute.xlu0 %4713
    %4716 = vset.pattern.permute.xlu0 1
    %4717 = vperm.xlu0 %4716, %v3123
    %v4718 = vpop.permute.xlu0 %4717
    %v4720 = vmul.f32 %v4706, %v3144
    %v4721 = vmul.f32 %v4710, %v3145
    %v4722 = vmul.f32 %v4714, %v3144
    %v4723 = vmul.f32 %v4718, %v3145
    %v4724 = vsel %vm1601, %v4720, 0.0
    %v4725 = vsel %vm1601, %v4721, 0.0
    %v4726 = vadd.f32 %v4724, %v4725
    %v4727 = vrot.slane %v4726, 4
    %v4728 = vadd.f32 %v4726, %v4727
    %v4729 = vrot.slane %v4728, 2
    %v4730 = vadd.f32 %v4728, %v4729
    %v4731 = vrot.slane %v4730, 1
    %v4732 = vadd.f32 %v4730, %v4731
    %v4733 = vsel %vm1601, %v4722, 0.0
    %v4734 = vsel %vm1601, %v4723, 0.0
    %v4735 = vadd.f32 %v4733, %v4734
    %v4736 = vrot.slane %v4735, 4
    %v4737 = vadd.f32 %v4735, %v4736
    %v4738 = vrot.slane %v4737, 2
    %v4739 = vadd.f32 %v4737, %v4738
    %v4740 = vrot.slane %v4739, 1
    %v4741 = vadd.f32 %v4739, %v4740
    %v4742 = vadd.f32 %v4702, %v4732
    %v4743 = vadd.f32 %v4703, %v4741
    %4744 = vset.pattern.permute.xlu0 2
    %4745 = vperm.xlu0 %4744, %v3120
    %v4746 = vpop.permute.xlu0 %4745
    %4748 = vset.pattern.permute.xlu0 2
    %4749 = vperm.xlu0 %4748, %v3121
    %v4750 = vpop.permute.xlu0 %4749
    %4752 = vset.pattern.permute.xlu0 2
    %4753 = vperm.xlu0 %4752, %v3122
    %v4754 = vpop.permute.xlu0 %4753
    %4756 = vset.pattern.permute.xlu0 2
    %4757 = vperm.xlu0 %4756, %v3123
    %v4758 = vpop.permute.xlu0 %4757
    %v4760 = vmul.f32 %v4746, %v3146
    %v4761 = vmul.f32 %v4750, %v3147
    %v4762 = vmul.f32 %v4754, %v3146
    %v4763 = vmul.f32 %v4758, %v3147
    %v4764 = vsel %vm1601, %v4760, 0.0
    %v4765 = vsel %vm1601, %v4761, 0.0
    %v4766 = vadd.f32 %v4764, %v4765
    %v4767 = vrot.slane %v4766, 4
    %v4768 = vadd.f32 %v4766, %v4767
    %v4769 = vrot.slane %v4768, 2
    %v4770 = vadd.f32 %v4768, %v4769
    %v4771 = vrot.slane %v4770, 1
    %v4772 = vadd.f32 %v4770, %v4771
    %v4773 = vsel %vm1601, %v4762, 0.0
    %v4774 = vsel %vm1601, %v4763, 0.0
    %v4775 = vadd.f32 %v4773, %v4774
    %v4776 = vrot.slane %v4775, 4
    %v4777 = vadd.f32 %v4775, %v4776
    %v4778 = vrot.slane %v4777, 2
    %v4779 = vadd.f32 %v4777, %v4778
    %v4780 = vrot.slane %v4779, 1
    %v4781 = vadd.f32 %v4779, %v4780
    %v4782 = vadd.f32 %v4742, %v4772
    %v4783 = vadd.f32 %v4743, %v4781
    %4784 = vset.pattern.permute.xlu0 3
    %4785 = vperm.xlu0 %4784, %v3120
    %v4786 = vpop.permute.xlu0 %4785
    %4788 = vset.pattern.permute.xlu0 3
    %4789 = vperm.xlu0 %4788, %v3121
    %v4790 = vpop.permute.xlu0 %4789
    %4792 = vset.pattern.permute.xlu0 3
    %4793 = vperm.xlu0 %4792, %v3122
    %v4794 = vpop.permute.xlu0 %4793
    %4796 = vset.pattern.permute.xlu0 3
    %4797 = vperm.xlu0 %4796, %v3123
    %v4798 = vpop.permute.xlu0 %4797
    %v4800 = vmul.f32 %v4786, %v3148
    %v4801 = vmul.f32 %v4790, %v3149
    %v4802 = vmul.f32 %v4794, %v3148
    %v4803 = vmul.f32 %v4798, %v3149
    %v4804 = vsel %vm1601, %v4800, 0.0
    %v4805 = vsel %vm1601, %v4801, 0.0
    %v4806 = vadd.f32 %v4804, %v4805
    %v4807 = vrot.slane %v4806, 4
    %v4808 = vadd.f32 %v4806, %v4807
    %v4809 = vrot.slane %v4808, 2
    %v4810 = vadd.f32 %v4808, %v4809
    %v4811 = vrot.slane %v4810, 1
    %v4812 = vadd.f32 %v4810, %v4811
    %v4813 = vsel %vm1601, %v4802, 0.0
    %v4814 = vsel %vm1601, %v4803, 0.0
    %v4815 = vadd.f32 %v4813, %v4814
    %v4816 = vrot.slane %v4815, 4
    %v4817 = vadd.f32 %v4815, %v4816
    %v4818 = vrot.slane %v4817, 2
    %v4819 = vadd.f32 %v4817, %v4818
    %v4820 = vrot.slane %v4819, 1
    %v4821 = vadd.f32 %v4819, %v4820
    %v4822 = vadd.f32 %v4782, %v4812
    %v4823 = vadd.f32 %v4783, %v4821
    %4824 = vset.pattern.permute.xlu0 4
    %4825 = vperm.xlu0 %4824, %v3120
    %v4826 = vpop.permute.xlu0 %4825
    %4828 = vset.pattern.permute.xlu0 4
    %4829 = vperm.xlu0 %4828, %v3121
    %v4830 = vpop.permute.xlu0 %4829
    %4832 = vset.pattern.permute.xlu0 4
    %4833 = vperm.xlu0 %4832, %v3122
    %v4834 = vpop.permute.xlu0 %4833
    %4836 = vset.pattern.permute.xlu0 4
    %4837 = vperm.xlu0 %4836, %v3123
    %v4838 = vpop.permute.xlu0 %4837
    %v4840 = vmul.f32 %v4826, %v3150
    %v4841 = vmul.f32 %v4830, %v3151
    %v4842 = vmul.f32 %v4834, %v3150
    %v4843 = vmul.f32 %v4838, %v3151
    %v4844 = vsel %vm1601, %v4840, 0.0
    %v4845 = vsel %vm1601, %v4841, 0.0
    %v4846 = vadd.f32 %v4844, %v4845
    %v4847 = vrot.slane %v4846, 4
    %v4848 = vadd.f32 %v4846, %v4847
    %v4849 = vrot.slane %v4848, 2
    %v4850 = vadd.f32 %v4848, %v4849
    %v4851 = vrot.slane %v4850, 1
    %v4852 = vadd.f32 %v4850, %v4851
    %v4853 = vsel %vm1601, %v4842, 0.0
    %v4854 = vsel %vm1601, %v4843, 0.0
    %v4855 = vadd.f32 %v4853, %v4854
    %v4856 = vrot.slane %v4855, 4
    %v4857 = vadd.f32 %v4855, %v4856
    %v4858 = vrot.slane %v4857, 2
    %v4859 = vadd.f32 %v4857, %v4858
    %v4860 = vrot.slane %v4859, 1
    %v4861 = vadd.f32 %v4859, %v4860
    %v4862 = vadd.f32 %v4822, %v4852
    %v4863 = vadd.f32 %v4823, %v4861
    %4864 = vset.pattern.permute.xlu0 5
    %4865 = vperm.xlu0 %4864, %v3120
    %v4866 = vpop.permute.xlu0 %4865
    %4868 = vset.pattern.permute.xlu0 5
    %4869 = vperm.xlu0 %4868, %v3121
    %v4870 = vpop.permute.xlu0 %4869
    %4872 = vset.pattern.permute.xlu0 5
    %4873 = vperm.xlu0 %4872, %v3122
    %v4874 = vpop.permute.xlu0 %4873
    %4876 = vset.pattern.permute.xlu0 5
    %4877 = vperm.xlu0 %4876, %v3123
    %v4878 = vpop.permute.xlu0 %4877
    %v4880 = vmul.f32 %v4866, %v3152
    %v4881 = vmul.f32 %v4870, %v3153
    %v4882 = vmul.f32 %v4874, %v3152
    %v4883 = vmul.f32 %v4878, %v3153
    %v4884 = vsel %vm1601, %v4880, 0.0
    %v4885 = vsel %vm1601, %v4881, 0.0
    %v4886 = vadd.f32 %v4884, %v4885
    %v4887 = vrot.slane %v4886, 4
    %v4888 = vadd.f32 %v4886, %v4887
    %v4889 = vrot.slane %v4888, 2
    %v4890 = vadd.f32 %v4888, %v4889
    %v4891 = vrot.slane %v4890, 1
    %v4892 = vadd.f32 %v4890, %v4891
    %v4893 = vsel %vm1601, %v4882, 0.0
    %v4894 = vsel %vm1601, %v4883, 0.0
    %v4895 = vadd.f32 %v4893, %v4894
    %v4896 = vrot.slane %v4895, 4
    %v4897 = vadd.f32 %v4895, %v4896
    %v4898 = vrot.slane %v4897, 2
    %v4899 = vadd.f32 %v4897, %v4898
    %v4900 = vrot.slane %v4899, 1
    %v4901 = vadd.f32 %v4899, %v4900
    %v4902 = vadd.f32 %v4862, %v4892
    %v4903 = vadd.f32 %v4863, %v4901
    %4904 = vset.pattern.permute.xlu0 6
    %4905 = vperm.xlu0 %4904, %v3120
    %v4906 = vpop.permute.xlu0 %4905
    %4908 = vset.pattern.permute.xlu0 6
    %4909 = vperm.xlu0 %4908, %v3121
    %v4910 = vpop.permute.xlu0 %4909
    %4912 = vset.pattern.permute.xlu0 6
    %4913 = vperm.xlu0 %4912, %v3122
    %v4914 = vpop.permute.xlu0 %4913
    %4916 = vset.pattern.permute.xlu0 6
    %4917 = vperm.xlu0 %4916, %v3123
    %v4918 = vpop.permute.xlu0 %4917
    %v4920 = vmul.f32 %v4906, %v3154
    %v4921 = vmul.f32 %v4910, %v3155
    %v4922 = vmul.f32 %v4914, %v3154
    %v4923 = vmul.f32 %v4918, %v3155
    %v4924 = vsel %vm1601, %v4920, 0.0
    %v4925 = vsel %vm1601, %v4921, 0.0
    %v4926 = vadd.f32 %v4924, %v4925
    %v4927 = vrot.slane %v4926, 4
    %v4928 = vadd.f32 %v4926, %v4927
    %v4929 = vrot.slane %v4928, 2
    %v4930 = vadd.f32 %v4928, %v4929
    %v4931 = vrot.slane %v4930, 1
    %v4932 = vadd.f32 %v4930, %v4931
    %v4933 = vsel %vm1601, %v4922, 0.0
    %v4934 = vsel %vm1601, %v4923, 0.0
    %v4935 = vadd.f32 %v4933, %v4934
    %v4936 = vrot.slane %v4935, 4
    %v4937 = vadd.f32 %v4935, %v4936
    %v4938 = vrot.slane %v4937, 2
    %v4939 = vadd.f32 %v4937, %v4938
    %v4940 = vrot.slane %v4939, 1
    %v4941 = vadd.f32 %v4939, %v4940
    %v4942 = vadd.f32 %v4902, %v4932
    %v4943 = vadd.f32 %v4903, %v4941
    %4944 = vset.pattern.permute.xlu0 7
    %4945 = vperm.xlu0 %4944, %v3120
    %v4946 = vpop.permute.xlu0 %4945
    %4948 = vset.pattern.permute.xlu0 7
    %4949 = vperm.xlu0 %4948, %v3121
    %v4950 = vpop.permute.xlu0 %4949
    %4952 = vset.pattern.permute.xlu0 7
    %4953 = vperm.xlu0 %4952, %v3122
    %v4954 = vpop.permute.xlu0 %4953
    %4956 = vset.pattern.permute.xlu0 7
    %4957 = vperm.xlu0 %4956, %v3123
    %v4958 = vpop.permute.xlu0 %4957
    %v4960 = vmul.f32 %v4946, %v3156
    %v4961 = vmul.f32 %v4950, %v3157
    %v4962 = vmul.f32 %v4954, %v3156
    %v4963 = vmul.f32 %v4958, %v3157
    %v4964 = vsel %vm1601, %v4960, 0.0
    %v4965 = vsel %vm1601, %v4961, 0.0
    %v4966 = vadd.f32 %v4964, %v4965
    %v4967 = vrot.slane %v4966, 4
    %v4968 = vadd.f32 %v4966, %v4967
    %v4969 = vrot.slane %v4968, 2
    %v4970 = vadd.f32 %v4968, %v4969
    %v4971 = vrot.slane %v4970, 1
    %v4972 = vadd.f32 %v4970, %v4971
    %v4973 = vsel %vm1601, %v4962, 0.0
    %v4974 = vsel %vm1601, %v4963, 0.0
    %v4975 = vadd.f32 %v4973, %v4974
    %v4976 = vrot.slane %v4975, 4
    %v4977 = vadd.f32 %v4975, %v4976
    %v4978 = vrot.slane %v4977, 2
    %v4979 = vadd.f32 %v4977, %v4978
    %v4980 = vrot.slane %v4979, 1
    %v4981 = vadd.f32 %v4979, %v4980
    %v4982 = vadd.f32 %v4942, %v4972
    %v4983 = vadd.f32 %v4943, %v4981
    %v4986 = vsel %vm931, %v4983, %v4982
    %v4988 = vadd.f32 %v3493, %v4986
    %v4991 = vunpack.c.l.s4 1966171168
    %v4992 = vunpack.c.0.s8 %v4991
    %v4993 = vlaneseq
    %v4994 = vshrl.u32 %v4993, 7
    %v4995 = vsub.s32 %v4992, %v4994
    %v4996 = vrot.slane %v4988, %v4995
    %v4997 = vcombine.high %v4996, %v4996
    %v4999 = vunpack.c.l.s4 1966171168
    %v5000 = vunpack.c.0.s8 %v4999
    %v5001 = vlaneseq
    %v5002 = vshrl.u32 %v5001, 7
    %v5003 = vsub.s32 %v5000, %v5002
    %v5004 = vrot.slane %v4996, %v5003
    %v5006 = vunpack.c.l.s4 1966171168
    %v5007 = vunpack.c.0.s8 %v5006
    %v5008 = vlaneseq
    %v5009 = vshrl.u32 %v5008, 7
    %v5010 = vsub.s32 %v5007, %v5009
    %v5011 = vrot.slane %v4997, %v5010
    %v5012 = vlaneseq
    %v5013 = vshrl.u32 %v5012, 7
    %v5014 = vsub.s32 0, %v5013
    %v5015 = vrot.slane %v5004, %v5014
    %v5016 = vlaneseq
    %v5017 = vshrl.u32 %v5016, 7
    %v5018 = vsub.s32 0, %v5017
    %v5019 = vrot.slane %v5011, %v5018
    %v5022 = vadd.f32 %v4643, %v5015
    %v5023 = vadd.f32 %v4649, %v5015
    %v5024 = vadd.f32 %v4655, %v5019
    %v5025 = vadd.f32 %v4661, %v5019
    %vm5026 = vcmp.ge.f32.partialorder %v5022, 0.0
    %vm5027 = vcmp.ge.f32.partialorder %v5023, 0.0
    %vm5028 = vcmp.ge.f32.partialorder %v5024, 0.0
    %vm5029 = vcmp.ge.f32.partialorder %v5025, 0.0
    %v5030 = vmul.f32 %v5022, 0.33
    %v5031 = vmul.f32 %v5023, 0.33
    %v5032 = vmul.f32 %v5024, 0.33
    %v5033 = vmul.f32 %v5025, 0.33
    %v5034 = vsel %vm5026, %v5022, %v5030
    %v5035 = vsel %vm5027, %v5023, %v5031
    %v5036 = vsel %vm5028, %v5024, %v5032
    %v5037 = vsel %vm5029, %v5025, %v5033
    %v5038 = vld [vmem:[%s37] sm:$0xf]
    %v5039 = vld [vmem:[%s39] sm:$0xff]
    %v5040 = vld [vmem:[%s39 + $0x8] sm:$0xff]
    %v5041 = vld [vmem:[%s39 + $0x10] sm:$0xff]
    %v5042 = vld [vmem:[%s39 + $0x18] sm:$0xff]
    %v5043 = vld [vmem:[%s39 + $0x20] sm:$0xff]
    %v5044 = vld [vmem:[%s39 + $0x28] sm:$0xff]
    %v5045 = vld [vmem:[%s39 + $0x30] sm:$0xff]
    %v5046 = vld [vmem:[%s39 + $0x38] sm:$0xff]
    %v5047 = vld [vmem:[%s41] sm:$0x1]
    %v5048 = vmul.f32 %v1580, %v5039
    %v5049 = vmul.f32 %v1585, %v5040
    %v5050 = vmul.f32 %v1590, %v5039
    %v5051 = vmul.f32 %v1595, %v5040
    %v5052 = vsel %vm1601, %v5048, 0.0
    %v5053 = vsel %vm1601, %v5049, 0.0
    %v5054 = vadd.f32 %v5052, %v5053
    %v5055 = vrot.slane %v5054, 4
    %v5056 = vadd.f32 %v5054, %v5055
    %v5057 = vrot.slane %v5056, 2
    %v5058 = vadd.f32 %v5056, %v5057
    %v5059 = vrot.slane %v5058, 1
    %v5060 = vadd.f32 %v5058, %v5059
    %v5061 = vsel %vm1601, %v5050, 0.0
    %v5062 = vsel %vm1601, %v5051, 0.0
    %v5063 = vadd.f32 %v5061, %v5062
    %v5064 = vrot.slane %v5063, 4
    %v5065 = vadd.f32 %v5063, %v5064
    %v5066 = vrot.slane %v5065, 2
    %v5067 = vadd.f32 %v5065, %v5066
    %v5068 = vrot.slane %v5067, 1
    %v5069 = vadd.f32 %v5067, %v5068
    %v5070 = vadd.f32 %v5060, 0.0
    %v5071 = vadd.f32 %v5069, 0.0
    %v5072 = vmul.f32 %v1624, %v5041
    %v5073 = vmul.f32 %v1628, %v5042
    %v5074 = vmul.f32 %v1632, %v5041
    %v5075 = vmul.f32 %v1636, %v5042
    %v5076 = vsel %vm1601, %v5072, 0.0
    %v5077 = vsel %vm1601, %v5073, 0.0
    %v5078 = vadd.f32 %v5076, %v5077
    %v5079 = vrot.slane %v5078, 4
    %v5080 = vadd.f32 %v5078, %v5079
    %v5081 = vrot.slane %v5080, 2
    %v5082 = vadd.f32 %v5080, %v5081
    %v5083 = vrot.slane %v5082, 1
    %v5084 = vadd.f32 %v5082, %v5083
    %v5085 = vsel %vm1601, %v5074, 0.0
    %v5086 = vsel %vm1601, %v5075, 0.0
    %v5087 = vadd.f32 %v5085, %v5086
    %v5088 = vrot.slane %v5087, 4
    %v5089 = vadd.f32 %v5087, %v5088
    %v5090 = vrot.slane %v5089, 2
    %v5091 = vadd.f32 %v5089, %v5090
    %v5092 = vrot.slane %v5091, 1
    %v5093 = vadd.f32 %v5091, %v5092
    %v5094 = vadd.f32 %v5070, %v5084
    %v5095 = vadd.f32 %v5071, %v5093
    %v5096 = vmul.f32 %v1664, %v5043
    %v5097 = vmul.f32 %v1668, %v5044
    %v5098 = vmul.f32 %v1672, %v5043
    %v5099 = vmul.f32 %v1676, %v5044
    %v5100 = vsel %vm1601, %v5096, 0.0
    %v5101 = vsel %vm1601, %v5097, 0.0
    %v5102 = vadd.f32 %v5100, %v5101
    %v5103 = vrot.slane %v5102, 4
    %v5104 = vadd.f32 %v5102, %v5103
    %v5105 = vrot.slane %v5104, 2
    %v5106 = vadd.f32 %v5104, %v5105
    %v5107 = vrot.slane %v5106, 1
    %v5108 = vadd.f32 %v5106, %v5107
    %v5109 = vsel %vm1601, %v5098, 0.0
    %v5110 = vsel %vm1601, %v5099, 0.0
    %v5111 = vadd.f32 %v5109, %v5110
    %v5112 = vrot.slane %v5111, 4
    %v5113 = vadd.f32 %v5111, %v5112
    %v5114 = vrot.slane %v5113, 2
    %v5115 = vadd.f32 %v5113, %v5114
    %v5116 = vrot.slane %v5115, 1
    %v5117 = vadd.f32 %v5115, %v5116
    %v5118 = vadd.f32 %v5094, %v5108
    %v5119 = vadd.f32 %v5095, %v5117
    %v5120 = vmul.f32 %v1704, %v5045
    %v5121 = vmul.f32 %v1708, %v5046
    %v5122 = vmul.f32 %v1712, %v5045
    %v5123 = vmul.f32 %v1716, %v5046
    %v5124 = vsel %vm1601, %v5120, 0.0
    %v5125 = vsel %vm1601, %v5121, 0.0
    %v5126 = vadd.f32 %v5124, %v5125
    %v5127 = vrot.slane %v5126, 4
    %v5128 = vadd.f32 %v5126, %v5127
    %v5129 = vrot.slane %v5128, 2
    %v5130 = vadd.f32 %v5128, %v5129
    %v5131 = vrot.slane %v5130, 1
    %v5132 = vadd.f32 %v5130, %v5131
    %v5133 = vsel %vm1601, %v5122, 0.0
    %v5134 = vsel %vm1601, %v5123, 0.0
    %v5135 = vadd.f32 %v5133, %v5134
    %v5136 = vrot.slane %v5135, 4
    %v5137 = vadd.f32 %v5135, %v5136
    %v5138 = vrot.slane %v5137, 2
    %v5139 = vadd.f32 %v5137, %v5138
    %v5140 = vrot.slane %v5139, 1
    %v5141 = vadd.f32 %v5139, %v5140
    %v5142 = vadd.f32 %v5118, %v5132
    %v5143 = vadd.f32 %v5119, %v5141
    %v5145 = vlaneseq
    %v5146 = vshrl.u32 %v5145, 7
    %v5147 = vsub.s32 0, %v5146
    %v5148 = vrot.slane %v5047, %v5147
    %v5152 = vsel %vm931, %v5143, %v5142
    %v5154 = vadd.f32 %v5148, %v5152
    %v5157 = vunpack.c.l.s4 1966171168
    %v5158 = vunpack.c.0.s8 %v5157
    %v5159 = vlaneseq
    %v5160 = vshrl.u32 %v5159, 7
    %v5161 = vsub.s32 %v5158, %v5160
    %v5162 = vrot.slane %v5154, %v5161
    %v5163 = vcombine.high %v5162, %v5162
    %v5165 = vunpack.c.l.s4 1966171168
    %v5166 = vunpack.c.0.s8 %v5165
    %v5167 = vlaneseq
    %v5168 = vshrl.u32 %v5167, 7
    %v5169 = vsub.s32 %v5166, %v5168
    %v5170 = vrot.slane %v5162, %v5169
    %v5172 = vunpack.c.l.s4 1966171168
    %v5173 = vunpack.c.0.s8 %v5172
    %v5174 = vlaneseq
    %v5175 = vshrl.u32 %v5174, 7
    %v5176 = vsub.s32 %v5173, %v5175
    %v5177 = vrot.slane %v5163, %v5176
    %v5178 = vlaneseq
    %v5179 = vshrl.u32 %v5178, 7
    %v5180 = vsub.s32 0, %v5179
    %v5181 = vrot.slane %v5170, %v5180
    %v5182 = vlaneseq
    %v5183 = vshrl.u32 %v5182, 7
    %v5184 = vsub.s32 0, %v5183
    %v5185 = vrot.slane %v5177, %v5184
    %v5189 = vsel %vm976, %v5038, 0
    %5191 = vmatprep.subr.mxu0 0.0
    %v5192 = vand.u32 %v5189, 4294901760
    %5193 = vmatpush1.msra.mxu0 %v5192
    %5194 = vmatprep.subr.mxu0 0.0
    %5195 = vmatpush1.msra.mxu0 0.0
    %5196 = vmatprep.subr.mxu0 0.0
    %5197 = vmatpush1.msra.mxu0 0.0
    %5198 = vmatprep.subr.mxu0 0.0
    %5199 = vmatpush1.msra.mxu0 0.0
    %5200 = vmatprep.subr.mxu0 0.0
    %5201 = vmatpush1.msra.mxu0 0.0
    %5202 = vmatprep.subr.mxu0 0.0
    %5203 = vmatpush1.msra.mxu0 0.0
    %5204 = vmatprep.subr.mxu0 0.0
    %5205 = vmatpush1.msra.mxu0 0.0
    %5206 = vmatprep.subr.mxu0 0.0
    %5207 = vmatpush1.msra.mxu0 0.0
    %5208 = vmatprep.subr.mxu0 0.0
    %5209 = vmatpush1.msra.mxu0 0.0
    %5210 = vmatprep.subr.mxu0 0.0
    %5211 = vmatpush1.msra.mxu0 0.0
    %5212 = vmatprep.subr.mxu0 0.0
    %5213 = vmatpush1.msra.mxu0 0.0
    %5214 = vmatprep.subr.mxu0 0.0
    %5215 = vmatpush1.msra.mxu0 0.0
    %5216 = vmatprep.subr.mxu0 0.0
    %5217 = vmatpush1.msra.mxu0 0.0
    %5218 = vmatprep.subr.mxu0 0.0
    %5219 = vmatpush1.msra.mxu0 0.0
    %5220 = vmatprep.subr.mxu0 0.0
    %5221 = vmatpush1.msra.mxu0 0.0
    %5222 = vmatprep.subr.mxu0 0.0
    %5223 = vmatpush1.msra.mxu0 0.0
    %5224 = vmatprep.subr.mxu0 0.0
    %5225 = vmatpush1.msra.mxu0 0.0
    %5226 = vmatprep.subr.mxu0 0.0
    %5227 = vmatpush1.msra.mxu0 0.0
    %5228 = vmatprep.subr.mxu0 0.0
    %5229 = vmatpush1.msra.mxu0 0.0
    %5230 = vmatprep.subr.mxu0 0.0
    %5231 = vmatpush1.msra.mxu0 0.0
    %5232 = vmatprep.subr.mxu0 0.0
    %5233 = vmatpush1.msra.mxu0 0.0
    %5234 = vmatprep.subr.mxu0 0.0
    %5235 = vmatpush1.msra.mxu0 0.0
    %5236 = vmatprep.subr.mxu0 0.0
    %5237 = vmatpush1.msra.mxu0 0.0
    %5238 = vmatprep.subr.mxu0 0.0
    %5239 = vmatpush1.msra.mxu0 0.0
    %5240 = vmatprep.subr.mxu0 0.0
    %5241 = vmatpush1.msra.mxu0 0.0
    %5242 = vmatprep.subr.mxu0 0.0
    %5243 = vmatpush1.msra.mxu0 0.0
    %5244 = vmatprep.subr.mxu0 0.0
    %5245 = vmatpush1.msra.mxu0 0.0
    %5246 = vmatprep.subr.mxu0 0.0
    %5247 = vmatpush1.msra.mxu0 0.0
    %5248 = vmatprep.subr.mxu0 0.0
    %5249 = vmatpush1.msra.mxu0 0.0
    %5250 = vmatprep.subr.mxu0 0.0
    %5251 = vmatpush1.msra.mxu0 0.0
    %5252 = vmatprep.subr.mxu0 0.0
    %5253 = vmatpush1.msra.mxu0 0.0
    %5254 = vmatprep.subr.mxu0 0.0
    %5255 = vmatpush1.msra.mxu0 0.0
    %5256 = vmatprep.mubr.f32.mxu0 0.0
    %v5257 = vand.u32 %v1786, 4294901760
    %v5258 = vsub.f32 %v1786, %v5257
    %v5259 = vand.u32 %v5258, 4294901760
    %v5260 = vsub.f32 %v5258, %v5259
    %v5261 = vand.u32 %v5260, 4294901760
    %5262 = vmatmul.mubr.f32.gmra.mrb[0].mxu0 %v5261
    %v5263 = vpop.f32.mrb[0].mxu0
    %v5264 = vadd.f32 %v5181, %v5263
    %v5265 = vpop.f32.mrb[0].mxu0
    %5266 = vmatprep.mubr.f32.mxu0 0.0
    %v5267 = vand.u32 %v1788, 4294901760
    %v5268 = vsub.f32 %v1788, %v5267
    %v5269 = vand.u32 %v5268, 4294901760
    %v5270 = vsub.f32 %v5268, %v5269
    %v5271 = vand.u32 %v5270, 4294901760
    %5272 = vmatmul.mubr.f32.gmra.mrb[0].mxu0 %v5271
    %v5273 = vpop.f32.mrb[0].mxu0
    %v5274 = vadd.f32 %v5181, %v5273
    %v5275 = vpop.f32.mrb[0].mxu0
    %5276 = vmatprep.mubr.f32.mxu0 0.0
    %v5277 = vand.u32 %v1790, 4294901760
    %v5278 = vsub.f32 %v1790, %v5277
    %v5279 = vand.u32 %v5278, 4294901760
    %v5280 = vsub.f32 %v5278, %v5279
    %v5281 = vand.u32 %v5280, 4294901760
    %5282 = vmatmul.mubr.f32.gmra.mrb[0].mxu0 %v5281
    %v5283 = vpop.f32.mrb[0].mxu0
    %v5284 = vadd.f32 %v5185, %v5283
    %v5285 = vpop.f32.mrb[0].mxu0
    %5286 = vmatprep.mubr.f32.mxu0 0.0
    %v5287 = vand.u32 %v1792, 4294901760
    %v5288 = vsub.f32 %v1792, %v5287
    %v5289 = vand.u32 %v5288, 4294901760
    %v5290 = vsub.f32 %v5288, %v5289
    %v5291 = vand.u32 %v5290, 4294901760
    %5292 = vmatmul.mubr.f32.gmra.mrb[0].mxu0 %v5291
    %v5293 = vpop.f32.mrb[0].mxu0
    %v5294 = vadd.f32 %v5185, %v5293
    %v5295 = vpop.f32.mrb[0].mxu0
    %5296 = vdwg.mxu0
    %5297 = vmatprep.subr.mxu0 0.0
    %v5298 = vand.u32 %v5189, 4294901760
    %v5299 = vsub.f32 %v5189, %v5298
    %v5300 = vand.u32 %v5299, 4294901760
    %v5301 = vsub.f32 %v5299, %v5300
    %v5302 = vand.u32 %v5301, 4294901760
    %5303 = vmatpush1.msra.mxu0 %v5302
    %5304 = vmatprep.subr.mxu0 0.0
    %5305 = vmatpush1.msra.mxu0 0.0
    %5306 = vmatprep.subr.mxu0 0.0
    %5307 = vmatpush1.msra.mxu0 0.0
    %5308 = vmatprep.subr.mxu0 0.0
    %5309 = vmatpush1.msra.mxu0 0.0
    %5310 = vmatprep.subr.mxu0 0.0
    %5311 = vmatpush1.msra.mxu0 0.0
    %5312 = vmatprep.subr.mxu0 0.0
    %5313 = vmatpush1.msra.mxu0 0.0
    %5314 = vmatprep.subr.mxu0 0.0
    %5315 = vmatpush1.msra.mxu0 0.0
    %5316 = vmatprep.subr.mxu0 0.0
    %5317 = vmatpush1.msra.mxu0 0.0
    %5318 = vmatprep.subr.mxu0 0.0
    %5319 = vmatpush1.msra.mxu0 0.0
    %5320 = vmatprep.subr.mxu0 0.0
    %5321 = vmatpush1.msra.mxu0 0.0
    %5322 = vmatprep.subr.mxu0 0.0
    %5323 = vmatpush1.msra.mxu0 0.0
    %5324 = vmatprep.subr.mxu0 0.0
    %5325 = vmatpush1.msra.mxu0 0.0
    %5326 = vmatprep.subr.mxu0 0.0
    %5327 = vmatpush1.msra.mxu0 0.0
    %5328 = vmatprep.subr.mxu0 0.0
    %5329 = vmatpush1.msra.mxu0 0.0
    %5330 = vmatprep.subr.mxu0 0.0
    %5331 = vmatpush1.msra.mxu0 0.0
    %5332 = vmatprep.subr.mxu0 0.0
    %5333 = vmatpush1.msra.mxu0 0.0
    %5334 = vmatprep.subr.mxu0 0.0
    %5335 = vmatpush1.msra.mxu0 0.0
    %5336 = vmatprep.subr.mxu0 0.0
    %5337 = vmatpush1.msra.mxu0 0.0
    %5338 = vmatprep.subr.mxu0 0.0
    %5339 = vmatpush1.msra.mxu0 0.0
    %5340 = vmatprep.subr.mxu0 0.0
    %5341 = vmatpush1.msra.mxu0 0.0
    %5342 = vmatprep.subr.mxu0 0.0
    %5343 = vmatpush1.msra.mxu0 0.0
    %5344 = vmatprep.subr.mxu0 0.0
    %5345 = vmatpush1.msra.mxu0 0.0
    %5346 = vmatprep.subr.mxu0 0.0
    %5347 = vmatpush1.msra.mxu0 0.0
    %5348 = vmatprep.subr.mxu0 0.0
    %5349 = vmatpush1.msra.mxu0 0.0
    %5350 = vmatprep.subr.mxu0 0.0
    %5351 = vmatpush1.msra.mxu0 0.0
    %5352 = vmatprep.subr.mxu0 0.0
    %5353 = vmatpush1.msra.mxu0 0.0
    %5354 = vmatprep.subr.mxu0 0.0
    %5355 = vmatpush1.msra.mxu0 0.0
    %5356 = vmatprep.subr.mxu0 0.0
    %5357 = vmatpush1.msra.mxu0 0.0
    %5358 = vmatprep.subr.mxu0 0.0
    %5359 = vmatpush1.msra.mxu0 0.0
    %5360 = vmatprep.subr.mxu0 0.0
    %5361 = vmatpush1.msra.mxu0 0.0
    %5362 = vmatprep.subr.mxu0 0.0
    %5363 = vmatpush1.msra.mxu0 0.0
    %5364 = vmatprep.subr.mxu0 0.0
    %5365 = vmatpush1.msra.mxu0 0.0
    %5366 = vmatprep.mubr.f32.mxu0 0.0
    %v5367 = vand.u32 %v1786, 4294901760
    %5368 = vmatmul.mubr.f32.gmra.mrb[0].mxu0 %v5367
    %v5369 = vpop.f32.mrb[0].mxu0
    %v5370 = vadd.f32 %v5264, %v5369
    %v5371 = vpop.f32.mrb[0].mxu0
    %5372 = vmatprep.mubr.f32.mxu0 0.0
    %v5373 = vand.u32 %v1788, 4294901760
    %5374 = vmatmul.mubr.f32.gmra.mrb[0].mxu0 %v5373
    %v5375 = vpop.f32.mrb[0].mxu0
    %v5376 = vadd.f32 %v5274, %v5375
    %v5377 = vpop.f32.mrb[0].mxu0
    %5378 = vmatprep.mubr.f32.mxu0 0.0
    %v5379 = vand.u32 %v1790, 4294901760
    %5380 = vmatmul.mubr.f32.gmra.mrb[0].mxu0 %v5379
    %v5381 = vpop.f32.mrb[0].mxu0
    %v5382 = vadd.f32 %v5284, %v5381
    %v5383 = vpop.f32.mrb[0].mxu0
    %5384 = vmatprep.mubr.f32.mxu0 0.0
    %v5385 = vand.u32 %v1792, 4294901760
    %5386 = vmatmul.mubr.f32.gmra.mrb[0].mxu0 %v5385
    %v5387 = vpop.f32.mrb[0].mxu0
    %v5388 = vadd.f32 %v5294, %v5387
    %v5389 = vpop.f32.mrb[0].mxu0
    %5390 = vdwg.mxu0
    %5391 = vmatprep.subr.mxu0 0.0
    %v5392 = vand.u32 %v5189, 4294901760
    %v5393 = vsub.f32 %v5189, %v5392
    %5394 = vmatpush1.msra.mxu0 %v5393
    %5395 = vmatprep.subr.mxu0 0.0
    %5396 = vmatpush1.msra.mxu0 0.0
    %5397 = vmatprep.subr.mxu0 0.0
    %5398 = vmatpush1.msra.mxu0 0.0
    %5399 = vmatprep.subr.mxu0 0.0
    %5400 = vmatpush1.msra.mxu0 0.0
    %5401 = vmatprep.subr.mxu0 0.0
    %5402 = vmatpush1.msra.mxu0 0.0
    %5403 = vmatprep.subr.mxu0 0.0
    %5404 = vmatpush1.msra.mxu0 0.0
    %5405 = vmatprep.subr.mxu0 0.0
    %5406 = vmatpush1.msra.mxu0 0.0
    %5407 = vmatprep.subr.mxu0 0.0
    %5408 = vmatpush1.msra.mxu0 0.0
    %5409 = vmatprep.subr.mxu0 0.0
    %5410 = vmatpush1.msra.mxu0 0.0
    %5411 = vmatprep.subr.mxu0 0.0
    %5412 = vmatpush1.msra.mxu0 0.0
    %5413 = vmatprep.subr.mxu0 0.0
    %5414 = vmatpush1.msra.mxu0 0.0
    %5415 = vmatprep.subr.mxu0 0.0
    %5416 = vmatpush1.msra.mxu0 0.0
    %5417 = vmatprep.subr.mxu0 0.0
    %5418 = vmatpush1.msra.mxu0 0.0
    %5419 = vmatprep.subr.mxu0 0.0
    %5420 = vmatpush1.msra.mxu0 0.0
    %5421 = vmatprep.subr.mxu0 0.0
    %5422 = vmatpush1.msra.mxu0 0.0
    %5423 = vmatprep.subr.mxu0 0.0
    %5424 = vmatpush1.msra.mxu0 0.0
    %5425 = vmatprep.subr.mxu0 0.0
    %5426 = vmatpush1.msra.mxu0 0.0
    %5427 = vmatprep.subr.mxu0 0.0
    %5428 = vmatpush1.msra.mxu0 0.0
    %5429 = vmatprep.subr.mxu0 0.0
    %5430 = vmatpush1.msra.mxu0 0.0
    %5431 = vmatprep.subr.mxu0 0.0
    %5432 = vmatpush1.msra.mxu0 0.0
    %5433 = vmatprep.subr.mxu0 0.0
    %5434 = vmatpush1.msra.mxu0 0.0
    %5435 = vmatprep.subr.mxu0 0.0
    %5436 = vmatpush1.msra.mxu0 0.0
    %5437 = vmatprep.subr.mxu0 0.0
    %5438 = vmatpush1.msra.mxu0 0.0
    %5439 = vmatprep.subr.mxu0 0.0
    %5440 = vmatpush1.msra.mxu0 0.0
    %5441 = vmatprep.subr.mxu0 0.0
    %5442 = vmatpush1.msra.mxu0 0.0
    %5443 = vmatprep.subr.mxu0 0.0
    %5444 = vmatpush1.msra.mxu0 0.0
    %5445 = vmatprep.subr.mxu0 0.0
    %5446 = vmatpush1.msra.mxu0 0.0
    %5447 = vmatprep.subr.mxu0 0.0
    %5448 = vmatpush1.msra.mxu0 0.0
    %5449 = vmatprep.subr.mxu0 0.0
    %5450 = vmatpush1.msra.mxu0 0.0
    %5451 = vmatprep.subr.mxu0 0.0
    %5452 = vmatpush1.msra.mxu0 0.0
    %5453 = vmatprep.subr.mxu0 0.0
    %5454 = vmatpush1.msra.mxu0 0.0
    %5455 = vmatprep.subr.mxu0 0.0
    %5456 = vmatpush1.msra.mxu0 0.0
    %5457 = vmatprep.mubr.f32.mxu0 0.0
    %v5458 = vand.u32 %v1786, 4294901760
    %v5459 = vsub.f32 %v1786, %v5458
    %5460 = vmatmul.mubr.f32.gmra.mrb[0].mxu0 %v5459
    %v5461 = vpop.f32.mrb[0].mxu0
    %v5462 = vadd.f32 %v5370, %v5461
    %v5463 = vpop.f32.mrb[0].mxu0
    %5464 = vmatprep.mubr.f32.mxu0 0.0
    %v5465 = vand.u32 %v1788, 4294901760
    %v5466 = vsub.f32 %v1788, %v5465
    %5467 = vmatmul.mubr.f32.gmra.mrb[0].mxu0 %v5466
    %v5468 = vpop.f32.mrb[0].mxu0
    %v5469 = vadd.f32 %v5376, %v5468
    %v5470 = vpop.f32.mrb[0].mxu0
    %5471 = vmatprep.mubr.f32.mxu0 0.0
    %v5472 = vand.u32 %v1790, 4294901760
    %v5473 = vsub.f32 %v1790, %v5472
    %5474 = vmatmul.mubr.f32.gmra.mrb[0].mxu0 %v5473
    %v5475 = vpop.f32.mrb[0].mxu0
    %v5476 = vadd.f32 %v5382, %v5475
    %v5477 = vpop.f32.mrb[0].mxu0
    %5478 = vmatprep.mubr.f32.mxu0 0.0
    %v5479 = vand.u32 %v1792, 4294901760
    %v5480 = vsub.f32 %v1792, %v5479
    %5481 = vmatmul.mubr.f32.gmra.mrb[0].mxu0 %v5480
    %v5482 = vpop.f32.mrb[0].mxu0
    %v5483 = vadd.f32 %v5388, %v5482
    %v5484 = vpop.f32.mrb[0].mxu0
    %5485 = vdwg.mxu0
    %5486 = vmatprep.subr.mxu0 0.0
    %v5487 = vand.u32 %v5189, 4294901760
    %5488 = vmatpush1.msra.mxu0 %v5487
    %5489 = vmatprep.subr.mxu0 0.0
    %5490 = vmatpush1.msra.mxu0 0.0
    %5491 = vmatprep.subr.mxu0 0.0
    %5492 = vmatpush1.msra.mxu0 0.0
    %5493 = vmatprep.subr.mxu0 0.0
    %5494 = vmatpush1.msra.mxu0 0.0
    %5495 = vmatprep.subr.mxu0 0.0
    %5496 = vmatpush1.msra.mxu0 0.0
    %5497 = vmatprep.subr.mxu0 0.0
    %5498 = vmatpush1.msra.mxu0 0.0
    %5499 = vmatprep.subr.mxu0 0.0
    %5500 = vmatpush1.msra.mxu0 0.0
    %5501 = vmatprep.subr.mxu0 0.0
    %5502 = vmatpush1.msra.mxu0 0.0
    %5503 = vmatprep.subr.mxu0 0.0
    %5504 = vmatpush1.msra.mxu0 0.0
    %5505 = vmatprep.subr.mxu0 0.0
    %5506 = vmatpush1.msra.mxu0 0.0
    %5507 = vmatprep.subr.mxu0 0.0
    %5508 = vmatpush1.msra.mxu0 0.0
    %5509 = vmatprep.subr.mxu0 0.0
    %5510 = vmatpush1.msra.mxu0 0.0
    %5511 = vmatprep.subr.mxu0 0.0
    %5512 = vmatpush1.msra.mxu0 0.0
    %5513 = vmatprep.subr.mxu0 0.0
    %5514 = vmatpush1.msra.mxu0 0.0
    %5515 = vmatprep.subr.mxu0 0.0
    %5516 = vmatpush1.msra.mxu0 0.0
    %5517 = vmatprep.subr.mxu0 0.0
    %5518 = vmatpush1.msra.mxu0 0.0
    %5519 = vmatprep.subr.mxu0 0.0
    %5520 = vmatpush1.msra.mxu0 0.0
    %5521 = vmatprep.subr.mxu0 0.0
    %5522 = vmatpush1.msra.mxu0 0.0
    %5523 = vmatprep.subr.mxu0 0.0
    %5524 = vmatpush1.msra.mxu0 0.0
    %5525 = vmatprep.subr.mxu0 0.0
    %5526 = vmatpush1.msra.mxu0 0.0
    %5527 = vmatprep.subr.mxu0 0.0
    %5528 = vmatpush1.msra.mxu0 0.0
    %5529 = vmatprep.subr.mxu0 0.0
    %5530 = vmatpush1.msra.mxu0 0.0
    %5531 = vmatprep.subr.mxu0 0.0
    %5532 = vmatpush1.msra.mxu0 0.0
    %5533 = vmatprep.subr.mxu0 0.0
    %5534 = vmatpush1.msra.mxu0 0.0
    %5535 = vmatprep.subr.mxu0 0.0
    %5536 = vmatpush1.msra.mxu0 0.0
    %5537 = vmatprep.subr.mxu0 0.0
    %5538 = vmatpush1.msra.mxu0 0.0
    %5539 = vmatprep.subr.mxu0 0.0
    %5540 = vmatpush1.msra.mxu0 0.0
    %5541 = vmatprep.subr.mxu0 0.0
    %5542 = vmatpush1.msra.mxu0 0.0
    %5543 = vmatprep.subr.mxu0 0.0
    %5544 = vmatpush1.msra.mxu0 0.0
    %5545 = vmatprep.subr.mxu0 0.0
    %5546 = vmatpush1.msra.mxu0 0.0
    %5547 = vmatprep.subr.mxu0 0.0
    %5548 = vmatpush1.msra.mxu0 0.0
    %5549 = vmatprep.subr.mxu0 0.0
    %5550 = vmatpush1.msra.mxu0 0.0
    %5551 = vmatprep.mubr.f32.mxu0 0.0
    %v5552 = vand.u32 %v1786, 4294901760
    %v5553 = vsub.f32 %v1786, %v5552
    %v5554 = vand.u32 %v5553, 4294901760
    %5555 = vmatmul.mubr.f32.gmra.mrb[0].mxu0 %v5554
    %v5556 = vpop.f32.mrb[0].mxu0
    %v5557 = vadd.f32 %v5462, %v5556
    %v5558 = vpop.f32.mrb[0].mxu0
    %5559 = vmatprep.mubr.f32.mxu0 0.0
    %v5560 = vand.u32 %v1788, 4294901760
    %v5561 = vsub.f32 %v1788, %v5560
    %v5562 = vand.u32 %v5561, 4294901760
    %5563 = vmatmul.mubr.f32.gmra.mrb[0].mxu0 %v5562
    %v5564 = vpop.f32.mrb[0].mxu0
    %v5565 = vadd.f32 %v5469, %v5564
    %v5566 = vpop.f32.mrb[0].mxu0
    %5567 = vmatprep.mubr.f32.mxu0 0.0
    %v5568 = vand.u32 %v1790, 4294901760
    %v5569 = vsub.f32 %v1790, %v5568
    %v5570 = vand.u32 %v5569, 4294901760
    %5571 = vmatmul.mubr.f32.gmra.mrb[0].mxu0 %v5570
    %v5572 = vpop.f32.mrb[0].mxu0
    %v5573 = vadd.f32 %v5476, %v5572
    %v5574 = vpop.f32.mrb[0].mxu0
    %5575 = vmatprep.mubr.f32.mxu0 0.0
    %v5576 = vand.u32 %v1792, 4294901760
    %v5577 = vsub.f32 %v1792, %v5576
    %v5578 = vand.u32 %v5577, 4294901760
    %5579 = vmatmul.mubr.f32.gmra.mrb[0].mxu0 %v5578
    %v5580 = vpop.f32.mrb[0].mxu0
    %v5581 = vadd.f32 %v5483, %v5580
    %v5582 = vpop.f32.mrb[0].mxu0
    %5583 = vdwg.mxu0
    %5584 = vmatprep.subr.mxu0 0.0
    %v5585 = vand.u32 %v5189, 4294901760
    %v5586 = vsub.f32 %v5189, %v5585
    %v5587 = vand.u32 %v5586, 4294901760
    %5588 = vmatpush1.msra.mxu0 %v5587
    %5589 = vmatprep.subr.mxu0 0.0
    %5590 = vmatpush1.msra.mxu0 0.0
    %5591 = vmatprep.subr.mxu0 0.0
    %5592 = vmatpush1.msra.mxu0 0.0
    %5593 = vmatprep.subr.mxu0 0.0
    %5594 = vmatpush1.msra.mxu0 0.0
    %5595 = vmatprep.subr.mxu0 0.0
    %5596 = vmatpush1.msra.mxu0 0.0
    %5597 = vmatprep.subr.mxu0 0.0
    %5598 = vmatpush1.msra.mxu0 0.0
    %5599 = vmatprep.subr.mxu0 0.0
    %5600 = vmatpush1.msra.mxu0 0.0
    %5601 = vmatprep.subr.mxu0 0.0
    %5602 = vmatpush1.msra.mxu0 0.0
    %5603 = vmatprep.subr.mxu0 0.0
    %5604 = vmatpush1.msra.mxu0 0.0
    %5605 = vmatprep.subr.mxu0 0.0
    %5606 = vmatpush1.msra.mxu0 0.0
    %5607 = vmatprep.subr.mxu0 0.0
    %5608 = vmatpush1.msra.mxu0 0.0
    %5609 = vmatprep.subr.mxu0 0.0
    %5610 = vmatpush1.msra.mxu0 0.0
    %5611 = vmatprep.subr.mxu0 0.0
    %5612 = vmatpush1.msra.mxu0 0.0
    %5613 = vmatprep.subr.mxu0 0.0
    %5614 = vmatpush1.msra.mxu0 0.0
    %5615 = vmatprep.subr.mxu0 0.0
    %5616 = vmatpush1.msra.mxu0 0.0
    %5617 = vmatprep.subr.mxu0 0.0
    %5618 = vmatpush1.msra.mxu0 0.0
    %5619 = vmatprep.subr.mxu0 0.0
    %5620 = vmatpush1.msra.mxu0 0.0
    %5621 = vmatprep.subr.mxu0 0.0
    %5622 = vmatpush1.msra.mxu0 0.0
    %5623 = vmatprep.subr.mxu0 0.0
    %5624 = vmatpush1.msra.mxu0 0.0
    %5625 = vmatprep.subr.mxu0 0.0
    %5626 = vmatpush1.msra.mxu0 0.0
    %5627 = vmatprep.subr.mxu0 0.0
    %5628 = vmatpush1.msra.mxu0 0.0
    %5629 = vmatprep.subr.mxu0 0.0
    %5630 = vmatpush1.msra.mxu0 0.0
    %5631 = vmatprep.subr.mxu0 0.0
    %5632 = vmatpush1.msra.mxu0 0.0
    %5633 = vmatprep.subr.mxu0 0.0
    %5634 = vmatpush1.msra.mxu0 0.0
    %5635 = vmatprep.subr.mxu0 0.0
    %5636 = vmatpush1.msra.mxu0 0.0
    %5637 = vmatprep.subr.mxu0 0.0
    %5638 = vmatpush1.msra.mxu0 0.0
    %5639 = vmatprep.subr.mxu0 0.0
    %5640 = vmatpush1.msra.mxu0 0.0
    %5641 = vmatprep.subr.mxu0 0.0
    %5642 = vmatpush1.msra.mxu0 0.0
    %5643 = vmatprep.subr.mxu0 0.0
    %5644 = vmatpush1.msra.mxu0 0.0
    %5645 = vmatprep.subr.mxu0 0.0
    %5646 = vmatpush1.msra.mxu0 0.0
    %5647 = vmatprep.subr.mxu0 0.0
    %5648 = vmatpush1.msra.mxu0 0.0
    %5649 = vmatprep.subr.mxu0 0.0
    %5650 = vmatpush1.msra.mxu0 0.0
    %5651 = vmatprep.mubr.f32.mxu0 0.0
    %v5652 = vand.u32 %v1786, 4294901760
    %5653 = vmatmul.mubr.f32.gmra.mrb[0].mxu0 %v5652
    %v5654 = vpop.f32.mrb[0].mxu0
    %v5655 = vadd.f32 %v5557, %v5654
    %v5656 = vpop.f32.mrb[0].mxu0
    %5657 = vmatprep.mubr.f32.mxu0 0.0
    %v5658 = vand.u32 %v1788, 4294901760
    %5659 = vmatmul.mubr.f32.gmra.mrb[0].mxu0 %v5658
    %v5660 = vpop.f32.mrb[0].mxu0
    %v5661 = vadd.f32 %v5565, %v5660
    %v5662 = vpop.f32.mrb[0].mxu0
    %5663 = vmatprep.mubr.f32.mxu0 0.0
    %v5664 = vand.u32 %v1790, 4294901760
    %5665 = vmatmul.mubr.f32.gmra.mrb[0].mxu0 %v5664
    %v5666 = vpop.f32.mrb[0].mxu0
    %v5667 = vadd.f32 %v5573, %v5666
    %v5668 = vpop.f32.mrb[0].mxu0
    %5669 = vmatprep.mubr.f32.mxu0 0.0
    %v5670 = vand.u32 %v1792, 4294901760
    %5671 = vmatmul.mubr.f32.gmra.mrb[0].mxu0 %v5670
    %v5672 = vpop.f32.mrb[0].mxu0
    %v5673 = vadd.f32 %v5581, %v5672
    %v5674 = vpop.f32.mrb[0].mxu0
    %5675 = vdwg.mxu0
    %5676 = vmatprep.subr.mxu0 0.0
    %v5677 = vand.u32 %v5189, 4294901760
    %5678 = vmatpush1.msra.mxu0 %v5677
    %5679 = vmatprep.subr.mxu0 0.0
    %5680 = vmatpush1.msra.mxu0 0.0
    %5681 = vmatprep.subr.mxu0 0.0
    %5682 = vmatpush1.msra.mxu0 0.0
    %5683 = vmatprep.subr.mxu0 0.0
    %5684 = vmatpush1.msra.mxu0 0.0
    %5685 = vmatprep.subr.mxu0 0.0
    %5686 = vmatpush1.msra.mxu0 0.0
    %5687 = vmatprep.subr.mxu0 0.0
    %5688 = vmatpush1.msra.mxu0 0.0
    %5689 = vmatprep.subr.mxu0 0.0
    %5690 = vmatpush1.msra.mxu0 0.0
    %5691 = vmatprep.subr.mxu0 0.0
    %5692 = vmatpush1.msra.mxu0 0.0
    %5693 = vmatprep.subr.mxu0 0.0
    %5694 = vmatpush1.msra.mxu0 0.0
    %5695 = vmatprep.subr.mxu0 0.0
    %5696 = vmatpush1.msra.mxu0 0.0
    %5697 = vmatprep.subr.mxu0 0.0
    %5698 = vmatpush1.msra.mxu0 0.0
    %5699 = vmatprep.subr.mxu0 0.0
    %5700 = vmatpush1.msra.mxu0 0.0
    %5701 = vmatprep.subr.mxu0 0.0
    %5702 = vmatpush1.msra.mxu0 0.0
    %5703 = vmatprep.subr.mxu0 0.0
    %5704 = vmatpush1.msra.mxu0 0.0
    %5705 = vmatprep.subr.mxu0 0.0
    %5706 = vmatpush1.msra.mxu0 0.0
    %5707 = vmatprep.subr.mxu0 0.0
    %5708 = vmatpush1.msra.mxu0 0.0
    %5709 = vmatprep.subr.mxu0 0.0
    %5710 = vmatpush1.msra.mxu0 0.0
    %5711 = vmatprep.subr.mxu0 0.0
    %5712 = vmatpush1.msra.mxu0 0.0
    %5713 = vmatprep.subr.mxu0 0.0
    %5714 = vmatpush1.msra.mxu0 0.0
    %5715 = vmatprep.subr.mxu0 0.0
    %5716 = vmatpush1.msra.mxu0 0.0
    %5717 = vmatprep.subr.mxu0 0.0
    %5718 = vmatpush1.msra.mxu0 0.0
    %5719 = vmatprep.subr.mxu0 0.0
    %5720 = vmatpush1.msra.mxu0 0.0
    %5721 = vmatprep.subr.mxu0 0.0
    %5722 = vmatpush1.msra.mxu0 0.0
    %5723 = vmatprep.subr.mxu0 0.0
    %5724 = vmatpush1.msra.mxu0 0.0
    %5725 = vmatprep.subr.mxu0 0.0
    %5726 = vmatpush1.msra.mxu0 0.0
    %5727 = vmatprep.subr.mxu0 0.0
    %5728 = vmatpush1.msra.mxu0 0.0
    %5729 = vmatprep.subr.mxu0 0.0
    %5730 = vmatpush1.msra.mxu0 0.0
    %5731 = vmatprep.subr.mxu0 0.0
    %5732 = vmatpush1.msra.mxu0 0.0
    %5733 = vmatprep.subr.mxu0 0.0
    %5734 = vmatpush1.msra.mxu0 0.0
    %5735 = vmatprep.subr.mxu0 0.0
    %5736 = vmatpush1.msra.mxu0 0.0
    %5737 = vmatprep.subr.mxu0 0.0
    %5738 = vmatpush1.msra.mxu0 0.0
    %5739 = vmatprep.subr.mxu0 0.0
    %5740 = vmatpush1.msra.mxu0 0.0
    %5741 = vmatprep.mubr.f32.mxu0 0.0
    %v5742 = vand.u32 %v1786, 4294901760
    %5743 = vmatmul.mubr.f32.gmra.mrb[0].mxu0 %v5742
    %v5744 = vpop.f32.mrb[0].mxu0
    %v5745 = vadd.f32 %v5655, %v5744
    %v5746 = vpop.f32.mrb[0].mxu0
    %5747 = vmatprep.mubr.f32.mxu0 0.0
    %v5748 = vand.u32 %v1788, 4294901760
    %5749 = vmatmul.mubr.f32.gmra.mrb[0].mxu0 %v5748
    %v5750 = vpop.f32.mrb[0].mxu0
    %v5751 = vadd.f32 %v5661, %v5750
    %v5752 = vpop.f32.mrb[0].mxu0
    %5753 = vmatprep.mubr.f32.mxu0 0.0
    %v5754 = vand.u32 %v1790, 4294901760
    %5755 = vmatmul.mubr.f32.gmra.mrb[0].mxu0 %v5754
    %v5756 = vpop.f32.mrb[0].mxu0
    %v5757 = vadd.f32 %v5667, %v5756
    %v5758 = vpop.f32.mrb[0].mxu0
    %5759 = vmatprep.mubr.f32.mxu0 0.0
    %v5760 = vand.u32 %v1792, 4294901760
    %5761 = vmatmul.mubr.f32.gmra.mrb[0].mxu0 %v5760
    %v5762 = vpop.f32.mrb[0].mxu0
    %v5763 = vadd.f32 %v5673, %v5762
    %v5764 = vpop.f32.mrb[0].mxu0
    %5765 = vdwg.mxu0
    %vm5766 = vcmp.ge.f32.partialorder %v5745, 0.0
    %vm5767 = vcmp.ge.f32.partialorder %v5751, 0.0
    %vm5768 = vcmp.ge.f32.partialorder %v5757, 0.0
    %vm5769 = vcmp.ge.f32.partialorder %v5763, 0.0
    %v5770 = vmul.f32 %v5745, 0.33
    %v5771 = vmul.f32 %v5751, 0.33
    %v5772 = vmul.f32 %v5757, 0.33
    %v5773 = vmul.f32 %v5763, 0.33
    %v5774 = vsel %vm5766, %v5745, %v5770
    %v5775 = vsel %vm5767, %v5751, %v5771
    %v5776 = vsel %vm5768, %v5757, %v5772
    %v5777 = vsel %vm5769, %v5763, %v5773
    %v5778 = vld [vmem:[%s43] sm:$0xff]
    %v5779 = vld [vmem:[%s43 + $0x8] sm:$0xff]
    %v5780 = vld [vmem:[%s43 + $0x10] sm:$0xff]
    %v5781 = vld [vmem:[%s43 + $0x18] sm:$0xff]
    %v5782 = vld [vmem:[%s43 + $0x20] sm:$0xff]
    %v5783 = vld [vmem:[%s43 + $0x28] sm:$0xff]
    %v5784 = vld [vmem:[%s43 + $0x30] sm:$0xff]
    %v5785 = vld [vmem:[%s43 + $0x38] sm:$0xff]
    %v5786 = vld [vmem:[%s43 + $0x40] sm:$0xff]
    %v5787 = vld [vmem:[%s43 + $0x48] sm:$0xff]
    %v5788 = vld [vmem:[%s43 + $0x50] sm:$0xff]
    %v5789 = vld [vmem:[%s43 + $0x58] sm:$0xff]
    %v5790 = vld [vmem:[%s43 + $0x60] sm:$0xff]
    %v5791 = vld [vmem:[%s43 + $0x68] sm:$0xff]
    %v5792 = vld [vmem:[%s43 + $0x70] sm:$0xff]
    %v5793 = vld [vmem:[%s43 + $0x78] sm:$0xff]
    %5795 = vset.pattern.permute.xlu0 0
    %5796 = vperm.xlu0 %5795, %v5034
    %v5797 = vpop.permute.xlu0 %5796
    %5800 = vset.pattern.permute.xlu0 0
    %5801 = vperm.xlu0 %5800, %v5035
    %v5802 = vpop.permute.xlu0 %5801
    %5805 = vset.pattern.permute.xlu0 0
    %5806 = vperm.xlu0 %5805, %v5036
    %v5807 = vpop.permute.xlu0 %5806
    %5810 = vset.pattern.permute.xlu0 0
    %5811 = vperm.xlu0 %5810, %v5037
    %v5812 = vpop.permute.xlu0 %5811
    %v5814 = vmul.f32 %v5797, %v5778
    %v5815 = vmul.f32 %v5802, %v5779
    %v5816 = vmul.f32 %v5807, %v5778
    %v5817 = vmul.f32 %v5812, %v5779
    %v5818 = vsel %vm135, %v5814, 0.0
    %v5819 = vsel %vm135, %v5815, 0.0
    %v5820 = vadd.f32 %v5818, %v5819
    %v5821 = vrot.slane %v5820, 4
    %v5822 = vadd.f32 %v5820, %v5821
    %v5823 = vrot.slane %v5822, 2
    %v5824 = vadd.f32 %v5822, %v5823
    %v5825 = vrot.slane %v5824, 1
    %v5826 = vadd.f32 %v5824, %v5825
    %v5827 = vsel %vm135, %v5816, 0.0
    %v5828 = vsel %vm135, %v5817, 0.0
    %v5829 = vadd.f32 %v5827, %v5828
    %v5830 = vrot.slane %v5829, 4
    %v5831 = vadd.f32 %v5829, %v5830
    %v5832 = vrot.slane %v5831, 2
    %v5833 = vadd.f32 %v5831, %v5832
    %v5834 = vrot.slane %v5833, 1
    %v5835 = vadd.f32 %v5833, %v5834
    %v5836 = vadd.f32 %v5826, 0.0
    %v5837 = vadd.f32 %v5835, 0.0
    %5838 = vset.pattern.permute.xlu0 1
    %5839 = vperm.xlu0 %5838, %v5034
    %v5840 = vpop.permute.xlu0 %5839
    %5842 = vset.pattern.permute.xlu0 1
    %5843 = vperm.xlu0 %5842, %v5035
    %v5844 = vpop.permute.xlu0 %5843
    %5846 = vset.pattern.permute.xlu0 1
    %5847 = vperm.xlu0 %5846, %v5036
    %v5848 = vpop.permute.xlu0 %5847
    %5850 = vset.pattern.permute.xlu0 1
    %5851 = vperm.xlu0 %5850, %v5037
    %v5852 = vpop.permute.xlu0 %5851
    %v5854 = vmul.f32 %v5840, %v5780
    %v5855 = vmul.f32 %v5844, %v5781
    %v5856 = vmul.f32 %v5848, %v5780
    %v5857 = vmul.f32 %v5852, %v5781
    %v5858 = vsel %vm135, %v5854, 0.0
    %v5859 = vsel %vm135, %v5855, 0.0
    %v5860 = vadd.f32 %v5858, %v5859
    %v5861 = vrot.slane %v5860, 4
    %v5862 = vadd.f32 %v5860, %v5861
    %v5863 = vrot.slane %v5862, 2
    %v5864 = vadd.f32 %v5862, %v5863
    %v5865 = vrot.slane %v5864, 1
    %v5866 = vadd.f32 %v5864, %v5865
    %v5867 = vsel %vm135, %v5856, 0.0
    %v5868 = vsel %vm135, %v5857, 0.0
    %v5869 = vadd.f32 %v5867, %v5868
    %v5870 = vrot.slane %v5869, 4
    %v5871 = vadd.f32 %v5869, %v5870
    %v5872 = vrot.slane %v5871, 2
    %v5873 = vadd.f32 %v5871, %v5872
    %v5874 = vrot.slane %v5873, 1
    %v5875 = vadd.f32 %v5873, %v5874
    %v5876 = vadd.f32 %v5836, %v5866
    %v5877 = vadd.f32 %v5837, %v5875
    %5878 = vset.pattern.permute.xlu0 2
    %5879 = vperm.xlu0 %5878, %v5034
    %v5880 = vpop.permute.xlu0 %5879
    %5882 = vset.pattern.permute.xlu0 2
    %5883 = vperm.xlu0 %5882, %v5035
    %v5884 = vpop.permute.xlu0 %5883
    %5886 = vset.pattern.permute.xlu0 2
    %5887 = vperm.xlu0 %5886, %v5036
    %v5888 = vpop.permute.xlu0 %5887
    %5890 = vset.pattern.permute.xlu0 2
    %5891 = vperm.xlu0 %5890, %v5037
    %v5892 = vpop.permute.xlu0 %5891
    %v5894 = vmul.f32 %v5880, %v5782
    %v5895 = vmul.f32 %v5884, %v5783
    %v5896 = vmul.f32 %v5888, %v5782
    %v5897 = vmul.f32 %v5892, %v5783
    %v5898 = vsel %vm135, %v5894, 0.0
    %v5899 = vsel %vm135, %v5895, 0.0
    %v5900 = vadd.f32 %v5898, %v5899
    %v5901 = vrot.slane %v5900, 4
    %v5902 = vadd.f32 %v5900, %v5901
    %v5903 = vrot.slane %v5902, 2
    %v5904 = vadd.f32 %v5902, %v5903
    %v5905 = vrot.slane %v5904, 1
    %v5906 = vadd.f32 %v5904, %v5905
    %v5907 = vsel %vm135, %v5896, 0.0
    %v5908 = vsel %vm135, %v5897, 0.0
    %v5909 = vadd.f32 %v5907, %v5908
    %v5910 = vrot.slane %v5909, 4
    %v5911 = vadd.f32 %v5909, %v5910
    %v5912 = vrot.slane %v5911, 2
    %v5913 = vadd.f32 %v5911, %v5912
    %v5914 = vrot.slane %v5913, 1
    %v5915 = vadd.f32 %v5913, %v5914
    %v5916 = vadd.f32 %v5876, %v5906
    %v5917 = vadd.f32 %v5877, %v5915
    %5918 = vset.pattern.permute.xlu0 3
    %5919 = vperm.xlu0 %5918, %v5034
    %v5920 = vpop.permute.xlu0 %5919
    %5922 = vset.pattern.permute.xlu0 3
    %5923 = vperm.xlu0 %5922, %v5035
    %v5924 = vpop.permute.xlu0 %5923
    %5926 = vset.pattern.permute.xlu0 3
    %5927 = vperm.xlu0 %5926, %v5036
    %v5928 = vpop.permute.xlu0 %5927
    %5930 = vset.pattern.permute.xlu0 3
    %5931 = vperm.xlu0 %5930, %v5037
    %v5932 = vpop.permute.xlu0 %5931
    %v5934 = vmul.f32 %v5920, %v5784
    %v5935 = vmul.f32 %v5924, %v5785
    %v5936 = vmul.f32 %v5928, %v5784
    %v5937 = vmul.f32 %v5932, %v5785
    %v5938 = vsel %vm135, %v5934, 0.0
    %v5939 = vsel %vm135, %v5935, 0.0
    %v5940 = vadd.f32 %v5938, %v5939
    %v5941 = vrot.slane %v5940, 4
    %v5942 = vadd.f32 %v5940, %v5941
    %v5943 = vrot.slane %v5942, 2
    %v5944 = vadd.f32 %v5942, %v5943
    %v5945 = vrot.slane %v5944, 1
    %v5946 = vadd.f32 %v5944, %v5945
    %v5947 = vsel %vm135, %v5936, 0.0
    %v5948 = vsel %vm135, %v5937, 0.0
    %v5949 = vadd.f32 %v5947, %v5948
    %v5950 = vrot.slane %v5949, 4
    %v5951 = vadd.f32 %v5949, %v5950
    %v5952 = vrot.slane %v5951, 2
    %v5953 = vadd.f32 %v5951, %v5952
    %v5954 = vrot.slane %v5953, 1
    %v5955 = vadd.f32 %v5953, %v5954
    %v5956 = vadd.f32 %v5916, %v5946
    %v5957 = vadd.f32 %v5917, %v5955
    %5958 = vset.pattern.permute.xlu0 4
    %5959 = vperm.xlu0 %5958, %v5034
    %v5960 = vpop.permute.xlu0 %5959
    %5962 = vset.pattern.permute.xlu0 4
    %5963 = vperm.xlu0 %5962, %v5035
    %v5964 = vpop.permute.xlu0 %5963
    %5966 = vset.pattern.permute.xlu0 4
    %5967 = vperm.xlu0 %5966, %v5036
    %v5968 = vpop.permute.xlu0 %5967
    %5970 = vset.pattern.permute.xlu0 4
    %5971 = vperm.xlu0 %5970, %v5037
    %v5972 = vpop.permute.xlu0 %5971
    %v5974 = vmul.f32 %v5960, %v5786
    %v5975 = vmul.f32 %v5964, %v5787
    %v5976 = vmul.f32 %v5968, %v5786
    %v5977 = vmul.f32 %v5972, %v5787
    %v5978 = vsel %vm135, %v5974, 0.0
    %v5979 = vsel %vm135, %v5975, 0.0
    %v5980 = vadd.f32 %v5978, %v5979
    %v5981 = vrot.slane %v5980, 4
    %v5982 = vadd.f32 %v5980, %v5981
    %v5983 = vrot.slane %v5982, 2
    %v5984 = vadd.f32 %v5982, %v5983
    %v5985 = vrot.slane %v5984, 1
    %v5986 = vadd.f32 %v5984, %v5985
    %v5987 = vsel %vm135, %v5976, 0.0
    %v5988 = vsel %vm135, %v5977, 0.0
    %v5989 = vadd.f32 %v5987, %v5988
    %v5990 = vrot.slane %v5989, 4
    %v5991 = vadd.f32 %v5989, %v5990
    %v5992 = vrot.slane %v5991, 2
    %v5993 = vadd.f32 %v5991, %v5992
    %v5994 = vrot.slane %v5993, 1
    %v5995 = vadd.f32 %v5993, %v5994
    %v5996 = vadd.f32 %v5956, %v5986
    %v5997 = vadd.f32 %v5957, %v5995
    %5998 = vset.pattern.permute.xlu0 5
    %5999 = vperm.xlu0 %5998, %v5034
    %v6000 = vpop.permute.xlu0 %5999
    %6002 = vset.pattern.permute.xlu0 5
    %6003 = vperm.xlu0 %6002, %v5035
    %v6004 = vpop.permute.xlu0 %6003
    %6006 = vset.pattern.permute.xlu0 5
    %6007 = vperm.xlu0 %6006, %v5036
    %v6008 = vpop.permute.xlu0 %6007
    %6010 = vset.pattern.permute.xlu0 5
    %6011 = vperm.xlu0 %6010, %v5037
    %v6012 = vpop.permute.xlu0 %6011
    %v6014 = vmul.f32 %v6000, %v5788
    %v6015 = vmul.f32 %v6004, %v5789
    %v6016 = vmul.f32 %v6008, %v5788
    %v6017 = vmul.f32 %v6012, %v5789
    %v6018 = vsel %vm135, %v6014, 0.0
    %v6019 = vsel %vm135, %v6015, 0.0
    %v6020 = vadd.f32 %v6018, %v6019
    %v6021 = vrot.slane %v6020, 4
    %v6022 = vadd.f32 %v6020, %v6021
    %v6023 = vrot.slane %v6022, 2
    %v6024 = vadd.f32 %v6022, %v6023
    %v6025 = vrot.slane %v6024, 1
    %v6026 = vadd.f32 %v6024, %v6025
    %v6027 = vsel %vm135, %v6016, 0.0
    %v6028 = vsel %vm135, %v6017, 0.0
    %v6029 = vadd.f32 %v6027, %v6028
    %v6030 = vrot.slane %v6029, 4
    %v6031 = vadd.f32 %v6029, %v6030
    %v6032 = vrot.slane %v6031, 2
    %v6033 = vadd.f32 %v6031, %v6032
    %v6034 = vrot.slane %v6033, 1
    %v6035 = vadd.f32 %v6033, %v6034
    %v6036 = vadd.f32 %v5996, %v6026
    %v6037 = vadd.f32 %v5997, %v6035
    %6038 = vset.pattern.permute.xlu0 6
    %6039 = vperm.xlu0 %6038, %v5034
    %v6040 = vpop.permute.xlu0 %6039
    %6042 = vset.pattern.permute.xlu0 6
    %6043 = vperm.xlu0 %6042, %v5035
    %v6044 = vpop.permute.xlu0 %6043
    %6046 = vset.pattern.permute.xlu0 6
    %6047 = vperm.xlu0 %6046, %v5036
    %v6048 = vpop.permute.xlu0 %6047
    %6050 = vset.pattern.permute.xlu0 6
    %6051 = vperm.xlu0 %6050, %v5037
    %v6052 = vpop.permute.xlu0 %6051
    %v6054 = vmul.f32 %v6040, %v5790
    %v6055 = vmul.f32 %v6044, %v5791
    %v6056 = vmul.f32 %v6048, %v5790
    %v6057 = vmul.f32 %v6052, %v5791
    %v6058 = vsel %vm135, %v6054, 0.0
    %v6059 = vsel %vm135, %v6055, 0.0
    %v6060 = vadd.f32 %v6058, %v6059
    %v6061 = vrot.slane %v6060, 4
    %v6062 = vadd.f32 %v6060, %v6061
    %v6063 = vrot.slane %v6062, 2
    %v6064 = vadd.f32 %v6062, %v6063
    %v6065 = vrot.slane %v6064, 1
    %v6066 = vadd.f32 %v6064, %v6065
    %v6067 = vsel %vm135, %v6056, 0.0
    %v6068 = vsel %vm135, %v6057, 0.0
    %v6069 = vadd.f32 %v6067, %v6068
    %v6070 = vrot.slane %v6069, 4
    %v6071 = vadd.f32 %v6069, %v6070
    %v6072 = vrot.slane %v6071, 2
    %v6073 = vadd.f32 %v6071, %v6072
    %v6074 = vrot.slane %v6073, 1
    %v6075 = vadd.f32 %v6073, %v6074
    %v6076 = vadd.f32 %v6036, %v6066
    %v6077 = vadd.f32 %v6037, %v6075
    %6078 = vset.pattern.permute.xlu0 7
    %6079 = vperm.xlu0 %6078, %v5034
    %v6080 = vpop.permute.xlu0 %6079
    %6082 = vset.pattern.permute.xlu0 7
    %6083 = vperm.xlu0 %6082, %v5035
    %v6084 = vpop.permute.xlu0 %6083
    %6086 = vset.pattern.permute.xlu0 7
    %6087 = vperm.xlu0 %6086, %v5036
    %v6088 = vpop.permute.xlu0 %6087
    %6090 = vset.pattern.permute.xlu0 7
    %6091 = vperm.xlu0 %6090, %v5037
    %v6092 = vpop.permute.xlu0 %6091
    %v6094 = vmul.f32 %v6080, %v5792
    %v6095 = vmul.f32 %v6084, %v5793
    %v6096 = vmul.f32 %v6088, %v5792
    %v6097 = vmul.f32 %v6092, %v5793
    %v6098 = vsel %vm135, %v6094, 0.0
    %v6099 = vsel %vm135, %v6095, 0.0
    %v6100 = vadd.f32 %v6098, %v6099
    %v6101 = vrot.slane %v6100, 4
    %v6102 = vadd.f32 %v6100, %v6101
    %v6103 = vrot.slane %v6102, 2
    %v6104 = vadd.f32 %v6102, %v6103
    %v6105 = vrot.slane %v6104, 1
    %v6106 = vadd.f32 %v6104, %v6105
    %v6107 = vsel %vm135, %v6096, 0.0
    %v6108 = vsel %vm135, %v6097, 0.0
    %v6109 = vadd.f32 %v6107, %v6108
    %v6110 = vrot.slane %v6109, 4
    %v6111 = vadd.f32 %v6109, %v6110
    %v6112 = vrot.slane %v6111, 2
    %v6113 = vadd.f32 %v6111, %v6112
    %v6114 = vrot.slane %v6113, 1
    %v6115 = vadd.f32 %v6113, %v6114
    %v6116 = vadd.f32 %v6076, %v6106
    %v6117 = vadd.f32 %v6077, %v6115
    %v6118 = vld [vmem:[%s45] sm:$0xff]
    %v6119 = vld [vmem:[%s45 + $0x8] sm:$0xff]
    %v6120 = vld [vmem:[%s45 + $0x10] sm:$0xff]
    %v6121 = vld [vmem:[%s45 + $0x18] sm:$0xff]
    %v6122 = vld [vmem:[%s45 + $0x20] sm:$0xff]
    %v6123 = vld [vmem:[%s45 + $0x28] sm:$0xff]
    %v6124 = vld [vmem:[%s45 + $0x30] sm:$0xff]
    %v6125 = vld [vmem:[%s45 + $0x38] sm:$0xff]
    %v6126 = vld [vmem:[%s45 + $0x40] sm:$0xff]
    %v6127 = vld [vmem:[%s45 + $0x48] sm:$0xff]
    %v6128 = vld [vmem:[%s45 + $0x50] sm:$0xff]
    %v6129 = vld [vmem:[%s45 + $0x58] sm:$0xff]
    %v6130 = vld [vmem:[%s45 + $0x60] sm:$0xff]
    %v6131 = vld [vmem:[%s45 + $0x68] sm:$0xff]
    %v6132 = vld [vmem:[%s45 + $0x70] sm:$0xff]
    %v6133 = vld [vmem:[%s45 + $0x78] sm:$0xff]
    %6135 = vset.pattern.permute.xlu0 0
    %6136 = vperm.xlu0 %6135, %v5774
    %v6137 = vpop.permute.xlu0 %6136
    %6140 = vset.pattern.permute.xlu0 0
    %6141 = vperm.xlu0 %6140, %v5775
    %v6142 = vpop.permute.xlu0 %6141
    %6145 = vset.pattern.permute.xlu0 0
    %6146 = vperm.xlu0 %6145, %v5776
    %v6147 = vpop.permute.xlu0 %6146
    %6150 = vset.pattern.permute.xlu0 0
    %6151 = vperm.xlu0 %6150, %v5777
    %v6152 = vpop.permute.xlu0 %6151
    %v6154 = vmul.f32 %v6137, %v6118
    %v6155 = vmul.f32 %v6142, %v6119
    %v6156 = vmul.f32 %v6147, %v6118
    %v6157 = vmul.f32 %v6152, %v6119
    %v6158 = vsel %vm135, %v6154, 0.0
    %v6159 = vsel %vm135, %v6155, 0.0
    %v6160 = vadd.f32 %v6158, %v6159
    %v6161 = vrot.slane %v6160, 4
    %v6162 = vadd.f32 %v6160, %v6161
    %v6163 = vrot.slane %v6162, 2
    %v6164 = vadd.f32 %v6162, %v6163
    %v6165 = vrot.slane %v6164, 1
    %v6166 = vadd.f32 %v6164, %v6165
    %v6167 = vsel %vm135, %v6156, 0.0
    %v6168 = vsel %vm135, %v6157, 0.0
    %v6169 = vadd.f32 %v6167, %v6168
    %v6170 = vrot.slane %v6169, 4
    %v6171 = vadd.f32 %v6169, %v6170
    %v6172 = vrot.slane %v6171, 2
    %v6173 = vadd.f32 %v6171, %v6172
    %v6174 = vrot.slane %v6173, 1
    %v6175 = vadd.f32 %v6173, %v6174
    %v6176 = vadd.f32 %v6166, 0.0
    %v6177 = vadd.f32 %v6175, 0.0
    %6178 = vset.pattern.permute.xlu0 1
    %6179 = vperm.xlu0 %6178, %v5774
    %v6180 = vpop.permute.xlu0 %6179
    %6182 = vset.pattern.permute.xlu0 1
    %6183 = vperm.xlu0 %6182, %v5775
    %v6184 = vpop.permute.xlu0 %6183
    %6186 = vset.pattern.permute.xlu0 1
    %6187 = vperm.xlu0 %6186, %v5776
    %v6188 = vpop.permute.xlu0 %6187
    %6190 = vset.pattern.permute.xlu0 1
    %6191 = vperm.xlu0 %6190, %v5777
    %v6192 = vpop.permute.xlu0 %6191
    %v6194 = vmul.f32 %v6180, %v6120
    %v6195 = vmul.f32 %v6184, %v6121
    %v6196 = vmul.f32 %v6188, %v6120
    %v6197 = vmul.f32 %v6192, %v6121
    %v6198 = vsel %vm135, %v6194, 0.0
    %v6199 = vsel %vm135, %v6195, 0.0
    %v6200 = vadd.f32 %v6198, %v6199
    %v6201 = vrot.slane %v6200, 4
    %v6202 = vadd.f32 %v6200, %v6201
    %v6203 = vrot.slane %v6202, 2
    %v6204 = vadd.f32 %v6202, %v6203
    %v6205 = vrot.slane %v6204, 1
    %v6206 = vadd.f32 %v6204, %v6205
    %v6207 = vsel %vm135, %v6196, 0.0
    %v6208 = vsel %vm135, %v6197, 0.0
    %v6209 = vadd.f32 %v6207, %v6208
    %v6210 = vrot.slane %v6209, 4
    %v6211 = vadd.f32 %v6209, %v6210
    %v6212 = vrot.slane %v6211, 2
    %v6213 = vadd.f32 %v6211, %v6212
    %v6214 = vrot.slane %v6213, 1
    %v6215 = vadd.f32 %v6213, %v6214
    %v6216 = vadd.f32 %v6176, %v6206
    %v6217 = vadd.f32 %v6177, %v6215
    %6218 = vset.pattern.permute.xlu0 2
    %6219 = vperm.xlu0 %6218, %v5774
    %v6220 = vpop.permute.xlu0 %6219
    %6222 = vset.pattern.permute.xlu0 2
    %6223 = vperm.xlu0 %6222, %v5775
    %v6224 = vpop.permute.xlu0 %6223
    %6226 = vset.pattern.permute.xlu0 2
    %6227 = vperm.xlu0 %6226, %v5776
    %v6228 = vpop.permute.xlu0 %6227
    %6230 = vset.pattern.permute.xlu0 2
    %6231 = vperm.xlu0 %6230, %v5777
    %v6232 = vpop.permute.xlu0 %6231
    %v6234 = vmul.f32 %v6220, %v6122
    %v6235 = vmul.f32 %v6224, %v6123
    %v6236 = vmul.f32 %v6228, %v6122
    %v6237 = vmul.f32 %v6232, %v6123
    %v6238 = vsel %vm135, %v6234, 0.0
    %v6239 = vsel %vm135, %v6235, 0.0
    %v6240 = vadd.f32 %v6238, %v6239
    %v6241 = vrot.slane %v6240, 4
    %v6242 = vadd.f32 %v6240, %v6241
    %v6243 = vrot.slane %v6242, 2
    %v6244 = vadd.f32 %v6242, %v6243
    %v6245 = vrot.slane %v6244, 1
    %v6246 = vadd.f32 %v6244, %v6245
    %v6247 = vsel %vm135, %v6236, 0.0
    %v6248 = vsel %vm135, %v6237, 0.0
    %v6249 = vadd.f32 %v6247, %v6248
    %v6250 = vrot.slane %v6249, 4
    %v6251 = vadd.f32 %v6249, %v6250
    %v6252 = vrot.slane %v6251, 2
    %v6253 = vadd.f32 %v6251, %v6252
    %v6254 = vrot.slane %v6253, 1
    %v6255 = vadd.f32 %v6253, %v6254
    %v6256 = vadd.f32 %v6216, %v6246
    %v6257 = vadd.f32 %v6217, %v6255
    %6258 = vset.pattern.permute.xlu0 3
    %6259 = vperm.xlu0 %6258, %v5774
    %v6260 = vpop.permute.xlu0 %6259
    %6262 = vset.pattern.permute.xlu0 3
    %6263 = vperm.xlu0 %6262, %v5775
    %v6264 = vpop.permute.xlu0 %6263
    %6266 = vset.pattern.permute.xlu0 3
    %6267 = vperm.xlu0 %6266, %v5776
    %v6268 = vpop.permute.xlu0 %6267
    %6270 = vset.pattern.permute.xlu0 3
    %6271 = vperm.xlu0 %6270, %v5777
    %v6272 = vpop.permute.xlu0 %6271
    %v6274 = vmul.f32 %v6260, %v6124
    %v6275 = vmul.f32 %v6264, %v6125
    %v6276 = vmul.f32 %v6268, %v6124
    %v6277 = vmul.f32 %v6272, %v6125
    %v6278 = vsel %vm135, %v6274, 0.0
    %v6279 = vsel %vm135, %v6275, 0.0
    %v6280 = vadd.f32 %v6278, %v6279
    %v6281 = vrot.slane %v6280, 4
    %v6282 = vadd.f32 %v6280, %v6281
    %v6283 = vrot.slane %v6282, 2
    %v6284 = vadd.f32 %v6282, %v6283
    %v6285 = vrot.slane %v6284, 1
    %v6286 = vadd.f32 %v6284, %v6285
    %v6287 = vsel %vm135, %v6276, 0.0
    %v6288 = vsel %vm135, %v6277, 0.0
    %v6289 = vadd.f32 %v6287, %v6288
    %v6290 = vrot.slane %v6289, 4
    %v6291 = vadd.f32 %v6289, %v6290
    %v6292 = vrot.slane %v6291, 2
    %v6293 = vadd.f32 %v6291, %v6292
    %v6294 = vrot.slane %v6293, 1
    %v6295 = vadd.f32 %v6293, %v6294
    %v6296 = vadd.f32 %v6256, %v6286
    %v6297 = vadd.f32 %v6257, %v6295
    %6298 = vset.pattern.permute.xlu0 4
    %6299 = vperm.xlu0 %6298, %v5774
    %v6300 = vpop.permute.xlu0 %6299
    %6302 = vset.pattern.permute.xlu0 4
    %6303 = vperm.xlu0 %6302, %v5775
    %v6304 = vpop.permute.xlu0 %6303
    %6306 = vset.pattern.permute.xlu0 4
    %6307 = vperm.xlu0 %6306, %v5776
    %v6308 = vpop.permute.xlu0 %6307
    %6310 = vset.pattern.permute.xlu0 4
    %6311 = vperm.xlu0 %6310, %v5777
    %v6312 = vpop.permute.xlu0 %6311
    %v6314 = vmul.f32 %v6300, %v6126
    %v6315 = vmul.f32 %v6304, %v6127
    %v6316 = vmul.f32 %v6308, %v6126
    %v6317 = vmul.f32 %v6312, %v6127
    %v6318 = vsel %vm135, %v6314, 0.0
    %v6319 = vsel %vm135, %v6315, 0.0
    %v6320 = vadd.f32 %v6318, %v6319
    %v6321 = vrot.slane %v6320, 4
    %v6322 = vadd.f32 %v6320, %v6321
    %v6323 = vrot.slane %v6322, 2
    %v6324 = vadd.f32 %v6322, %v6323
    %v6325 = vrot.slane %v6324, 1
    %v6326 = vadd.f32 %v6324, %v6325
    %v6327 = vsel %vm135, %v6316, 0.0
    %v6328 = vsel %vm135, %v6317, 0.0
    %v6329 = vadd.f32 %v6327, %v6328
    %v6330 = vrot.slane %v6329, 4
    %v6331 = vadd.f32 %v6329, %v6330
    %v6332 = vrot.slane %v6331, 2
    %v6333 = vadd.f32 %v6331, %v6332
    %v6334 = vrot.slane %v6333, 1
    %v6335 = vadd.f32 %v6333, %v6334
    %v6336 = vadd.f32 %v6296, %v6326
    %v6337 = vadd.f32 %v6297, %v6335
    %6338 = vset.pattern.permute.xlu0 5
    %6339 = vperm.xlu0 %6338, %v5774
    %v6340 = vpop.permute.xlu0 %6339
    %6342 = vset.pattern.permute.xlu0 5
    %6343 = vperm.xlu0 %6342, %v5775
    %v6344 = vpop.permute.xlu0 %6343
    %6346 = vset.pattern.permute.xlu0 5
    %6347 = vperm.xlu0 %6346, %v5776
    %v6348 = vpop.permute.xlu0 %6347
    %6350 = vset.pattern.permute.xlu0 5
    %6351 = vperm.xlu0 %6350, %v5777
    %v6352 = vpop.permute.xlu0 %6351
    %v6354 = vmul.f32 %v6340, %v6128
    %v6355 = vmul.f32 %v6344, %v6129
    %v6356 = vmul.f32 %v6348, %v6128
    %v6357 = vmul.f32 %v6352, %v6129
    %v6358 = vsel %vm135, %v6354, 0.0
    %v6359 = vsel %vm135, %v6355, 0.0
    %v6360 = vadd.f32 %v6358, %v6359
    %v6361 = vrot.slane %v6360, 4
    %v6362 = vadd.f32 %v6360, %v6361
    %v6363 = vrot.slane %v6362, 2
    %v6364 = vadd.f32 %v6362, %v6363
    %v6365 = vrot.slane %v6364, 1
    %v6366 = vadd.f32 %v6364, %v6365
    %v6367 = vsel %vm135, %v6356, 0.0
    %v6368 = vsel %vm135, %v6357, 0.0
    %v6369 = vadd.f32 %v6367, %v6368
    %v6370 = vrot.slane %v6369, 4
    %v6371 = vadd.f32 %v6369, %v6370
    %v6372 = vrot.slane %v6371, 2
    %v6373 = vadd.f32 %v6371, %v6372
    %v6374 = vrot.slane %v6373, 1
    %v6375 = vadd.f32 %v6373, %v6374
    %v6376 = vadd.f32 %v6336, %v6366
    %v6377 = vadd.f32 %v6337, %v6375
    %6378 = vset.pattern.permute.xlu0 6
    %6379 = vperm.xlu0 %6378, %v5774
    %v6380 = vpop.permute.xlu0 %6379
    %6382 = vset.pattern.permute.xlu0 6
    %6383 = vperm.xlu0 %6382, %v5775
    %v6384 = vpop.permute.xlu0 %6383
    %6386 = vset.pattern.permute.xlu0 6
    %6387 = vperm.xlu0 %6386, %v5776
    %v6388 = vpop.permute.xlu0 %6387
    %6390 = vset.pattern.permute.xlu0 6
    %6391 = vperm.xlu0 %6390, %v5777
    %v6392 = vpop.permute.xlu0 %6391
    %v6394 = vmul.f32 %v6380, %v6130
    %v6395 = vmul.f32 %v6384, %v6131
    %v6396 = vmul.f32 %v6388, %v6130
    %v6397 = vmul.f32 %v6392, %v6131
    %v6398 = vsel %vm135, %v6394, 0.0
    %v6399 = vsel %vm135, %v6395, 0.0
    %v6400 = vadd.f32 %v6398, %v6399
    %v6401 = vrot.slane %v6400, 4
    %v6402 = vadd.f32 %v6400, %v6401
    %v6403 = vrot.slane %v6402, 2
    %v6404 = vadd.f32 %v6402, %v6403
    %v6405 = vrot.slane %v6404, 1
    %v6406 = vadd.f32 %v6404, %v6405
    %v6407 = vsel %vm135, %v6396, 0.0
    %v6408 = vsel %vm135, %v6397, 0.0
    %v6409 = vadd.f32 %v6407, %v6408
    %v6410 = vrot.slane %v6409, 4
    %v6411 = vadd.f32 %v6409, %v6410
    %v6412 = vrot.slane %v6411, 2
    %v6413 = vadd.f32 %v6411, %v6412
    %v6414 = vrot.slane %v6413, 1
    %v6415 = vadd.f32 %v6413, %v6414
    %v6416 = vadd.f32 %v6376, %v6406
    %v6417 = vadd.f32 %v6377, %v6415
    %6418 = vset.pattern.permute.xlu0 7
    %6419 = vperm.xlu0 %6418, %v5774
    %v6420 = vpop.permute.xlu0 %6419
    %6422 = vset.pattern.permute.xlu0 7
    %6423 = vperm.xlu0 %6422, %v5775
    %v6424 = vpop.permute.xlu0 %6423
    %6426 = vset.pattern.permute.xlu0 7
    %6427 = vperm.xlu0 %6426, %v5776
    %v6428 = vpop.permute.xlu0 %6427
    %6430 = vset.pattern.permute.xlu0 7
    %6431 = vperm.xlu0 %6430, %v5777
    %v6432 = vpop.permute.xlu0 %6431
    %v6434 = vmul.f32 %v6420, %v6132
    %v6435 = vmul.f32 %v6424, %v6133
    %v6436 = vmul.f32 %v6428, %v6132
    %v6437 = vmul.f32 %v6432, %v6133
    %v6438 = vsel %vm135, %v6434, 0.0
    %v6439 = vsel %vm135, %v6435, 0.0
    %v6440 = vadd.f32 %v6438, %v6439
    %v6441 = vrot.slane %v6440, 4
    %v6442 = vadd.f32 %v6440, %v6441
    %v6443 = vrot.slane %v6442, 2
    %v6444 = vadd.f32 %v6442, %v6443
    %v6445 = vrot.slane %v6444, 1
    %v6446 = vadd.f32 %v6444, %v6445
    %v6447 = vsel %vm135, %v6436, 0.0
    %v6448 = vsel %vm135, %v6437, 0.0
    %v6449 = vadd.f32 %v6447, %v6448
    %v6450 = vrot.slane %v6449, 4
    %v6451 = vadd.f32 %v6449, %v6450
    %v6452 = vrot.slane %v6451, 2
    %v6453 = vadd.f32 %v6451, %v6452
    %v6454 = vrot.slane %v6453, 1
    %v6455 = vadd.f32 %v6453, %v6454
    %v6456 = vadd.f32 %v6416, %v6446
    %v6457 = vadd.f32 %v6417, %v6455
    %v6458 = vadd.f32 %v6116, %v6456
    %v6459 = vadd.f32 %v6117, %v6457
    %v6460 = vld [vmem:[%s47] sm:$0x1]
    %v6462 = vlaneseq
    %v6463 = vshrl.u32 %v6462, 7
    %v6464 = vsub.s32 0, %v6463
    %v6465 = vrot.slane %v6460, %v6464
    %v6467 = vadd.f32 %v6458, %v6465
    %v6468 = vadd.f32 %v6459, %v6465
    %vm6469 = vcmp.ge.f32.partialorder %v6467, 0.0
    %vm6470 = vcmp.ge.f32.partialorder %v6468, 0.0
    %v6471 = vmul.f32 %v6467, 0.33
    %v6472 = vmul.f32 %v6468, 0.33
    %v6473 = vsel %vm6469, %v6467, %v6471
    %v6474 = vsel %vm6470, %v6468, %v6472
    %v6475 = vld [vmem:[%s49] sm:$0xff]
    %v6476 = vld [vmem:[%s49 + $0x8] sm:$0xff]
    %v6477 = vld [vmem:[%s51] sm:$0x1]
    %v6479 = vlaneseq
    %v6480 = vshrl.u32 %v6479, 7
    %v6481 = vsub.s32 0, %v6480
    %v6482 = vrot.slane %v6477, %v6481
    %v6486 = vrot.slane %v6474, 7
    %v6487 = vsel %vm931, %v6486, %v6473
    %v6488 = vsel %vm135, %v6487, 0
    %6490 = vmatprep.subr.mxu0 0.0
    %v6491 = vand.u32 %v6475, 4294901760
    %6492 = vmatpush1.msra.mxu0 %v6491
    %6493 = vmatprep.subr.mxu0 0.0
    %v6494 = vand.u32 %v6476, 4294901760
    %6495 = vmatpush1.msra.mxu0 %v6494
    %6496 = vmatprep.subr.mxu0 0.0
    %6497 = vmatpush1.msra.mxu0 0.0
    %6498 = vmatprep.subr.mxu0 0.0
    %6499 = vmatpush1.msra.mxu0 0.0
    %6500 = vmatprep.subr.mxu0 0.0
    %6501 = vmatpush1.msra.mxu0 0.0
    %6502 = vmatprep.subr.mxu0 0.0
    %6503 = vmatpush1.msra.mxu0 0.0
    %6504 = vmatprep.subr.mxu0 0.0
    %6505 = vmatpush1.msra.mxu0 0.0
    %6506 = vmatprep.subr.mxu0 0.0
    %6507 = vmatpush1.msra.mxu0 0.0
    %6508 = vmatprep.subr.mxu0 0.0
    %6509 = vmatpush1.msra.mxu0 0.0
    %6510 = vmatprep.subr.mxu0 0.0
    %6511 = vmatpush1.msra.mxu0 0.0
    %6512 = vmatprep.subr.mxu0 0.0
    %6513 = vmatpush1.msra.mxu0 0.0
    %6514 = vmatprep.subr.mxu0 0.0
    %6515 = vmatpush1.msra.mxu0 0.0
    %6516 = vmatprep.subr.mxu0 0.0
    %6517 = vmatpush1.msra.mxu0 0.0
    %6518 = vmatprep.subr.mxu0 0.0
    %6519 = vmatpush1.msra.mxu0 0.0
    %6520 = vmatprep.subr.mxu0 0.0
    %6521 = vmatpush1.msra.mxu0 0.0
    %6522 = vmatprep.subr.mxu0 0.0
    %6523 = vmatpush1.msra.mxu0 0.0
    %6524 = vmatprep.subr.mxu0 0.0
    %6525 = vmatpush1.msra.mxu0 0.0
    %6526 = vmatprep.subr.mxu0 0.0
    %6527 = vmatpush1.msra.mxu0 0.0
    %6528 = vmatprep.subr.mxu0 0.0
    %6529 = vmatpush1.msra.mxu0 0.0
    %6530 = vmatprep.subr.mxu0 0.0
    %6531 = vmatpush1.msra.mxu0 0.0
    %6532 = vmatprep.subr.mxu0 0.0
    %6533 = vmatpush1.msra.mxu0 0.0
    %6534 = vmatprep.subr.mxu0 0.0
    %6535 = vmatpush1.msra.mxu0 0.0
    %6536 = vmatprep.subr.mxu0 0.0
    %6537 = vmatpush1.msra.mxu0 0.0
    %6538 = vmatprep.subr.mxu0 0.0
    %6539 = vmatpush1.msra.mxu0 0.0
    %6540 = vmatprep.subr.mxu0 0.0
    %6541 = vmatpush1.msra.mxu0 0.0
    %6542 = vmatprep.subr.mxu0 0.0
    %6543 = vmatpush1.msra.mxu0 0.0
    %6544 = vmatprep.subr.mxu0 0.0
    %6545 = vmatpush1.msra.mxu0 0.0
    %6546 = vmatprep.subr.mxu0 0.0
    %6547 = vmatpush1.msra.mxu0 0.0
    %6548 = vmatprep.subr.mxu0 0.0
    %6549 = vmatpush1.msra.mxu0 0.0
    %6550 = vmatprep.subr.mxu0 0.0
    %6551 = vmatpush1.msra.mxu0 0.0
    %6552 = vmatprep.subr.mxu0 0.0
    %6553 = vmatpush1.msra.mxu0 0.0
    %6554 = vmatprep.subr.mxu0 0.0
    %6555 = vmatpush1.msra.mxu0 0.0
    %6556 = vmatprep.mubr.f32.mxu0 0.0
    %v6557 = vand.u32 %v6488, 4294901760
    %v6558 = vsub.f32 %v6488, %v6557
    %v6559 = vand.u32 %v6558, 4294901760
    %v6560 = vsub.f32 %v6558, %v6559
    %v6561 = vand.u32 %v6560, 4294901760
    %6562 = vmatmul.mubr.f32.gmra.mrb[0].mxu0 %v6561
    %v6563 = vpop.f32.mrb[0].mxu0
    %v6564 = vadd.f32 %v6482, %v6563
    %v6565 = vpop.f32.mrb[0].mxu0
    %6566 = vdwg.mxu0
    %6567 = vmatprep.subr.mxu0 0.0
    %v6568 = vand.u32 %v6475, 4294901760
    %v6569 = vsub.f32 %v6475, %v6568
    %v6570 = vand.u32 %v6569, 4294901760
    %v6571 = vsub.f32 %v6569, %v6570
    %v6572 = vand.u32 %v6571, 4294901760
    %6573 = vmatpush1.msra.mxu0 %v6572
    %6574 = vmatprep.subr.mxu0 0.0
    %v6575 = vand.u32 %v6476, 4294901760
    %v6576 = vsub.f32 %v6476, %v6575
    %v6577 = vand.u32 %v6576, 4294901760
    %v6578 = vsub.f32 %v6576, %v6577
    %v6579 = vand.u32 %v6578, 4294901760
    %6580 = vmatpush1.msra.mxu0 %v6579
    %6581 = vmatprep.subr.mxu0 0.0
    %6582 = vmatpush1.msra.mxu0 0.0
    %6583 = vmatprep.subr.mxu0 0.0
    %6584 = vmatpush1.msra.mxu0 0.0
    %6585 = vmatprep.subr.mxu0 0.0
    %6586 = vmatpush1.msra.mxu0 0.0
    %6587 = vmatprep.subr.mxu0 0.0
    %6588 = vmatpush1.msra.mxu0 0.0
    %6589 = vmatprep.subr.mxu0 0.0
    %6590 = vmatpush1.msra.mxu0 0.0
    %6591 = vmatprep.subr.mxu0 0.0
    %6592 = vmatpush1.msra.mxu0 0.0
    %6593 = vmatprep.subr.mxu0 0.0
    %6594 = vmatpush1.msra.mxu0 0.0
    %6595 = vmatprep.subr.mxu0 0.0
    %6596 = vmatpush1.msra.mxu0 0.0
    %6597 = vmatprep.subr.mxu0 0.0
    %6598 = vmatpush1.msra.mxu0 0.0
    %6599 = vmatprep.subr.mxu0 0.0
    %6600 = vmatpush1.msra.mxu0 0.0
    %6601 = vmatprep.subr.mxu0 0.0
    %6602 = vmatpush1.msra.mxu0 0.0
    %6603 = vmatprep.subr.mxu0 0.0
    %6604 = vmatpush1.msra.mxu0 0.0
    %6605 = vmatprep.subr.mxu0 0.0
    %6606 = vmatpush1.msra.mxu0 0.0
    %6607 = vmatprep.subr.mxu0 0.0
    %6608 = vmatpush1.msra.mxu0 0.0
    %6609 = vmatprep.subr.mxu0 0.0
    %6610 = vmatpush1.msra.mxu0 0.0
    %6611 = vmatprep.subr.mxu0 0.0
    %6612 = vmatpush1.msra.mxu0 0.0
    %6613 = vmatprep.subr.mxu0 0.0
    %6614 = vmatpush1.msra.mxu0 0.0
    %6615 = vmatprep.subr.mxu0 0.0
    %6616 = vmatpush1.msra.mxu0 0.0
    %6617 = vmatprep.subr.mxu0 0.0
    %6618 = vmatpush1.msra.mxu0 0.0
    %6619 = vmatprep.subr.mxu0 0.0
    %6620 = vmatpush1.msra.mxu0 0.0
    %6621 = vmatprep.subr.mxu0 0.0
    %6622 = vmatpush1.msra.mxu0 0.0
    %6623 = vmatprep.subr.mxu0 0.0
    %6624 = vmatpush1.msra.mxu0 0.0
    %6625 = vmatprep.subr.mxu0 0.0
    %6626 = vmatpush1.msra.mxu0 0.0
    %6627 = vmatprep.subr.mxu0 0.0
    %6628 = vmatpush1.msra.mxu0 0.0
    %6629 = vmatprep.subr.mxu0 0.0
    %6630 = vmatpush1.msra.mxu0 0.0
    %6631 = vmatprep.subr.mxu0 0.0
    %6632 = vmatpush1.msra.mxu0 0.0
    %6633 = vmatprep.subr.mxu0 0.0
    %6634 = vmatpush1.msra.mxu0 0.0
    %6635 = vmatprep.subr.mxu0 0.0
    %6636 = vmatpush1.msra.mxu0 0.0
    %6637 = vmatprep.subr.mxu0 0.0
    %6638 = vmatpush1.msra.mxu0 0.0
    %6639 = vmatprep.subr.mxu0 0.0
    %6640 = vmatpush1.msra.mxu0 0.0
    %6641 = vmatprep.mubr.f32.mxu0 0.0
    %v6642 = vand.u32 %v6488, 4294901760
    %6643 = vmatmul.mubr.f32.gmra.mrb[0].mxu0 %v6642
    %v6644 = vpop.f32.mrb[0].mxu0
    %v6645 = vadd.f32 %v6564, %v6644
    %v6646 = vpop.f32.mrb[0].mxu0
    %6647 = vdwg.mxu0
    %6648 = vmatprep.subr.mxu0 0.0
    %v6649 = vand.u32 %v6475, 4294901760
    %v6650 = vsub.f32 %v6475, %v6649
    %6651 = vmatpush1.msra.mxu0 %v6650
    %6652 = vmatprep.subr.mxu0 0.0
    %v6653 = vand.u32 %v6476, 4294901760
    %v6654 = vsub.f32 %v6476, %v6653
    %6655 = vmatpush1.msra.mxu0 %v6654
    %6656 = vmatprep.subr.mxu0 0.0
    %6657 = vmatpush1.msra.mxu0 0.0
    %6658 = vmatprep.subr.mxu0 0.0
    %6659 = vmatpush1.msra.mxu0 0.0
    %6660 = vmatprep.subr.mxu0 0.0
    %6661 = vmatpush1.msra.mxu0 0.0
    %6662 = vmatprep.subr.mxu0 0.0
    %6663 = vmatpush1.msra.mxu0 0.0
    %6664 = vmatprep.subr.mxu0 0.0
    %6665 = vmatpush1.msra.mxu0 0.0
    %6666 = vmatprep.subr.mxu0 0.0
    %6667 = vmatpush1.msra.mxu0 0.0
    %6668 = vmatprep.subr.mxu0 0.0
    %6669 = vmatpush1.msra.mxu0 0.0
    %6670 = vmatprep.subr.mxu0 0.0
    %6671 = vmatpush1.msra.mxu0 0.0
    %6672 = vmatprep.subr.mxu0 0.0
    %6673 = vmatpush1.msra.mxu0 0.0
    %6674 = vmatprep.subr.mxu0 0.0
    %6675 = vmatpush1.msra.mxu0 0.0
    %6676 = vmatprep.subr.mxu0 0.0
    %6677 = vmatpush1.msra.mxu0 0.0
    %6678 = vmatprep.subr.mxu0 0.0
    %6679 = vmatpush1.msra.mxu0 0.0
    %6680 = vmatprep.subr.mxu0 0.0
    %6681 = vmatpush1.msra.mxu0 0.0
    %6682 = vmatprep.subr.mxu0 0.0
    %6683 = vmatpush1.msra.mxu0 0.0
    %6684 = vmatprep.subr.mxu0 0.0
    %6685 = vmatpush1.msra.mxu0 0.0
    %6686 = vmatprep.subr.mxu0 0.0
    %6687 = vmatpush1.msra.mxu0 0.0
    %6688 = vmatprep.subr.mxu0 0.0
    %6689 = vmatpush1.msra.mxu0 0.0
    %6690 = vmatprep.subr.mxu0 0.0
    %6691 = vmatpush1.msra.mxu0 0.0
    %6692 = vmatprep.subr.mxu0 0.0
    %6693 = vmatpush1.msra.mxu0 0.0
    %6694 = vmatprep.subr.mxu0 0.0
    %6695 = vmatpush1.msra.mxu0 0.0
    %6696 = vmatprep.subr.mxu0 0.0
    %6697 = vmatpush1.msra.mxu0 0.0
    %6698 = vmatprep.subr.mxu0 0.0
    %6699 = vmatpush1.msra.mxu0 0.0
    %6700 = vmatprep.subr.mxu0 0.0
    %6701 = vmatpush1.msra.mxu0 0.0
    %6702 = vmatprep.subr.mxu0 0.0
    %6703 = vmatpush1.msra.mxu0 0.0
    %6704 = vmatprep.subr.mxu0 0.0
    %6705 = vmatpush1.msra.mxu0 0.0
    %6706 = vmatprep.subr.mxu0 0.0
    %6707 = vmatpush1.msra.mxu0 0.0
    %6708 = vmatprep.subr.mxu0 0.0
    %6709 = vmatpush1.msra.mxu0 0.0
    %6710 = vmatprep.subr.mxu0 0.0
    %6711 = vmatpush1.msra.mxu0 0.0
    %6712 = vmatprep.subr.mxu0 0.0
    %6713 = vmatpush1.msra.mxu0 0.0
    %6714 = vmatprep.subr.mxu0 0.0
    %6715 = vmatpush1.msra.mxu0 0.0
    %6716 = vmatprep.mubr.f32.mxu0 0.0
    %v6717 = vand.u32 %v6488, 4294901760
    %v6718 = vsub.f32 %v6488, %v6717
    %6719 = vmatmul.mubr.f32.gmra.mrb[0].mxu0 %v6718
    %v6720 = vpop.f32.mrb[0].mxu0
    %v6721 = vadd.f32 %v6645, %v6720
    %v6722 = vpop.f32.mrb[0].mxu0
    %6723 = vdwg.mxu0
    %6724 = vmatprep.subr.mxu0 0.0
    %v6725 = vand.u32 %v6475, 4294901760
    %6726 = vmatpush1.msra.mxu0 %v6725
    %6727 = vmatprep.subr.mxu0 0.0
    %v6728 = vand.u32 %v6476, 4294901760
    %6729 = vmatpush1.msra.mxu0 %v6728
    %6730 = vmatprep.subr.mxu0 0.0
    %6731 = vmatpush1.msra.mxu0 0.0
    %6732 = vmatprep.subr.mxu0 0.0
    %6733 = vmatpush1.msra.mxu0 0.0
    %6734 = vmatprep.subr.mxu0 0.0
    %6735 = vmatpush1.msra.mxu0 0.0
    %6736 = vmatprep.subr.mxu0 0.0
    %6737 = vmatpush1.msra.mxu0 0.0
    %6738 = vmatprep.subr.mxu0 0.0
    %6739 = vmatpush1.msra.mxu0 0.0
    %6740 = vmatprep.subr.mxu0 0.0
    %6741 = vmatpush1.msra.mxu0 0.0
    %6742 = vmatprep.subr.mxu0 0.0
    %6743 = vmatpush1.msra.mxu0 0.0
    %6744 = vmatprep.subr.mxu0 0.0
    %6745 = vmatpush1.msra.mxu0 0.0
    %6746 = vmatprep.subr.mxu0 0.0
    %6747 = vmatpush1.msra.mxu0 0.0
    %6748 = vmatprep.subr.mxu0 0.0
    %6749 = vmatpush1.msra.mxu0 0.0
    %6750 = vmatprep.subr.mxu0 0.0
    %6751 = vmatpush1.msra.mxu0 0.0
    %6752 = vmatprep.subr.mxu0 0.0
    %6753 = vmatpush1.msra.mxu0 0.0
    %6754 = vmatprep.subr.mxu0 0.0
    %6755 = vmatpush1.msra.mxu0 0.0
    %6756 = vmatprep.subr.mxu0 0.0
    %6757 = vmatpush1.msra.mxu0 0.0
    %6758 = vmatprep.subr.mxu0 0.0
    %6759 = vmatpush1.msra.mxu0 0.0
    %6760 = vmatprep.subr.mxu0 0.0
    %6761 = vmatpush1.msra.mxu0 0.0
    %6762 = vmatprep.subr.mxu0 0.0
    %6763 = vmatpush1.msra.mxu0 0.0
    %6764 = vmatprep.subr.mxu0 0.0
    %6765 = vmatpush1.msra.mxu0 0.0
    %6766 = vmatprep.subr.mxu0 0.0
    %6767 = vmatpush1.msra.mxu0 0.0
    %6768 = vmatprep.subr.mxu0 0.0
    %6769 = vmatpush1.msra.mxu0 0.0
    %6770 = vmatprep.subr.mxu0 0.0
    %6771 = vmatpush1.msra.mxu0 0.0
    %6772 = vmatprep.subr.mxu0 0.0
    %6773 = vmatpush1.msra.mxu0 0.0
    %6774 = vmatprep.subr.mxu0 0.0
    %6775 = vmatpush1.msra.mxu0 0.0
    %6776 = vmatprep.subr.mxu0 0.0
    %6777 = vmatpush1.msra.mxu0 0.0
    %6778 = vmatprep.subr.mxu0 0.0
    %6779 = vmatpush1.msra.mxu0 0.0
    %6780 = vmatprep.subr.mxu0 0.0
    %6781 = vmatpush1.msra.mxu0 0.0
    %6782 = vmatprep.subr.mxu0 0.0
    %6783 = vmatpush1.msra.mxu0 0.0
    %6784 = vmatprep.subr.mxu0 0.0
    %6785 = vmatpush1.msra.mxu0 0.0
    %6786 = vmatprep.subr.mxu0 0.0
    %6787 = vmatpush1.msra.mxu0 0.0
    %6788 = vmatprep.subr.mxu0 0.0
    %6789 = vmatpush1.msra.mxu0 0.0
    %6790 = vmatprep.mubr.f32.mxu0 0.0
    %v6791 = vand.u32 %v6488, 4294901760
    %v6792 = vsub.f32 %v6488, %v6791
    %v6793 = vand.u32 %v6792, 4294901760
    %6794 = vmatmul.mubr.f32.gmra.mrb[0].mxu0 %v6793
    %v6795 = vpop.f32.mrb[0].mxu0
    %v6796 = vadd.f32 %v6721, %v6795
    %v6797 = vpop.f32.mrb[0].mxu0
    %6798 = vdwg.mxu0
    %6799 = vmatprep.subr.mxu0 0.0
    %v6800 = vand.u32 %v6475, 4294901760
    %v6801 = vsub.f32 %v6475, %v6800
    %v6802 = vand.u32 %v6801, 4294901760
    %6803 = vmatpush1.msra.mxu0 %v6802
    %6804 = vmatprep.subr.mxu0 0.0
    %v6805 = vand.u32 %v6476, 4294901760
    %v6806 = vsub.f32 %v6476, %v6805
    %v6807 = vand.u32 %v6806, 4294901760
    %6808 = vmatpush1.msra.mxu0 %v6807
    %6809 = vmatprep.subr.mxu0 0.0
    %6810 = vmatpush1.msra.mxu0 0.0
    %6811 = vmatprep.subr.mxu0 0.0
    %6812 = vmatpush1.msra.mxu0 0.0
    %6813 = vmatprep.subr.mxu0 0.0
    %6814 = vmatpush1.msra.mxu0 0.0
    %6815 = vmatprep.subr.mxu0 0.0
    %6816 = vmatpush1.msra.mxu0 0.0
    %6817 = vmatprep.subr.mxu0 0.0
    %6818 = vmatpush1.msra.mxu0 0.0
    %6819 = vmatprep.subr.mxu0 0.0
    %6820 = vmatpush1.msra.mxu0 0.0
    %6821 = vmatprep.subr.mxu0 0.0
    %6822 = vmatpush1.msra.mxu0 0.0
    %6823 = vmatprep.subr.mxu0 0.0
    %6824 = vmatpush1.msra.mxu0 0.0
    %6825 = vmatprep.subr.mxu0 0.0
    %6826 = vmatpush1.msra.mxu0 0.0
    %6827 = vmatprep.subr.mxu0 0.0
    %6828 = vmatpush1.msra.mxu0 0.0
    %6829 = vmatprep.subr.mxu0 0.0
    %6830 = vmatpush1.msra.mxu0 0.0
    %6831 = vmatprep.subr.mxu0 0.0
    %6832 = vmatpush1.msra.mxu0 0.0
    %6833 = vmatprep.subr.mxu0 0.0
    %6834 = vmatpush1.msra.mxu0 0.0
    %6835 = vmatprep.subr.mxu0 0.0
    %6836 = vmatpush1.msra.mxu0 0.0
    %6837 = vmatprep.subr.mxu0 0.0
    %6838 = vmatpush1.msra.mxu0 0.0
    %6839 = vmatprep.subr.mxu0 0.0
    %6840 = vmatpush1.msra.mxu0 0.0
    %6841 = vmatprep.subr.mxu0 0.0
    %6842 = vmatpush1.msra.mxu0 0.0
    %6843 = vmatprep.subr.mxu0 0.0
    %6844 = vmatpush1.msra.mxu0 0.0
    %6845 = vmatprep.subr.mxu0 0.0
    %6846 = vmatpush1.msra.mxu0 0.0
    %6847 = vmatprep.subr.mxu0 0.0
    %6848 = vmatpush1.msra.mxu0 0.0
    %6849 = vmatprep.subr.mxu0 0.0
    %6850 = vmatpush1.msra.mxu0 0.0
    %6851 = vmatprep.subr.mxu0 0.0
    %6852 = vmatpush1.msra.mxu0 0.0
    %6853 = vmatprep.subr.mxu0 0.0
    %6854 = vmatpush1.msra.mxu0 0.0
    %6855 = vmatprep.subr.mxu0 0.0
    %6856 = vmatpush1.msra.mxu0 0.0
    %6857 = vmatprep.subr.mxu0 0.0
    %6858 = vmatpush1.msra.mxu0 0.0
    %6859 = vmatprep.subr.mxu0 0.0
    %6860 = vmatpush1.msra.mxu0 0.0
    %6861 = vmatprep.subr.mxu0 0.0
    %6862 = vmatpush1.msra.mxu0 0.0
    %6863 = vmatprep.subr.mxu0 0.0
    %6864 = vmatpush1.msra.mxu0 0.0
    %6865 = vmatprep.subr.mxu0 0.0
    %6866 = vmatpush1.msra.mxu0 0.0
    %6867 = vmatprep.subr.mxu0 0.0
    %6868 = vmatpush1.msra.mxu0 0.0
    %6869 = vmatprep.mubr.f32.mxu0 0.0
    %v6870 = vand.u32 %v6488, 4294901760
    %6871 = vmatmul.mubr.f32.gmra.mrb[0].mxu0 %v6870
    %v6872 = vpop.f32.mrb[0].mxu0
    %v6873 = vadd.f32 %v6796, %v6872
    %v6874 = vpop.f32.mrb[0].mxu0
    %6875 = vdwg.mxu0
    %6876 = vmatprep.subr.mxu0 0.0
    %v6877 = vand.u32 %v6475, 4294901760
    %6878 = vmatpush1.msra.mxu0 %v6877
    %6879 = vmatprep.subr.mxu0 0.0
    %v6880 = vand.u32 %v6476, 4294901760
    %6881 = vmatpush1.msra.mxu0 %v6880
    %6882 = vmatprep.subr.mxu0 0.0
    %6883 = vmatpush1.msra.mxu0 0.0
    %6884 = vmatprep.subr.mxu0 0.0
    %6885 = vmatpush1.msra.mxu0 0.0
    %6886 = vmatprep.subr.mxu0 0.0
    %6887 = vmatpush1.msra.mxu0 0.0
    %6888 = vmatprep.subr.mxu0 0.0
    %6889 = vmatpush1.msra.mxu0 0.0
    %6890 = vmatprep.subr.mxu0 0.0
    %6891 = vmatpush1.msra.mxu0 0.0
    %6892 = vmatprep.subr.mxu0 0.0
    %6893 = vmatpush1.msra.mxu0 0.0
    %6894 = vmatprep.subr.mxu0 0.0
    %6895 = vmatpush1.msra.mxu0 0.0
    %6896 = vmatprep.subr.mxu0 0.0
    %6897 = vmatpush1.msra.mxu0 0.0
    %6898 = vmatprep.subr.mxu0 0.0
    %6899 = vmatpush1.msra.mxu0 0.0
    %6900 = vmatprep.subr.mxu0 0.0
    %6901 = vmatpush1.msra.mxu0 0.0
    %6902 = vmatprep.subr.mxu0 0.0
    %6903 = vmatpush1.msra.mxu0 0.0
    %6904 = vmatprep.subr.mxu0 0.0
    %6905 = vmatpush1.msra.mxu0 0.0
    %6906 = vmatprep.subr.mxu0 0.0
    %6907 = vmatpush1.msra.mxu0 0.0
    %6908 = vmatprep.subr.mxu0 0.0
    %6909 = vmatpush1.msra.mxu0 0.0
    %6910 = vmatprep.subr.mxu0 0.0
    %6911 = vmatpush1.msra.mxu0 0.0
    %6912 = vmatprep.subr.mxu0 0.0
    %6913 = vmatpush1.msra.mxu0 0.0
    %6914 = vmatprep.subr.mxu0 0.0
    %6915 = vmatpush1.msra.mxu0 0.0
    %6916 = vmatprep.subr.mxu0 0.0
    %6917 = vmatpush1.msra.mxu0 0.0
    %6918 = vmatprep.subr.mxu0 0.0
    %6919 = vmatpush1.msra.mxu0 0.0
    %6920 = vmatprep.subr.mxu0 0.0
    %6921 = vmatpush1.msra.mxu0 0.0
    %6922 = vmatprep.subr.mxu0 0.0
    %6923 = vmatpush1.msra.mxu0 0.0
    %6924 = vmatprep.subr.mxu0 0.0
    %6925 = vmatpush1.msra.mxu0 0.0
    %6926 = vmatprep.subr.mxu0 0.0
    %6927 = vmatpush1.msra.mxu0 0.0
    %6928 = vmatprep.subr.mxu0 0.0
    %6929 = vmatpush1.msra.mxu0 0.0
    %6930 = vmatprep.subr.mxu0 0.0
    %6931 = vmatpush1.msra.mxu0 0.0
    %6932 = vmatprep.subr.mxu0 0.0
    %6933 = vmatpush1.msra.mxu0 0.0
    %6934 = vmatprep.subr.mxu0 0.0
    %6935 = vmatpush1.msra.mxu0 0.0
    %6936 = vmatprep.subr.mxu0 0.0
    %6937 = vmatpush1.msra.mxu0 0.0
    %6938 = vmatprep.subr.mxu0 0.0
    %6939 = vmatpush1.msra.mxu0 0.0
    %6940 = vmatprep.subr.mxu0 0.0
    %6941 = vmatpush1.msra.mxu0 0.0
    %6942 = vmatprep.mubr.f32.mxu0 0.0
    %v6943 = vand.u32 %v6488, 4294901760
    %6944 = vmatmul.mubr.f32.gmra.mrb[0].mxu0 %v6943
    %v6945 = vpop.f32.mrb[0].mxu0
    %v6946 = vadd.f32 %v6873, %v6945
    %v6947 = vpop.f32.mrb[0].mxu0
    %6948 = vdwg.mxu0
    %v6949 = vmax.f32 %v6946, 0.0
    %v6950 = vld [vmem:[%s53] sm:$0xff]
    %v6951 = vld [vmem:[%s53 + $0x8] sm:$0xff]
    %v6952 = vld [vmem:[%s53 + $0x10] sm:$0xff]
    %v6953 = vld [vmem:[%s53 + $0x18] sm:$0xff]
    %v6954 = vld [vmem:[%s55] sm:$0x1]
    %v6956 = vlaneseq
    %v6957 = vshrl.u32 %v6956, 7
    %v6958 = vsub.s32 0, %v6957
    %v6959 = vrot.slane %v6954, %v6958
    %vm6961 = vcmask 261120
    %v6963 = vsel %vm6961, %v6949, 0
    %6965 = vmatprep.subr.mxu0 0.0
    %v6966 = vand.u32 %v6950, 4294901760
    %6967 = vmatpush1.msra.mxu0 %v6966
    %6968 = vmatprep.subr.mxu0 0.0
    %v6969 = vand.u32 %v6951, 4294901760
    %6970 = vmatpush1.msra.mxu0 %v6969
    %6971 = vmatprep.subr.mxu0 0.0
    %v6972 = vand.u32 %v6952, 4294901760
    %6973 = vmatpush1.msra.mxu0 %v6972
    %6974 = vmatprep.subr.mxu0 0.0
    %v6975 = vand.u32 %v6953, 4294901760
    %6976 = vmatpush1.msra.mxu0 %v6975
    %6977 = vmatprep.subr.mxu0 0.0
    %6978 = vmatpush1.msra.mxu0 0.0
    %6979 = vmatprep.subr.mxu0 0.0
    %6980 = vmatpush1.msra.mxu0 0.0
    %6981 = vmatprep.subr.mxu0 0.0
    %6982 = vmatpush1.msra.mxu0 0.0
    %6983 = vmatprep.subr.mxu0 0.0
    %6984 = vmatpush1.msra.mxu0 0.0
    %6985 = vmatprep.subr.mxu0 0.0
    %6986 = vmatpush1.msra.mxu0 0.0
    %6987 = vmatprep.subr.mxu0 0.0
    %6988 = vmatpush1.msra.mxu0 0.0
    %6989 = vmatprep.subr.mxu0 0.0
    %6990 = vmatpush1.msra.mxu0 0.0
    %6991 = vmatprep.subr.mxu0 0.0
    %6992 = vmatpush1.msra.mxu0 0.0
    %6993 = vmatprep.subr.mxu0 0.0
    %6994 = vmatpush1.msra.mxu0 0.0
    %6995 = vmatprep.subr.mxu0 0.0
    %6996 = vmatpush1.msra.mxu0 0.0
    %6997 = vmatprep.subr.mxu0 0.0
    %6998 = vmatpush1.msra.mxu0 0.0
    %6999 = vmatprep.subr.mxu0 0.0
    %7000 = vmatpush1.msra.mxu0 0.0
    %7001 = vmatprep.subr.mxu0 0.0
    %7002 = vmatpush1.msra.mxu0 0.0
    %7003 = vmatprep.subr.mxu0 0.0
    %7004 = vmatpush1.msra.mxu0 0.0
    %7005 = vmatprep.subr.mxu0 0.0
    %7006 = vmatpush1.msra.mxu0 0.0
    %7007 = vmatprep.subr.mxu0 0.0
    %7008 = vmatpush1.msra.mxu0 0.0
    %7009 = vmatprep.subr.mxu0 0.0
    %7010 = vmatpush1.msra.mxu0 0.0
    %7011 = vmatprep.subr.mxu0 0.0
    %7012 = vmatpush1.msra.mxu0 0.0
    %7013 = vmatprep.subr.mxu0 0.0
    %7014 = vmatpush1.msra.mxu0 0.0
    %7015 = vmatprep.subr.mxu0 0.0
    %7016 = vmatpush1.msra.mxu0 0.0
    %7017 = vmatprep.subr.mxu0 0.0
    %7018 = vmatpush1.msra.mxu0 0.0
    %7019 = vmatprep.subr.mxu0 0.0
    %7020 = vmatpush1.msra.mxu0 0.0
    %7021 = vmatprep.subr.mxu0 0.0
    %7022 = vmatpush1.msra.mxu0 0.0
    %7023 = vmatprep.subr.mxu0 0.0
    %7024 = vmatpush1.msra.mxu0 0.0
    %7025 = vmatprep.subr.mxu0 0.0
    %7026 = vmatpush1.msra.mxu0 0.0
    %7027 = vmatprep.subr.mxu0 0.0
    %7028 = vmatpush1.msra.mxu0 0.0
    %7029 = vmatprep.subr.mxu0 0.0
    %7030 = vmatpush1.msra.mxu0 0.0
    %7031 = vmatprep.subr.mxu0 0.0
    %7032 = vmatpush1.msra.mxu0 0.0
    %7033 = vmatprep.mubr.f32.mxu0 0.0
    %v7034 = vand.u32 %v6963, 4294901760
    %v7035 = vsub.f32 %v6963, %v7034
    %v7036 = vand.u32 %v7035, 4294901760
    %v7037 = vsub.f32 %v7035, %v7036
    %v7038 = vand.u32 %v7037, 4294901760
    %7039 = vmatmul.mubr.f32.gmra.mrb[0].mxu0 %v7038
    %v7040 = vpop.f32.mrb[0].mxu0
    %v7041 = vadd.f32 %v6959, %v7040
    %v7042 = vpop.f32.mrb[0].mxu0
    %7043 = vdwg.mxu0
    %7044 = vmatprep.subr.mxu0 0.0
    %v7045 = vand.u32 %v6950, 4294901760
    %v7046 = vsub.f32 %v6950, %v7045
    %v7047 = vand.u32 %v7046, 4294901760
    %v7048 = vsub.f32 %v7046, %v7047
    %v7049 = vand.u32 %v7048, 4294901760
    %7050 = vmatpush1.msra.mxu0 %v7049
    %7051 = vmatprep.subr.mxu0 0.0
    %v7052 = vand.u32 %v6951, 4294901760
    %v7053 = vsub.f32 %v6951, %v7052
    %v7054 = vand.u32 %v7053, 4294901760
    %v7055 = vsub.f32 %v7053, %v7054
    %v7056 = vand.u32 %v7055, 4294901760
    %7057 = vmatpush1.msra.mxu0 %v7056
    %7058 = vmatprep.subr.mxu0 0.0
    %v7059 = vand.u32 %v6952, 4294901760
    %v7060 = vsub.f32 %v6952, %v7059
    %v7061 = vand.u32 %v7060, 4294901760
    %v7062 = vsub.f32 %v7060, %v7061
    %v7063 = vand.u32 %v7062, 4294901760
    %7064 = vmatpush1.msra.mxu0 %v7063
    %7065 = vmatprep.subr.mxu0 0.0
    %v7066 = vand.u32 %v6953, 4294901760
    %v7067 = vsub.f32 %v6953, %v7066
    %v7068 = vand.u32 %v7067, 4294901760
    %v7069 = vsub.f32 %v7067, %v7068
    %v7070 = vand.u32 %v7069, 4294901760
    %7071 = vmatpush1.msra.mxu0 %v7070
    %7072 = vmatprep.subr.mxu0 0.0
    %7073 = vmatpush1.msra.mxu0 0.0
    %7074 = vmatprep.subr.mxu0 0.0
    %7075 = vmatpush1.msra.mxu0 0.0
    %7076 = vmatprep.subr.mxu0 0.0
    %7077 = vmatpush1.msra.mxu0 0.0
    %7078 = vmatprep.subr.mxu0 0.0
    %7079 = vmatpush1.msra.mxu0 0.0
    %7080 = vmatprep.subr.mxu0 0.0
    %7081 = vmatpush1.msra.mxu0 0.0
    %7082 = vmatprep.subr.mxu0 0.0
    %7083 = vmatpush1.msra.mxu0 0.0
    %7084 = vmatprep.subr.mxu0 0.0
    %7085 = vmatpush1.msra.mxu0 0.0
    %7086 = vmatprep.subr.mxu0 0.0
    %7087 = vmatpush1.msra.mxu0 0.0
    %7088 = vmatprep.subr.mxu0 0.0
    %7089 = vmatpush1.msra.mxu0 0.0
    %7090 = vmatprep.subr.mxu0 0.0
    %7091 = vmatpush1.msra.mxu0 0.0
    %7092 = vmatprep.subr.mxu0 0.0
    %7093 = vmatpush1.msra.mxu0 0.0
    %7094 = vmatprep.subr.mxu0 0.0
    %7095 = vmatpush1.msra.mxu0 0.0
    %7096 = vmatprep.subr.mxu0 0.0
    %7097 = vmatpush1.msra.mxu0 0.0
    %7098 = vmatprep.subr.mxu0 0.0
    %7099 = vmatpush1.msra.mxu0 0.0
    %7100 = vmatprep.subr.mxu0 0.0
    %7101 = vmatpush1.msra.mxu0 0.0
    %7102 = vmatprep.subr.mxu0 0.0
    %7103 = vmatpush1.msra.mxu0 0.0
    %7104 = vmatprep.subr.mxu0 0.0
    %7105 = vmatpush1.msra.mxu0 0.0
    %7106 = vmatprep.subr.mxu0 0.0
    %7107 = vmatpush1.msra.mxu0 0.0
    %7108 = vmatprep.subr.mxu0 0.0
    %7109 = vmatpush1.msra.mxu0 0.0
    %7110 = vmatprep.subr.mxu0 0.0
    %7111 = vmatpush1.msra.mxu0 0.0
    %7112 = vmatprep.subr.mxu0 0.0
    %7113 = vmatpush1.msra.mxu0 0.0
    %7114 = vmatprep.subr.mxu0 0.0
    %7115 = vmatpush1.msra.mxu0 0.0
    %7116 = vmatprep.subr.mxu0 0.0
    %7117 = vmatpush1.msra.mxu0 0.0
    %7118 = vmatprep.subr.mxu0 0.0
    %7119 = vmatpush1.msra.mxu0 0.0
    %7120 = vmatprep.subr.mxu0 0.0
    %7121 = vmatpush1.msra.mxu0 0.0
    %7122 = vmatprep.subr.mxu0 0.0
    %7123 = vmatpush1.msra.mxu0 0.0
    %7124 = vmatprep.subr.mxu0 0.0
    %7125 = vmatpush1.msra.mxu0 0.0
    %7126 = vmatprep.subr.mxu0 0.0
    %7127 = vmatpush1.msra.mxu0 0.0
    %7128 = vmatprep.mubr.f32.mxu0 0.0
    %v7129 = vand.u32 %v6963, 4294901760
    %7130 = vmatmul.mubr.f32.gmra.mrb[0].mxu0 %v7129
    %v7131 = vpop.f32.mrb[0].mxu0
    %v7132 = vadd.f32 %v7041, %v7131
    %v7133 = vpop.f32.mrb[0].mxu0
    %7134 = vdwg.mxu0
    %7135 = vmatprep.subr.mxu0 0.0
    %v7136 = vand.u32 %v6950, 4294901760
    %v7137 = vsub.f32 %v6950, %v7136
    %7138 = vmatpush1.msra.mxu0 %v7137
    %7139 = vmatprep.subr.mxu0 0.0
    %v7140 = vand.u32 %v6951, 4294901760
    %v7141 = vsub.f32 %v6951, %v7140
    %7142 = vmatpush1.msra.mxu0 %v7141
    %7143 = vmatprep.subr.mxu0 0.0
    %v7144 = vand.u32 %v6952, 4294901760
    %v7145 = vsub.f32 %v6952, %v7144
    %7146 = vmatpush1.msra.mxu0 %v7145
    %7147 = vmatprep.subr.mxu0 0.0
    %v7148 = vand.u32 %v6953, 4294901760
    %v7149 = vsub.f32 %v6953, %v7148
    %7150 = vmatpush1.msra.mxu0 %v7149
    %7151 = vmatprep.subr.mxu0 0.0
    %7152 = vmatpush1.msra.mxu0 0.0
    %7153 = vmatprep.subr.mxu0 0.0
    %7154 = vmatpush1.msra.mxu0 0.0
    %7155 = vmatprep.subr.mxu0 0.0
    %7156 = vmatpush1.msra.mxu0 0.0
    %7157 = vmatprep.subr.mxu0 0.0
    %7158 = vmatpush1.msra.mxu0 0.0
    %7159 = vmatprep.subr.mxu0 0.0
    %7160 = vmatpush1.msra.mxu0 0.0
    %7161 = vmatprep.subr.mxu0 0.0
    %7162 = vmatpush1.msra.mxu0 0.0
    %7163 = vmatprep.subr.mxu0 0.0
    %7164 = vmatpush1.msra.mxu0 0.0
    %7165 = vmatprep.subr.mxu0 0.0
    %7166 = vmatpush1.msra.mxu0 0.0
    %7167 = vmatprep.subr.mxu0 0.0
    %7168 = vmatpush1.msra.mxu0 0.0
    %7169 = vmatprep.subr.mxu0 0.0
    %7170 = vmatpush1.msra.mxu0 0.0
    %7171 = vmatprep.subr.mxu0 0.0
    %7172 = vmatpush1.msra.mxu0 0.0
    %7173 = vmatprep.subr.mxu0 0.0
    %7174 = vmatpush1.msra.mxu0 0.0
    %7175 = vmatprep.subr.mxu0 0.0
    %7176 = vmatpush1.msra.mxu0 0.0
    %7177 = vmatprep.subr.mxu0 0.0
    %7178 = vmatpush1.msra.mxu0 0.0
    %7179 = vmatprep.subr.mxu0 0.0
    %7180 = vmatpush1.msra.mxu0 0.0
    %7181 = vmatprep.subr.mxu0 0.0
    %7182 = vmatpush1.msra.mxu0 0.0
    %7183 = vmatprep.subr.mxu0 0.0
    %7184 = vmatpush1.msra.mxu0 0.0
    %7185 = vmatprep.subr.mxu0 0.0
    %7186 = vmatpush1.msra.mxu0 0.0
    %7187 = vmatprep.subr.mxu0 0.0
    %7188 = vmatpush1.msra.mxu0 0.0
    %7189 = vmatprep.subr.mxu0 0.0
    %7190 = vmatpush1.msra.mxu0 0.0
    %7191 = vmatprep.subr.mxu0 0.0
    %7192 = vmatpush1.msra.mxu0 0.0
    %7193 = vmatprep.subr.mxu0 0.0
    %7194 = vmatpush1.msra.mxu0 0.0
    %7195 = vmatprep.subr.mxu0 0.0
    %7196 = vmatpush1.msra.mxu0 0.0
    %7197 = vmatprep.subr.mxu0 0.0
    %7198 = vmatpush1.msra.mxu0 0.0
    %7199 = vmatprep.subr.mxu0 0.0
    %7200 = vmatpush1.msra.mxu0 0.0
    %7201 = vmatprep.subr.mxu0 0.0
    %7202 = vmatpush1.msra.mxu0 0.0
    %7203 = vmatprep.subr.mxu0 0.0
    %7204 = vmatpush1.msra.mxu0 0.0
    %7205 = vmatprep.subr.mxu0 0.0
    %7206 = vmatpush1.msra.mxu0 0.0
    %7207 = vmatprep.mubr.f32.mxu0 0.0
    %v7208 = vand.u32 %v6963, 4294901760
    %v7209 = vsub.f32 %v6963, %v7208
    %7210 = vmatmul.mubr.f32.gmra.mrb[0].mxu0 %v7209
    %v7211 = vpop.f32.mrb[0].mxu0
    %v7212 = vadd.f32 %v7132, %v7211
    %v7213 = vpop.f32.mrb[0].mxu0
    %7214 = vdwg.mxu0
    %7215 = vmatprep.subr.mxu0 0.0
    %v7216 = vand.u32 %v6950, 4294901760
    %7217 = vmatpush1.msra.mxu0 %v7216
    %7218 = vmatprep.subr.mxu0 0.0
    %v7219 = vand.u32 %v6951, 4294901760
    %7220 = vmatpush1.msra.mxu0 %v7219
    %7221 = vmatprep.subr.mxu0 0.0
    %v7222 = vand.u32 %v6952, 4294901760
    %7223 = vmatpush1.msra.mxu0 %v7222
    %7224 = vmatprep.subr.mxu0 0.0
    %v7225 = vand.u32 %v6953, 4294901760
    %7226 = vmatpush1.msra.mxu0 %v7225
    %7227 = vmatprep.subr.mxu0 0.0
    %7228 = vmatpush1.msra.mxu0 0.0
    %7229 = vmatprep.subr.mxu0 0.0
    %7230 = vmatpush1.msra.mxu0 0.0
    %7231 = vmatprep.subr.mxu0 0.0
    %7232 = vmatpush1.msra.mxu0 0.0
    %7233 = vmatprep.subr.mxu0 0.0
    %7234 = vmatpush1.msra.mxu0 0.0
    %7235 = vmatprep.subr.mxu0 0.0
    %7236 = vmatpush1.msra.mxu0 0.0
    %7237 = vmatprep.subr.mxu0 0.0
    %7238 = vmatpush1.msra.mxu0 0.0
    %7239 = vmatprep.subr.mxu0 0.0
    %7240 = vmatpush1.msra.mxu0 0.0
    %7241 = vmatprep.subr.mxu0 0.0
    %7242 = vmatpush1.msra.mxu0 0.0
    %7243 = vmatprep.subr.mxu0 0.0
    %7244 = vmatpush1.msra.mxu0 0.0
    %7245 = vmatprep.subr.mxu0 0.0
    %7246 = vmatpush1.msra.mxu0 0.0
    %7247 = vmatprep.subr.mxu0 0.0
    %7248 = vmatpush1.msra.mxu0 0.0
    %7249 = vmatprep.subr.mxu0 0.0
    %7250 = vmatpush1.msra.mxu0 0.0
    %7251 = vmatprep.subr.mxu0 0.0
    %7252 = vmatpush1.msra.mxu0 0.0
    %7253 = vmatprep.subr.mxu0 0.0
    %7254 = vmatpush1.msra.mxu0 0.0
    %7255 = vmatprep.subr.mxu0 0.0
    %7256 = vmatpush1.msra.mxu0 0.0
    %7257 = vmatprep.subr.mxu0 0.0
    %7258 = vmatpush1.msra.mxu0 0.0
    %7259 = vmatprep.subr.mxu0 0.0
    %7260 = vmatpush1.msra.mxu0 0.0
    %7261 = vmatprep.subr.mxu0 0.0
    %7262 = vmatpush1.msra.mxu0 0.0
    %7263 = vmatprep.subr.mxu0 0.0
    %7264 = vmatpush1.msra.mxu0 0.0
    %7265 = vmatprep.subr.mxu0 0.0
    %7266 = vmatpush1.msra.mxu0 0.0
    %7267 = vmatprep.subr.mxu0 0.0
    %7268 = vmatpush1.msra.mxu0 0.0
    %7269 = vmatprep.subr.mxu0 0.0
    %7270 = vmatpush1.msra.mxu0 0.0
    %7271 = vmatprep.subr.mxu0 0.0
    %7272 = vmatpush1.msra.mxu0 0.0
    %7273 = vmatprep.subr.mxu0 0.0
    %7274 = vmatpush1.msra.mxu0 0.0
    %7275 = vmatprep.subr.mxu0 0.0
    %7276 = vmatpush1.msra.mxu0 0.0
    %7277 = vmatprep.subr.mxu0 0.0
    %7278 = vmatpush1.msra.mxu0 0.0
    %7279 = vmatprep.subr.mxu0 0.0
    %7280 = vmatpush1.msra.mxu0 0.0
    %7281 = vmatprep.subr.mxu0 0.0
    %7282 = vmatpush1.msra.mxu0 0.0
    %7283 = vmatprep.mubr.f32.mxu0 0.0
    %v7284 = vand.u32 %v6963, 4294901760
    %v7285 = vsub.f32 %v6963, %v7284
    %v7286 = vand.u32 %v7285, 4294901760
    %7287 = vmatmul.mubr.f32.gmra.mrb[0].mxu0 %v7286
    %v7288 = vpop.f32.mrb[0].mxu0
    %v7289 = vadd.f32 %v7212, %v7288
    %v7290 = vpop.f32.mrb[0].mxu0
    %7291 = vdwg.mxu0
    %7292 = vmatprep.subr.mxu0 0.0
    %v7293 = vand.u32 %v6950, 4294901760
    %v7294 = vsub.f32 %v6950, %v7293
    %v7295 = vand.u32 %v7294, 4294901760
    %7296 = vmatpush1.msra.mxu0 %v7295
    %7297 = vmatprep.subr.mxu0 0.0
    %v7298 = vand.u32 %v6951, 4294901760
    %v7299 = vsub.f32 %v6951, %v7298
    %v7300 = vand.u32 %v7299, 4294901760
    %7301 = vmatpush1.msra.mxu0 %v7300
    %7302 = vmatprep.subr.mxu0 0.0
    %v7303 = vand.u32 %v6952, 4294901760
    %v7304 = vsub.f32 %v6952, %v7303
    %v7305 = vand.u32 %v7304, 4294901760
    %7306 = vmatpush1.msra.mxu0 %v7305
    %7307 = vmatprep.subr.mxu0 0.0
    %v7308 = vand.u32 %v6953, 4294901760
    %v7309 = vsub.f32 %v6953, %v7308
    %v7310 = vand.u32 %v7309, 4294901760
    %7311 = vmatpush1.msra.mxu0 %v7310
    %7312 = vmatprep.subr.mxu0 0.0
    %7313 = vmatpush1.msra.mxu0 0.0
    %7314 = vmatprep.subr.mxu0 0.0
    %7315 = vmatpush1.msra.mxu0 0.0
    %7316 = vmatprep.subr.mxu0 0.0
    %7317 = vmatpush1.msra.mxu0 0.0
    %7318 = vmatprep.subr.mxu0 0.0
    %7319 = vmatpush1.msra.mxu0 0.0
    %7320 = vmatprep.subr.mxu0 0.0
    %7321 = vmatpush1.msra.mxu0 0.0
    %7322 = vmatprep.subr.mxu0 0.0
    %7323 = vmatpush1.msra.mxu0 0.0
    %7324 = vmatprep.subr.mxu0 0.0
    %7325 = vmatpush1.msra.mxu0 0.0
    %7326 = vmatprep.subr.mxu0 0.0
    %7327 = vmatpush1.msra.mxu0 0.0
    %7328 = vmatprep.subr.mxu0 0.0
    %7329 = vmatpush1.msra.mxu0 0.0
    %7330 = vmatprep.subr.mxu0 0.0
    %7331 = vmatpush1.msra.mxu0 0.0
    %7332 = vmatprep.subr.mxu0 0.0
    %7333 = vmatpush1.msra.mxu0 0.0
    %7334 = vmatprep.subr.mxu0 0.0
    %7335 = vmatpush1.msra.mxu0 0.0
    %7336 = vmatprep.subr.mxu0 0.0
    %7337 = vmatpush1.msra.mxu0 0.0
    %7338 = vmatprep.subr.mxu0 0.0
    %7339 = vmatpush1.msra.mxu0 0.0
    %7340 = vmatprep.subr.mxu0 0.0
    %7341 = vmatpush1.msra.mxu0 0.0
    %7342 = vmatprep.subr.mxu0 0.0
    %7343 = vmatpush1.msra.mxu0 0.0
    %7344 = vmatprep.subr.mxu0 0.0
    %7345 = vmatpush1.msra.mxu0 0.0
    %7346 = vmatprep.subr.mxu0 0.0
    %7347 = vmatpush1.msra.mxu0 0.0
    %7348 = vmatprep.subr.mxu0 0.0
    %7349 = vmatpush1.msra.mxu0 0.0
    %7350 = vmatprep.subr.mxu0 0.0
    %7351 = vmatpush1.msra.mxu0 0.0
    %7352 = vmatprep.subr.mxu0 0.0
    %7353 = vmatpush1.msra.mxu0 0.0
    %7354 = vmatprep.subr.mxu0 0.0
    %7355 = vmatpush1.msra.mxu0 0.0
    %7356 = vmatprep.subr.mxu0 0.0
    %7357 = vmatpush1.msra.mxu0 0.0
    %7358 = vmatprep.subr.mxu0 0.0
    %7359 = vmatpush1.msra.mxu0 0.0
    %7360 = vmatprep.subr.mxu0 0.0
    %7361 = vmatpush1.msra.mxu0 0.0
    %7362 = vmatprep.subr.mxu0 0.0
    %7363 = vmatpush1.msra.mxu0 0.0
    %7364 = vmatprep.subr.mxu0 0.0
    %7365 = vmatpush1.msra.mxu0 0.0
    %7366 = vmatprep.subr.mxu0 0.0
    %7367 = vmatpush1.msra.mxu0 0.0
    %7368 = vmatprep.mubr.f32.mxu0 0.0
    %v7369 = vand.u32 %v6963, 4294901760
    %7370 = vmatmul.mubr.f32.gmra.mrb[0].mxu0 %v7369
    %v7371 = vpop.f32.mrb[0].mxu0
    %v7372 = vadd.f32 %v7289, %v7371
    %v7373 = vpop.f32.mrb[0].mxu0
    %7374 = vdwg.mxu0
    %7375 = vmatprep.subr.mxu0 0.0
    %v7376 = vand.u32 %v6950, 4294901760
    %7377 = vmatpush1.msra.mxu0 %v7376
    %7378 = vmatprep.subr.mxu0 0.0
    %v7379 = vand.u32 %v6951, 4294901760
    %7380 = vmatpush1.msra.mxu0 %v7379
    %7381 = vmatprep.subr.mxu0 0.0
    %v7382 = vand.u32 %v6952, 4294901760
    %7383 = vmatpush1.msra.mxu0 %v7382
    %7384 = vmatprep.subr.mxu0 0.0
    %v7385 = vand.u32 %v6953, 4294901760
    %7386 = vmatpush1.msra.mxu0 %v7385
    %7387 = vmatprep.subr.mxu0 0.0
    %7388 = vmatpush1.msra.mxu0 0.0
    %7389 = vmatprep.subr.mxu0 0.0
    %7390 = vmatpush1.msra.mxu0 0.0
    %7391 = vmatprep.subr.mxu0 0.0
    %7392 = vmatpush1.msra.mxu0 0.0
    %7393 = vmatprep.subr.mxu0 0.0
    %7394 = vmatpush1.msra.mxu0 0.0
    %7395 = vmatprep.subr.mxu0 0.0
    %7396 = vmatpush1.msra.mxu0 0.0
    %7397 = vmatprep.subr.mxu0 0.0
    %7398 = vmatpush1.msra.mxu0 0.0
    %7399 = vmatprep.subr.mxu0 0.0
    %7400 = vmatpush1.msra.mxu0 0.0
    %7401 = vmatprep.subr.mxu0 0.0
    %7402 = vmatpush1.msra.mxu0 0.0
    %7403 = vmatprep.subr.mxu0 0.0
    %7404 = vmatpush1.msra.mxu0 0.0
    %7405 = vmatprep.subr.mxu0 0.0
    %7406 = vmatpush1.msra.mxu0 0.0
    %7407 = vmatprep.subr.mxu0 0.0
    %7408 = vmatpush1.msra.mxu0 0.0
    %7409 = vmatprep.subr.mxu0 0.0
    %7410 = vmatpush1.msra.mxu0 0.0
    %7411 = vmatprep.subr.mxu0 0.0
    %7412 = vmatpush1.msra.mxu0 0.0
    %7413 = vmatprep.subr.mxu0 0.0
    %7414 = vmatpush1.msra.mxu0 0.0
    %7415 = vmatprep.subr.mxu0 0.0
    %7416 = vmatpush1.msra.mxu0 0.0
    %7417 = vmatprep.subr.mxu0 0.0
    %7418 = vmatpush1.msra.mxu0 0.0
    %7419 = vmatprep.subr.mxu0 0.0
    %7420 = vmatpush1.msra.mxu0 0.0
    %7421 = vmatprep.subr.mxu0 0.0
    %7422 = vmatpush1.msra.mxu0 0.0
    %7423 = vmatprep.subr.mxu0 0.0
    %7424 = vmatpush1.msra.mxu0 0.0
    %7425 = vmatprep.subr.mxu0 0.0
    %7426 = vmatpush1.msra.mxu0 0.0
    %7427 = vmatprep.subr.mxu0 0.0
    %7428 = vmatpush1.msra.mxu0 0.0
    %7429 = vmatprep.subr.mxu0 0.0
    %7430 = vmatpush1.msra.mxu0 0.0
    %7431 = vmatprep.subr.mxu0 0.0
    %7432 = vmatpush1.msra.mxu0 0.0
    %7433 = vmatprep.subr.mxu0 0.0
    %7434 = vmatpush1.msra.mxu0 0.0
    %7435 = vmatprep.subr.mxu0 0.0
    %7436 = vmatpush1.msra.mxu0 0.0
    %7437 = vmatprep.subr.mxu0 0.0
    %7438 = vmatpush1.msra.mxu0 0.0
    %7439 = vmatprep.subr.mxu0 0.0
    %7440 = vmatpush1.msra.mxu0 0.0
    %7441 = vmatprep.subr.mxu0 0.0
    %7442 = vmatpush1.msra.mxu0 0.0
    %7443 = vmatprep.mubr.f32.mxu0 0.0
    %v7444 = vand.u32 %v6963, 4294901760
    %7445 = vmatmul.mubr.f32.gmra.mrb[0].mxu0 %v7444
    %v7446 = vpop.f32.mrb[0].mxu0
    %v7447 = vadd.f32 %v7372, %v7446
    %v7448 = vpop.f32.mrb[0].mxu0
    %7449 = vdwg.mxu0
    %vm7450 = vcmask 9216
    %v7451 = vsel %vm7450, %v7447, -inf
    %7452 = vmax.xlane.f32.xlu0 %v7451
    %v7453 = vpop.xlane.xlu0 %7452
    %v7454 = vsub.f32 %v7447, %v7453
    %v7455 = vmul.f32 %v7454, 1.442695
    %v7456 = vpow.pop %v7455
    %v7457 = vsel %vm7450, %v7456, 0.0
    %7458 = vadd.xlane.f32.xlu0 %v7457
    %v7459 = vpop.xlane.xlu0 %7458
    %v7460 = vrcp.pop %v7459
    %v7461 = vmul.f32 %v7456, %v7460
    %7462 = vst.msk [vmem:[#allocation2] sm:$0x3] %vm7450, %v7461
    %7463 = vxpose.xlu0.b32.start [1/16] %v3120, 128
    %7464 = vxpose.xlu0.b32.cont [2/16] %v3121, 128
    %7465 = vxpose.xlu0.b32.cont [3/16] 0.0, 128
    %7466 = vxpose.xlu0.b32.cont [4/16] 0.0, 128
    %7467 = vxpose.xlu0.b32.cont [5/16] 0.0, 128
    %7468 = vxpose.xlu0.b32.cont [6/16] 0.0, 128
    %7469 = vxpose.xlu0.b32.cont [7/16] 0.0, 128
    %7470 = vxpose.xlu0.b32.cont [8/16] 0.0, 128
    %7471 = vxpose.xlu0.b32.cont [9/16] 0.0, 128
    %7472 = vxpose.xlu0.b32.cont [10/16] 0.0, 128
    %7473 = vxpose.xlu0.b32.cont [11/16] 0.0, 128
    %7474 = vxpose.xlu0.b32.cont [12/16] 0.0, 128
    %7475 = vxpose.xlu0.b32.cont [13/16] 0.0, 128
    %7476 = vxpose.xlu0.b32.cont [14/16] 0.0, 128
    %7477 = vxpose.xlu0.b32.cont [15/16] 0.0, 128
    %7478 = vxpose.xlu0.b32.end [16/16] 0.0, 128
    %v7479 = vpop.trf.xlu0
    %v7480 = vpop.trf.xlu0
    %v7481 = vpop.trf.xlu0
    %v7482 = vpop.trf.xlu0
    %v7483 = vpop.trf.xlu0
    %v7484 = vpop.trf.xlu0
    %v7485 = vpop.trf.xlu0
    %v7486 = vpop.trf.xlu0
    %v7487 = vpop.trf.xlu0
    %v7488 = vpop.trf.xlu0
    %v7489 = vpop.trf.xlu0
    %v7490 = vpop.trf.xlu0
    %v7491 = vpop.trf.xlu0
    %v7492 = vpop.trf.xlu0
    %v7493 = vpop.trf.xlu0
    %v7494 = vpop.trf.xlu0
    %7495 = vxpose.xlu0.b32.start [1/16] %v3122, 128
    %7496 = vxpose.xlu0.b32.cont [2/16] %v3123, 128
    %7497 = vxpose.xlu0.b32.cont [3/16] 0.0, 128
    %7498 = vxpose.xlu0.b32.cont [4/16] 0.0, 128
    %7499 = vxpose.xlu0.b32.cont [5/16] 0.0, 128
    %7500 = vxpose.xlu0.b32.cont [6/16] 0.0, 128
    %7501 = vxpose.xlu0.b32.cont [7/16] 0.0, 128
    %7502 = vxpose.xlu0.b32.cont [8/16] 0.0, 128
    %7503 = vxpose.xlu0.b32.cont [9/16] 0.0, 128
    %7504 = vxpose.xlu0.b32.cont [10/16] 0.0, 128
    %7505 = vxpose.xlu0.b32.cont [11/16] 0.0, 128
    %7506 = vxpose.xlu0.b32.cont [12/16] 0.0, 128
    %7507 = vxpose.xlu0.b32.cont [13/16] 0.0, 128
    %7508 = vxpose.xlu0.b32.cont [14/16] 0.0, 128
    %7509 = vxpose.xlu0.b32.cont [15/16] 0.0, 128
    %7510 = vxpose.xlu0.b32.end [16/16] 0.0, 128
    %v7511 = vpop.trf.xlu0
    %v7512 = vpop.trf.xlu0
    %v7513 = vpop.trf.xlu0
    %v7514 = vpop.trf.xlu0
    %v7515 = vpop.trf.xlu0
    %v7516 = vpop.trf.xlu0
    %v7517 = vpop.trf.xlu0
    %v7518 = vpop.trf.xlu0
    %v7519 = vpop.trf.xlu0
    %v7520 = vpop.trf.xlu0
    %v7521 = vpop.trf.xlu0
    %v7522 = vpop.trf.xlu0
    %v7523 = vpop.trf.xlu0
    %v7524 = vpop.trf.xlu0
    %v7525 = vpop.trf.xlu0
    %v7526 = vpop.trf.xlu0
    %v7527 = vld [vmem:[%s3] sm:$0xff]
    %v7528 = vld [vmem:[%s3 + $0x8] sm:$0xff]
    %v7529 = vld [vmem:[%s3 + $0x10] sm:$0xff]
    %v7530 = vld [vmem:[%s3 + $0x18] sm:$0xff]
    %v7532 = vsel %vm135, %v7479, 0
    %v7535 = vsel %vm135, %v7511, 0
    %v7537 = vand.u32 %v7528, 4294901760
    %7538 = vmatprep.subr.mxu0 %v7537
    %v7539 = vand.u32 %v7527, 4294901760
    %7540 = vmatpush1.msra.mxu0 %v7539
    %v7541 = vand.u32 %v7530, 4294901760
    %7542 = vmatprep.subr.mxu0 %v7541
    %v7543 = vand.u32 %v7529, 4294901760
    %7544 = vmatpush1.msra.mxu0 %v7543
    %7545 = vmatprep.subr.mxu0 0.0
    %7546 = vmatpush1.msra.mxu0 0.0
    %7547 = vmatprep.subr.mxu0 0.0
    %7548 = vmatpush1.msra.mxu0 0.0
    %7549 = vmatprep.subr.mxu0 0.0
    %7550 = vmatpush1.msra.mxu0 0.0
    %7551 = vmatprep.subr.mxu0 0.0
    %7552 = vmatpush1.msra.mxu0 0.0
    %7553 = vmatprep.subr.mxu0 0.0
    %7554 = vmatpush1.msra.mxu0 0.0
    %7555 = vmatprep.subr.mxu0 0.0
    %7556 = vmatpush1.msra.mxu0 0.0
    %7557 = vmatprep.subr.mxu0 0.0
    %7558 = vmatpush1.msra.mxu0 0.0
    %7559 = vmatprep.subr.mxu0 0.0
    %7560 = vmatpush1.msra.mxu0 0.0
    %7561 = vmatprep.subr.mxu0 0.0
    %7562 = vmatpush1.msra.mxu0 0.0
    %7563 = vmatprep.subr.mxu0 0.0
    %7564 = vmatpush1.msra.mxu0 0.0
    %7565 = vmatprep.subr.mxu0 0.0
    %7566 = vmatpush1.msra.mxu0 0.0
    %7567 = vmatprep.subr.mxu0 0.0
    %7568 = vmatpush1.msra.mxu0 0.0
    %7569 = vmatprep.subr.mxu0 0.0
    %7570 = vmatpush1.msra.mxu0 0.0
    %7571 = vmatprep.subr.mxu0 0.0
    %7572 = vmatpush1.msra.mxu0 0.0
    %7573 = vmatprep.subr.mxu0 0.0
    %7574 = vmatpush1.msra.mxu0 0.0
    %7575 = vmatprep.subr.mxu0 0.0
    %7576 = vmatpush1.msra.mxu0 0.0
    %7577 = vmatprep.subr.mxu0 0.0
    %7578 = vmatpush1.msra.mxu0 0.0
    %7579 = vmatprep.subr.mxu0 0.0
    %7580 = vmatpush1.msra.mxu0 0.0
    %7581 = vmatprep.subr.mxu0 0.0
    %7582 = vmatpush1.msra.mxu0 0.0
    %7583 = vmatprep.subr.mxu0 0.0
    %7584 = vmatpush1.msra.mxu0 0.0
    %7585 = vmatprep.subr.mxu0 0.0
    %7586 = vmatpush1.msra.mxu0 0.0
    %7587 = vmatprep.subr.mxu0 0.0
    %7588 = vmatpush1.msra.mxu0 0.0
    %7589 = vmatprep.subr.mxu0 0.0
    %7590 = vmatpush1.msra.mxu0 0.0
    %7591 = vmatprep.subr.mxu0 0.0
    %7592 = vmatpush1.msra.mxu0 0.0
    %7593 = vmatprep.subr.mxu0 0.0
    %7594 = vmatpush1.msra.mxu0 0.0
    %7595 = vmatprep.subr.mxu0 0.0
    %7596 = vmatpush1.msra.mxu0 0.0
    %7597 = vmatprep.subr.mxu0 0.0
    %7598 = vmatpush1.msra.mxu0 0.0
    %7599 = vmatprep.subr.mxu0 0.0
    %7600 = vmatpush1.msra.mxu0 0.0
    %7601 = vmatprep.subr.mxu0 0.0
    %7602 = vmatpush1.msra.mxu0 0.0
    %7603 = vmatprep.subr.mxu0 0.0
    %7604 = vmatpush1.msra.mxu0 0.0
    %7605 = vmatprep.mubr.f32.mxu0 0.0
    %v7606 = vand.u32 %v7532, 4294901760
    %v7607 = vsub.f32 %v7532, %v7606
    %v7608 = vand.u32 %v7607, 4294901760
    %v7609 = vsub.f32 %v7607, %v7608
    %v7610 = vand.u32 %v7609, 4294901760
    %7611 = vmatmul.mubr.f32.gmra.mrb[0].mxu0 %v7610
    %v7612 = vpop.f32.mrb[0].mxu0
    %v7613 = vadd.f32 0.0, %v7612
    %v7614 = vpop.f32.mrb[0].mxu0
    %v7615 = vadd.f32 0.0, %v7614
    %7616 = vmatprep.mubr.f32.mxu0 0.0
    %v7617 = vand.u32 %v7535, 4294901760
    %v7618 = vsub.f32 %v7535, %v7617
    %v7619 = vand.u32 %v7618, 4294901760
    %v7620 = vsub.f32 %v7618, %v7619
    %v7621 = vand.u32 %v7620, 4294901760
    %7622 = vmatmul.mubr.f32.gmra.mrb[0].mxu0 %v7621
    %v7623 = vpop.f32.mrb[0].mxu0
    %v7624 = vadd.f32 0.0, %v7623
    %v7625 = vpop.f32.mrb[0].mxu0
    %v7626 = vadd.f32 0.0, %v7625
    %7627 = vdwg.mxu0
    %v7628 = vand.u32 %v7528, 4294901760
    %v7629 = vsub.f32 %v7528, %v7628
    %v7630 = vand.u32 %v7629, 4294901760
    %v7631 = vsub.f32 %v7629, %v7630
    %v7632 = vand.u32 %v7631, 4294901760
    %7633 = vmatprep.subr.mxu0 %v7632
    %v7634 = vand.u32 %v7527, 4294901760
    %v7635 = vsub.f32 %v7527, %v7634
    %v7636 = vand.u32 %v7635, 4294901760
    %v7637 = vsub.f32 %v7635, %v7636
    %v7638 = vand.u32 %v7637, 4294901760
    %7639 = vmatpush1.msra.mxu0 %v7638
    %v7640 = vand.u32 %v7530, 4294901760
    %v7641 = vsub.f32 %v7530, %v7640
    %v7642 = vand.u32 %v7641, 4294901760
    %v7643 = vsub.f32 %v7641, %v7642
    %v7644 = vand.u32 %v7643, 4294901760
    %7645 = vmatprep.subr.mxu0 %v7644
    %v7646 = vand.u32 %v7529, 4294901760
    %v7647 = vsub.f32 %v7529, %v7646
    %v7648 = vand.u32 %v7647, 4294901760
    %v7649 = vsub.f32 %v7647, %v7648
    %v7650 = vand.u32 %v7649, 4294901760
    %7651 = vmatpush1.msra.mxu0 %v7650
    %7652 = vmatprep.subr.mxu0 0.0
    %7653 = vmatpush1.msra.mxu0 0.0
    %7654 = vmatprep.subr.mxu0 0.0
    %7655 = vmatpush1.msra.mxu0 0.0
    %7656 = vmatprep.subr.mxu0 0.0
    %7657 = vmatpush1.msra.mxu0 0.0
    %7658 = vmatprep.subr.mxu0 0.0
    %7659 = vmatpush1.msra.mxu0 0.0
    %7660 = vmatprep.subr.mxu0 0.0
    %7661 = vmatpush1.msra.mxu0 0.0
    %7662 = vmatprep.subr.mxu0 0.0
    %7663 = vmatpush1.msra.mxu0 0.0
    %7664 = vmatprep.subr.mxu0 0.0
    %7665 = vmatpush1.msra.mxu0 0.0
    %7666 = vmatprep.subr.mxu0 0.0
    %7667 = vmatpush1.msra.mxu0 0.0
    %7668 = vmatprep.subr.mxu0 0.0
    %7669 = vmatpush1.msra.mxu0 0.0
    %7670 = vmatprep.subr.mxu0 0.0
    %7671 = vmatpush1.msra.mxu0 0.0
    %7672 = vmatprep.subr.mxu0 0.0
    %7673 = vmatpush1.msra.mxu0 0.0
    %7674 = vmatprep.subr.mxu0 0.0
    %7675 = vmatpush1.msra.mxu0 0.0
    %7676 = vmatprep.subr.mxu0 0.0
    %7677 = vmatpush1.msra.mxu0 0.0
    %7678 = vmatprep.subr.mxu0 0.0
    %7679 = vmatpush1.msra.mxu0 0.0
    %7680 = vmatprep.subr.mxu0 0.0
    %7681 = vmatpush1.msra.mxu0 0.0
    %7682 = vmatprep.subr.mxu0 0.0
    %7683 = vmatpush1.msra.mxu0 0.0
    %7684 = vmatprep.subr.mxu0 0.0
    %7685 = vmatpush1.msra.mxu0 0.0
    %7686 = vmatprep.subr.mxu0 0.0
    %7687 = vmatpush1.msra.mxu0 0.0
    %7688 = vmatprep.subr.mxu0 0.0
    %7689 = vmatpush1.msra.mxu0 0.0
    %7690 = vmatprep.subr.mxu0 0.0
    %7691 = vmatpush1.msra.mxu0 0.0
    %7692 = vmatprep.subr.mxu0 0.0
    %7693 = vmatpush1.msra.mxu0 0.0
    %7694 = vmatprep.subr.mxu0 0.0
    %7695 = vmatpush1.msra.mxu0 0.0
    %7696 = vmatprep.subr.mxu0 0.0
    %7697 = vmatpush1.msra.mxu0 0.0
    %7698 = vmatprep.subr.mxu0 0.0
    %7699 = vmatpush1.msra.mxu0 0.0
    %7700 = vmatprep.subr.mxu0 0.0
    %7701 = vmatpush1.msra.mxu0 0.0
    %7702 = vmatprep.subr.mxu0 0.0
    %7703 = vmatpush1.msra.mxu0 0.0
    %7704 = vmatprep.subr.mxu0 0.0
    %7705 = vmatpush1.msra.mxu0 0.0
    %7706 = vmatprep.subr.mxu0 0.0
    %7707 = vmatpush1.msra.mxu0 0.0
    %7708 = vmatprep.subr.mxu0 0.0
    %7709 = vmatpush1.msra.mxu0 0.0
    %7710 = vmatprep.subr.mxu0 0.0
    %7711 = vmatpush1.msra.mxu0 0.0
    %7712 = vmatprep.mubr.f32.mxu0 0.0
    %v7713 = vand.u32 %v7532, 4294901760
    %7714 = vmatmul.mubr.f32.gmra.mrb[0].mxu0 %v7713
    %v7715 = vpop.f32.mrb[0].mxu0
    %v7716 = vadd.f32 %v7613, %v7715
    %v7717 = vpop.f32.mrb[0].mxu0
    %v7718 = vadd.f32 %v7615, %v7717
    %7719 = vmatprep.mubr.f32.mxu0 0.0
    %v7720 = vand.u32 %v7535, 4294901760
    %7721 = vmatmul.mubr.f32.gmra.mrb[0].mxu0 %v7720
    %v7722 = vpop.f32.mrb[0].mxu0
    %v7723 = vadd.f32 %v7624, %v7722
    %v7724 = vpop.f32.mrb[0].mxu0
    %v7725 = vadd.f32 %v7626, %v7724
    %7726 = vdwg.mxu0
    %v7727 = vand.u32 %v7528, 4294901760
    %v7728 = vsub.f32 %v7528, %v7727
    %7729 = vmatprep.subr.mxu0 %v7728
    %v7730 = vand.u32 %v7527, 4294901760
    %v7731 = vsub.f32 %v7527, %v7730
    %7732 = vmatpush1.msra.mxu0 %v7731
    %v7733 = vand.u32 %v7530, 4294901760
    %v7734 = vsub.f32 %v7530, %v7733
    %7735 = vmatprep.subr.mxu0 %v7734
    %v7736 = vand.u32 %v7529, 4294901760
    %v7737 = vsub.f32 %v7529, %v7736
    %7738 = vmatpush1.msra.mxu0 %v7737
    %7739 = vmatprep.subr.mxu0 0.0
    %7740 = vmatpush1.msra.mxu0 0.0
    %7741 = vmatprep.subr.mxu0 0.0
    %7742 = vmatpush1.msra.mxu0 0.0
    %7743 = vmatprep.subr.mxu0 0.0
    %7744 = vmatpush1.msra.mxu0 0.0
    %7745 = vmatprep.subr.mxu0 0.0
    %7746 = vmatpush1.msra.mxu0 0.0
    %7747 = vmatprep.subr.mxu0 0.0
    %7748 = vmatpush1.msra.mxu0 0.0
    %7749 = vmatprep.subr.mxu0 0.0
    %7750 = vmatpush1.msra.mxu0 0.0
    %7751 = vmatprep.subr.mxu0 0.0
    %7752 = vmatpush1.msra.mxu0 0.0
    %7753 = vmatprep.subr.mxu0 0.0
    %7754 = vmatpush1.msra.mxu0 0.0
    %7755 = vmatprep.subr.mxu0 0.0
    %7756 = vmatpush1.msra.mxu0 0.0
    %7757 = vmatprep.subr.mxu0 0.0
    %7758 = vmatpush1.msra.mxu0 0.0
    %7759 = vmatprep.subr.mxu0 0.0
    %7760 = vmatpush1.msra.mxu0 0.0
    %7761 = vmatprep.subr.mxu0 0.0
    %7762 = vmatpush1.msra.mxu0 0.0
    %7763 = vmatprep.subr.mxu0 0.0
    %7764 = vmatpush1.msra.mxu0 0.0
    %7765 = vmatprep.subr.mxu0 0.0
    %7766 = vmatpush1.msra.mxu0 0.0
    %7767 = vmatprep.subr.mxu0 0.0
    %7768 = vmatpush1.msra.mxu0 0.0
    %7769 = vmatprep.subr.mxu0 0.0
    %7770 = vmatpush1.msra.mxu0 0.0
    %7771 = vmatprep.subr.mxu0 0.0
    %7772 = vmatpush1.msra.mxu0 0.0
    %7773 = vmatprep.subr.mxu0 0.0
    %7774 = vmatpush1.msra.mxu0 0.0
    %7775 = vmatprep.subr.mxu0 0.0
    %7776 = vmatpush1.msra.mxu0 0.0
    %7777 = vmatprep.subr.mxu0 0.0
    %7778 = vmatpush1.msra.mxu0 0.0
    %7779 = vmatprep.subr.mxu0 0.0
    %7780 = vmatpush1.msra.mxu0 0.0
    %7781 = vmatprep.subr.mxu0 0.0
    %7782 = vmatpush1.msra.mxu0 0.0
    %7783 = vmatprep.subr.mxu0 0.0
    %7784 = vmatpush1.msra.mxu0 0.0
    %7785 = vmatprep.subr.mxu0 0.0
    %7786 = vmatpush1.msra.mxu0 0.0
    %7787 = vmatprep.subr.mxu0 0.0
    %7788 = vmatpush1.msra.mxu0 0.0
    %7789 = vmatprep.subr.mxu0 0.0
    %7790 = vmatpush1.msra.mxu0 0.0
    %7791 = vmatprep.subr.mxu0 0.0
    %7792 = vmatpush1.msra.mxu0 0.0
    %7793 = vmatprep.subr.mxu0 0.0
    %7794 = vmatpush1.msra.mxu0 0.0
    %7795 = vmatprep.subr.mxu0 0.0
    %7796 = vmatpush1.msra.mxu0 0.0
    %7797 = vmatprep.subr.mxu0 0.0
    %7798 = vmatpush1.msra.mxu0 0.0
    %7799 = vmatprep.mubr.f32.mxu0 0.0
    %v7800 = vand.u32 %v7532, 4294901760
    %v7801 = vsub.f32 %v7532, %v7800
    %7802 = vmatmul.mubr.f32.gmra.mrb[0].mxu0 %v7801
    %v7803 = vpop.f32.mrb[0].mxu0
    %v7804 = vadd.f32 %v7716, %v7803
    %v7805 = vpop.f32.mrb[0].mxu0
    %v7806 = vadd.f32 %v7718, %v7805
    %7807 = vmatprep.mubr.f32.mxu0 0.0
    %v7808 = vand.u32 %v7535, 4294901760
    %v7809 = vsub.f32 %v7535, %v7808
    %7810 = vmatmul.mubr.f32.gmra.mrb[0].mxu0 %v7809
    %v7811 = vpop.f32.mrb[0].mxu0
    %v7812 = vadd.f32 %v7723, %v7811
    %v7813 = vpop.f32.mrb[0].mxu0
    %v7814 = vadd.f32 %v7725, %v7813
    %7815 = vdwg.mxu0
    %v7816 = vand.u32 %v7528, 4294901760
    %7817 = vmatprep.subr.mxu0 %v7816
    %v7818 = vand.u32 %v7527, 4294901760
    %7819 = vmatpush1.msra.mxu0 %v7818
    %v7820 = vand.u32 %v7530, 4294901760
    %7821 = vmatprep.subr.mxu0 %v7820
    %v7822 = vand.u32 %v7529, 4294901760
    %7823 = vmatpush1.msra.mxu0 %v7822
    %7824 = vmatprep.subr.mxu0 0.0
    %7825 = vmatpush1.msra.mxu0 0.0
    %7826 = vmatprep.subr.mxu0 0.0
    %7827 = vmatpush1.msra.mxu0 0.0
    %7828 = vmatprep.subr.mxu0 0.0
    %7829 = vmatpush1.msra.mxu0 0.0
    %7830 = vmatprep.subr.mxu0 0.0
    %7831 = vmatpush1.msra.mxu0 0.0
    %7832 = vmatprep.subr.mxu0 0.0
    %7833 = vmatpush1.msra.mxu0 0.0
    %7834 = vmatprep.subr.mxu0 0.0
    %7835 = vmatpush1.msra.mxu0 0.0
    %7836 = vmatprep.subr.mxu0 0.0
    %7837 = vmatpush1.msra.mxu0 0.0
    %7838 = vmatprep.subr.mxu0 0.0
    %7839 = vmatpush1.msra.mxu0 0.0
    %7840 = vmatprep.subr.mxu0 0.0
    %7841 = vmatpush1.msra.mxu0 0.0
    %7842 = vmatprep.subr.mxu0 0.0
    %7843 = vmatpush1.msra.mxu0 0.0
    %7844 = vmatprep.subr.mxu0 0.0
    %7845 = vmatpush1.msra.mxu0 0.0
    %7846 = vmatprep.subr.mxu0 0.0
    %7847 = vmatpush1.msra.mxu0 0.0
    %7848 = vmatprep.subr.mxu0 0.0
    %7849 = vmatpush1.msra.mxu0 0.0
    %7850 = vmatprep.subr.mxu0 0.0
    %7851 = vmatpush1.msra.mxu0 0.0
    %7852 = vmatprep.subr.mxu0 0.0
    %7853 = vmatpush1.msra.mxu0 0.0
    %7854 = vmatprep.subr.mxu0 0.0
    %7855 = vmatpush1.msra.mxu0 0.0
    %7856 = vmatprep.subr.mxu0 0.0
    %7857 = vmatpush1.msra.mxu0 0.0
    %7858 = vmatprep.subr.mxu0 0.0
    %7859 = vmatpush1.msra.mxu0 0.0
    %7860 = vmatprep.subr.mxu0 0.0
    %7861 = vmatpush1.msra.mxu0 0.0
    %7862 = vmatprep.subr.mxu0 0.0
    %7863 = vmatpush1.msra.mxu0 0.0
    %7864 = vmatprep.subr.mxu0 0.0
    %7865 = vmatpush1.msra.mxu0 0.0
    %7866 = vmatprep.subr.mxu0 0.0
    %7867 = vmatpush1.msra.mxu0 0.0
    %7868 = vmatprep.subr.mxu0 0.0
    %7869 = vmatpush1.msra.mxu0 0.0
    %7870 = vmatprep.subr.mxu0 0.0
    %7871 = vmatpush1.msra.mxu0 0.0
    %7872 = vmatprep.subr.mxu0 0.0
    %7873 = vmatpush1.msra.mxu0 0.0
    %7874 = vmatprep.subr.mxu0 0.0
    %7875 = vmatpush1.msra.mxu0 0.0
    %7876 = vmatprep.subr.mxu0 0.0
    %7877 = vmatpush1.msra.mxu0 0.0
    %7878 = vmatprep.subr.mxu0 0.0
    %7879 = vmatpush1.msra.mxu0 0.0
    %7880 = vmatprep.subr.mxu0 0.0
    %7881 = vmatpush1.msra.mxu0 0.0
    %7882 = vmatprep.subr.mxu0 0.0
    %7883 = vmatpush1.msra.mxu0 0.0
    %7884 = vmatprep.mubr.f32.mxu0 0.0
    %v7885 = vand.u32 %v7532, 4294901760
    %v7886 = vsub.f32 %v7532, %v7885
    %v7887 = vand.u32 %v7886, 4294901760
    %7888 = vmatmul.mubr.f32.gmra.mrb[0].mxu0 %v7887
    %v7889 = vpop.f32.mrb[0].mxu0
    %v7890 = vadd.f32 %v7804, %v7889
    %v7891 = vpop.f32.mrb[0].mxu0
    %v7892 = vadd.f32 %v7806, %v7891
    %7893 = vmatprep.mubr.f32.mxu0 0.0
    %v7894 = vand.u32 %v7535, 4294901760
    %v7895 = vsub.f32 %v7535, %v7894
    %v7896 = vand.u32 %v7895, 4294901760
    %7897 = vmatmul.mubr.f32.gmra.mrb[0].mxu0 %v7896
    %v7898 = vpop.f32.mrb[0].mxu0
    %v7899 = vadd.f32 %v7812, %v7898
    %v7900 = vpop.f32.mrb[0].mxu0
    %v7901 = vadd.f32 %v7814, %v7900
    %7902 = vdwg.mxu0
    %v7903 = vand.u32 %v7528, 4294901760
    %v7904 = vsub.f32 %v7528, %v7903
    %v7905 = vand.u32 %v7904, 4294901760
    %7906 = vmatprep.subr.mxu0 %v7905
    %v7907 = vand.u32 %v7527, 4294901760
    %v7908 = vsub.f32 %v7527, %v7907
    %v7909 = vand.u32 %v7908, 4294901760
    %7910 = vmatpush1.msra.mxu0 %v7909
    %v7911 = vand.u32 %v7530, 4294901760
    %v7912 = vsub.f32 %v7530, %v7911
    %v7913 = vand.u32 %v7912, 4294901760
    %7914 = vmatprep.subr.mxu0 %v7913
    %v7915 = vand.u32 %v7529, 4294901760
    %v7916 = vsub.f32 %v7529, %v7915
    %v7917 = vand.u32 %v7916, 4294901760
    %7918 = vmatpush1.msra.mxu0 %v7917
    %7919 = vmatprep.subr.mxu0 0.0
    %7920 = vmatpush1.msra.mxu0 0.0
    %7921 = vmatprep.subr.mxu0 0.0
    %7922 = vmatpush1.msra.mxu0 0.0
    %7923 = vmatprep.subr.mxu0 0.0
    %7924 = vmatpush1.msra.mxu0 0.0
    %7925 = vmatprep.subr.mxu0 0.0
    %7926 = vmatpush1.msra.mxu0 0.0
    %7927 = vmatprep.subr.mxu0 0.0
    %7928 = vmatpush1.msra.mxu0 0.0
    %7929 = vmatprep.subr.mxu0 0.0
    %7930 = vmatpush1.msra.mxu0 0.0
    %7931 = vmatprep.subr.mxu0 0.0
    %7932 = vmatpush1.msra.mxu0 0.0
    %7933 = vmatprep.subr.mxu0 0.0
    %7934 = vmatpush1.msra.mxu0 0.0
    %7935 = vmatprep.subr.mxu0 0.0
    %7936 = vmatpush1.msra.mxu0 0.0
    %7937 = vmatprep.subr.mxu0 0.0
    %7938 = vmatpush1.msra.mxu0 0.0
    %7939 = vmatprep.subr.mxu0 0.0
    %7940 = vmatpush1.msra.mxu0 0.0
    %7941 = vmatprep.subr.mxu0 0.0
    %7942 = vmatpush1.msra.mxu0 0.0
    %7943 = vmatprep.subr.mxu0 0.0
    %7944 = vmatpush1.msra.mxu0 0.0
    %7945 = vmatprep.subr.mxu0 0.0
    %7946 = vmatpush1.msra.mxu0 0.0
    %7947 = vmatprep.subr.mxu0 0.0
    %7948 = vmatpush1.msra.mxu0 0.0
    %7949 = vmatprep.subr.mxu0 0.0
    %7950 = vmatpush1.msra.mxu0 0.0
    %7951 = vmatprep.subr.mxu0 0.0
    %7952 = vmatpush1.msra.mxu0 0.0
    %7953 = vmatprep.subr.mxu0 0.0
    %7954 = vmatpush1.msra.mxu0 0.0
    %7955 = vmatprep.subr.mxu0 0.0
    %7956 = vmatpush1.msra.mxu0 0.0
    %7957 = vmatprep.subr.mxu0 0.0
    %7958 = vmatpush1.msra.mxu0 0.0
    %7959 = vmatprep.subr.mxu0 0.0
    %7960 = vmatpush1.msra.mxu0 0.0
    %7961 = vmatprep.subr.mxu0 0.0
    %7962 = vmatpush1.msra.mxu0 0.0
    %7963 = vmatprep.subr.mxu0 0.0
    %7964 = vmatpush1.msra.mxu0 0.0
    %7965 = vmatprep.subr.mxu0 0.0
    %7966 = vmatpush1.msra.mxu0 0.0
    %7967 = vmatprep.subr.mxu0 0.0
    %7968 = vmatpush1.msra.mxu0 0.0
    %7969 = vmatprep.subr.mxu0 0.0
    %7970 = vmatpush1.msra.mxu0 0.0
    %7971 = vmatprep.subr.mxu0 0.0
    %7972 = vmatpush1.msra.mxu0 0.0
    %7973 = vmatprep.subr.mxu0 0.0
    %7974 = vmatpush1.msra.mxu0 0.0
    %7975 = vmatprep.subr.mxu0 0.0
    %7976 = vmatpush1.msra.mxu0 0.0
    %7977 = vmatprep.subr.mxu0 0.0
    %7978 = vmatpush1.msra.mxu0 0.0
    %7979 = vmatprep.mubr.f32.mxu0 0.0
    %v7980 = vand.u32 %v7532, 4294901760
    %7981 = vmatmul.mubr.f32.gmra.mrb[0].mxu0 %v7980
    %v7982 = vpop.f32.mrb[0].mxu0
    %v7983 = vadd.f32 %v7890, %v7982
    %v7984 = vpop.f32.mrb[0].mxu0
    %v7985 = vadd.f32 %v7892, %v7984
    %7986 = vmatprep.mubr.f32.mxu0 0.0
    %v7987 = vand.u32 %v7535, 4294901760
    %7988 = vmatmul.mubr.f32.gmra.mrb[0].mxu0 %v7987
    %v7989 = vpop.f32.mrb[0].mxu0
    %v7990 = vadd.f32 %v7899, %v7989
    %v7991 = vpop.f32.mrb[0].mxu0
    %v7992 = vadd.f32 %v7901, %v7991
    %7993 = vdwg.mxu0
    %v7994 = vand.u32 %v7528, 4294901760
    %7995 = vmatprep.subr.mxu0 %v7994
    %v7996 = vand.u32 %v7527, 4294901760
    %7997 = vmatpush1.msra.mxu0 %v7996
    %v7998 = vand.u32 %v7530, 4294901760
    %7999 = vmatprep.subr.mxu0 %v7998
    %v8000 = vand.u32 %v7529, 4294901760
    %8001 = vmatpush1.msra.mxu0 %v8000
    %8002 = vmatprep.subr.mxu0 0.0
    %8003 = vmatpush1.msra.mxu0 0.0
    %8004 = vmatprep.subr.mxu0 0.0
    %8005 = vmatpush1.msra.mxu0 0.0
    %8006 = vmatprep.subr.mxu0 0.0
    %8007 = vmatpush1.msra.mxu0 0.0
    %8008 = vmatprep.subr.mxu0 0.0
    %8009 = vmatpush1.msra.mxu0 0.0
    %8010 = vmatprep.subr.mxu0 0.0
    %8011 = vmatpush1.msra.mxu0 0.0
    %8012 = vmatprep.subr.mxu0 0.0
    %8013 = vmatpush1.msra.mxu0 0.0
    %8014 = vmatprep.subr.mxu0 0.0
    %8015 = vmatpush1.msra.mxu0 0.0
    %8016 = vmatprep.subr.mxu0 0.0
    %8017 = vmatpush1.msra.mxu0 0.0
    %8018 = vmatprep.subr.mxu0 0.0
    %8019 = vmatpush1.msra.mxu0 0.0
    %8020 = vmatprep.subr.mxu0 0.0
    %8021 = vmatpush1.msra.mxu0 0.0
    %8022 = vmatprep.subr.mxu0 0.0
    %8023 = vmatpush1.msra.mxu0 0.0
    %8024 = vmatprep.subr.mxu0 0.0
    %8025 = vmatpush1.msra.mxu0 0.0
    %8026 = vmatprep.subr.mxu0 0.0
    %8027 = vmatpush1.msra.mxu0 0.0
    %8028 = vmatprep.subr.mxu0 0.0
    %8029 = vmatpush1.msra.mxu0 0.0
    %8030 = vmatprep.subr.mxu0 0.0
    %8031 = vmatpush1.msra.mxu0 0.0
    %8032 = vmatprep.subr.mxu0 0.0
    %8033 = vmatpush1.msra.mxu0 0.0
    %8034 = vmatprep.subr.mxu0 0.0
    %8035 = vmatpush1.msra.mxu0 0.0
    %8036 = vmatprep.subr.mxu0 0.0
    %8037 = vmatpush1.msra.mxu0 0.0
    %8038 = vmatprep.subr.mxu0 0.0
    %8039 = vmatpush1.msra.mxu0 0.0
    %8040 = vmatprep.subr.mxu0 0.0
    %8041 = vmatpush1.msra.mxu0 0.0
    %8042 = vmatprep.subr.mxu0 0.0
    %8043 = vmatpush1.msra.mxu0 0.0
    %8044 = vmatprep.subr.mxu0 0.0
    %8045 = vmatpush1.msra.mxu0 0.0
    %8046 = vmatprep.subr.mxu0 0.0
    %8047 = vmatpush1.msra.mxu0 0.0
    %8048 = vmatprep.subr.mxu0 0.0
    %8049 = vmatpush1.msra.mxu0 0.0
    %8050 = vmatprep.subr.mxu0 0.0
    %8051 = vmatpush1.msra.mxu0 0.0
    %8052 = vmatprep.subr.mxu0 0.0
    %8053 = vmatpush1.msra.mxu0 0.0
    %8054 = vmatprep.subr.mxu0 0.0
    %8055 = vmatpush1.msra.mxu0 0.0
    %8056 = vmatprep.subr.mxu0 0.0
    %8057 = vmatpush1.msra.mxu0 0.0
    %8058 = vmatprep.subr.mxu0 0.0
    %8059 = vmatpush1.msra.mxu0 0.0
    %8060 = vmatprep.subr.mxu0 0.0
    %8061 = vmatpush1.msra.mxu0 0.0
    %8062 = vmatprep.mubr.f32.mxu0 0.0
    %v8063 = vand.u32 %v7532, 4294901760
    %8064 = vmatmul.mubr.f32.gmra.mrb[0].mxu0 %v8063
    %v8065 = vpop.f32.mrb[0].mxu0
    %v8066 = vadd.f32 %v7983, %v8065
    %v8067 = vpop.f32.mrb[0].mxu0
    %v8068 = vadd.f32 %v7985, %v8067
    %8069 = vmatprep.mubr.f32.mxu0 0.0
    %v8070 = vand.u32 %v7535, 4294901760
    %8071 = vmatmul.mubr.f32.gmra.mrb[0].mxu0 %v8070
    %v8072 = vpop.f32.mrb[0].mxu0
    %v8073 = vadd.f32 %v7990, %v8072
    %v8074 = vpop.f32.mrb[0].mxu0
    %v8075 = vadd.f32 %v7992, %v8074
    %8076 = vdwg.mxu0
    %8077 = vst [vmem:[%s59] sm:$0xff] %v8066
    %8078 = vst [vmem:[%s59 + $0x8] sm:$0xff] %v8068
    %8079 = vst [vmem:[%s59 + $0x10] sm:$0xff] %v8073
    %8080 = vst [vmem:[%s59 + $0x18] sm:$0xff] %v8075
    // Predicated region
    $region114: #{network_sw_forward.1} parent=1 // pred_check
      _
    $region115: #{network_sw_forward.1} parent=1 // pred_check_branch
      %8082 = sbr.rel (0) target = $region117
    $region116: #{network_sw_forward.1} parent=1 // pred_region
      %s8084 = ssub.s32 32, 32
      %8085 = vsyncadd [#allocation3], %s8084
      %s8087 = sshll.u32 [#allocation2], 4
      %s8088 = int_to_ptr.vmem [resolvable:$true] %s8087
      %8090 = dma.vmem_to_hbm [thread:$0]  %s8088, 32, %s57, [#allocation3]
    $region117: #{network_sw_forward.1} parent=1 // pred_fallthru
      _
    // Predicated region
    $region118: #{network_sw_forward.1} parent=1 // pred_check
      _
    $region119: #{network_sw_forward.1} parent=1 // pred_check_branch
      %8092 = sbr.rel (0) target = $region121
    $region120: #{network_sw_forward.1} parent=1 // pred_region
      _
    $region121: #{network_sw_forward.1} parent=1 // pred_fallthru
      _
    // Predicated region
    $region122: #{network_sw_forward.1} parent=1 // pred_check
      _
    $region123: #{network_sw_forward.1} parent=1 // pred_check_branch
      %8094 = sbr.rel (0) target = $region125
    $region124: #{network_sw_forward.1} parent=1 // pred_region
      %8095 = dma.done [#allocation3], 32
    $region125: #{network_sw_forward.1} parent=1 // pred_fallthru
      _
    // Predicated region
    $region126: #{network_sw_forward.1} parent=1 // pred_check
      _
    $region127: #{network_sw_forward.1} parent=1 // pred_check_branch
      %8097 = sbr.rel (0) target = $region129
    $region128: #{network_sw_forward.1} parent=1 // pred_region
      _
    $region129: #{network_sw_forward.1} parent=1 // pred_fallthru
      _
    %8098 = vsyncpa [#allocation3], 1

</llo_original>
